<compile_context>
chip_gen: v7x
topology: tpu7x:2x2x1
jax: 0.10.0
libtpu: 0.0.40
codegen_flags: <defaults>
</compile_context>

<pallas_src>
import numpy as np

import jax
import jax.numpy as jnp
from jax.experimental import pallas as pl
from jax.experimental.pallas import tpu as pltpu

VMEM_LIMIT = 32 * 1024 * 1024


def _round_up(x, m):
    return (x + m - 1) // m * m


def _pick_tb(batch):
    """Batch-tile size: >=2 grid steps at small B, fatter tiles at large B."""
    if batch >= 128:
        return 32
    if batch >= 32:
        return 16
    return 8


# ----------------------------------------------------------------------------
# Fused Pallas kernel: conv1 -> pool -> conv2 -> pool -> fc1 -> fc2 -> logsoftmax
# ----------------------------------------------------------------------------
def _mnist_fused_kernel(x_ref, m1_ref, b1c_ref, m2_ref, b2c_ref,
                        w1s_ref, b1f_ref, w2f_ref, b2f_ref, o_ref):
    tb = x_ref.shape[1]
    x = x_ref[...]                                        # (28, TB, 28) f32

    # ---- conv1 (1->32, 5x5 valid) as 5 banded-Toeplitz MXU matmuls --------
    # rows = (u, b); columns = (v%2)*384 + (v//2)*32 + co  (pool-friendly).
    acc1 = None
    for i in range(5):
        lhs = x[i:i + 24].reshape(24 * tb, 28).astype(jnp.bfloat16)
        t = jnp.dot(lhs, m1_ref[i], preferred_element_type=jnp.float32)
        acc1 = t if acc1 is None else acc1 + t            # (24*TB, 768) f32

    # ---- 2x2 max-pool, then bias + ReLU (bias hoisted out of the max) -----
    r = acc1.reshape(12, 2, tb, 768)                      # rows -> (p, du, b)
    pu = jnp.maximum(r[:, 0], r[:, 1])                    # pool over rows
    pv = jnp.maximum(pu[..., :384], pu[..., 384:])        # pool over cols
    a1 = jnp.maximum(pv + b1c_ref[...], 0.0)              # (12, TB, 384) f32
    # a1[p, b, q*32 + co] == pooled/ReLU'd conv1 activation.

    # ---- conv2 (32->64, 5x5 valid) on the VMEM-resident a1 ----------------
    # rows = (m, b); columns = (n%2)*256 + (n//2)*64 + d.
    acc2 = None
    for i in range(5):
        lhs = a1[i:i + 8].reshape(8 * tb, 384).astype(jnp.bfloat16)
        t = jnp.dot(lhs, m2_ref[i], preferred_element_type=jnp.float32)
        acc2 = t if acc2 is None else acc2 + t            # (8*TB, 512) f32

    r2 = acc2.reshape(4, 2, tb, 512)                      # rows -> (s, dm, b)
    qu = jnp.maximum(r2[:, 0], r2[:, 1])
    qv = jnp.maximum(qu[..., :256], qu[..., 256:])
    a2 = jnp.maximum(qv + b2c_ref[...], 0.0)              # (4, TB, 256) f32
    # a2[s, b, t*64 + d] == pooled/ReLU'd conv2 activation.

    # ---- fc1 + ReLU (decomposed over the pooled-row index s) --------------
    h = None
    for s in range(4):
        t = jnp.dot(a2[s].astype(jnp.bfloat16), w1s_ref[s],
                    preferred_element_type=jnp.float32)
        h = t if h is None else h + t
    h = jnp.maximum(h + b1f_ref[...], 0.0)                # (TB, 128) f32

    # ---- fc2 + log_softmax (padded logits carry a -1e30 bias) -------------
    y = jnp.dot(h.astype(jnp.bfloat16), w2f_ref[...],
                preferred_element_type=jnp.float32) + b2f_ref[...]
    m = jnp.max(y, axis=-1, keepdims=True)
    lse = jnp.log(jnp.sum(jnp.exp(y - m), axis=-1, keepdims=True)) + m
    o_ref[...] = y - lse


def _full_spec(a):
    zeros = (0,) * a.ndim
    return pl.BlockSpec(a.shape, lambda b: zeros)


def mnist_fused_forward(x_hbw, prep, tb):
    """x_hbw: (28, Bp, 28) f32 with Bp % tb == 0 -> (Bp, 128) f32 log-probs."""
    _, bp, _ = x_hbw.shape
    nsteps = bp // tb
    flops = nsteps * 2 * tb * (5 * 24 * 28 * 768 + 5 * 8 * 384 * 512
                               + 4 * 256 * 128 + 128 * 128)
    bytes_accessed = int(x_hbw.size) * 4 + bp * 128 * 4 + sum(
        int(v.size) * v.dtype.itemsize for v in prep.values())
    return pl.pallas_call(
        _mnist_fused_kernel,
        out_shape=jax.ShapeDtypeStruct((bp, 128), jnp.float32),
        grid_spec=pltpu.PrefetchScalarGridSpec(
            num_scalar_prefetch=0,
            grid=(nsteps,),
            in_specs=[
                pl.BlockSpec((28, tb, 28), lambda b: (0, b, 0)),
                _full_spec(prep["m1"]), _full_spec(prep["b1c"]),
                _full_spec(prep["m2"]), _full_spec(prep["b2c"]),
                _full_spec(prep["w1s"]), _full_spec(prep["b1f"]),
                _full_spec(prep["w2f"]), _full_spec(prep["b2f"]),
            ],
            out_specs=pl.BlockSpec((tb, 128), lambda b: (b, 0)),
        ),
        compiler_params=pltpu.CompilerParams(
            dimension_semantics=("parallel",),
            vmem_limit_bytes=VMEM_LIMIT),
        cost_estimate=pl.CostEstimate(flops=flops, transcendentals=bp * 128,
                                      bytes_accessed=int(bytes_accessed)),
    )(x_hbw, prep["m1"], prep["b1c"], prep["m2"], prep["b2c"],
      prep["w1s"], prep["b1f"], prep["w2f"], prep["b2f"])


# ----------------------------------------------------------------------------
# Parameters (PyTorch layout -> kernel-ready Toeplitz/matmul layout, done once)
# ----------------------------------------------------------------------------
def init_params(key):
    """PyTorch-layout MNISTNet parameters (nn.Conv2d / nn.Linear style init)."""
    ks = jax.random.split(key, 8)

    def u(k, shape, fan_in):
        bound = 1.0 / jnp.sqrt(fan_in)
        return jax.random.uniform(k, shape, jnp.float32, -bound, bound)

    return {
        "conv1_w": u(ks[0], (32, 1, 5, 5), 1 * 5 * 5),
        "conv1_b": u(ks[1], (32,), 1 * 5 * 5),
        "conv2_w": u(ks[2], (64, 32, 5, 5), 32 * 5 * 5),
        "conv2_b": u(ks[3], (64,), 32 * 5 * 5),
        "fc1_w": u(ks[4], (128, 64 * 4 * 4), 64 * 4 * 4),   # PyTorch (out, in)
        "fc1_b": u(ks[5], (128,), 64 * 4 * 4),
        "fc2_w": u(ks[6], (10, 128), 128),
        "fc2_b": u(ks[7], (10,), 128),
    }


def prepare_params(params):
    """One-time conversion to banded-Toeplitz / per-row matmul weights."""
    f32 = np.float32
    w1 = np.asarray(params["conv1_w"], f32)        # (co=32, 1, i, j)
    b1 = np.asarray(params["conv1_b"], f32)
    w2 = np.asarray(params["conv2_w"], f32)        # (d=64, co=32, i, j)
    b2 = np.asarray(params["conv2_b"], f32)

    # conv1 Toeplitz: M1[i][w, col] = w1[co, 0, i, w - v]  (0 <= w - v < 5)
    # with pool-friendly column order col = (v%2)*384 + (v//2)*32 + co.
    m1 = np.zeros((5, 28, 768), f32)
    for i in range(5):
        for v in range(24):
            c0 = (v % 2) * 384 + (v // 2) * 32
            for j in range(5):
                m1[i, v + j, c0:c0 + 32] = w1[:, 0, i, j]
    b1c = np.tile(b1, 12)[None, :]                 # (1, 384): lane = q*32 + co

    # conv2 Toeplitz: M2[i][q*32+co, col] = w2[d, co, i, q - n]
    # with col = (n%2)*256 + (n//2)*64 + d.
    m2 = np.zeros((5, 384, 512), f32)
    for i in range(5):
        for n in range(8):
            c0 = (n % 2) * 256 + (n // 2) * 64
            for j in range(5):
                q = n + j
                m2[i, q * 32:(q + 1) * 32, c0:c0 + 64] = w2[:, :, i, j].T
    b2c = np.tile(b2, 4)[None, :]                  # (1, 256): lane = t*64 + d

    # fc1: PyTorch flatten order is (d, s, t); our A2 layout is [s, b, t*64+d],
    # so split fc1 into 4 per-s matmuls with rows ordered (t, d).
    fw1 = np.asarray(params["fc1_w"], f32).reshape(128, 64, 4, 4)  # (o, d, s, t)
    w1s = np.transpose(fw1, (2, 3, 1, 0)).reshape(4, 256, 128)     # [s, t*64+d, o]
    b1f = np.asarray(params["fc1_b"], f32)[None, :]                # (1, 128)

    # fc2: pad 10 -> 128 output lanes; padded logits get a -1e30 bias so they
    # vanish inside the fused (f32) log_softmax while stores stay lane-dense.
    w2f = np.zeros((128, 128), f32)
    w2f[:, :10] = np.asarray(params["fc2_w"], f32).T
    b2f = np.full((1, 128), -1e30, f32)
    b2f[0, :10] = np.asarray(params["fc2_b"], f32)

    bf16 = jnp.bfloat16
    return {
        "m1": jnp.asarray(m1, bf16), "b1c": jnp.asarray(b1c, jnp.float32),
        "m2": jnp.asarray(m2, bf16), "b2c": jnp.asarray(b2c, jnp.float32),
        "w1s": jnp.asarray(w1s, bf16), "b1f": jnp.asarray(b1f, jnp.float32),
        "w2f": jnp.asarray(w2f, bf16), "b2f": jnp.asarray(b2f, jnp.float32),
    }


# ----------------------------------------------------------------------------
# MNISTNet forward
# ----------------------------------------------------------------------------
@jax.jit
def mnist_net_forward(x_nchw, prep):
    """x_nchw: (B, 1, 28, 28) f32 -> (B, 10) log-probabilities."""
    B = x_nchw.shape[0]
    tb = _pick_tb(B)
    bp = max(2 * tb, _round_up(B, tb))          # >= 2 grid steps (v7x megacore)
    x = x_nchw.reshape(B, 28, 28).astype(jnp.float32)
    if bp != B:
        x = jnp.pad(x, ((0, bp - B), (0, 0), (0, 0)))
    # dropout1 / dropout2 / dropout3: identity in eval mode.
    x_hbw = jnp.transpose(x, (1, 0, 2))         # (28, Bp, 28): [H, B, W]
    out = mnist_fused_forward(x_hbw, prep, tb)  # (Bp, 128) f32 log-probs
    return out[:B, :10]


if __name__ == "__main__":
    key = jax.random.PRNGKey(0)
    k_x, k_p = jax.random.split(key)
    x = jax.random.normal(k_x, (2, 1, 28, 28), jnp.float32)    # MNIST-shaped input
    params = init_params(k_p)
    prep = prepare_params(params)

    out = mnist_net_forward(x, prep)
    out = jax.block_until_ready(out)

    assert out.shape == (2, 10), out.shape
    # log_softmax sanity: each row's exp() sums to ~1
    row_sums = jnp.exp(out.astype(jnp.float32)).sum(axis=1)
    assert bool(jnp.allclose(row_sums, 1.0, atol=1e-4)), row_sums
    print("KERNEL_OK")
</pallas_src>

<mosaic_0001>
module attributes {stable_mosaic.version = 11 : i64} {
  func.func @_mnist_fused_kernel(%arg0: i32, %arg1: memref<28x8x28xf32, #tpu.memory_space<vmem>>, %arg2: memref<5x28x768xbf16, #tpu.memory_space<vmem>>, %arg3: memref<1x384xf32, #tpu.memory_space<vmem>>, %arg4: memref<5x384x512xbf16, #tpu.memory_space<vmem>>, %arg5: memref<1x256xf32, #tpu.memory_space<vmem>>, %arg6: memref<4x256x128xbf16, #tpu.memory_space<vmem>>, %arg7: memref<1x128xf32, #tpu.memory_space<vmem>>, %arg8: memref<128x128xbf16, #tpu.memory_space<vmem>>, %arg9: memref<1x128xf32, #tpu.memory_space<vmem>>, %arg10: memref<8x128xf32, #tpu.memory_space<vmem>>) attributes {dimension_semantics = [#tpu.dimension_semantics<parallel>], iteration_bounds = array<i64: 2>, scalar_prefetch = 0 : i64, scratch_operands = 0 : i64, tpu.core_type = #tpu.core_type<tc>, window_params = [{transform_indices = @transform_0, window_bounds = array<i64: 28, 8, 28>}, {pipeline_mode = #tpu.pipeline_mode<synchronous>, transform_indices = @transform_1, window_bounds = array<i64: 5, 28, 768>}, {pipeline_mode = #tpu.pipeline_mode<synchronous>, transform_indices = @transform_2, window_bounds = array<i64: 1, 384>}, {pipeline_mode = #tpu.pipeline_mode<synchronous>, transform_indices = @transform_3, window_bounds = array<i64: 5, 384, 512>}, {pipeline_mode = #tpu.pipeline_mode<synchronous>, transform_indices = @transform_4, window_bounds = array<i64: 1, 256>}, {pipeline_mode = #tpu.pipeline_mode<synchronous>, transform_indices = @transform_5, window_bounds = array<i64: 4, 256, 128>}, {pipeline_mode = #tpu.pipeline_mode<synchronous>, transform_indices = @transform_6, window_bounds = array<i64: 1, 128>}, {pipeline_mode = #tpu.pipeline_mode<synchronous>, transform_indices = @transform_7, window_bounds = array<i64: 128, 128>}, {pipeline_mode = #tpu.pipeline_mode<synchronous>, transform_indices = @transform_8, window_bounds = array<i64: 1, 128>}, {transform_indices = @transform_9, window_bounds = array<i64: 8, 128>}]} {
    %c0 = arith.constant 0 : index
    %c0_0 = arith.constant 0 : index
    %c0_1 = arith.constant 0 : index
    %0 = vector.load %arg1[%c0, %c0_0, %c0_1] : memref<28x8x28xf32, #tpu.memory_space<vmem>>, vector<28x8x28xf32>
    %1 = vector.extract_strided_slice %0 {offsets = [0, 0, 0], sizes = [24, 8, 28], strides = [1, 1, 1]} : vector<28x8x28xf32> to vector<24x8x28xf32>
    %2 = vector.shape_cast %1 : vector<24x8x28xf32> to vector<192x28xf32>
    %3 = arith.truncf %2 : vector<192x28xf32> to vector<192x28xbf16>
    %c0_2 = arith.constant 0 : index
    %c0_3 = arith.constant 0 : index
    %c0_4 = arith.constant 0 : index
    %4 = vector.load %arg2[%c0_2, %c0_3, %c0_4] : memref<5x28x768xbf16, #tpu.memory_space<vmem>>, vector<1x28x768xbf16>
    %5 = vector.shape_cast %4 : vector<1x28x768xbf16> to vector<28x768xbf16>
    %cst = arith.constant dense<0.000000e+00> : vector<192x768xf32>
    %6 = tpu.matmul %3, %5, %cst {dimension_numbers = #tpu.dot_dimension_numbers<[1], [0], [0], [1], [0, 0, 1, 1], [], []>} : vector<192x28xbf16>, vector<28x768xbf16>, vector<192x768xf32> -> vector<192x768xf32>
    %7 = vector.extract_strided_slice %0 {offsets = [1, 0, 0], sizes = [24, 8, 28], strides = [1, 1, 1]} : vector<28x8x28xf32> to vector<24x8x28xf32>
    %8 = vector.shape_cast %7 : vector<24x8x28xf32> to vector<192x28xf32>
    %9 = arith.truncf %8 : vector<192x28xf32> to vector<192x28xbf16>
    %c1 = arith.constant 1 : index
    %c0_5 = arith.constant 0 : index
    %c0_6 = arith.constant 0 : index
    %10 = vector.load %arg2[%c1, %c0_5, %c0_6] : memref<5x28x768xbf16, #tpu.memory_space<vmem>>, vector<1x28x768xbf16>
    %11 = vector.shape_cast %10 : vector<1x28x768xbf16> to vector<28x768xbf16>
    %cst_7 = arith.constant dense<0.000000e+00> : vector<192x768xf32>
    %12 = tpu.matmul %9, %11, %cst_7 {dimension_numbers = #tpu.dot_dimension_numbers<[1], [0], [0], [1], [0, 0, 1, 1], [], []>} : vector<192x28xbf16>, vector<28x768xbf16>, vector<192x768xf32> -> vector<192x768xf32>
    %13 = arith.addf %6, %12 : vector<192x768xf32>
    %14 = vector.extract_strided_slice %0 {offsets = [2, 0, 0], sizes = [24, 8, 28], strides = [1, 1, 1]} : vector<28x8x28xf32> to vector<24x8x28xf32>
    %15 = vector.shape_cast %14 : vector<24x8x28xf32> to vector<192x28xf32>
    %16 = arith.truncf %15 : vector<192x28xf32> to vector<192x28xbf16>
    %c2 = arith.constant 2 : index
    %c0_8 = arith.constant 0 : index
    %c0_9 = arith.constant 0 : index
    %17 = vector.load %arg2[%c2, %c0_8, %c0_9] : memref<5x28x768xbf16, #tpu.memory_space<vmem>>, vector<1x28x768xbf16>
    %18 = vector.shape_cast %17 : vector<1x28x768xbf16> to vector<28x768xbf16>
    %cst_10 = arith.constant dense<0.000000e+00> : vector<192x768xf32>
    %19 = tpu.matmul %16, %18, %cst_10 {dimension_numbers = #tpu.dot_dimension_numbers<[1], [0], [0], [1], [0, 0, 1, 1], [], []>} : vector<192x28xbf16>, vector<28x768xbf16>, vector<192x768xf32> -> vector<192x768xf32>
    %20 = arith.addf %13, %19 : vector<192x768xf32>
    %21 = vector.extract_strided_slice %0 {offsets = [3, 0, 0], sizes = [24, 8, 28], strides = [1, 1, 1]} : vector<28x8x28xf32> to vector<24x8x28xf32>
    %22 = vector.shape_cast %21 : vector<24x8x28xf32> to vector<192x28xf32>
    %23 = arith.truncf %22 : vector<192x28xf32> to vector<192x28xbf16>
    %c3 = arith.constant 3 : index
    %c0_11 = arith.constant 0 : index
    %c0_12 = arith.constant 0 : index
    %24 = vector.load %arg2[%c3, %c0_11, %c0_12] : memref<5x28x768xbf16, #tpu.memory_space<vmem>>, vector<1x28x768xbf16>
    %25 = vector.shape_cast %24 : vector<1x28x768xbf16> to vector<28x768xbf16>
    %cst_13 = arith.constant dense<0.000000e+00> : vector<192x768xf32>
    %26 = tpu.matmul %23, %25, %cst_13 {dimension_numbers = #tpu.dot_dimension_numbers<[1], [0], [0], [1], [0, 0, 1, 1], [], []>} : vector<192x28xbf16>, vector<28x768xbf16>, vector<192x768xf32> -> vector<192x768xf32>
    %27 = arith.addf %20, %26 : vector<192x768xf32>
    %28 = vector.extract_strided_slice %0 {offsets = [4, 0, 0], sizes = [24, 8, 28], strides = [1, 1, 1]} : vector<28x8x28xf32> to vector<24x8x28xf32>
    %29 = vector.shape_cast %28 : vector<24x8x28xf32> to vector<192x28xf32>
    %30 = arith.truncf %29 : vector<192x28xf32> to vector<192x28xbf16>
    %c4 = arith.constant 4 : index
    %c0_14 = arith.constant 0 : index
    %c0_15 = arith.constant 0 : index
    %31 = vector.load %arg2[%c4, %c0_14, %c0_15] : memref<5x28x768xbf16, #tpu.memory_space<vmem>>, vector<1x28x768xbf16>
    %32 = vector.shape_cast %31 : vector<1x28x768xbf16> to vector<28x768xbf16>
    %cst_16 = arith.constant dense<0.000000e+00> : vector<192x768xf32>
    %33 = tpu.matmul %30, %32, %cst_16 {dimension_numbers = #tpu.dot_dimension_numbers<[1], [0], [0], [1], [0, 0, 1, 1], [], []>} : vector<192x28xbf16>, vector<28x768xbf16>, vector<192x768xf32> -> vector<192x768xf32>
    %34 = arith.addf %27, %33 : vector<192x768xf32>
    %35 = vector.shape_cast %34 : vector<192x768xf32> to vector<12x2x8x768xf32>
    %36 = vector.extract_strided_slice %35 {offsets = [0, 0, 0, 0], sizes = [12, 1, 8, 768], strides = [1, 1, 1, 1]} : vector<12x2x8x768xf32> to vector<12x1x8x768xf32>
    %37 = vector.shape_cast %36 : vector<12x1x8x768xf32> to vector<12x8x768xf32>
    %38 = vector.extract_strided_slice %35 {offsets = [0, 1, 0, 0], sizes = [12, 1, 8, 768], strides = [1, 1, 1, 1]} : vector<12x2x8x768xf32> to vector<12x1x8x768xf32>
    %39 = vector.shape_cast %38 : vector<12x1x8x768xf32> to vector<12x8x768xf32>
    %40 = arith.maximumf %37, %39 : vector<12x8x768xf32>
    %41 = vector.extract_strided_slice %40 {offsets = [0, 0, 0], sizes = [12, 8, 384], strides = [1, 1, 1]} : vector<12x8x768xf32> to vector<12x8x384xf32>
    %42 = vector.extract_strided_slice %40 {offsets = [0, 0, 384], sizes = [12, 8, 384], strides = [1, 1, 1]} : vector<12x8x768xf32> to vector<12x8x384xf32>
    %43 = arith.maximumf %41, %42 : vector<12x8x384xf32>
    %c0_17 = arith.constant 0 : index
    %c0_18 = arith.constant 0 : index
    %44 = vector.load %arg3[%c0_17, %c0_18] : memref<1x384xf32, #tpu.memory_space<vmem>>, vector<1x384xf32>
    %45 = vector.shape_cast %44 : vector<1x384xf32> to vector<1x1x384xf32>
    %46 = vector.broadcast %45 : vector<1x1x384xf32> to vector<12x8x384xf32>
    %47 = arith.addf %43, %46 : vector<12x8x384xf32>
    %cst_19 = arith.constant 0.000000e+00 : f32
    %48 = vector.broadcast %cst_19 : f32 to vector<12x8x384xf32>
    %49 = arith.maximumf %47, %48 : vector<12x8x384xf32>
    %50 = vector.extract_strided_slice %49 {offsets = [0, 0, 0], sizes = [8, 8, 384], strides = [1, 1, 1]} : vector<12x8x384xf32> to vector<8x8x384xf32>
    %51 = vector.shape_cast %50 : vector<8x8x384xf32> to vector<64x384xf32>
    %52 = arith.truncf %51 : vector<64x384xf32> to vector<64x384xbf16>
    %c0_20 = arith.constant 0 : index
    %c0_21 = arith.constant 0 : index
    %c0_22 = arith.constant 0 : index
    %53 = vector.load %arg4[%c0_20, %c0_21, %c0_22] : memref<5x384x512xbf16, #tpu.memory_space<vmem>>, vector<1x384x512xbf16>
    %54 = vector.shape_cast %53 : vector<1x384x512xbf16> to vector<384x512xbf16>
    %cst_23 = arith.constant dense<0.000000e+00> : vector<64x512xf32>
    %55 = tpu.matmul %52, %54, %cst_23 {dimension_numbers = #tpu.dot_dimension_numbers<[1], [0], [0], [1], [0, 0, 1, 1], [], []>} : vector<64x384xbf16>, vector<384x512xbf16>, vector<64x512xf32> -> vector<64x512xf32>
    %56 = vector.extract_strided_slice %49 {offsets = [1, 0, 0], sizes = [8, 8, 384], strides = [1, 1, 1]} : vector<12x8x384xf32> to vector<8x8x384xf32>
    %57 = vector.shape_cast %56 : vector<8x8x384xf32> to vector<64x384xf32>
    %58 = arith.truncf %57 : vector<64x384xf32> to vector<64x384xbf16>
    %c1_24 = arith.constant 1 : index
    %c0_25 = arith.constant 0 : index
    %c0_26 = arith.constant 0 : index
    %59 = vector.load %arg4[%c1_24, %c0_25, %c0_26] : memref<5x384x512xbf16, #tpu.memory_space<vmem>>, vector<1x384x512xbf16>
    %60 = vector.shape_cast %59 : vector<1x384x512xbf16> to vector<384x512xbf16>
    %cst_27 = arith.constant dense<0.000000e+00> : vector<64x512xf32>
    %61 = tpu.matmul %58, %60, %cst_27 {dimension_numbers = #tpu.dot_dimension_numbers<[1], [0], [0], [1], [0, 0, 1, 1], [], []>} : vector<64x384xbf16>, vector<384x512xbf16>, vector<64x512xf32> -> vector<64x512xf32>
    %62 = arith.addf %55, %61 : vector<64x512xf32>
    %63 = vector.extract_strided_slice %49 {offsets = [2, 0, 0], sizes = [8, 8, 384], strides = [1, 1, 1]} : vector<12x8x384xf32> to vector<8x8x384xf32>
    %64 = vector.shape_cast %63 : vector<8x8x384xf32> to vector<64x384xf32>
    %65 = arith.truncf %64 : vector<64x384xf32> to vector<64x384xbf16>
    %c2_28 = arith.constant 2 : index
    %c0_29 = arith.constant 0 : index
    %c0_30 = arith.constant 0 : index
    %66 = vector.load %arg4[%c2_28, %c0_29, %c0_30] : memref<5x384x512xbf16, #tpu.memory_space<vmem>>, vector<1x384x512xbf16>
    %67 = vector.shape_cast %66 : vector<1x384x512xbf16> to vector<384x512xbf16>
    %cst_31 = arith.constant dense<0.000000e+00> : vector<64x512xf32>
    %68 = tpu.matmul %65, %67, %cst_31 {dimension_numbers = #tpu.dot_dimension_numbers<[1], [0], [0], [1], [0, 0, 1, 1], [], []>} : vector<64x384xbf16>, vector<384x512xbf16>, vector<64x512xf32> -> vector<64x512xf32>
    %69 = arith.addf %62, %68 : vector<64x512xf32>
    %70 = vector.extract_strided_slice %49 {offsets = [3, 0, 0], sizes = [8, 8, 384], strides = [1, 1, 1]} : vector<12x8x384xf32> to vector<8x8x384xf32>
    %71 = vector.shape_cast %70 : vector<8x8x384xf32> to vector<64x384xf32>
    %72 = arith.truncf %71 : vector<64x384xf32> to vector<64x384xbf16>
    %c3_32 = arith.constant 3 : index
    %c0_33 = arith.constant 0 : index
    %c0_34 = arith.constant 0 : index
    %73 = vector.load %arg4[%c3_32, %c0_33, %c0_34] : memref<5x384x512xbf16, #tpu.memory_space<vmem>>, vector<1x384x512xbf16>
    %74 = vector.shape_cast %73 : vector<1x384x512xbf16> to vector<384x512xbf16>
    %cst_35 = arith.constant dense<0.000000e+00> : vector<64x512xf32>
    %75 = tpu.matmul %72, %74, %cst_35 {dimension_numbers = #tpu.dot_dimension_numbers<[1], [0], [0], [1], [0, 0, 1, 1], [], []>} : vector<64x384xbf16>, vector<384x512xbf16>, vector<64x512xf32> -> vector<64x512xf32>
    %76 = arith.addf %69, %75 : vector<64x512xf32>
    %77 = vector.extract_strided_slice %49 {offsets = [4, 0, 0], sizes = [8, 8, 384], strides = [1, 1, 1]} : vector<12x8x384xf32> to vector<8x8x384xf32>
    %78 = vector.shape_cast %77 : vector<8x8x384xf32> to vector<64x384xf32>
    %79 = arith.truncf %78 : vector<64x384xf32> to vector<64x384xbf16>
    %c4_36 = arith.constant 4 : index
    %c0_37 = arith.constant 0 : index
    %c0_38 = arith.constant 0 : index
    %80 = vector.load %arg4[%c4_36, %c0_37, %c0_38] : memref<5x384x512xbf16, #tpu.memory_space<vmem>>, vector<1x384x512xbf16>
    %81 = vector.shape_cast %80 : vector<1x384x512xbf16> to vector<384x512xbf16>
    %cst_39 = arith.constant dense<0.000000e+00> : vector<64x512xf32>
    %82 = tpu.matmul %79, %81, %cst_39 {dimension_numbers = #tpu.dot_dimension_numbers<[1], [0], [0], [1], [0, 0, 1, 1], [], []>} : vector<64x384xbf16>, vector<384x512xbf16>, vector<64x512xf32> -> vector<64x512xf32>
    %83 = arith.addf %76, %82 : vector<64x512xf32>
    %84 = vector.shape_cast %83 : vector<64x512xf32> to vector<4x2x8x512xf32>
    %85 = vector.extract_strided_slice %84 {offsets = [0, 0, 0, 0], sizes = [4, 1, 8, 512], strides = [1, 1, 1, 1]} : vector<4x2x8x512xf32> to vector<4x1x8x512xf32>
    %86 = vector.shape_cast %85 : vector<4x1x8x512xf32> to vector<4x8x512xf32>
    %87 = vector.extract_strided_slice %84 {offsets = [0, 1, 0, 0], sizes = [4, 1, 8, 512], strides = [1, 1, 1, 1]} : vector<4x2x8x512xf32> to vector<4x1x8x512xf32>
    %88 = vector.shape_cast %87 : vector<4x1x8x512xf32> to vector<4x8x512xf32>
    %89 = arith.maximumf %86, %88 : vector<4x8x512xf32>
    %90 = vector.extract_strided_slice %89 {offsets = [0, 0, 0], sizes = [4, 8, 256], strides = [1, 1, 1]} : vector<4x8x512xf32> to vector<4x8x256xf32>
    %91 = vector.extract_strided_slice %89 {offsets = [0, 0, 256], sizes = [4, 8, 256], strides = [1, 1, 1]} : vector<4x8x512xf32> to vector<4x8x256xf32>
    %92 = arith.maximumf %90, %91 : vector<4x8x256xf32>
    %c0_40 = arith.constant 0 : index
    %c0_41 = arith.constant 0 : index
    %93 = vector.load %arg5[%c0_40, %c0_41] : memref<1x256xf32, #tpu.memory_space<vmem>>, vector<1x256xf32>
    %94 = vector.shape_cast %93 : vector<1x256xf32> to vector<1x1x256xf32>
    %95 = vector.broadcast %94 : vector<1x1x256xf32> to vector<4x8x256xf32>
    %96 = arith.addf %92, %95 : vector<4x8x256xf32>
    %cst_42 = arith.constant 0.000000e+00 : f32
    %97 = vector.broadcast %cst_42 : f32 to vector<4x8x256xf32>
    %98 = arith.maximumf %96, %97 : vector<4x8x256xf32>
    %99 = vector.extract_strided_slice %98 {offsets = [0, 0, 0], sizes = [1, 8, 256], strides = [1, 1, 1]} : vector<4x8x256xf32> to vector<1x8x256xf32>
    %100 = vector.shape_cast %99 : vector<1x8x256xf32> to vector<8x256xf32>
    %101 = arith.truncf %100 : vector<8x256xf32> to vector<8x256xbf16>
    %c0_43 = arith.constant 0 : index
    %c0_44 = arith.constant 0 : index
    %c0_45 = arith.constant 0 : index
    %102 = vector.load %arg6[%c0_43, %c0_44, %c0_45] : memref<4x256x128xbf16, #tpu.memory_space<vmem>>, vector<1x256x128xbf16>
    %103 = vector.shape_cast %102 : vector<1x256x128xbf16> to vector<256x128xbf16>
    %cst_46 = arith.constant dense<0.000000e+00> : vector<8x128xf32>
    %104 = tpu.matmul %101, %103, %cst_46 {dimension_numbers = #tpu.dot_dimension_numbers<[1], [0], [0], [1], [0, 0, 1, 1], [], []>} : vector<8x256xbf16>, vector<256x128xbf16>, vector<8x128xf32> -> vector<8x128xf32>
    %105 = vector.extract_strided_slice %98 {offsets = [1, 0, 0], sizes = [1, 8, 256], strides = [1, 1, 1]} : vector<4x8x256xf32> to vector<1x8x256xf32>
    %106 = vector.shape_cast %105 : vector<1x8x256xf32> to vector<8x256xf32>
    %107 = arith.truncf %106 : vector<8x256xf32> to vector<8x256xbf16>
    %c1_47 = arith.constant 1 : index
    %c0_48 = arith.constant 0 : index
    %c0_49 = arith.constant 0 : index
    %108 = vector.load %arg6[%c1_47, %c0_48, %c0_49] : memref<4x256x128xbf16, #tpu.memory_space<vmem>>, vector<1x256x128xbf16>
    %109 = vector.shape_cast %108 : vector<1x256x128xbf16> to vector<256x128xbf16>
    %cst_50 = arith.constant dense<0.000000e+00> : vector<8x128xf32>
    %110 = tpu.matmul %107, %109, %cst_50 {dimension_numbers = #tpu.dot_dimension_numbers<[1], [0], [0], [1], [0, 0, 1, 1], [], []>} : vector<8x256xbf16>, vector<256x128xbf16>, vector<8x128xf32> -> vector<8x128xf32>
    %111 = arith.addf %104, %110 : vector<8x128xf32>
    %112 = vector.extract_strided_slice %98 {offsets = [2, 0, 0], sizes = [1, 8, 256], strides = [1, 1, 1]} : vector<4x8x256xf32> to vector<1x8x256xf32>
    %113 = vector.shape_cast %112 : vector<1x8x256xf32> to vector<8x256xf32>
    %114 = arith.truncf %113 : vector<8x256xf32> to vector<8x256xbf16>
    %c2_51 = arith.constant 2 : index
    %c0_52 = arith.constant 0 : index
    %c0_53 = arith.constant 0 : index
    %115 = vector.load %arg6[%c2_51, %c0_52, %c0_53] : memref<4x256x128xbf16, #tpu.memory_space<vmem>>, vector<1x256x128xbf16>
    %116 = vector.shape_cast %115 : vector<1x256x128xbf16> to vector<256x128xbf16>
    %cst_54 = arith.constant dense<0.000000e+00> : vector<8x128xf32>
    %117 = tpu.matmul %114, %116, %cst_54 {dimension_numbers = #tpu.dot_dimension_numbers<[1], [0], [0], [1], [0, 0, 1, 1], [], []>} : vector<8x256xbf16>, vector<256x128xbf16>, vector<8x128xf32> -> vector<8x128xf32>
    %118 = arith.addf %111, %117 : vector<8x128xf32>
    %119 = vector.extract_strided_slice %98 {offsets = [3, 0, 0], sizes = [1, 8, 256], strides = [1, 1, 1]} : vector<4x8x256xf32> to vector<1x8x256xf32>
    %120 = vector.shape_cast %119 : vector<1x8x256xf32> to vector<8x256xf32>
    %121 = arith.truncf %120 : vector<8x256xf32> to vector<8x256xbf16>
    %c3_55 = arith.constant 3 : index
    %c0_56 = arith.constant 0 : index
    %c0_57 = arith.constant 0 : index
    %122 = vector.load %arg6[%c3_55, %c0_56, %c0_57] : memref<4x256x128xbf16, #tpu.memory_space<vmem>>, vector<1x256x128xbf16>
    %123 = vector.shape_cast %122 : vector<1x256x128xbf16> to vector<256x128xbf16>
    %cst_58 = arith.constant dense<0.000000e+00> : vector<8x128xf32>
    %124 = tpu.matmul %121, %123, %cst_58 {dimension_numbers = #tpu.dot_dimension_numbers<[1], [0], [0], [1], [0, 0, 1, 1], [], []>} : vector<8x256xbf16>, vector<256x128xbf16>, vector<8x128xf32> -> vector<8x128xf32>
    %125 = arith.addf %118, %124 : vector<8x128xf32>
    %c0_59 = arith.constant 0 : index
    %c0_60 = arith.constant 0 : index
    %126 = vector.load %arg7[%c0_59, %c0_60] : memref<1x128xf32, #tpu.memory_space<vmem>>, vector<1x128xf32>
    %127 = vector.broadcast %126 : vector<1x128xf32> to vector<8x128xf32>
    %128 = arith.addf %125, %127 : vector<8x128xf32>
    %cst_61 = arith.constant 0.000000e+00 : f32
    %129 = vector.broadcast %cst_61 : f32 to vector<8x128xf32>
    %130 = arith.maximumf %128, %129 : vector<8x128xf32>
    %131 = arith.truncf %130 : vector<8x128xf32> to vector<8x128xbf16>
    %c0_62 = arith.constant 0 : index
    %c0_63 = arith.constant 0 : index
    %132 = vector.load %arg8[%c0_62, %c0_63] : memref<128x128xbf16, #tpu.memory_space<vmem>>, vector<128x128xbf16>
    %cst_64 = arith.constant dense<0.000000e+00> : vector<8x128xf32>
    %133 = tpu.matmul %131, %132, %cst_64 {dimension_numbers = #tpu.dot_dimension_numbers<[1], [0], [0], [1], [0, 0, 1, 1], [], []>} : vector<8x128xbf16>, vector<128x128xbf16>, vector<8x128xf32> -> vector<8x128xf32>
    %c0_65 = arith.constant 0 : index
    %c0_66 = arith.constant 0 : index
    %134 = vector.load %arg9[%c0_65, %c0_66] : memref<1x128xf32, #tpu.memory_space<vmem>>, vector<1x128xf32>
    %135 = vector.broadcast %134 : vector<1x128xf32> to vector<8x128xf32>
    %136 = arith.addf %133, %135 : vector<8x128xf32>
    %cst_67 = arith.constant dense<0xFF800000> : vector<8xf32>
    %137 = vector.multi_reduction <maximumf>, %136, %cst_67 [1] : vector<8x128xf32> to vector<8xf32>
    %138 = vector.shape_cast %137 : vector<8xf32> to vector<8x1xf32>
    %139 = vector.broadcast %138 : vector<8x1xf32> to vector<8x128xf32>
    %140 = arith.subf %136, %139 : vector<8x128xf32>
    %141 = math.exp %140 : vector<8x128xf32>
    %cst_68 = arith.constant dense<0.000000e+00> : vector<8xf32>
    %142 = vector.multi_reduction <add>, %141, %cst_68 [1] : vector<8x128xf32> to vector<8xf32>
    %143 = vector.shape_cast %142 : vector<8xf32> to vector<8x1xf32>
    %144 = math.log %143 : vector<8x1xf32>
    %145 = arith.addf %144, %138 : vector<8x1xf32>
    %146 = vector.broadcast %145 : vector<8x1xf32> to vector<8x128xf32>
    %147 = arith.subf %136, %146 : vector<8x128xf32>
    %c0_69 = arith.constant 0 : index
    %c0_70 = arith.constant 0 : index
    %148 = vector.load %arg10[%c0_69, %c0_70] : memref<8x128xf32, #tpu.memory_space<vmem>>, vector<8x128xf32>
    tpu.vector_store %arg10[%c0_69, %c0_70], %147 {strides = array<i32>} : memref<8x128xf32, #tpu.memory_space<vmem>>, vector<8x128xf32>,
    return
  }
  func.func @transform_0(%arg0: i32) -> (i32, i32, i32) {
    %c0_i32 = arith.constant 0 : i32
    %c0_i32_0 = arith.constant 0 : i32
    %c0_i32_1 = arith.constant 0 : i32
    return %c0_i32, %arg0, %c0_i32_0 : i32, i32, i32
  }
  func.func @transform_1(%arg0: i32) -> (i32, i32, i32) {
    %c0_i32 = arith.constant 0 : i32
    %c0_i32_0 = arith.constant 0 : i32
    %c0_i32_1 = arith.constant 0 : i32
    %c0_i32_2 = arith.constant 0 : i32
    return %c0_i32, %c0_i32_0, %c0_i32_1 : i32, i32, i32
  }
  func.func @transform_2(%arg0: i32) -> (i32, i32) {
    %c0_i32 = arith.constant 0 : i32
    %c0_i32_0 = arith.constant 0 : i32
    %c0_i32_1 = arith.constant 0 : i32
    return %c0_i32, %c0_i32_0 : i32, i32
  }
  func.func @transform_3(%arg0: i32) -> (i32, i32, i32) {
    %c0_i32 = arith.constant 0 : i32
    %c0_i32_0 = arith.constant 0 : i32
    %c0_i32_1 = arith.constant 0 : i32
    %c0_i32_2 = arith.constant 0 : i32
    return %c0_i32, %c0_i32_0, %c0_i32_1 : i32, i32, i32
  }
  func.func @transform_4(%arg0: i32) -> (i32, i32) {
    %c0_i32 = arith.constant 0 : i32
    %c0_i32_0 = arith.constant 0 : i32
    %c0_i32_1 = arith.constant 0 : i32
    return %c0_i32, %c0_i32_0 : i32, i32
  }
  func.func @transform_5(%arg0: i32) -> (i32, i32, i32) {
    %c0_i32 = arith.constant 0 : i32
    %c0_i32_0 = arith.constant 0 : i32
    %c0_i32_1 = arith.constant 0 : i32
    %c0_i32_2 = arith.constant 0 : i32
    return %c0_i32, %c0_i32_0, %c0_i32_1 : i32, i32, i32
  }
  func.func @transform_6(%arg0: i32) -> (i32, i32) {
    %c0_i32 = arith.constant 0 : i32
    %c0_i32_0 = arith.constant 0 : i32
    %c0_i32_1 = arith.constant 0 : i32
    return %c0_i32, %c0_i32_0 : i32, i32
  }
  func.func @transform_7(%arg0: i32) -> (i32, i32) {
    %c0_i32 = arith.constant 0 : i32
    %c0_i32_0 = arith.constant 0 : i32
    %c0_i32_1 = arith.constant 0 : i32
    return %c0_i32, %c0_i32_0 : i32, i32
  }
  func.func @transform_8(%arg0: i32) -> (i32, i32) {
    %c0_i32 = arith.constant 0 : i32
    %c0_i32_0 = arith.constant 0 : i32
    %c0_i32_1 = arith.constant 0 : i32
    return %c0_i32, %c0_i32_0 : i32, i32
  }
  func.func @transform_9(%arg0: i32) -> (i32, i32) {
    %c0_i32 = arith.constant 0 : i32
    %c0_i32_0 = arith.constant 0 : i32
    return %arg0, %c0_i32 : i32, i32
  }
}

</mosaic_0001>

<llo_original>
// kernel: mnist_net_forward.1
$region0: #{mnist_net_forward.1}
  #allocation0 [shape = 'u32[]', space=smem, size = 0x4, offset = 0x4, fixed_abs, tag = 'smem constant byte address 0x4 - core index']
  #allocation1 [shape = 'u32[144,128]{1,0:T(1,128)}', space=vmem, size = 0x12000, scoped, tag = 'internal scratch']
  %s0 = inlined_call_operand.vmem [shape: f32[28,16,28], index: 0, kind: input, shape index: {}]
  %s1 = inlined_call_operand.hbm [shape: bf16[5,28,768], index: 1, kind: input, shape index: {}]
  %s2 = inlined_call_operand.hbm [shape: f32[1,384], index: 2, kind: input, shape index: {}]
  %s3 = inlined_call_operand.hbm [shape: bf16[5,384,512], index: 3, kind: input, shape index: {}]
  %s4 = inlined_call_operand.hbm [shape: f32[1,256], index: 4, kind: input, shape index: {}]
  %s5 = inlined_call_operand.hbm [shape: bf16[4,256,128], index: 5, kind: input, shape index: {}]
  %s6 = inlined_call_operand.hbm [shape: f32[1,128], index: 6, kind: input, shape index: {}]
  %s7 = inlined_call_operand.hbm [shape: bf16[128,128], index: 7, kind: input, shape index: {}]
  %s8 = inlined_call_operand.hbm [shape: f32[1,128], index: 8, kind: input, shape index: {}]
  %s9 = inlined_call_operand.vmem [shape: f32[16,128], index: 9, kind: output, shape index: {}]
  %s10 = sld [smem:[#allocation0]]
  $region139: #{mnist_net_forward.1} parent=0
    _
  %s12 = ssub.s32 1, %s10
  %s13 = scalar_select 0, %s12, %s10
  $region1: #{mnist_net_forward.1} parent=0
    #allocation2 [shape = 'u8[229376]{0}', space=vmem, size = 0x38000, scoped, tag = 'input window, operand 0']
    #allocation3 [shape = 'u8[245760]{0}', space=vmem, size = 0x3c000, scoped, tag = 'input window, operand 1, single buffered']
    #allocation4 [shape = 's32[2]{0}', space=sflag, size = 0x8, scoped, tag = 'scoped memory for mnist_net_forward.1']
    #allocation5 [shape = 'u8[1536]{0}', space=vmem, size = 0x800, scoped, tag = 'input window, operand 2, single buffered']
    #allocation6 [shape = 's32[1]{0}', space=sflag, size = 0x4, scoped, tag = 'scoped memory for mnist_net_forward.1']
    #allocation7 [shape = 'u8[1966080]{0}', space=vmem, size = 0x1e0000, scoped, tag = 'input window, operand 3, single buffered']
    #allocation8 [shape = 'u8[1024]{0}', space=vmem, size = 0x400, scoped, tag = 'input window, operand 4, single buffered']
    #allocation9 [shape = 's32[1]{0}', space=sflag, size = 0x4, scoped, tag = 'scoped memory for mnist_net_forward.1']
    #allocation10 [shape = 'u8[262144]{0}', space=vmem, size = 0x40000, scoped, tag = 'input window, operand 5, single buffered']
    #allocation11 [shape = 'u8[512]{0}', space=vmem, size = 0x400, scoped, tag = 'input window, operand 6, single buffered']
    #allocation12 [shape = 's32[1]{0}', space=sflag, size = 0x4, scoped, tag = 'scoped memory for mnist_net_forward.1']
    #allocation13 [shape = 'u8[32768]{0}', space=vmem, size = 0x8000, scoped, tag = 'input window, operand 7, single buffered']
    #allocation14 [shape = 'u8[512]{0}', space=vmem, size = 0x400, scoped, tag = 'input window, operand 8, single buffered']
    #allocation15 [shape = 's32[1]{0}', space=sflag, size = 0x4, scoped, tag = 'scoped memory for mnist_net_forward.1']
    %14 = vsyncpa [#allocation4], 0
    %15 = vsyncpa [#allocation6], 0
    %16 = vsyncpa [#allocation9], 0
    %17 = vsyncpa [#allocation12], 0
    %18 = vsyncpa [#allocation15], 0
    loop: start=0, step=1, limit=4
    $region2: #{mnist_net_forward.1} parent=1 // loop_pre_header
      _
    $region3: #{mnist_net_forward.1} parent=1 // loop_header
      %s20 = sphi 0, %s24
      %p21 = scmp.ge.s32.totalorder %s20, 4
      %s30 = sphi 0, %s32
      %s33 = sphi 0, %s30
      %s34 = sphi 0, %s33
      %s50 = sphi 0, %s34
      %s54 = sphi 0, %s54
      %s56 = sphi 0, %s54
      %s57 = sphi 0, %s56
      %s71 = sphi 0, %s57
      %s75 = sphi 0, %s75
      %s77 = sphi 0, %s75
      %s78 = sphi 0, %s77
      %s92 = sphi 0, %s78
      %s96 = sphi 0, %s96
      %s98 = sphi 0, %s96
      %s99 = sphi 0, %s98
      %s113 = sphi 0, %s99
      %s117 = sphi 0, %s117
      %s119 = sphi 0, %s117
      %s120 = sphi 0, %s119
      %s134 = sphi 0, %s120
      %s138 = sphi 0, %s138
      %s140 = sphi 0, %s138
      %s141 = sphi 0, %s140
      %s155 = sphi 0, %s141
      %s159 = sphi 0, %s159
      %s161 = sphi 0, %s159
      %s162 = sphi 0, %s161
      %s176 = sphi 0, %s162
      %s180 = sphi 0, %s180
      %s182 = sphi 0, %s180
      %s183 = sphi 0, %s182
      %s197 = sphi 0, %s183
      %s201 = sphi 0, %s201
      %s203 = sphi 0, %s201
      %s204 = sphi 0, %s203
      %s218 = sphi 0, %s204
      %s224 = sphi 0, %s226
      %s227 = sphi 0, %s224
      %s228 = sphi 0, %s227
      %s244 = sphi 0, %s228
    $region4: #{mnist_net_forward.1} parent=1 // loop_header_branch
      %23 = sbr.rel (%p21) target = $region8
    $region5: #{mnist_net_forward.1} parent=1 // loop_body
      %s25 = ssub.s32 %s20, 1
      %s26 = ssub.s32 %s20, 2
      %s27 = sadd.s32 %s20, 1
      %s28 = ssub.s32 %s20, %s27
      %p29 = scmp.eq.s32.totalorder %s28, 0
      %s31 = sadd.s32 %s30, 1
      %s32 = scalar_select %p29, %s30, %s31
      %p35 = pneg %p29
      %p36 = scmp.eq.s32.totalorder %s20, 1
      %p37 = por %p35, %p36
      %p38 = scmp.ne.s32.totalorder %s30, %s33
      %p39 = scmp.eq.s32.totalorder %s20, 0
      %p40 = por %p38, %p39
      %p41 = scmp.ne.s32.totalorder %s30, %s33
      %p42 = scmp.eq.s32.totalorder %s25, 1
      %p43 = por %p41, %p42
      %p44 = scmp.ne.s32.totalorder %s33, %s34
      %p45 = scmp.eq.s32.totalorder %s25, 0
      %p46 = por %p44, %p45
      %p47 = scmp.ne.s32.totalorder %s33, %s34
      %p48 = scmp.eq.s32.totalorder %s26, 1
      %p49 = por %p47, %p48
      %p51 = scmp.ne.s32.totalorder %s34, %s50
      %p52 = scmp.eq.s32.totalorder %s26, 0
      %p53 = por %p51, %p52
      %s55 = sadd.s32 %s54, 1
      %p58 = scmp.eq.s32.totalorder %s20, 1
      %p59 = scmp.ne.s32.totalorder %s54, %s56
      %p60 = scmp.eq.s32.totalorder %s20, 0
      %p61 = por %p59, %p60
      %p62 = scmp.ne.s32.totalorder %s54, %s56
      %p63 = scmp.eq.s32.totalorder %s25, 1
      %p64 = por %p62, %p63
      %p65 = scmp.ne.s32.totalorder %s56, %s57
      %p66 = scmp.eq.s32.totalorder %s25, 0
      %p67 = por %p65, %p66
      %p68 = scmp.ne.s32.totalorder %s56, %s57
      %p69 = scmp.eq.s32.totalorder %s26, 1
      %p70 = por %p68, %p69
      %p72 = scmp.ne.s32.totalorder %s57, %s71
      %p73 = scmp.eq.s32.totalorder %s26, 0
      %p74 = por %p72, %p73
      %s76 = sadd.s32 %s75, 1
      %p79 = scmp.eq.s32.totalorder %s20, 1
      %p80 = scmp.ne.s32.totalorder %s75, %s77
      %p81 = scmp.eq.s32.totalorder %s20, 0
      %p82 = por %p80, %p81
      %p83 = scmp.ne.s32.totalorder %s75, %s77
      %p84 = scmp.eq.s32.totalorder %s25, 1
      %p85 = por %p83, %p84
      %p86 = scmp.ne.s32.totalorder %s77, %s78
      %p87 = scmp.eq.s32.totalorder %s25, 0
      %p88 = por %p86, %p87
      %p89 = scmp.ne.s32.totalorder %s77, %s78
      %p90 = scmp.eq.s32.totalorder %s26, 1
      %p91 = por %p89, %p90
      %p93 = scmp.ne.s32.totalorder %s78, %s92
      %p94 = scmp.eq.s32.totalorder %s26, 0
      %p95 = por %p93, %p94
      %s97 = sadd.s32 %s96, 1
      %p100 = scmp.eq.s32.totalorder %s20, 1
      %p101 = scmp.ne.s32.totalorder %s96, %s98
      %p102 = scmp.eq.s32.totalorder %s20, 0
      %p103 = por %p101, %p102
      %p104 = scmp.ne.s32.totalorder %s96, %s98
      %p105 = scmp.eq.s32.totalorder %s25, 1
      %p106 = por %p104, %p105
      %p107 = scmp.ne.s32.totalorder %s98, %s99
      %p108 = scmp.eq.s32.totalorder %s25, 0
      %p109 = por %p107, %p108
      %p110 = scmp.ne.s32.totalorder %s98, %s99
      %p111 = scmp.eq.s32.totalorder %s26, 1
      %p112 = por %p110, %p111
      %p114 = scmp.ne.s32.totalorder %s99, %s113
      %p115 = scmp.eq.s32.totalorder %s26, 0
      %p116 = por %p114, %p115
      %s118 = sadd.s32 %s117, 1
      %p121 = scmp.eq.s32.totalorder %s20, 1
      %p122 = scmp.ne.s32.totalorder %s117, %s119
      %p123 = scmp.eq.s32.totalorder %s20, 0
      %p124 = por %p122, %p123
      %p125 = scmp.ne.s32.totalorder %s117, %s119
      %p126 = scmp.eq.s32.totalorder %s25, 1
      %p127 = por %p125, %p126
      %p128 = scmp.ne.s32.totalorder %s119, %s120
      %p129 = scmp.eq.s32.totalorder %s25, 0
      %p130 = por %p128, %p129
      %p131 = scmp.ne.s32.totalorder %s119, %s120
      %p132 = scmp.eq.s32.totalorder %s26, 1
      %p133 = por %p131, %p132
      %p135 = scmp.ne.s32.totalorder %s120, %s134
      %p136 = scmp.eq.s32.totalorder %s26, 0
      %p137 = por %p135, %p136
      %s139 = sadd.s32 %s138, 1
      %p142 = scmp.eq.s32.totalorder %s20, 1
      %p143 = scmp.ne.s32.totalorder %s138, %s140
      %p144 = scmp.eq.s32.totalorder %s20, 0
      %p145 = por %p143, %p144
      %p146 = scmp.ne.s32.totalorder %s138, %s140
      %p147 = scmp.eq.s32.totalorder %s25, 1
      %p148 = por %p146, %p147
      %p149 = scmp.ne.s32.totalorder %s140, %s141
      %p150 = scmp.eq.s32.totalorder %s25, 0
      %p151 = por %p149, %p150
      %p152 = scmp.ne.s32.totalorder %s140, %s141
      %p153 = scmp.eq.s32.totalorder %s26, 1
      %p154 = por %p152, %p153
      %p156 = scmp.ne.s32.totalorder %s141, %s155
      %p157 = scmp.eq.s32.totalorder %s26, 0
      %p158 = por %p156, %p157
      %s160 = sadd.s32 %s159, 1
      %p163 = scmp.eq.s32.totalorder %s20, 1
      %p164 = scmp.ne.s32.totalorder %s159, %s161
      %p165 = scmp.eq.s32.totalorder %s20, 0
      %p166 = por %p164, %p165
      %p167 = scmp.ne.s32.totalorder %s159, %s161
      %p168 = scmp.eq.s32.totalorder %s25, 1
      %p169 = por %p167, %p168
      %p170 = scmp.ne.s32.totalorder %s161, %s162
      %p171 = scmp.eq.s32.totalorder %s25, 0
      %p172 = por %p170, %p171
      %p173 = scmp.ne.s32.totalorder %s161, %s162
      %p174 = scmp.eq.s32.totalorder %s26, 1
      %p175 = por %p173, %p174
      %p177 = scmp.ne.s32.totalorder %s162, %s176
      %p178 = scmp.eq.s32.totalorder %s26, 0
      %p179 = por %p177, %p178
      %s181 = sadd.s32 %s180, 1
      %p184 = scmp.eq.s32.totalorder %s20, 1
      %p185 = scmp.ne.s32.totalorder %s180, %s182
      %p186 = scmp.eq.s32.totalorder %s20, 0
      %p187 = por %p185, %p186
      %p188 = scmp.ne.s32.totalorder %s180, %s182
      %p189 = scmp.eq.s32.totalorder %s25, 1
      %p190 = por %p188, %p189
      %p191 = scmp.ne.s32.totalorder %s182, %s183
      %p192 = scmp.eq.s32.totalorder %s25, 0
      %p193 = por %p191, %p192
      %p194 = scmp.ne.s32.totalorder %s182, %s183
      %p195 = scmp.eq.s32.totalorder %s26, 1
      %p196 = por %p194, %p195
      %p198 = scmp.ne.s32.totalorder %s183, %s197
      %p199 = scmp.eq.s32.totalorder %s26, 0
      %p200 = por %p198, %p199
      %s202 = sadd.s32 %s201, 1
      %p205 = scmp.eq.s32.totalorder %s20, 1
      %p206 = scmp.ne.s32.totalorder %s201, %s203
      %p207 = scmp.eq.s32.totalorder %s20, 0
      %p208 = por %p206, %p207
      %p209 = scmp.ne.s32.totalorder %s201, %s203
      %p210 = scmp.eq.s32.totalorder %s25, 1
      %p211 = por %p209, %p210
      %p212 = scmp.ne.s32.totalorder %s203, %s204
      %p213 = scmp.eq.s32.totalorder %s25, 0
      %p214 = por %p212, %p213
      %p215 = scmp.ne.s32.totalorder %s203, %s204
      %p216 = scmp.eq.s32.totalorder %s26, 1
      %p217 = por %p215, %p216
      %p219 = scmp.ne.s32.totalorder %s204, %s218
      %p220 = scmp.eq.s32.totalorder %s26, 0
      %p221 = por %p219, %p220
      %s222 = ssub.s32 %s20, %s27
      %p223 = scmp.eq.s32.totalorder %s222, 0
      %s225 = sadd.s32 %s224, 1
      %s226 = scalar_select %p223, %s224, %s225
      %p229 = pneg %p223
      %p230 = scmp.eq.s32.totalorder %s20, 1
      %p231 = por %p229, %p230
      %p232 = scmp.ne.s32.totalorder %s224, %s227
      %p233 = scmp.eq.s32.totalorder %s20, 0
      %p234 = por %p232, %p233
      %p235 = scmp.ne.s32.totalorder %s224, %s227
      %p236 = scmp.eq.s32.totalorder %s25, 1
      %p237 = por %p235, %p236
      %p238 = scmp.ne.s32.totalorder %s227, %s228
      %p239 = scmp.eq.s32.totalorder %s25, 0
      %p240 = por %p238, %p239
      %p241 = scmp.ne.s32.totalorder %s227, %s228
      %p242 = scmp.eq.s32.totalorder %s26, 1
      %p243 = por %p241, %p242
      %p245 = scmp.ne.s32.totalorder %s228, %s244
      %p246 = scmp.eq.s32.totalorder %s26, 0
      %p247 = por %p245, %p246
      %p248 = scmp.le.s32.totalorder 1, %s20
      %p249 = scmp.lt.s32.totalorder %s20, 3
      %p250 = pnand %p248, %p249
      %p251 = pneg %p250
      // Predicated region
      $region9: #{mnist_net_forward.1} parent=5 // pred_check
        _
      $region10: #{mnist_net_forward.1} parent=5 // pred_check_branch
        %253 = sbr.rel (%p250) target = $region12
      $region11: #{mnist_net_forward.1} parent=5 // pred_region
        %s254 = ssub.s32 %s20, 1
        // Predicated region
        $region13: #{mnist_net_forward.1} parent=11 // pred_check
          %p255 = pneg %p67
        $region14: #{mnist_net_forward.1} parent=11 // pred_check_branch
          %257 = sbr.rel (%p255) target = $region16
        $region15: #{mnist_net_forward.1} parent=11 // pred_region
          %s259 = ssub.s32 7680, 7680
          %260 = vsyncadd [#allocation4], %s259
          %s261 = sshll.u32 [#allocation3], 4
          %s262 = int_to_ptr.vmem [resolvable:$true] %s261
          %267 = dma.hbm_to_vmem [thread:$0]  %s1, 7680, %s262, [#allocation4], 384, 384, 24
        $region16: #{mnist_net_forward.1} parent=11 // pred_fallthru
          _
        // Predicated region
        $region17: #{mnist_net_forward.1} parent=11 // pred_check
          %p268 = pneg %p88
        $region18: #{mnist_net_forward.1} parent=11 // pred_check_branch
          %270 = sbr.rel (%p268) target = $region20
        $region19: #{mnist_net_forward.1} parent=11 // pred_region
          %s272 = ssub.s32 48, 48
          %273 = vsyncadd [#allocation6], %s272
          %s275 = sshll.u32 [#allocation5], 4
          %s276 = int_to_ptr.vmem [resolvable:$true] %s275
          %278 = dma.hbm_to_vmem [thread:$0]  %s2, 48, %s276, [#allocation6]
        $region20: #{mnist_net_forward.1} parent=11 // pred_fallthru
          _
        // Predicated region
        $region21: #{mnist_net_forward.1} parent=11 // pred_check
          %p279 = pneg %p109
        $region22: #{mnist_net_forward.1} parent=11 // pred_check_branch
          %281 = sbr.rel (%p279) target = $region24
        $region23: #{mnist_net_forward.1} parent=11 // pred_region
          %s283 = ssub.s32 61440, 61440
          %284 = vsyncadd [#allocation6], %s283
          %s285 = sshll.u32 [#allocation7], 4
          %s286 = int_to_ptr.vmem [resolvable:$true] %s285
          %291 = dma.hbm_to_vmem [thread:$0]  %s3, 61440, %s286, [#allocation6], 256, 256, 16
        $region24: #{mnist_net_forward.1} parent=11 // pred_fallthru
          _
        // Predicated region
        $region25: #{mnist_net_forward.1} parent=11 // pred_check
          %p292 = pneg %p130
        $region26: #{mnist_net_forward.1} parent=11 // pred_check_branch
          %294 = sbr.rel (%p292) target = $region28
        $region27: #{mnist_net_forward.1} parent=11 // pred_region
          %s296 = ssub.s32 32, 32
          %297 = vsyncadd [#allocation9], %s296
          %s299 = sshll.u32 [#allocation8], 4
          %s300 = int_to_ptr.vmem [resolvable:$true] %s299
          %302 = dma.hbm_to_vmem [thread:$0]  %s4, 32, %s300, [#allocation9]
        $region28: #{mnist_net_forward.1} parent=11 // pred_fallthru
          _
        // Predicated region
        $region29: #{mnist_net_forward.1} parent=11 // pred_check
          %p303 = pneg %p151
        $region30: #{mnist_net_forward.1} parent=11 // pred_check_branch
          %305 = sbr.rel (%p303) target = $region32
        $region31: #{mnist_net_forward.1} parent=11 // pred_region
          %s307 = ssub.s32 8192, 8192
          %308 = vsyncadd [#allocation9], %s307
          %s309 = sshll.u32 [#allocation10], 4
          %s310 = int_to_ptr.vmem [resolvable:$true] %s309
          %315 = dma.hbm_to_vmem [thread:$0]  %s5, 8192, %s310, [#allocation9], 64, 64, 4
        $region32: #{mnist_net_forward.1} parent=11 // pred_fallthru
          _
        // Predicated region
        $region33: #{mnist_net_forward.1} parent=11 // pred_check
          %p316 = pneg %p172
        $region34: #{mnist_net_forward.1} parent=11 // pred_check_branch
          %318 = sbr.rel (%p316) target = $region36
        $region35: #{mnist_net_forward.1} parent=11 // pred_region
          %s320 = ssub.s32 16, 16
          %321 = vsyncadd [#allocation12], %s320
          %s323 = sshll.u32 [#allocation11], 4
          %s324 = int_to_ptr.vmem [resolvable:$true] %s323
          %326 = dma.hbm_to_vmem [thread:$0]  %s6, 16, %s324, [#allocation12]
        $region36: #{mnist_net_forward.1} parent=11 // pred_fallthru
          _
        // Predicated region
        $region37: #{mnist_net_forward.1} parent=11 // pred_check
          %p327 = pneg %p193
        $region38: #{mnist_net_forward.1} parent=11 // pred_check_branch
          %329 = sbr.rel (%p327) target = $region40
        $region39: #{mnist_net_forward.1} parent=11 // pred_region
          %s331 = ssub.s32 1024, 1024
          %332 = vsyncadd [#allocation12], %s331
          %s333 = sshll.u32 [#allocation13], 4
          %s334 = int_to_ptr.vmem [resolvable:$true] %s333
          %339 = dma.hbm_to_vmem [thread:$0]  %s7, 1024, %s334, [#allocation12], 64, 64, 4
        $region40: #{mnist_net_forward.1} parent=11 // pred_fallthru
          _
        // Predicated region
        $region41: #{mnist_net_forward.1} parent=11 // pred_check
          %p340 = pneg %p214
        $region42: #{mnist_net_forward.1} parent=11 // pred_check_branch
          %342 = sbr.rel (%p340) target = $region44
        $region43: #{mnist_net_forward.1} parent=11 // pred_region
          %s344 = ssub.s32 16, 16
          %345 = vsyncadd [#allocation15], %s344
          %s347 = sshll.u32 [#allocation14], 4
          %s348 = int_to_ptr.vmem [resolvable:$true] %s347
          %350 = dma.hbm_to_vmem [thread:$0]  %s8, 16, %s348, [#allocation15]
        $region44: #{mnist_net_forward.1} parent=11 // pred_fallthru
          _
      $region12: #{mnist_net_forward.1} parent=5 // pred_fallthru
        _
      %p351 = scmp.lt.s32.totalorder %s20, 2
      // Predicated region
      $region45: #{mnist_net_forward.1} parent=5 // pred_check
        %p352 = pneg %p351
      $region46: #{mnist_net_forward.1} parent=5 // pred_check_branch
        %354 = sbr.rel (%p352) target = $region48
      $region47: #{mnist_net_forward.1} parent=5 // pred_region
        // Predicated region
        $region49: #{mnist_net_forward.1} parent=47 // pred_check
          %p355 = pneg %p40
        $region50: #{mnist_net_forward.1} parent=47 // pred_check_branch
          %357 = sbr.rel (%p355) target = $region52
        $region51: #{mnist_net_forward.1} parent=47 // pred_region
          %s358 = sand.u32 %s30, 1
          %s359 = sand.u32 %s30, 1
          %s360 = smul.addr %s359, 224
          %s361 = scalar_lea.vmem [#allocation2], %s360
          %s362 = smul.addr %s20, 8
          %s363 = scalar_lea.vmem %s0, %s362
          // Predicated region
          $region53: #{mnist_net_forward.1} parent=51 // pred_check
            _
          $region54: #{mnist_net_forward.1} parent=51 // pred_check_branch
            %365 = sbr.rel (0) target = $region56
          $region55: #{mnist_net_forward.1} parent=51 // pred_region
            // Predicated region
            $region57: #{mnist_net_forward.1} parent=55 // pred_check
              _
            $region58: #{mnist_net_forward.1} parent=55 // pred_check_branch
              %367 = sbr.rel (0) target = $region60
            $region59: #{mnist_net_forward.1} parent=55 // pred_region
              // Predicated region
              $region72: #{mnist_net_forward.1} parent=59 // pred_check
                _
              $region73: #{mnist_net_forward.1} parent=59 // pred_check_branch
                %436 = sbr.rel (0) target = $region75
              $region74: #{mnist_net_forward.1} parent=59 // pred_region
                loop: start=0, step=1, limit=1
                $region76: #{mnist_net_forward.1} parent=74 // loop_pre_header
                  _
                $region77: #{mnist_net_forward.1} parent=74 // loop_header
                  %s438 = sphi 0, %s442
                  %p439 = scmp.ge.s32.totalorder %s438, 1
                  %s443 = sphi %s363, %s363
                  %s444 = sphi %s361, %s361
                $region78: #{mnist_net_forward.1} parent=74 // loop_header_branch
                  %441 = sbr.rel (%p439) target = $region82
                $region79: #{mnist_net_forward.1} parent=74 // loop_body
                  %v445 = vld [vmem:[%s443] sm:$0xff]
                  %446 = vst [vmem:[%s444] sm:$0xff] %v445
                  %v447 = vld [vmem:[%s443 + $0x10] sm:$0xff]
                  %448 = vst [vmem:[%s444 + $0x8] sm:$0xff] %v447
                  %v449 = vld [vmem:[%s443 + $0x20] sm:$0xff]
                  %450 = vst [vmem:[%s444 + $0x10] sm:$0xff] %v449
                  %v451 = vld [vmem:[%s443 + $0x30] sm:$0xff]
                  %452 = vst [vmem:[%s444 + $0x18] sm:$0xff] %v451
                  %v453 = vld [vmem:[%s443 + $0x40] sm:$0xff]
                  %454 = vst [vmem:[%s444 + $0x20] sm:$0xff] %v453
                  %v455 = vld [vmem:[%s443 + $0x50] sm:$0xff]
                  %456 = vst [vmem:[%s444 + $0x28] sm:$0xff] %v455
                  %v457 = vld [vmem:[%s443 + $0x60] sm:$0xff]
                  %458 = vst [vmem:[%s444 + $0x30] sm:$0xff] %v457
                  %v459 = vld [vmem:[%s443 + $0x70] sm:$0xff]
                  %460 = vst [vmem:[%s444 + $0x38] sm:$0xff] %v459
                  %v461 = vld [vmem:[%s443 + $0x80] sm:$0xff]
                  %462 = vst [vmem:[%s444 + $0x40] sm:$0xff] %v461
                  %v463 = vld [vmem:[%s443 + $0x90] sm:$0xff]
                  %464 = vst [vmem:[%s444 + $0x48] sm:$0xff] %v463
                  %v465 = vld [vmem:[%s443 + $0xa0] sm:$0xff]
                  %466 = vst [vmem:[%s444 + $0x50] sm:$0xff] %v465
                  %v467 = vld [vmem:[%s443 + $0xb0] sm:$0xff]
                  %468 = vst [vmem:[%s444 + $0x58] sm:$0xff] %v467
                  %v469 = vld [vmem:[%s443 + $0xc0] sm:$0xff]
                  %470 = vst [vmem:[%s444 + $0x60] sm:$0xff] %v469
                  %v471 = vld [vmem:[%s443 + $0xd0] sm:$0xff]
                  %472 = vst [vmem:[%s444 + $0x68] sm:$0xff] %v471
                  %v473 = vld [vmem:[%s443 + $0xe0] sm:$0xff]
                  %474 = vst [vmem:[%s444 + $0x70] sm:$0xff] %v473
                  %v475 = vld [vmem:[%s443 + $0xf0] sm:$0xff]
                  %476 = vst [vmem:[%s444 + $0x78] sm:$0xff] %v475
                  %v477 = vld [vmem:[%s443 + $0x100] sm:$0xff]
                  %478 = vst [vmem:[%s444 + $0x80] sm:$0xff] %v477
                  %v479 = vld [vmem:[%s443 + $0x110] sm:$0xff]
                  %480 = vst [vmem:[%s444 + $0x88] sm:$0xff] %v479
                  %v481 = vld [vmem:[%s443 + $0x120] sm:$0xff]
                  %482 = vst [vmem:[%s444 + $0x90] sm:$0xff] %v481
                  %v483 = vld [vmem:[%s443 + $0x130] sm:$0xff]
                  %484 = vst [vmem:[%s444 + $0x98] sm:$0xff] %v483
                  %v485 = vld [vmem:[%s443 + $0x140] sm:$0xff]
                  %486 = vst [vmem:[%s444 + $0xa0] sm:$0xff] %v485
                  %v487 = vld [vmem:[%s443 + $0x150] sm:$0xff]
                  %488 = vst [vmem:[%s444 + $0xa8] sm:$0xff] %v487
                  %v489 = vld [vmem:[%s443 + $0x160] sm:$0xff]
                  %490 = vst [vmem:[%s444 + $0xb0] sm:$0xff] %v489
                  %v491 = vld [vmem:[%s443 + $0x170] sm:$0xff]
                  %492 = vst [vmem:[%s444 + $0xb8] sm:$0xff] %v491
                  %v493 = vld [vmem:[%s443 + $0x180] sm:$0xff]
                  %494 = vst [vmem:[%s444 + $0xc0] sm:$0xff] %v493
                  %v495 = vld [vmem:[%s443 + $0x190] sm:$0xff]
                  %496 = vst [vmem:[%s444 + $0xc8] sm:$0xff] %v495
                  %v497 = vld [vmem:[%s443 + $0x1a0] sm:$0xff]
                  %498 = vst [vmem:[%s444 + $0xd0] sm:$0xff] %v497
                  %v499 = vld [vmem:[%s443 + $0x1b0] sm:$0xff]
                  %500 = vst [vmem:[%s444 + $0xd8] sm:$0xff] %v499
                $region80: #{mnist_net_forward.1} parent=74 // loop_footer
                  %s442 = sadd.s32 1, %s438
                $region81: #{mnist_net_forward.1} parent=74 // loop_footer_branch
                  %437 = sbr.rel target = $region77
                $region82: #{mnist_net_forward.1} parent=74 // loop_exit
                  _
              $region75: #{mnist_net_forward.1} parent=59 // pred_fallthru
                _
              // Predicated region
              $region83: #{mnist_net_forward.1} parent=59 // pred_check
                _
              $region84: #{mnist_net_forward.1} parent=59 // pred_check_branch
                %502 = sbr.rel target = $region86
              $region85: #{mnist_net_forward.1} parent=59 // pred_region
                _
              $region86: #{mnist_net_forward.1} parent=59 // pred_fallthru
                _
            $region60: #{mnist_net_forward.1} parent=55 // pred_fallthru
              _
            // Predicated region
            $region61: #{mnist_net_forward.1} parent=55 // pred_check
              _
            $region62: #{mnist_net_forward.1} parent=55 // pred_check_branch
              %369 = sbr.rel target = $region64
            $region63: #{mnist_net_forward.1} parent=55 // pred_region
              loop: start=0, step=1, limit=1
              $region65: #{mnist_net_forward.1} parent=63 // loop_pre_header
                _
              $region66: #{mnist_net_forward.1} parent=63 // loop_header
                %s372 = sphi 0, %s376
                %p373 = scmp.ge.s32.totalorder %s372, 1
                %s377 = sphi %s363, %s363
                %s378 = sphi %s361, %s361
              $region67: #{mnist_net_forward.1} parent=63 // loop_header_branch
                %375 = sbr.rel (%p373) target = $region71
              $region68: #{mnist_net_forward.1} parent=63 // loop_body
                %v379 = vld [vmem:[%s377] sm:$0xff]
                %380 = vst [vmem:[%s378] sm:$0xff] %v379
                %v381 = vld [vmem:[%s377 + $0x10] sm:$0xff]
                %382 = vst [vmem:[%s378 + $0x8] sm:$0xff] %v381
                %v383 = vld [vmem:[%s377 + $0x20] sm:$0xff]
                %384 = vst [vmem:[%s378 + $0x10] sm:$0xff] %v383
                %v385 = vld [vmem:[%s377 + $0x30] sm:$0xff]
                %386 = vst [vmem:[%s378 + $0x18] sm:$0xff] %v385
                %v387 = vld [vmem:[%s377 + $0x40] sm:$0xff]
                %388 = vst [vmem:[%s378 + $0x20] sm:$0xff] %v387
                %v389 = vld [vmem:[%s377 + $0x50] sm:$0xff]
                %390 = vst [vmem:[%s378 + $0x28] sm:$0xff] %v389
                %v391 = vld [vmem:[%s377 + $0x60] sm:$0xff]
                %392 = vst [vmem:[%s378 + $0x30] sm:$0xff] %v391
                %v393 = vld [vmem:[%s377 + $0x70] sm:$0xff]
                %394 = vst [vmem:[%s378 + $0x38] sm:$0xff] %v393
                %v395 = vld [vmem:[%s377 + $0x80] sm:$0xff]
                %396 = vst [vmem:[%s378 + $0x40] sm:$0xff] %v395
                %v397 = vld [vmem:[%s377 + $0x90] sm:$0xff]
                %398 = vst [vmem:[%s378 + $0x48] sm:$0xff] %v397
                %v399 = vld [vmem:[%s377 + $0xa0] sm:$0xff]
                %400 = vst [vmem:[%s378 + $0x50] sm:$0xff] %v399
                %v401 = vld [vmem:[%s377 + $0xb0] sm:$0xff]
                %402 = vst [vmem:[%s378 + $0x58] sm:$0xff] %v401
                %v403 = vld [vmem:[%s377 + $0xc0] sm:$0xff]
                %404 = vst [vmem:[%s378 + $0x60] sm:$0xff] %v403
                %v405 = vld [vmem:[%s377 + $0xd0] sm:$0xff]
                %406 = vst [vmem:[%s378 + $0x68] sm:$0xff] %v405
                %v407 = vld [vmem:[%s377 + $0xe0] sm:$0xff]
                %408 = vst [vmem:[%s378 + $0x70] sm:$0xff] %v407
                %v409 = vld [vmem:[%s377 + $0xf0] sm:$0xff]
                %410 = vst [vmem:[%s378 + $0x78] sm:$0xff] %v409
                %v411 = vld [vmem:[%s377 + $0x100] sm:$0xff]
                %412 = vst [vmem:[%s378 + $0x80] sm:$0xff] %v411
                %v413 = vld [vmem:[%s377 + $0x110] sm:$0xff]
                %414 = vst [vmem:[%s378 + $0x88] sm:$0xff] %v413
                %v415 = vld [vmem:[%s377 + $0x120] sm:$0xff]
                %416 = vst [vmem:[%s378 + $0x90] sm:$0xff] %v415
                %v417 = vld [vmem:[%s377 + $0x130] sm:$0xff]
                %418 = vst [vmem:[%s378 + $0x98] sm:$0xff] %v417
                %v419 = vld [vmem:[%s377 + $0x140] sm:$0xff]
                %420 = vst [vmem:[%s378 + $0xa0] sm:$0xff] %v419
                %v421 = vld [vmem:[%s377 + $0x150] sm:$0xff]
                %422 = vst [vmem:[%s378 + $0xa8] sm:$0xff] %v421
                %v423 = vld [vmem:[%s377 + $0x160] sm:$0xff]
                %424 = vst [vmem:[%s378 + $0xb0] sm:$0xff] %v423
                %v425 = vld [vmem:[%s377 + $0x170] sm:$0xff]
                %426 = vst [vmem:[%s378 + $0xb8] sm:$0xff] %v425
                %v427 = vld [vmem:[%s377 + $0x180] sm:$0xff]
                %428 = vst [vmem:[%s378 + $0xc0] sm:$0xff] %v427
                %v429 = vld [vmem:[%s377 + $0x190] sm:$0xff]
                %430 = vst [vmem:[%s378 + $0xc8] sm:$0xff] %v429
                %v431 = vld [vmem:[%s377 + $0x1a0] sm:$0xff]
                %432 = vst [vmem:[%s378 + $0xd0] sm:$0xff] %v431
                %v433 = vld [vmem:[%s377 + $0x1b0] sm:$0xff]
                %434 = vst [vmem:[%s378 + $0xd8] sm:$0xff] %v433
              $region69: #{mnist_net_forward.1} parent=63 // loop_footer
                %s376 = sadd.s32 1, %s372
              $region70: #{mnist_net_forward.1} parent=63 // loop_footer_branch
                %371 = sbr.rel target = $region66
              $region71: #{mnist_net_forward.1} parent=63 // loop_exit
                _
            $region64: #{mnist_net_forward.1} parent=55 // pred_fallthru
              _
          $region56: #{mnist_net_forward.1} parent=51 // pred_fallthru
            _
          %503 = vnop
        $region52: #{mnist_net_forward.1} parent=47 // pred_fallthru
          _
      $region48: #{mnist_net_forward.1} parent=5 // pred_fallthru
        _
      %p504 = scmp.le.s32.totalorder 1, %s20
      %p505 = scmp.lt.s32.totalorder %s20, 3
      %p506 = pnand %p504, %p505
      %p507 = pneg %p506
      // Predicated region
      $region87: #{mnist_net_forward.1} parent=5 // pred_check
        _
      $region88: #{mnist_net_forward.1} parent=5 // pred_check_branch
        %509 = sbr.rel (%p506) target = $region90
      $region89: #{mnist_net_forward.1} parent=5 // pred_region
        %s510 = ssub.s32 %s20, 1
        %s511 = sand.u32 %s33, 1
        %s512 = sand.u32 %s33, 1
        %s513 = smul.addr %s512, 224
        %s514 = scalar_lea.vmem [#allocation2], %s513
        // Predicated region
        $region91: #{mnist_net_forward.1} parent=89 // pred_check
          %p515 = pneg %p46
        $region92: #{mnist_net_forward.1} parent=89 // pred_check_branch
          %517 = sbr.rel (%p515) target = $region94
        $region93: #{mnist_net_forward.1} parent=89 // pred_region
          _
        $region94: #{mnist_net_forward.1} parent=89 // pred_fallthru
          _
        // Predicated region
        $region95: #{mnist_net_forward.1} parent=89 // pred_check
          %p518 = pneg %p67
        $region96: #{mnist_net_forward.1} parent=89 // pred_check_branch
          %520 = sbr.rel (%p518) target = $region98
        $region97: #{mnist_net_forward.1} parent=89 // pred_region
          %521 = dma.done [#allocation4], 7680
        $region98: #{mnist_net_forward.1} parent=89 // pred_fallthru
          _
        // Predicated region
        $region99: #{mnist_net_forward.1} parent=89 // pred_check
          %p522 = pneg %p88
        $region100: #{mnist_net_forward.1} parent=89 // pred_check_branch
          %524 = sbr.rel (%p522) target = $region102
        $region101: #{mnist_net_forward.1} parent=89 // pred_region
          %525 = dma.done [#allocation6], 48
        $region102: #{mnist_net_forward.1} parent=89 // pred_fallthru
          _
        // Predicated region
        $region103: #{mnist_net_forward.1} parent=89 // pred_check
          %p526 = pneg %p109
        $region104: #{mnist_net_forward.1} parent=89 // pred_check_branch
          %528 = sbr.rel (%p526) target = $region106
        $region105: #{mnist_net_forward.1} parent=89 // pred_region
          %529 = dma.done [#allocation6], 61440
        $region106: #{mnist_net_forward.1} parent=89 // pred_fallthru
          _
        // Predicated region
        $region107: #{mnist_net_forward.1} parent=89 // pred_check
          %p530 = pneg %p130
        $region108: #{mnist_net_forward.1} parent=89 // pred_check_branch
          %532 = sbr.rel (%p530) target = $region110
        $region109: #{mnist_net_forward.1} parent=89 // pred_region
          %533 = dma.done [#allocation9], 32
        $region110: #{mnist_net_forward.1} parent=89 // pred_fallthru
          _
        // Predicated region
        $region111: #{mnist_net_forward.1} parent=89 // pred_check
          %p534 = pneg %p151
        $region112: #{mnist_net_forward.1} parent=89 // pred_check_branch
          %536 = sbr.rel (%p534) target = $region114
        $region113: #{mnist_net_forward.1} parent=89 // pred_region
          %537 = dma.done [#allocation9], 8192
        $region114: #{mnist_net_forward.1} parent=89 // pred_fallthru
          _
        // Predicated region
        $region115: #{mnist_net_forward.1} parent=89 // pred_check
          %p538 = pneg %p172
        $region116: #{mnist_net_forward.1} parent=89 // pred_check_branch
          %540 = sbr.rel (%p538) target = $region118
        $region117: #{mnist_net_forward.1} parent=89 // pred_region
          %541 = dma.done [#allocation12], 16
        $region118: #{mnist_net_forward.1} parent=89 // pred_fallthru
          _
        // Predicated region
        $region119: #{mnist_net_forward.1} parent=89 // pred_check
          %p542 = pneg %p193
        $region120: #{mnist_net_forward.1} parent=89 // pred_check_branch
          %544 = sbr.rel (%p542) target = $region122
        $region121: #{mnist_net_forward.1} parent=89 // pred_region
          %545 = dma.done [#allocation12], 1024
        $region122: #{mnist_net_forward.1} parent=89 // pred_fallthru
          _
        // Predicated region
        $region123: #{mnist_net_forward.1} parent=89 // pred_check
          %p546 = pneg %p214
        $region124: #{mnist_net_forward.1} parent=89 // pred_check_branch
          %548 = sbr.rel (%p546) target = $region126
        $region125: #{mnist_net_forward.1} parent=89 // pred_region
          %549 = dma.done [#allocation15], 16
        $region126: #{mnist_net_forward.1} parent=89 // pred_fallthru
          _
        %s550 = sand.u32 %s33, 1
        %s551 = sand.u32 %s33, 1
        %s552 = smul.addr %s551, 224
        %s553 = scalar_lea.vmem [#allocation2], %s552
        %p554 = pneg %p46
        %p555 = pneg %p43
        %p556 = pneg %p67
        %p557 = pneg %p64
        %p558 = pneg %p88
        %p559 = pneg %p85
        %p560 = pneg %p109
        %p561 = pneg %p106
        %p562 = pneg %p130
        %p563 = pneg %p127
        %p564 = pneg %p151
        %p565 = pneg %p148
        %p566 = pneg %p172
        %p567 = pneg %p169
        %p568 = pneg %p193
        %p569 = pneg %p190
        %p570 = pneg %p214
        %p571 = pneg %p211
        %p572 = pneg %p240
        %p573 = pneg %p237
        %p574 = scmp.lt.s32.totalorder %s25, 1
        %s575 = scalar_select %p574, %s25, 1
        %s576 = smul.addr %s575, 8
        %s577 = scalar_lea.vmem %s9, %s576
        %p578 = scmp.lt.s32.totalorder %s25, 1
        %s579 = scalar_select %p578, %s25, 1
        %s580 = smul.addr %s579, 8
        %s581 = scalar_lea.vmem %s9, %s580
        %v583 = vld [vmem:[%s514] sm:$0xff]
        %v584 = vld [vmem:[%s514 + $0x8] sm:$0xff]
        %v585 = vld [vmem:[%s514 + $0x10] sm:$0xff]
        %v586 = vld [vmem:[%s514 + $0x18] sm:$0xff]
        %v587 = vld [vmem:[%s514 + $0x20] sm:$0xff]
        %v588 = vld [vmem:[%s514 + $0x28] sm:$0xff]
        %v589 = vld [vmem:[%s514 + $0x30] sm:$0xff]
        %v590 = vld [vmem:[%s514 + $0x38] sm:$0xff]
        %v591 = vld [vmem:[%s514 + $0x40] sm:$0xff]
        %v592 = vld [vmem:[%s514 + $0x48] sm:$0xff]
        %v593 = vld [vmem:[%s514 + $0x50] sm:$0xff]
        %v594 = vld [vmem:[%s514 + $0x58] sm:$0xff]
        %v595 = vld [vmem:[%s514 + $0x60] sm:$0xff]
        %v596 = vld [vmem:[%s514 + $0x68] sm:$0xff]
        %v597 = vld [vmem:[%s514 + $0x70] sm:$0xff]
        %v598 = vld [vmem:[%s514 + $0x78] sm:$0xff]
        %v599 = vld [vmem:[%s514 + $0x80] sm:$0xff]
        %v600 = vld [vmem:[%s514 + $0x88] sm:$0xff]
        %v601 = vld [vmem:[%s514 + $0x90] sm:$0xff]
        %v602 = vld [vmem:[%s514 + $0x98] sm:$0xff]
        %v603 = vld [vmem:[%s514 + $0xa0] sm:$0xff]
        %v604 = vld [vmem:[%s514 + $0xa8] sm:$0xff]
        %v605 = vld [vmem:[%s514 + $0xb0] sm:$0xff]
        %v606 = vld [vmem:[%s514 + $0xb8] sm:$0xff]
        %v607 = vld [vmem:[%s514 + $0xc0] sm:$0xff]
        %v608 = vld [vmem:[%s514 + $0xc8] sm:$0xff]
        %v609 = vld [vmem:[%s514 + $0xd0] sm:$0xff]
        %v610 = vld [vmem:[%s514 + $0xd8] sm:$0xff]
        %v611 = vpack.c.bf16 %v584, %v583
        %v612 = vpack.c.bf16 %v586, %v585
        %v613 = vpack.c.bf16 %v588, %v587
        %v614 = vpack.c.bf16 %v590, %v589
        %v615 = vpack.c.bf16 %v592, %v591
        %v616 = vpack.c.bf16 %v594, %v593
        %v617 = vpack.c.bf16 %v596, %v595
        %v618 = vpack.c.bf16 %v598, %v597
        %v619 = vpack.c.bf16 %v600, %v599
        %v620 = vpack.c.bf16 %v602, %v601
        %v621 = vpack.c.bf16 %v604, %v603
        %v622 = vpack.c.bf16 %v606, %v605
        %v623 = vld [vmem:[#allocation3] sm:$0xff]
        %v624 = vld [vmem:[#allocation3 + $0x8] sm:$0xff]
        %v625 = vld [vmem:[#allocation3 + $0x10] sm:$0xff]
        %v626 = vld [vmem:[#allocation3 + $0x18] sm:$0xff]
        %v627 = vld [vmem:[#allocation3 + $0x20] sm:$0xff]
        %v628 = vld [vmem:[#allocation3 + $0x28] sm:$0xff]
        %v629 = vld [vmem:[#allocation3 + $0x30] sm:$0xff]
        %v630 = vld [vmem:[#allocation3 + $0x38] sm:$0xff]
        %v631 = vld [vmem:[#allocation3 + $0x40] sm:$0xff]
        %v632 = vld [vmem:[#allocation3 + $0x48] sm:$0x33]
        %v633 = vld [vmem:[#allocation3 + $0x50] sm:$0x33]
        %v634 = vld [vmem:[#allocation3 + $0x58] sm:$0x33]
        %v635 = vpack.c.bf16 %v585, %v584
        %v636 = vpack.c.bf16 %v587, %v586
        %v637 = vpack.c.bf16 %v589, %v588
        %v638 = vpack.c.bf16 %v591, %v590
        %v639 = vpack.c.bf16 %v593, %v592
        %v640 = vpack.c.bf16 %v595, %v594
        %v641 = vpack.c.bf16 %v597, %v596
        %v642 = vpack.c.bf16 %v599, %v598
        %v643 = vpack.c.bf16 %v601, %v600
        %v644 = vpack.c.bf16 %v603, %v602
        %v645 = vpack.c.bf16 %v605, %v604
        %v646 = vpack.c.bf16 %v607, %v606
        %s647 = scalar_lea.vmem [#allocation3], 96
        %v648 = vld [vmem:[%s647] sm:$0xff]
        %v649 = vld [vmem:[%s647 + $0x8] sm:$0xff]
        %v650 = vld [vmem:[%s647 + $0x10] sm:$0xff]
        %v651 = vld [vmem:[%s647 + $0x18] sm:$0xff]
        %v652 = vld [vmem:[%s647 + $0x20] sm:$0xff]
        %v653 = vld [vmem:[%s647 + $0x28] sm:$0xff]
        %v654 = vld [vmem:[%s647 + $0x30] sm:$0xff]
        %v655 = vld [vmem:[%s647 + $0x38] sm:$0xff]
        %v656 = vld [vmem:[%s647 + $0x40] sm:$0xff]
        %v657 = vld [vmem:[%s647 + $0x48] sm:$0x33]
        %v658 = vld [vmem:[%s647 + $0x50] sm:$0x33]
        %v659 = vld [vmem:[%s647 + $0x58] sm:$0x33]
        %v672 = vunpack.c.l.b16 %v648
        %v673 = vunpack.c.h.b16 %v648
        %v674 = vunpack.c.l.b16 %v649
        %v675 = vunpack.c.h.b16 %v649
        %v676 = vunpack.c.l.b16 %v650
        %v677 = vunpack.c.h.b16 %v650
        %v678 = vunpack.c.l.b16 %v651
        %v679 = vunpack.c.h.b16 %v651
        %v680 = vunpack.c.l.b16 %v652
        %v681 = vunpack.c.h.b16 %v652
        %v682 = vunpack.c.l.b16 %v653
        %v683 = vunpack.c.h.b16 %v653
        %v684 = vunpack.c.l.b16 %v654
        %v685 = vunpack.c.h.b16 %v654
        %v686 = vunpack.c.l.b16 %v655
        %v687 = vunpack.c.h.b16 %v655
        %v688 = vunpack.c.l.b16 %v656
        %v689 = vunpack.c.h.b16 %v656
        %v690 = vunpack.c.l.b16 %v657
        %v691 = vunpack.c.h.b16 %v657
        %v692 = vunpack.c.l.b16 %v658
        %v693 = vunpack.c.h.b16 %v658
        %v694 = vunpack.c.l.b16 %v659
        %v695 = vunpack.c.h.b16 %v659
        %v696 = vpack.c.b16 %v678, %v672
        %v697 = vpack.c.b16 %v679, %v673
        %v698 = vpack.c.b16 %v680, %v674
        %v699 = vpack.c.b16 %v681, %v675
        %v700 = vpack.c.b16 %v682, %v676
        %v701 = vpack.c.b16 %v683, %v677
        %v702 = vpack.c.b16 %v690, %v684
        %v703 = vpack.c.b16 %v691, %v685
        %v704 = vpack.c.b16 %v692, %v686
        %v705 = vpack.c.b16 %v693, %v687
        %v706 = vpack.c.b16 %v694, %v688
        %v707 = vpack.c.b16 %v695, %v689
        %vm714 = vcmask 228352
        %v716 = vsel %vm714, %v635, 0
        %v719 = vsel %vm714, %v636, 0
        %v722 = vsel %vm714, %v637, 0
        %v725 = vsel %vm714, %v638, 0
        %v728 = vsel %vm714, %v639, 0
        %v731 = vsel %vm714, %v640, 0
        %v734 = vsel %vm714, %v641, 0
        %v737 = vsel %vm714, %v642, 0
        %v740 = vsel %vm714, %v643, 0
        %v743 = vsel %vm714, %v644, 0
        %v746 = vsel %vm714, %v645, 0
        %v749 = vsel %vm714, %v646, 0
        %vm751 = vcmask 1045504
        %v753 = vsel %vm751, %v702, 0
        %v756 = vsel %vm751, %v703, 0
        %v759 = vsel %vm751, %v704, 0
        %v762 = vsel %vm751, %v705, 0
        %v765 = vsel %vm751, %v706, 0
        %v768 = vsel %vm751, %v707, 0
        %770 = vmatprep.subr.bf16.mxu0 %v697
        %771 = vmatpush1.bf16.msra.mxu0 %v696
        %772 = vmatprep.subr.bf16.mxu0 %v756
        %773 = vmatpush1.bf16.msra.mxu0 %v753
        %774 = vmatprep.subr.bf16.mxu0 0
        %775 = vmatpush1.bf16.msra.mxu0 0
        %776 = vmatprep.subr.bf16.mxu0 0
        %777 = vmatpush1.bf16.msra.mxu0 0
        %778 = vmatprep.subr.bf16.mxu0 0
        %779 = vmatpush1.bf16.msra.mxu0 0
        %780 = vmatprep.subr.bf16.mxu0 0
        %781 = vmatpush1.bf16.msra.mxu0 0
        %782 = vmatprep.subr.bf16.mxu0 0
        %783 = vmatpush1.bf16.msra.mxu0 0
        %784 = vmatprep.subr.bf16.mxu0 0
        %785 = vmatpush1.bf16.msra.mxu0 0
        %786 = vmatprep.subr.bf16.mxu0 0
        %787 = vmatpush1.bf16.msra.mxu0 0
        %788 = vmatprep.subr.bf16.mxu0 0
        %789 = vmatpush1.bf16.msra.mxu0 0
        %790 = vmatprep.subr.bf16.mxu0 0
        %791 = vmatpush1.bf16.msra.mxu0 0
        %792 = vmatprep.subr.bf16.mxu0 0
        %793 = vmatpush1.bf16.msra.mxu0 0
        %794 = vmatprep.subr.bf16.mxu0 0
        %795 = vmatpush1.bf16.msra.mxu0 0
        %796 = vmatprep.subr.bf16.mxu0 0
        %797 = vmatpush1.bf16.msra.mxu0 0
        %798 = vmatprep.subr.bf16.mxu0 0
        %799 = vmatpush1.bf16.msra.mxu0 0
        %800 = vmatprep.subr.bf16.mxu0 0
        %801 = vmatpush1.bf16.msra.mxu0 0
        %802 = vmatprep.mubr.bf16.mxu0 0
        %803 = vmatmul.mubr.bf16.gmra.mrb[0].mxu0 %v716
        %v804 = vpop.f32.mrb[0].mxu0
        %v805 = vadd.f32 0.0, %v804
        %v806 = vpop.f32.mrb[0].mxu0
        %v807 = vadd.f32 0.0, %v806
        %v808 = vpop.f32.mrb[0].mxu0
        %v809 = vadd.f32 0.0, %v808
        %v810 = vpop.f32.mrb[0].mxu0
        %v811 = vadd.f32 0.0, %v810
        %812 = vmatprep.mubr.bf16.mxu0 0
        %813 = vmatmul.mubr.bf16.gmra.mrb[0].mxu0 %v719
        %v814 = vpop.f32.mrb[0].mxu0
        %v815 = vadd.f32 0.0, %v814
        %v816 = vpop.f32.mrb[0].mxu0
        %v817 = vadd.f32 0.0, %v816
        %v818 = vpop.f32.mrb[0].mxu0
        %v819 = vadd.f32 0.0, %v818
        %v820 = vpop.f32.mrb[0].mxu0
        %v821 = vadd.f32 0.0, %v820
        %822 = vmatprep.mubr.bf16.mxu0 0
        %823 = vmatmul.mubr.bf16.gmra.mrb[0].mxu0 %v722
        %v824 = vpop.f32.mrb[0].mxu0
        %v825 = vadd.f32 0.0, %v824
        %v826 = vpop.f32.mrb[0].mxu0
        %v827 = vadd.f32 0.0, %v826
        %v828 = vpop.f32.mrb[0].mxu0
        %v829 = vadd.f32 0.0, %v828
        %v830 = vpop.f32.mrb[0].mxu0
        %v831 = vadd.f32 0.0, %v830
        %832 = vmatprep.mubr.bf16.mxu0 0
        %833 = vmatmul.mubr.bf16.gmra.mrb[0].mxu0 %v725
        %v834 = vpop.f32.mrb[0].mxu0
        %v835 = vadd.f32 0.0, %v834
        %v836 = vpop.f32.mrb[0].mxu0
        %v837 = vadd.f32 0.0, %v836
        %v838 = vpop.f32.mrb[0].mxu0
        %v839 = vadd.f32 0.0, %v838
        %v840 = vpop.f32.mrb[0].mxu0
        %v841 = vadd.f32 0.0, %v840
        %842 = vmatprep.mubr.bf16.mxu0 0
        %843 = vmatmul.mubr.bf16.gmra.mrb[0].mxu0 %v728
        %v844 = vpop.f32.mrb[0].mxu0
        %v845 = vadd.f32 0.0, %v844
        %v846 = vpop.f32.mrb[0].mxu0
        %v847 = vadd.f32 0.0, %v846
        %v848 = vpop.f32.mrb[0].mxu0
        %v849 = vadd.f32 0.0, %v848
        %v850 = vpop.f32.mrb[0].mxu0
        %v851 = vadd.f32 0.0, %v850
        %852 = vmatprep.mubr.bf16.mxu0 0
        %853 = vmatmul.mubr.bf16.gmra.mrb[0].mxu0 %v731
        %v854 = vpop.f32.mrb[0].mxu0
        %v855 = vadd.f32 0.0, %v854
        %v856 = vpop.f32.mrb[0].mxu0
        %v857 = vadd.f32 0.0, %v856
        %v858 = vpop.f32.mrb[0].mxu0
        %v859 = vadd.f32 0.0, %v858
        %v860 = vpop.f32.mrb[0].mxu0
        %v861 = vadd.f32 0.0, %v860
        %862 = vmatprep.mubr.bf16.mxu0 0
        %863 = vmatmul.mubr.bf16.gmra.mrb[0].mxu0 %v734
        %v864 = vpop.f32.mrb[0].mxu0
        %v865 = vadd.f32 0.0, %v864
        %v866 = vpop.f32.mrb[0].mxu0
        %v867 = vadd.f32 0.0, %v866
        %v868 = vpop.f32.mrb[0].mxu0
        %v869 = vadd.f32 0.0, %v868
        %v870 = vpop.f32.mrb[0].mxu0
        %v871 = vadd.f32 0.0, %v870
        %872 = vmatprep.mubr.bf16.mxu0 0
        %873 = vmatmul.mubr.bf16.gmra.mrb[0].mxu0 %v737
        %v874 = vpop.f32.mrb[0].mxu0
        %v875 = vadd.f32 0.0, %v874
        %v876 = vpop.f32.mrb[0].mxu0
        %v877 = vadd.f32 0.0, %v876
        %v878 = vpop.f32.mrb[0].mxu0
        %v879 = vadd.f32 0.0, %v878
        %v880 = vpop.f32.mrb[0].mxu0
        %v881 = vadd.f32 0.0, %v880
        %882 = vmatprep.mubr.bf16.mxu0 0
        %883 = vmatmul.mubr.bf16.gmra.mrb[0].mxu0 %v740
        %v884 = vpop.f32.mrb[0].mxu0
        %v885 = vadd.f32 0.0, %v884
        %v886 = vpop.f32.mrb[0].mxu0
        %v887 = vadd.f32 0.0, %v886
        %v888 = vpop.f32.mrb[0].mxu0
        %v889 = vadd.f32 0.0, %v888
        %v890 = vpop.f32.mrb[0].mxu0
        %v891 = vadd.f32 0.0, %v890
        %892 = vmatprep.mubr.bf16.mxu0 0
        %893 = vmatmul.mubr.bf16.gmra.mrb[0].mxu0 %v743
        %v894 = vpop.f32.mrb[0].mxu0
        %v895 = vadd.f32 0.0, %v894
        %v896 = vpop.f32.mrb[0].mxu0
        %v897 = vadd.f32 0.0, %v896
        %v898 = vpop.f32.mrb[0].mxu0
        %v899 = vadd.f32 0.0, %v898
        %v900 = vpop.f32.mrb[0].mxu0
        %v901 = vadd.f32 0.0, %v900
        %902 = vmatprep.mubr.bf16.mxu0 0
        %903 = vmatmul.mubr.bf16.gmra.mrb[0].mxu0 %v746
        %v904 = vpop.f32.mrb[0].mxu0
        %v905 = vadd.f32 0.0, %v904
        %v906 = vpop.f32.mrb[0].mxu0
        %v907 = vadd.f32 0.0, %v906
        %v908 = vpop.f32.mrb[0].mxu0
        %v909 = vadd.f32 0.0, %v908
        %v910 = vpop.f32.mrb[0].mxu0
        %v911 = vadd.f32 0.0, %v910
        %912 = vmatprep.mubr.bf16.mxu0 0
        %913 = vmatmul.mubr.bf16.gmra.mrb[0].mxu0 %v749
        %v914 = vpop.f32.mrb[0].mxu0
        %v915 = vadd.f32 0.0, %v914
        %v916 = vpop.f32.mrb[0].mxu0
        %v917 = vadd.f32 0.0, %v916
        %v918 = vpop.f32.mrb[0].mxu0
        %v919 = vadd.f32 0.0, %v918
        %v920 = vpop.f32.mrb[0].mxu0
        %v921 = vadd.f32 0.0, %v920
        %922 = vdwg.mxu0
        %923 = vmatprep.subr.bf16.mxu0 %v699
        %924 = vmatpush1.bf16.msra.mxu0 %v698
        %925 = vmatprep.subr.bf16.mxu0 %v762
        %926 = vmatpush1.bf16.msra.mxu0 %v759
        %927 = vmatprep.subr.bf16.mxu0 0
        %928 = vmatpush1.bf16.msra.mxu0 0
        %929 = vmatprep.subr.bf16.mxu0 0
        %930 = vmatpush1.bf16.msra.mxu0 0
        %931 = vmatprep.subr.bf16.mxu0 0
        %932 = vmatpush1.bf16.msra.mxu0 0
        %933 = vmatprep.subr.bf16.mxu0 0
        %934 = vmatpush1.bf16.msra.mxu0 0
        %935 = vmatprep.subr.bf16.mxu0 0
        %936 = vmatpush1.bf16.msra.mxu0 0
        %937 = vmatprep.subr.bf16.mxu0 0
        %938 = vmatpush1.bf16.msra.mxu0 0
        %939 = vmatprep.subr.bf16.mxu0 0
        %940 = vmatpush1.bf16.msra.mxu0 0
        %941 = vmatprep.subr.bf16.mxu0 0
        %942 = vmatpush1.bf16.msra.mxu0 0
        %943 = vmatprep.subr.bf16.mxu0 0
        %944 = vmatpush1.bf16.msra.mxu0 0
        %945 = vmatprep.subr.bf16.mxu0 0
        %946 = vmatpush1.bf16.msra.mxu0 0
        %947 = vmatprep.subr.bf16.mxu0 0
        %948 = vmatpush1.bf16.msra.mxu0 0
        %949 = vmatprep.subr.bf16.mxu0 0
        %950 = vmatpush1.bf16.msra.mxu0 0
        %951 = vmatprep.subr.bf16.mxu0 0
        %952 = vmatpush1.bf16.msra.mxu0 0
        %953 = vmatprep.subr.bf16.mxu0 0
        %954 = vmatpush1.bf16.msra.mxu0 0
        %955 = vmatprep.mubr.bf16.mxu0 0
        %956 = vmatmul.mubr.bf16.gmra.mrb[0].mxu0 %v716
        %v957 = vpop.f32.mrb[0].mxu0
        %v958 = vadd.f32 0.0, %v957
        %v959 = vpop.f32.mrb[0].mxu0
        %v960 = vadd.f32 0.0, %v959
        %v961 = vpop.f32.mrb[0].mxu0
        %v962 = vadd.f32 0.0, %v961
        %v963 = vpop.f32.mrb[0].mxu0
        %v964 = vadd.f32 0.0, %v963
        %965 = vmatprep.mubr.bf16.mxu0 0
        %966 = vmatmul.mubr.bf16.gmra.mrb[0].mxu0 %v719
        %v967 = vpop.f32.mrb[0].mxu0
        %v968 = vadd.f32 0.0, %v967
        %v969 = vpop.f32.mrb[0].mxu0
        %v970 = vadd.f32 0.0, %v969
        %v971 = vpop.f32.mrb[0].mxu0
        %v972 = vadd.f32 0.0, %v971
        %v973 = vpop.f32.mrb[0].mxu0
        %v974 = vadd.f32 0.0, %v973
        %975 = vmatprep.mubr.bf16.mxu0 0
        %976 = vmatmul.mubr.bf16.gmra.mrb[0].mxu0 %v722
        %v977 = vpop.f32.mrb[0].mxu0
        %v978 = vadd.f32 0.0, %v977
        %v979 = vpop.f32.mrb[0].mxu0
        %v980 = vadd.f32 0.0, %v979
        %v981 = vpop.f32.mrb[0].mxu0
        %v982 = vadd.f32 0.0, %v981
        %v983 = vpop.f32.mrb[0].mxu0
        %v984 = vadd.f32 0.0, %v983
        %985 = vmatprep.mubr.bf16.mxu0 0
        %986 = vmatmul.mubr.bf16.gmra.mrb[0].mxu0 %v725
        %v987 = vpop.f32.mrb[0].mxu0
        %v988 = vadd.f32 0.0, %v987
        %v989 = vpop.f32.mrb[0].mxu0
        %v990 = vadd.f32 0.0, %v989
        %v991 = vpop.f32.mrb[0].mxu0
        %v992 = vadd.f32 0.0, %v991
        %v993 = vpop.f32.mrb[0].mxu0
        %v994 = vadd.f32 0.0, %v993
        %995 = vmatprep.mubr.bf16.mxu0 0
        %996 = vmatmul.mubr.bf16.gmra.mrb[0].mxu0 %v728
        %v997 = vpop.f32.mrb[0].mxu0
        %v998 = vadd.f32 0.0, %v997
        %v999 = vpop.f32.mrb[0].mxu0
        %v1000 = vadd.f32 0.0, %v999
        %v1001 = vpop.f32.mrb[0].mxu0
        %v1002 = vadd.f32 0.0, %v1001
        %v1003 = vpop.f32.mrb[0].mxu0
        %v1004 = vadd.f32 0.0, %v1003
        %1005 = vmatprep.mubr.bf16.mxu0 0
        %1006 = vmatmul.mubr.bf16.gmra.mrb[0].mxu0 %v731
        %v1007 = vpop.f32.mrb[0].mxu0
        %v1008 = vadd.f32 0.0, %v1007
        %v1009 = vpop.f32.mrb[0].mxu0
        %v1010 = vadd.f32 0.0, %v1009
        %v1011 = vpop.f32.mrb[0].mxu0
        %v1012 = vadd.f32 0.0, %v1011
        %v1013 = vpop.f32.mrb[0].mxu0
        %v1014 = vadd.f32 0.0, %v1013
        %1015 = vmatprep.mubr.bf16.mxu0 0
        %1016 = vmatmul.mubr.bf16.gmra.mrb[0].mxu0 %v734
        %v1017 = vpop.f32.mrb[0].mxu0
        %v1018 = vadd.f32 0.0, %v1017
        %v1019 = vpop.f32.mrb[0].mxu0
        %v1020 = vadd.f32 0.0, %v1019
        %v1021 = vpop.f32.mrb[0].mxu0
        %v1022 = vadd.f32 0.0, %v1021
        %v1023 = vpop.f32.mrb[0].mxu0
        %v1024 = vadd.f32 0.0, %v1023
        %1025 = vmatprep.mubr.bf16.mxu0 0
        %1026 = vmatmul.mubr.bf16.gmra.mrb[0].mxu0 %v737
        %v1027 = vpop.f32.mrb[0].mxu0
        %v1028 = vadd.f32 0.0, %v1027
        %v1029 = vpop.f32.mrb[0].mxu0
        %v1030 = vadd.f32 0.0, %v1029
        %v1031 = vpop.f32.mrb[0].mxu0
        %v1032 = vadd.f32 0.0, %v1031
        %v1033 = vpop.f32.mrb[0].mxu0
        %v1034 = vadd.f32 0.0, %v1033
        %1035 = vmatprep.mubr.bf16.mxu0 0
        %1036 = vmatmul.mubr.bf16.gmra.mrb[0].mxu0 %v740
        %v1037 = vpop.f32.mrb[0].mxu0
        %v1038 = vadd.f32 0.0, %v1037
        %v1039 = vpop.f32.mrb[0].mxu0
        %v1040 = vadd.f32 0.0, %v1039
        %v1041 = vpop.f32.mrb[0].mxu0
        %v1042 = vadd.f32 0.0, %v1041
        %v1043 = vpop.f32.mrb[0].mxu0
        %v1044 = vadd.f32 0.0, %v1043
        %1045 = vmatprep.mubr.bf16.mxu0 0
        %1046 = vmatmul.mubr.bf16.gmra.mrb[0].mxu0 %v743
        %v1047 = vpop.f32.mrb[0].mxu0
        %v1048 = vadd.f32 0.0, %v1047
        %v1049 = vpop.f32.mrb[0].mxu0
        %v1050 = vadd.f32 0.0, %v1049
        %v1051 = vpop.f32.mrb[0].mxu0
        %v1052 = vadd.f32 0.0, %v1051
        %v1053 = vpop.f32.mrb[0].mxu0
        %v1054 = vadd.f32 0.0, %v1053
        %1055 = vmatprep.mubr.bf16.mxu0 0
        %1056 = vmatmul.mubr.bf16.gmra.mrb[0].mxu0 %v746
        %v1057 = vpop.f32.mrb[0].mxu0
        %v1058 = vadd.f32 0.0, %v1057
        %v1059 = vpop.f32.mrb[0].mxu0
        %v1060 = vadd.f32 0.0, %v1059
        %v1061 = vpop.f32.mrb[0].mxu0
        %v1062 = vadd.f32 0.0, %v1061
        %v1063 = vpop.f32.mrb[0].mxu0
        %v1064 = vadd.f32 0.0, %v1063
        %1065 = vmatprep.mubr.bf16.mxu0 0
        %1066 = vmatmul.mubr.bf16.gmra.mrb[0].mxu0 %v749
        %v1067 = vpop.f32.mrb[0].mxu0
        %v1068 = vadd.f32 0.0, %v1067
        %v1069 = vpop.f32.mrb[0].mxu0
        %v1070 = vadd.f32 0.0, %v1069
        %v1071 = vpop.f32.mrb[0].mxu0
        %v1072 = vadd.f32 0.0, %v1071
        %v1073 = vpop.f32.mrb[0].mxu0
        %v1074 = vadd.f32 0.0, %v1073
        %1075 = vdwg.mxu0
        %1076 = vmatprep.subr.bf16.mxu0 %v701
        %1077 = vmatpush1.bf16.msra.mxu0 %v700
        %1078 = vmatprep.subr.bf16.mxu0 %v768
        %1079 = vmatpush1.bf16.msra.mxu0 %v765
        %1080 = vmatprep.subr.bf16.mxu0 0
        %1081 = vmatpush1.bf16.msra.mxu0 0
        %1082 = vmatprep.subr.bf16.mxu0 0
        %1083 = vmatpush1.bf16.msra.mxu0 0
        %1084 = vmatprep.subr.bf16.mxu0 0
        %1085 = vmatpush1.bf16.msra.mxu0 0
        %1086 = vmatprep.subr.bf16.mxu0 0
        %1087 = vmatpush1.bf16.msra.mxu0 0
        %1088 = vmatprep.subr.bf16.mxu0 0
        %1089 = vmatpush1.bf16.msra.mxu0 0
        %1090 = vmatprep.subr.bf16.mxu0 0
        %1091 = vmatpush1.bf16.msra.mxu0 0
        %1092 = vmatprep.subr.bf16.mxu0 0
        %1093 = vmatpush1.bf16.msra.mxu0 0
        %1094 = vmatprep.subr.bf16.mxu0 0
        %1095 = vmatpush1.bf16.msra.mxu0 0
        %1096 = vmatprep.subr.bf16.mxu0 0
        %1097 = vmatpush1.bf16.msra.mxu0 0
        %1098 = vmatprep.subr.bf16.mxu0 0
        %1099 = vmatpush1.bf16.msra.mxu0 0
        %1100 = vmatprep.subr.bf16.mxu0 0
        %1101 = vmatpush1.bf16.msra.mxu0 0
        %1102 = vmatprep.subr.bf16.mxu0 0
        %1103 = vmatpush1.bf16.msra.mxu0 0
        %1104 = vmatprep.subr.bf16.mxu0 0
        %1105 = vmatpush1.bf16.msra.mxu0 0
        %1106 = vmatprep.subr.bf16.mxu0 0
        %1107 = vmatpush1.bf16.msra.mxu0 0
        %1108 = vmatprep.mubr.bf16.mxu0 0
        %1109 = vmatmul.mubr.bf16.gmra.mrb[0].mxu0 %v716
        %v1110 = vpop.f32.mrb[0].mxu0
        %v1111 = vadd.f32 0.0, %v1110
        %v1112 = vpop.f32.mrb[0].mxu0
        %v1113 = vadd.f32 0.0, %v1112
        %v1114 = vpop.f32.mrb[0].mxu0
        %v1115 = vadd.f32 0.0, %v1114
        %v1116 = vpop.f32.mrb[0].mxu0
        %v1117 = vadd.f32 0.0, %v1116
        %1118 = vmatprep.mubr.bf16.mxu0 0
        %1119 = vmatmul.mubr.bf16.gmra.mrb[0].mxu0 %v719
        %v1120 = vpop.f32.mrb[0].mxu0
        %v1121 = vadd.f32 0.0, %v1120
        %v1122 = vpop.f32.mrb[0].mxu0
        %v1123 = vadd.f32 0.0, %v1122
        %v1124 = vpop.f32.mrb[0].mxu0
        %v1125 = vadd.f32 0.0, %v1124
        %v1126 = vpop.f32.mrb[0].mxu0
        %v1127 = vadd.f32 0.0, %v1126
        %1128 = vmatprep.mubr.bf16.mxu0 0
        %1129 = vmatmul.mubr.bf16.gmra.mrb[0].mxu0 %v722
        %v1130 = vpop.f32.mrb[0].mxu0
        %v1131 = vadd.f32 0.0, %v1130
        %v1132 = vpop.f32.mrb[0].mxu0
        %v1133 = vadd.f32 0.0, %v1132
        %v1134 = vpop.f32.mrb[0].mxu0
        %v1135 = vadd.f32 0.0, %v1134
        %v1136 = vpop.f32.mrb[0].mxu0
        %v1137 = vadd.f32 0.0, %v1136
        %1138 = vmatprep.mubr.bf16.mxu0 0
        %1139 = vmatmul.mubr.bf16.gmra.mrb[0].mxu0 %v725
        %v1140 = vpop.f32.mrb[0].mxu0
        %v1141 = vadd.f32 0.0, %v1140
        %v1142 = vpop.f32.mrb[0].mxu0
        %v1143 = vadd.f32 0.0, %v1142
        %v1144 = vpop.f32.mrb[0].mxu0
        %v1145 = vadd.f32 0.0, %v1144
        %v1146 = vpop.f32.mrb[0].mxu0
        %v1147 = vadd.f32 0.0, %v1146
        %1148 = vmatprep.mubr.bf16.mxu0 0
        %1149 = vmatmul.mubr.bf16.gmra.mrb[0].mxu0 %v728
        %v1150 = vpop.f32.mrb[0].mxu0
        %v1151 = vadd.f32 0.0, %v1150
        %v1152 = vpop.f32.mrb[0].mxu0
        %v1153 = vadd.f32 0.0, %v1152
        %v1154 = vpop.f32.mrb[0].mxu0
        %v1155 = vadd.f32 0.0, %v1154
        %v1156 = vpop.f32.mrb[0].mxu0
        %v1157 = vadd.f32 0.0, %v1156
        %1158 = vmatprep.mubr.bf16.mxu0 0
        %1159 = vmatmul.mubr.bf16.gmra.mrb[0].mxu0 %v731
        %v1160 = vpop.f32.mrb[0].mxu0
        %v1161 = vadd.f32 0.0, %v1160
        %v1162 = vpop.f32.mrb[0].mxu0
        %v1163 = vadd.f32 0.0, %v1162
        %v1164 = vpop.f32.mrb[0].mxu0
        %v1165 = vadd.f32 0.0, %v1164
        %v1166 = vpop.f32.mrb[0].mxu0
        %v1167 = vadd.f32 0.0, %v1166
        %1168 = vmatprep.mubr.bf16.mxu0 0
        %1169 = vmatmul.mubr.bf16.gmra.mrb[0].mxu0 %v734
        %v1170 = vpop.f32.mrb[0].mxu0
        %v1171 = vadd.f32 0.0, %v1170
        %v1172 = vpop.f32.mrb[0].mxu0
        %v1173 = vadd.f32 0.0, %v1172
        %v1174 = vpop.f32.mrb[0].mxu0
        %v1175 = vadd.f32 0.0, %v1174
        %v1176 = vpop.f32.mrb[0].mxu0
        %v1177 = vadd.f32 0.0, %v1176
        %1178 = vmatprep.mubr.bf16.mxu0 0
        %1179 = vmatmul.mubr.bf16.gmra.mrb[0].mxu0 %v737
        %v1180 = vpop.f32.mrb[0].mxu0
        %v1181 = vadd.f32 0.0, %v1180
        %v1182 = vpop.f32.mrb[0].mxu0
        %v1183 = vadd.f32 0.0, %v1182
        %v1184 = vpop.f32.mrb[0].mxu0
        %v1185 = vadd.f32 0.0, %v1184
        %v1186 = vpop.f32.mrb[0].mxu0
        %v1187 = vadd.f32 0.0, %v1186
        %1188 = vmatprep.mubr.bf16.mxu0 0
        %1189 = vmatmul.mubr.bf16.gmra.mrb[0].mxu0 %v740
        %v1190 = vpop.f32.mrb[0].mxu0
        %v1191 = vadd.f32 0.0, %v1190
        %v1192 = vpop.f32.mrb[0].mxu0
        %v1193 = vadd.f32 0.0, %v1192
        %v1194 = vpop.f32.mrb[0].mxu0
        %v1195 = vadd.f32 0.0, %v1194
        %v1196 = vpop.f32.mrb[0].mxu0
        %v1197 = vadd.f32 0.0, %v1196
        %1198 = vmatprep.mubr.bf16.mxu0 0
        %1199 = vmatmul.mubr.bf16.gmra.mrb[0].mxu0 %v743
        %v1200 = vpop.f32.mrb[0].mxu0
        %v1201 = vadd.f32 0.0, %v1200
        %v1202 = vpop.f32.mrb[0].mxu0
        %v1203 = vadd.f32 0.0, %v1202
        %v1204 = vpop.f32.mrb[0].mxu0
        %v1205 = vadd.f32 0.0, %v1204
        %v1206 = vpop.f32.mrb[0].mxu0
        %v1207 = vadd.f32 0.0, %v1206
        %1208 = vmatprep.mubr.bf16.mxu0 0
        %1209 = vmatmul.mubr.bf16.gmra.mrb[0].mxu0 %v746
        %v1210 = vpop.f32.mrb[0].mxu0
        %v1211 = vadd.f32 0.0, %v1210
        %v1212 = vpop.f32.mrb[0].mxu0
        %v1213 = vadd.f32 0.0, %v1212
        %v1214 = vpop.f32.mrb[0].mxu0
        %v1215 = vadd.f32 0.0, %v1214
        %v1216 = vpop.f32.mrb[0].mxu0
        %v1217 = vadd.f32 0.0, %v1216
        %1218 = vmatprep.mubr.bf16.mxu0 0
        %1219 = vmatmul.mubr.bf16.gmra.mrb[0].mxu0 %v749
        %v1220 = vpop.f32.mrb[0].mxu0
        %v1221 = vadd.f32 0.0, %v1220
        %v1222 = vpop.f32.mrb[0].mxu0
        %v1223 = vadd.f32 0.0, %v1222
        %v1224 = vpop.f32.mrb[0].mxu0
        %v1225 = vadd.f32 0.0, %v1224
        %v1226 = vpop.f32.mrb[0].mxu0
        %v1227 = vadd.f32 0.0, %v1226
        %1228 = vdwg.mxu0
        %v1241 = vunpack.c.l.b16 %v623
        %v1242 = vunpack.c.h.b16 %v623
        %v1243 = vunpack.c.l.b16 %v624
        %v1244 = vunpack.c.h.b16 %v624
        %v1245 = vunpack.c.l.b16 %v625
        %v1246 = vunpack.c.h.b16 %v625
        %v1247 = vunpack.c.l.b16 %v626
        %v1248 = vunpack.c.h.b16 %v626
        %v1249 = vunpack.c.l.b16 %v627
        %v1250 = vunpack.c.h.b16 %v627
        %v1251 = vunpack.c.l.b16 %v628
        %v1252 = vunpack.c.h.b16 %v628
        %v1253 = vunpack.c.l.b16 %v629
        %v1254 = vunpack.c.h.b16 %v629
        %v1255 = vunpack.c.l.b16 %v630
        %v1256 = vunpack.c.h.b16 %v630
        %v1257 = vunpack.c.l.b16 %v631
        %v1258 = vunpack.c.h.b16 %v631
        %v1259 = vunpack.c.l.b16 %v632
        %v1260 = vunpack.c.h.b16 %v632
        %v1261 = vunpack.c.l.b16 %v633
        %v1262 = vunpack.c.h.b16 %v633
        %v1263 = vunpack.c.l.b16 %v634
        %v1264 = vunpack.c.h.b16 %v634
        %v1265 = vpack.c.b16 %v1247, %v1241
        %v1266 = vpack.c.b16 %v1248, %v1242
        %v1267 = vpack.c.b16 %v1249, %v1243
        %v1268 = vpack.c.b16 %v1250, %v1244
        %v1269 = vpack.c.b16 %v1251, %v1245
        %v1270 = vpack.c.b16 %v1252, %v1246
        %v1271 = vpack.c.b16 %v1259, %v1253
        %v1272 = vpack.c.b16 %v1260, %v1254
        %v1273 = vpack.c.b16 %v1261, %v1255
        %v1274 = vpack.c.b16 %v1262, %v1256
        %v1275 = vpack.c.b16 %v1263, %v1257
        %v1276 = vpack.c.b16 %v1264, %v1258
        %v1284 = vsel %vm714, %v611, 0
        %v1287 = vsel %vm714, %v612, 0
        %v1290 = vsel %vm714, %v613, 0
        %v1293 = vsel %vm714, %v614, 0
        %v1296 = vsel %vm714, %v615, 0
        %v1299 = vsel %vm714, %v616, 0
        %v1302 = vsel %vm714, %v617, 0
        %v1305 = vsel %vm714, %v618, 0
        %v1308 = vsel %vm714, %v619, 0
        %v1311 = vsel %vm714, %v620, 0
        %v1314 = vsel %vm714, %v621, 0
        %v1317 = vsel %vm714, %v622, 0
        %v1320 = vsel %vm751, %v1271, 0
        %v1323 = vsel %vm751, %v1272, 0
        %v1326 = vsel %vm751, %v1273, 0
        %v1329 = vsel %vm751, %v1274, 0
        %v1332 = vsel %vm751, %v1275, 0
        %v1335 = vsel %vm751, %v1276, 0
        %1337 = vmatprep.subr.bf16.mxu0 %v1266
        %1338 = vmatpush1.bf16.msra.mxu0 %v1265
        %1339 = vmatprep.subr.bf16.mxu0 %v1323
        %1340 = vmatpush1.bf16.msra.mxu0 %v1320
        %1341 = vmatprep.subr.bf16.mxu0 0
        %1342 = vmatpush1.bf16.msra.mxu0 0
        %1343 = vmatprep.subr.bf16.mxu0 0
        %1344 = vmatpush1.bf16.msra.mxu0 0
        %1345 = vmatprep.subr.bf16.mxu0 0
        %1346 = vmatpush1.bf16.msra.mxu0 0
        %1347 = vmatprep.subr.bf16.mxu0 0
        %1348 = vmatpush1.bf16.msra.mxu0 0
        %1349 = vmatprep.subr.bf16.mxu0 0
        %1350 = vmatpush1.bf16.msra.mxu0 0
        %1351 = vmatprep.subr.bf16.mxu0 0
        %1352 = vmatpush1.bf16.msra.mxu0 0
        %1353 = vmatprep.subr.bf16.mxu0 0
        %1354 = vmatpush1.bf16.msra.mxu0 0
        %1355 = vmatprep.subr.bf16.mxu0 0
        %1356 = vmatpush1.bf16.msra.mxu0 0
        %1357 = vmatprep.subr.bf16.mxu0 0
        %1358 = vmatpush1.bf16.msra.mxu0 0
        %1359 = vmatprep.subr.bf16.mxu0 0
        %1360 = vmatpush1.bf16.msra.mxu0 0
        %1361 = vmatprep.subr.bf16.mxu0 0
        %1362 = vmatpush1.bf16.msra.mxu0 0
        %1363 = vmatprep.subr.bf16.mxu0 0
        %1364 = vmatpush1.bf16.msra.mxu0 0
        %1365 = vmatprep.subr.bf16.mxu0 0
        %1366 = vmatpush1.bf16.msra.mxu0 0
        %1367 = vmatprep.subr.bf16.mxu0 0
        %1368 = vmatpush1.bf16.msra.mxu0 0
        %1369 = vmatprep.mubr.bf16.mxu0 0
        %1370 = vmatmul.mubr.bf16.gmra.mrb[0].mxu0 %v1284
        %v1371 = vpop.f32.mrb[0].mxu0
        %v1372 = vadd.f32 %v805, %v1371
        %v1373 = vpop.f32.mrb[0].mxu0
        %v1374 = vadd.f32 %v807, %v1373
        %v1375 = vpop.f32.mrb[0].mxu0
        %v1376 = vadd.f32 %v809, %v1375
        %v1377 = vpop.f32.mrb[0].mxu0
        %v1378 = vadd.f32 %v811, %v1377
        %1379 = vmatprep.mubr.bf16.mxu0 0
        %1380 = vmatmul.mubr.bf16.gmra.mrb[0].mxu0 %v1287
        %v1381 = vpop.f32.mrb[0].mxu0
        %v1382 = vadd.f32 %v815, %v1381
        %v1383 = vpop.f32.mrb[0].mxu0
        %v1384 = vadd.f32 %v817, %v1383
        %v1385 = vpop.f32.mrb[0].mxu0
        %v1386 = vadd.f32 %v819, %v1385
        %v1387 = vpop.f32.mrb[0].mxu0
        %v1388 = vadd.f32 %v821, %v1387
        %1389 = vmatprep.mubr.bf16.mxu0 0
        %1390 = vmatmul.mubr.bf16.gmra.mrb[0].mxu0 %v1290
        %v1391 = vpop.f32.mrb[0].mxu0
        %v1392 = vadd.f32 %v825, %v1391
        %v1393 = vpop.f32.mrb[0].mxu0
        %v1394 = vadd.f32 %v827, %v1393
        %v1395 = vpop.f32.mrb[0].mxu0
        %v1396 = vadd.f32 %v829, %v1395
        %v1397 = vpop.f32.mrb[0].mxu0
        %v1398 = vadd.f32 %v831, %v1397
        %1399 = vmatprep.mubr.bf16.mxu0 0
        %1400 = vmatmul.mubr.bf16.gmra.mrb[0].mxu0 %v1293
        %v1401 = vpop.f32.mrb[0].mxu0
        %v1402 = vadd.f32 %v835, %v1401
        %v1403 = vpop.f32.mrb[0].mxu0
        %v1404 = vadd.f32 %v837, %v1403
        %v1405 = vpop.f32.mrb[0].mxu0
        %v1406 = vadd.f32 %v839, %v1405
        %v1407 = vpop.f32.mrb[0].mxu0
        %v1408 = vadd.f32 %v841, %v1407
        %1409 = vmatprep.mubr.bf16.mxu0 0
        %1410 = vmatmul.mubr.bf16.gmra.mrb[0].mxu0 %v1296
        %v1411 = vpop.f32.mrb[0].mxu0
        %v1412 = vadd.f32 %v845, %v1411
        %v1413 = vpop.f32.mrb[0].mxu0
        %v1414 = vadd.f32 %v847, %v1413
        %v1415 = vpop.f32.mrb[0].mxu0
        %v1416 = vadd.f32 %v849, %v1415
        %v1417 = vpop.f32.mrb[0].mxu0
        %v1418 = vadd.f32 %v851, %v1417
        %1419 = vmatprep.mubr.bf16.mxu0 0
        %1420 = vmatmul.mubr.bf16.gmra.mrb[0].mxu0 %v1299
        %v1421 = vpop.f32.mrb[0].mxu0
        %v1422 = vadd.f32 %v855, %v1421
        %v1423 = vpop.f32.mrb[0].mxu0
        %v1424 = vadd.f32 %v857, %v1423
        %v1425 = vpop.f32.mrb[0].mxu0
        %v1426 = vadd.f32 %v859, %v1425
        %v1427 = vpop.f32.mrb[0].mxu0
        %v1428 = vadd.f32 %v861, %v1427
        %1429 = vmatprep.mubr.bf16.mxu0 0
        %1430 = vmatmul.mubr.bf16.gmra.mrb[0].mxu0 %v1302
        %v1431 = vpop.f32.mrb[0].mxu0
        %v1432 = vadd.f32 %v865, %v1431
        %v1433 = vpop.f32.mrb[0].mxu0
        %v1434 = vadd.f32 %v867, %v1433
        %v1435 = vpop.f32.mrb[0].mxu0
        %v1436 = vadd.f32 %v869, %v1435
        %v1437 = vpop.f32.mrb[0].mxu0
        %v1438 = vadd.f32 %v871, %v1437
        %1439 = vmatprep.mubr.bf16.mxu0 0
        %1440 = vmatmul.mubr.bf16.gmra.mrb[0].mxu0 %v1305
        %v1441 = vpop.f32.mrb[0].mxu0
        %v1442 = vadd.f32 %v875, %v1441
        %v1443 = vpop.f32.mrb[0].mxu0
        %v1444 = vadd.f32 %v877, %v1443
        %v1445 = vpop.f32.mrb[0].mxu0
        %v1446 = vadd.f32 %v879, %v1445
        %v1447 = vpop.f32.mrb[0].mxu0
        %v1448 = vadd.f32 %v881, %v1447
        %1449 = vmatprep.mubr.bf16.mxu0 0
        %1450 = vmatmul.mubr.bf16.gmra.mrb[0].mxu0 %v1308
        %v1451 = vpop.f32.mrb[0].mxu0
        %v1452 = vadd.f32 %v885, %v1451
        %v1453 = vpop.f32.mrb[0].mxu0
        %v1454 = vadd.f32 %v887, %v1453
        %v1455 = vpop.f32.mrb[0].mxu0
        %v1456 = vadd.f32 %v889, %v1455
        %v1457 = vpop.f32.mrb[0].mxu0
        %v1458 = vadd.f32 %v891, %v1457
        %1459 = vmatprep.mubr.bf16.mxu0 0
        %1460 = vmatmul.mubr.bf16.gmra.mrb[0].mxu0 %v1311
        %v1461 = vpop.f32.mrb[0].mxu0
        %v1462 = vadd.f32 %v895, %v1461
        %v1463 = vpop.f32.mrb[0].mxu0
        %v1464 = vadd.f32 %v897, %v1463
        %v1465 = vpop.f32.mrb[0].mxu0
        %v1466 = vadd.f32 %v899, %v1465
        %v1467 = vpop.f32.mrb[0].mxu0
        %v1468 = vadd.f32 %v901, %v1467
        %1469 = vmatprep.mubr.bf16.mxu0 0
        %1470 = vmatmul.mubr.bf16.gmra.mrb[0].mxu0 %v1314
        %v1471 = vpop.f32.mrb[0].mxu0
        %v1472 = vadd.f32 %v905, %v1471
        %v1473 = vpop.f32.mrb[0].mxu0
        %v1474 = vadd.f32 %v907, %v1473
        %v1475 = vpop.f32.mrb[0].mxu0
        %v1476 = vadd.f32 %v909, %v1475
        %v1477 = vpop.f32.mrb[0].mxu0
        %v1478 = vadd.f32 %v911, %v1477
        %1479 = vmatprep.mubr.bf16.mxu0 0
        %1480 = vmatmul.mubr.bf16.gmra.mrb[0].mxu0 %v1317
        %v1481 = vpop.f32.mrb[0].mxu0
        %v1482 = vadd.f32 %v915, %v1481
        %v1483 = vpop.f32.mrb[0].mxu0
        %v1484 = vadd.f32 %v917, %v1483
        %v1485 = vpop.f32.mrb[0].mxu0
        %v1486 = vadd.f32 %v919, %v1485
        %v1487 = vpop.f32.mrb[0].mxu0
        %v1488 = vadd.f32 %v921, %v1487
        %1489 = vdwg.mxu0
        %1490 = vmatprep.subr.bf16.mxu0 %v1268
        %1491 = vmatpush1.bf16.msra.mxu0 %v1267
        %1492 = vmatprep.subr.bf16.mxu0 %v1329
        %1493 = vmatpush1.bf16.msra.mxu0 %v1326
        %1494 = vmatprep.subr.bf16.mxu0 0
        %1495 = vmatpush1.bf16.msra.mxu0 0
        %1496 = vmatprep.subr.bf16.mxu0 0
        %1497 = vmatpush1.bf16.msra.mxu0 0
        %1498 = vmatprep.subr.bf16.mxu0 0
        %1499 = vmatpush1.bf16.msra.mxu0 0
        %1500 = vmatprep.subr.bf16.mxu0 0
        %1501 = vmatpush1.bf16.msra.mxu0 0
        %1502 = vmatprep.subr.bf16.mxu0 0
        %1503 = vmatpush1.bf16.msra.mxu0 0
        %1504 = vmatprep.subr.bf16.mxu0 0
        %1505 = vmatpush1.bf16.msra.mxu0 0
        %1506 = vmatprep.subr.bf16.mxu0 0
        %1507 = vmatpush1.bf16.msra.mxu0 0
        %1508 = vmatprep.subr.bf16.mxu0 0
        %1509 = vmatpush1.bf16.msra.mxu0 0
        %1510 = vmatprep.subr.bf16.mxu0 0
        %1511 = vmatpush1.bf16.msra.mxu0 0
        %1512 = vmatprep.subr.bf16.mxu0 0
        %1513 = vmatpush1.bf16.msra.mxu0 0
        %1514 = vmatprep.subr.bf16.mxu0 0
        %1515 = vmatpush1.bf16.msra.mxu0 0
        %1516 = vmatprep.subr.bf16.mxu0 0
        %1517 = vmatpush1.bf16.msra.mxu0 0
        %1518 = vmatprep.subr.bf16.mxu0 0
        %1519 = vmatpush1.bf16.msra.mxu0 0
        %1520 = vmatprep.subr.bf16.mxu0 0
        %1521 = vmatpush1.bf16.msra.mxu0 0
        %1522 = vmatprep.mubr.bf16.mxu0 0
        %1523 = vmatmul.mubr.bf16.gmra.mrb[0].mxu0 %v1284
        %v1524 = vpop.f32.mrb[0].mxu0
        %v1525 = vadd.f32 %v958, %v1524
        %v1526 = vpop.f32.mrb[0].mxu0
        %v1527 = vadd.f32 %v960, %v1526
        %v1528 = vpop.f32.mrb[0].mxu0
        %v1529 = vadd.f32 %v962, %v1528
        %v1530 = vpop.f32.mrb[0].mxu0
        %v1531 = vadd.f32 %v964, %v1530
        %1532 = vmatprep.mubr.bf16.mxu0 0
        %1533 = vmatmul.mubr.bf16.gmra.mrb[0].mxu0 %v1287
        %v1534 = vpop.f32.mrb[0].mxu0
        %v1535 = vadd.f32 %v968, %v1534
        %v1536 = vpop.f32.mrb[0].mxu0
        %v1537 = vadd.f32 %v970, %v1536
        %v1538 = vpop.f32.mrb[0].mxu0
        %v1539 = vadd.f32 %v972, %v1538
        %v1540 = vpop.f32.mrb[0].mxu0
        %v1541 = vadd.f32 %v974, %v1540
        %1542 = vmatprep.mubr.bf16.mxu0 0
        %1543 = vmatmul.mubr.bf16.gmra.mrb[0].mxu0 %v1290
        %v1544 = vpop.f32.mrb[0].mxu0
        %v1545 = vadd.f32 %v978, %v1544
        %v1546 = vpop.f32.mrb[0].mxu0
        %v1547 = vadd.f32 %v980, %v1546
        %v1548 = vpop.f32.mrb[0].mxu0
        %v1549 = vadd.f32 %v982, %v1548
        %v1550 = vpop.f32.mrb[0].mxu0
        %v1551 = vadd.f32 %v984, %v1550
        %1552 = vmatprep.mubr.bf16.mxu0 0
        %1553 = vmatmul.mubr.bf16.gmra.mrb[0].mxu0 %v1293
        %v1554 = vpop.f32.mrb[0].mxu0
        %v1555 = vadd.f32 %v988, %v1554
        %v1556 = vpop.f32.mrb[0].mxu0
        %v1557 = vadd.f32 %v990, %v1556
        %v1558 = vpop.f32.mrb[0].mxu0
        %v1559 = vadd.f32 %v992, %v1558
        %v1560 = vpop.f32.mrb[0].mxu0
        %v1561 = vadd.f32 %v994, %v1560
        %1562 = vmatprep.mubr.bf16.mxu0 0
        %1563 = vmatmul.mubr.bf16.gmra.mrb[0].mxu0 %v1296
        %v1564 = vpop.f32.mrb[0].mxu0
        %v1565 = vadd.f32 %v998, %v1564
        %v1566 = vpop.f32.mrb[0].mxu0
        %v1567 = vadd.f32 %v1000, %v1566
        %v1568 = vpop.f32.mrb[0].mxu0
        %v1569 = vadd.f32 %v1002, %v1568
        %v1570 = vpop.f32.mrb[0].mxu0
        %v1571 = vadd.f32 %v1004, %v1570
        %1572 = vmatprep.mubr.bf16.mxu0 0
        %1573 = vmatmul.mubr.bf16.gmra.mrb[0].mxu0 %v1299
        %v1574 = vpop.f32.mrb[0].mxu0
        %v1575 = vadd.f32 %v1008, %v1574
        %v1576 = vpop.f32.mrb[0].mxu0
        %v1577 = vadd.f32 %v1010, %v1576
        %v1578 = vpop.f32.mrb[0].mxu0
        %v1579 = vadd.f32 %v1012, %v1578
        %v1580 = vpop.f32.mrb[0].mxu0
        %v1581 = vadd.f32 %v1014, %v1580
        %1582 = vmatprep.mubr.bf16.mxu0 0
        %1583 = vmatmul.mubr.bf16.gmra.mrb[0].mxu0 %v1302
        %v1584 = vpop.f32.mrb[0].mxu0
        %v1585 = vadd.f32 %v1018, %v1584
        %v1586 = vpop.f32.mrb[0].mxu0
        %v1587 = vadd.f32 %v1020, %v1586
        %v1588 = vpop.f32.mrb[0].mxu0
        %v1589 = vadd.f32 %v1022, %v1588
        %v1590 = vpop.f32.mrb[0].mxu0
        %v1591 = vadd.f32 %v1024, %v1590
        %1592 = vmatprep.mubr.bf16.mxu0 0
        %1593 = vmatmul.mubr.bf16.gmra.mrb[0].mxu0 %v1305
        %v1594 = vpop.f32.mrb[0].mxu0
        %v1595 = vadd.f32 %v1028, %v1594
        %v1596 = vpop.f32.mrb[0].mxu0
        %v1597 = vadd.f32 %v1030, %v1596
        %v1598 = vpop.f32.mrb[0].mxu0
        %v1599 = vadd.f32 %v1032, %v1598
        %v1600 = vpop.f32.mrb[0].mxu0
        %v1601 = vadd.f32 %v1034, %v1600
        %1602 = vmatprep.mubr.bf16.mxu0 0
        %1603 = vmatmul.mubr.bf16.gmra.mrb[0].mxu0 %v1308
        %v1604 = vpop.f32.mrb[0].mxu0
        %v1605 = vadd.f32 %v1038, %v1604
        %v1606 = vpop.f32.mrb[0].mxu0
        %v1607 = vadd.f32 %v1040, %v1606
        %v1608 = vpop.f32.mrb[0].mxu0
        %v1609 = vadd.f32 %v1042, %v1608
        %v1610 = vpop.f32.mrb[0].mxu0
        %v1611 = vadd.f32 %v1044, %v1610
        %1612 = vmatprep.mubr.bf16.mxu0 0
        %1613 = vmatmul.mubr.bf16.gmra.mrb[0].mxu0 %v1311
        %v1614 = vpop.f32.mrb[0].mxu0
        %v1615 = vadd.f32 %v1048, %v1614
        %v1616 = vpop.f32.mrb[0].mxu0
        %v1617 = vadd.f32 %v1050, %v1616
        %v1618 = vpop.f32.mrb[0].mxu0
        %v1619 = vadd.f32 %v1052, %v1618
        %v1620 = vpop.f32.mrb[0].mxu0
        %v1621 = vadd.f32 %v1054, %v1620
        %1622 = vmatprep.mubr.bf16.mxu0 0
        %1623 = vmatmul.mubr.bf16.gmra.mrb[0].mxu0 %v1314
        %v1624 = vpop.f32.mrb[0].mxu0
        %v1625 = vadd.f32 %v1058, %v1624
        %v1626 = vpop.f32.mrb[0].mxu0
        %v1627 = vadd.f32 %v1060, %v1626
        %v1628 = vpop.f32.mrb[0].mxu0
        %v1629 = vadd.f32 %v1062, %v1628
        %v1630 = vpop.f32.mrb[0].mxu0
        %v1631 = vadd.f32 %v1064, %v1630
        %1632 = vmatprep.mubr.bf16.mxu0 0
        %1633 = vmatmul.mubr.bf16.gmra.mrb[0].mxu0 %v1317
        %v1634 = vpop.f32.mrb[0].mxu0
        %v1635 = vadd.f32 %v1068, %v1634
        %v1636 = vpop.f32.mrb[0].mxu0
        %v1637 = vadd.f32 %v1070, %v1636
        %v1638 = vpop.f32.mrb[0].mxu0
        %v1639 = vadd.f32 %v1072, %v1638
        %v1640 = vpop.f32.mrb[0].mxu0
        %v1641 = vadd.f32 %v1074, %v1640
        %1642 = vdwg.mxu0
        %1643 = vmatprep.subr.bf16.mxu0 %v1270
        %1644 = vmatpush1.bf16.msra.mxu0 %v1269
        %1645 = vmatprep.subr.bf16.mxu0 %v1335
        %1646 = vmatpush1.bf16.msra.mxu0 %v1332
        %1647 = vmatprep.subr.bf16.mxu0 0
        %1648 = vmatpush1.bf16.msra.mxu0 0
        %1649 = vmatprep.subr.bf16.mxu0 0
        %1650 = vmatpush1.bf16.msra.mxu0 0
        %1651 = vmatprep.subr.bf16.mxu0 0
        %1652 = vmatpush1.bf16.msra.mxu0 0
        %1653 = vmatprep.subr.bf16.mxu0 0
        %1654 = vmatpush1.bf16.msra.mxu0 0
        %1655 = vmatprep.subr.bf16.mxu0 0
        %1656 = vmatpush1.bf16.msra.mxu0 0
        %1657 = vmatprep.subr.bf16.mxu0 0
        %1658 = vmatpush1.bf16.msra.mxu0 0
        %1659 = vmatprep.subr.bf16.mxu0 0
        %1660 = vmatpush1.bf16.msra.mxu0 0
        %1661 = vmatprep.subr.bf16.mxu0 0
        %1662 = vmatpush1.bf16.msra.mxu0 0
        %1663 = vmatprep.subr.bf16.mxu0 0
        %1664 = vmatpush1.bf16.msra.mxu0 0
        %1665 = vmatprep.subr.bf16.mxu0 0
        %1666 = vmatpush1.bf16.msra.mxu0 0
        %1667 = vmatprep.subr.bf16.mxu0 0
        %1668 = vmatpush1.bf16.msra.mxu0 0
        %1669 = vmatprep.subr.bf16.mxu0 0
        %1670 = vmatpush1.bf16.msra.mxu0 0
        %1671 = vmatprep.subr.bf16.mxu0 0
        %1672 = vmatpush1.bf16.msra.mxu0 0
        %1673 = vmatprep.subr.bf16.mxu0 0
        %1674 = vmatpush1.bf16.msra.mxu0 0
        %1675 = vmatprep.mubr.bf16.mxu0 0
        %1676 = vmatmul.mubr.bf16.gmra.mrb[0].mxu0 %v1284
        %v1677 = vpop.f32.mrb[0].mxu0
        %v1678 = vadd.f32 %v1111, %v1677
        %v1679 = vpop.f32.mrb[0].mxu0
        %v1680 = vadd.f32 %v1113, %v1679
        %v1681 = vpop.f32.mrb[0].mxu0
        %v1682 = vadd.f32 %v1115, %v1681
        %v1683 = vpop.f32.mrb[0].mxu0
        %v1684 = vadd.f32 %v1117, %v1683
        %1685 = vmatprep.mubr.bf16.mxu0 0
        %1686 = vmatmul.mubr.bf16.gmra.mrb[0].mxu0 %v1287
        %v1687 = vpop.f32.mrb[0].mxu0
        %v1688 = vadd.f32 %v1121, %v1687
        %v1689 = vpop.f32.mrb[0].mxu0
        %v1690 = vadd.f32 %v1123, %v1689
        %v1691 = vpop.f32.mrb[0].mxu0
        %v1692 = vadd.f32 %v1125, %v1691
        %v1693 = vpop.f32.mrb[0].mxu0
        %v1694 = vadd.f32 %v1127, %v1693
        %1695 = vmatprep.mubr.bf16.mxu0 0
        %1696 = vmatmul.mubr.bf16.gmra.mrb[0].mxu0 %v1290
        %v1697 = vpop.f32.mrb[0].mxu0
        %v1698 = vadd.f32 %v1131, %v1697
        %v1699 = vpop.f32.mrb[0].mxu0
        %v1700 = vadd.f32 %v1133, %v1699
        %v1701 = vpop.f32.mrb[0].mxu0
        %v1702 = vadd.f32 %v1135, %v1701
        %v1703 = vpop.f32.mrb[0].mxu0
        %v1704 = vadd.f32 %v1137, %v1703
        %1705 = vmatprep.mubr.bf16.mxu0 0
        %1706 = vmatmul.mubr.bf16.gmra.mrb[0].mxu0 %v1293
        %v1707 = vpop.f32.mrb[0].mxu0
        %v1708 = vadd.f32 %v1141, %v1707
        %v1709 = vpop.f32.mrb[0].mxu0
        %v1710 = vadd.f32 %v1143, %v1709
        %v1711 = vpop.f32.mrb[0].mxu0
        %v1712 = vadd.f32 %v1145, %v1711
        %v1713 = vpop.f32.mrb[0].mxu0
        %v1714 = vadd.f32 %v1147, %v1713
        %1715 = vmatprep.mubr.bf16.mxu0 0
        %1716 = vmatmul.mubr.bf16.gmra.mrb[0].mxu0 %v1296
        %v1717 = vpop.f32.mrb[0].mxu0
        %v1718 = vadd.f32 %v1151, %v1717
        %v1719 = vpop.f32.mrb[0].mxu0
        %v1720 = vadd.f32 %v1153, %v1719
        %v1721 = vpop.f32.mrb[0].mxu0
        %v1722 = vadd.f32 %v1155, %v1721
        %v1723 = vpop.f32.mrb[0].mxu0
        %v1724 = vadd.f32 %v1157, %v1723
        %1725 = vmatprep.mubr.bf16.mxu0 0
        %1726 = vmatmul.mubr.bf16.gmra.mrb[0].mxu0 %v1299
        %v1727 = vpop.f32.mrb[0].mxu0
        %v1728 = vadd.f32 %v1161, %v1727
        %v1729 = vpop.f32.mrb[0].mxu0
        %v1730 = vadd.f32 %v1163, %v1729
        %v1731 = vpop.f32.mrb[0].mxu0
        %v1732 = vadd.f32 %v1165, %v1731
        %v1733 = vpop.f32.mrb[0].mxu0
        %v1734 = vadd.f32 %v1167, %v1733
        %1735 = vmatprep.mubr.bf16.mxu0 0
        %1736 = vmatmul.mubr.bf16.gmra.mrb[0].mxu0 %v1302
        %v1737 = vpop.f32.mrb[0].mxu0
        %v1738 = vadd.f32 %v1171, %v1737
        %v1739 = vpop.f32.mrb[0].mxu0
        %v1740 = vadd.f32 %v1173, %v1739
        %v1741 = vpop.f32.mrb[0].mxu0
        %v1742 = vadd.f32 %v1175, %v1741
        %v1743 = vpop.f32.mrb[0].mxu0
        %v1744 = vadd.f32 %v1177, %v1743
        %1745 = vmatprep.mubr.bf16.mxu0 0
        %1746 = vmatmul.mubr.bf16.gmra.mrb[0].mxu0 %v1305
        %v1747 = vpop.f32.mrb[0].mxu0
        %v1748 = vadd.f32 %v1181, %v1747
        %v1749 = vpop.f32.mrb[0].mxu0
        %v1750 = vadd.f32 %v1183, %v1749
        %v1751 = vpop.f32.mrb[0].mxu0
        %v1752 = vadd.f32 %v1185, %v1751
        %v1753 = vpop.f32.mrb[0].mxu0
        %v1754 = vadd.f32 %v1187, %v1753
        %1755 = vmatprep.mubr.bf16.mxu0 0
        %1756 = vmatmul.mubr.bf16.gmra.mrb[0].mxu0 %v1308
        %v1757 = vpop.f32.mrb[0].mxu0
        %v1758 = vadd.f32 %v1191, %v1757
        %v1759 = vpop.f32.mrb[0].mxu0
        %v1760 = vadd.f32 %v1193, %v1759
        %v1761 = vpop.f32.mrb[0].mxu0
        %v1762 = vadd.f32 %v1195, %v1761
        %v1763 = vpop.f32.mrb[0].mxu0
        %v1764 = vadd.f32 %v1197, %v1763
        %1765 = vmatprep.mubr.bf16.mxu0 0
        %1766 = vmatmul.mubr.bf16.gmra.mrb[0].mxu0 %v1311
        %v1767 = vpop.f32.mrb[0].mxu0
        %v1768 = vadd.f32 %v1201, %v1767
        %v1769 = vpop.f32.mrb[0].mxu0
        %v1770 = vadd.f32 %v1203, %v1769
        %v1771 = vpop.f32.mrb[0].mxu0
        %v1772 = vadd.f32 %v1205, %v1771
        %v1773 = vpop.f32.mrb[0].mxu0
        %v1774 = vadd.f32 %v1207, %v1773
        %1775 = vmatprep.mubr.bf16.mxu0 0
        %1776 = vmatmul.mubr.bf16.gmra.mrb[0].mxu0 %v1314
        %v1777 = vpop.f32.mrb[0].mxu0
        %v1778 = vadd.f32 %v1211, %v1777
        %v1779 = vpop.f32.mrb[0].mxu0
        %v1780 = vadd.f32 %v1213, %v1779
        %v1781 = vpop.f32.mrb[0].mxu0
        %v1782 = vadd.f32 %v1215, %v1781
        %v1783 = vpop.f32.mrb[0].mxu0
        %v1784 = vadd.f32 %v1217, %v1783
        %1785 = vmatprep.mubr.bf16.mxu0 0
        %1786 = vmatmul.mubr.bf16.gmra.mrb[0].mxu0 %v1317
        %v1787 = vpop.f32.mrb[0].mxu0
        %v1788 = vadd.f32 %v1221, %v1787
        %v1789 = vpop.f32.mrb[0].mxu0
        %v1790 = vadd.f32 %v1223, %v1789
        %v1791 = vpop.f32.mrb[0].mxu0
        %v1792 = vadd.f32 %v1225, %v1791
        %v1793 = vpop.f32.mrb[0].mxu0
        %v1794 = vadd.f32 %v1227, %v1793
        %1795 = vdwg.mxu0
        %v1796 = vpack.c.bf16 %v608, %v607
        %s1797 = scalar_lea.vmem [#allocation3], 192
        %v1798 = vld [vmem:[%s1797] sm:$0xff]
        %v1799 = vld [vmem:[%s1797 + $0x8] sm:$0xff]
        %v1800 = vld [vmem:[%s1797 + $0x10] sm:$0xff]
        %v1801 = vld [vmem:[%s1797 + $0x18] sm:$0xff]
        %v1802 = vld [vmem:[%s1797 + $0x20] sm:$0xff]
        %v1803 = vld [vmem:[%s1797 + $0x28] sm:$0xff]
        %v1804 = vld [vmem:[%s1797 + $0x30] sm:$0xff]
        %v1805 = vld [vmem:[%s1797 + $0x38] sm:$0xff]
        %v1806 = vld [vmem:[%s1797 + $0x40] sm:$0xff]
        %v1807 = vld [vmem:[%s1797 + $0x48] sm:$0x33]
        %v1808 = vld [vmem:[%s1797 + $0x50] sm:$0x33]
        %v1809 = vld [vmem:[%s1797 + $0x58] sm:$0x33]
        %v1822 = vunpack.c.l.b16 %v1798
        %v1823 = vunpack.c.h.b16 %v1798
        %v1824 = vunpack.c.l.b16 %v1799
        %v1825 = vunpack.c.h.b16 %v1799
        %v1826 = vunpack.c.l.b16 %v1800
        %v1827 = vunpack.c.h.b16 %v1800
        %v1828 = vunpack.c.l.b16 %v1801
        %v1829 = vunpack.c.h.b16 %v1801
        %v1830 = vunpack.c.l.b16 %v1802
        %v1831 = vunpack.c.h.b16 %v1802
        %v1832 = vunpack.c.l.b16 %v1803
        %v1833 = vunpack.c.h.b16 %v1803
        %v1834 = vunpack.c.l.b16 %v1804
        %v1835 = vunpack.c.h.b16 %v1804
        %v1836 = vunpack.c.l.b16 %v1805
        %v1837 = vunpack.c.h.b16 %v1805
        %v1838 = vunpack.c.l.b16 %v1806
        %v1839 = vunpack.c.h.b16 %v1806
        %v1840 = vunpack.c.l.b16 %v1807
        %v1841 = vunpack.c.h.b16 %v1807
        %v1842 = vunpack.c.l.b16 %v1808
        %v1843 = vunpack.c.h.b16 %v1808
        %v1844 = vunpack.c.l.b16 %v1809
        %v1845 = vunpack.c.h.b16 %v1809
        %v1846 = vpack.c.b16 %v1828, %v1822
        %v1847 = vpack.c.b16 %v1829, %v1823
        %v1848 = vpack.c.b16 %v1830, %v1824
        %v1849 = vpack.c.b16 %v1831, %v1825
        %v1850 = vpack.c.b16 %v1832, %v1826
        %v1851 = vpack.c.b16 %v1833, %v1827
        %v1852 = vpack.c.b16 %v1840, %v1834
        %v1853 = vpack.c.b16 %v1841, %v1835
        %v1854 = vpack.c.b16 %v1842, %v1836
        %v1855 = vpack.c.b16 %v1843, %v1837
        %v1856 = vpack.c.b16 %v1844, %v1838
        %v1857 = vpack.c.b16 %v1845, %v1839
        %v1865 = vsel %vm714, %v1796, 0
        %v1868 = vsel %vm751, %v1852, 0
        %v1871 = vsel %vm751, %v1853, 0
        %v1874 = vsel %vm751, %v1854, 0
        %v1877 = vsel %vm751, %v1855, 0
        %v1880 = vsel %vm751, %v1856, 0
        %v1883 = vsel %vm751, %v1857, 0
        %1885 = vmatprep.subr.bf16.mxu0 %v1847
        %1886 = vmatpush1.bf16.msra.mxu0 %v1846
        %1887 = vmatprep.subr.bf16.mxu0 %v1871
        %1888 = vmatpush1.bf16.msra.mxu0 %v1868
        %1889 = vmatprep.subr.bf16.mxu0 0
        %1890 = vmatpush1.bf16.msra.mxu0 0
        %1891 = vmatprep.subr.bf16.mxu0 0
        %1892 = vmatpush1.bf16.msra.mxu0 0
        %1893 = vmatprep.subr.bf16.mxu0 0
        %1894 = vmatpush1.bf16.msra.mxu0 0
        %1895 = vmatprep.subr.bf16.mxu0 0
        %1896 = vmatpush1.bf16.msra.mxu0 0
        %1897 = vmatprep.subr.bf16.mxu0 0
        %1898 = vmatpush1.bf16.msra.mxu0 0
        %1899 = vmatprep.subr.bf16.mxu0 0
        %1900 = vmatpush1.bf16.msra.mxu0 0
        %1901 = vmatprep.subr.bf16.mxu0 0
        %1902 = vmatpush1.bf16.msra.mxu0 0
        %1903 = vmatprep.subr.bf16.mxu0 0
        %1904 = vmatpush1.bf16.msra.mxu0 0
        %1905 = vmatprep.subr.bf16.mxu0 0
        %1906 = vmatpush1.bf16.msra.mxu0 0
        %1907 = vmatprep.subr.bf16.mxu0 0
        %1908 = vmatpush1.bf16.msra.mxu0 0
        %1909 = vmatprep.subr.bf16.mxu0 0
        %1910 = vmatpush1.bf16.msra.mxu0 0
        %1911 = vmatprep.subr.bf16.mxu0 0
        %1912 = vmatpush1.bf16.msra.mxu0 0
        %1913 = vmatprep.subr.bf16.mxu0 0
        %1914 = vmatpush1.bf16.msra.mxu0 0
        %1915 = vmatprep.subr.bf16.mxu0 0
        %1916 = vmatpush1.bf16.msra.mxu0 0
        %1917 = vmatprep.mubr.bf16.mxu0 0
        %1918 = vmatmul.mubr.bf16.gmra.mrb[0].mxu0 %v1287
        %v1919 = vpop.f32.mrb[0].mxu0
        %v1920 = vadd.f32 0.0, %v1919
        %v1921 = vpop.f32.mrb[0].mxu0
        %v1922 = vadd.f32 0.0, %v1921
        %v1923 = vpop.f32.mrb[0].mxu0
        %v1924 = vadd.f32 0.0, %v1923
        %v1925 = vpop.f32.mrb[0].mxu0
        %v1926 = vadd.f32 0.0, %v1925
        %1927 = vmatprep.mubr.bf16.mxu0 0
        %1928 = vmatmul.mubr.bf16.gmra.mrb[0].mxu0 %v1290
        %v1929 = vpop.f32.mrb[0].mxu0
        %v1930 = vadd.f32 0.0, %v1929
        %v1931 = vpop.f32.mrb[0].mxu0
        %v1932 = vadd.f32 0.0, %v1931
        %v1933 = vpop.f32.mrb[0].mxu0
        %v1934 = vadd.f32 0.0, %v1933
        %v1935 = vpop.f32.mrb[0].mxu0
        %v1936 = vadd.f32 0.0, %v1935
        %1937 = vmatprep.mubr.bf16.mxu0 0
        %1938 = vmatmul.mubr.bf16.gmra.mrb[0].mxu0 %v1293
        %v1939 = vpop.f32.mrb[0].mxu0
        %v1940 = vadd.f32 0.0, %v1939
        %v1941 = vpop.f32.mrb[0].mxu0
        %v1942 = vadd.f32 0.0, %v1941
        %v1943 = vpop.f32.mrb[0].mxu0
        %v1944 = vadd.f32 0.0, %v1943
        %v1945 = vpop.f32.mrb[0].mxu0
        %v1946 = vadd.f32 0.0, %v1945
        %1947 = vmatprep.mubr.bf16.mxu0 0
        %1948 = vmatmul.mubr.bf16.gmra.mrb[0].mxu0 %v1296
        %v1949 = vpop.f32.mrb[0].mxu0
        %v1950 = vadd.f32 0.0, %v1949
        %v1951 = vpop.f32.mrb[0].mxu0
        %v1952 = vadd.f32 0.0, %v1951
        %v1953 = vpop.f32.mrb[0].mxu0
        %v1954 = vadd.f32 0.0, %v1953
        %v1955 = vpop.f32.mrb[0].mxu0
        %v1956 = vadd.f32 0.0, %v1955
        %1957 = vmatprep.mubr.bf16.mxu0 0
        %1958 = vmatmul.mubr.bf16.gmra.mrb[0].mxu0 %v1299
        %v1959 = vpop.f32.mrb[0].mxu0
        %v1960 = vadd.f32 0.0, %v1959
        %v1961 = vpop.f32.mrb[0].mxu0
        %v1962 = vadd.f32 0.0, %v1961
        %v1963 = vpop.f32.mrb[0].mxu0
        %v1964 = vadd.f32 0.0, %v1963
        %v1965 = vpop.f32.mrb[0].mxu0
        %v1966 = vadd.f32 0.0, %v1965
        %1967 = vmatprep.mubr.bf16.mxu0 0
        %1968 = vmatmul.mubr.bf16.gmra.mrb[0].mxu0 %v1302
        %v1969 = vpop.f32.mrb[0].mxu0
        %v1970 = vadd.f32 0.0, %v1969
        %v1971 = vpop.f32.mrb[0].mxu0
        %v1972 = vadd.f32 0.0, %v1971
        %v1973 = vpop.f32.mrb[0].mxu0
        %v1974 = vadd.f32 0.0, %v1973
        %v1975 = vpop.f32.mrb[0].mxu0
        %v1976 = vadd.f32 0.0, %v1975
        %1977 = vmatprep.mubr.bf16.mxu0 0
        %1978 = vmatmul.mubr.bf16.gmra.mrb[0].mxu0 %v1305
        %v1979 = vpop.f32.mrb[0].mxu0
        %v1980 = vadd.f32 0.0, %v1979
        %v1981 = vpop.f32.mrb[0].mxu0
        %v1982 = vadd.f32 0.0, %v1981
        %v1983 = vpop.f32.mrb[0].mxu0
        %v1984 = vadd.f32 0.0, %v1983
        %v1985 = vpop.f32.mrb[0].mxu0
        %v1986 = vadd.f32 0.0, %v1985
        %1987 = vmatprep.mubr.bf16.mxu0 0
        %1988 = vmatmul.mubr.bf16.gmra.mrb[0].mxu0 %v1308
        %v1989 = vpop.f32.mrb[0].mxu0
        %v1990 = vadd.f32 0.0, %v1989
        %v1991 = vpop.f32.mrb[0].mxu0
        %v1992 = vadd.f32 0.0, %v1991
        %v1993 = vpop.f32.mrb[0].mxu0
        %v1994 = vadd.f32 0.0, %v1993
        %v1995 = vpop.f32.mrb[0].mxu0
        %v1996 = vadd.f32 0.0, %v1995
        %1997 = vmatprep.mubr.bf16.mxu0 0
        %1998 = vmatmul.mubr.bf16.gmra.mrb[0].mxu0 %v1311
        %v1999 = vpop.f32.mrb[0].mxu0
        %v2000 = vadd.f32 0.0, %v1999
        %v2001 = vpop.f32.mrb[0].mxu0
        %v2002 = vadd.f32 0.0, %v2001
        %v2003 = vpop.f32.mrb[0].mxu0
        %v2004 = vadd.f32 0.0, %v2003
        %v2005 = vpop.f32.mrb[0].mxu0
        %v2006 = vadd.f32 0.0, %v2005
        %2007 = vmatprep.mubr.bf16.mxu0 0
        %2008 = vmatmul.mubr.bf16.gmra.mrb[0].mxu0 %v1314
        %v2009 = vpop.f32.mrb[0].mxu0
        %v2010 = vadd.f32 0.0, %v2009
        %v2011 = vpop.f32.mrb[0].mxu0
        %v2012 = vadd.f32 0.0, %v2011
        %v2013 = vpop.f32.mrb[0].mxu0
        %v2014 = vadd.f32 0.0, %v2013
        %v2015 = vpop.f32.mrb[0].mxu0
        %v2016 = vadd.f32 0.0, %v2015
        %2017 = vmatprep.mubr.bf16.mxu0 0
        %2018 = vmatmul.mubr.bf16.gmra.mrb[0].mxu0 %v1317
        %v2019 = vpop.f32.mrb[0].mxu0
        %v2020 = vadd.f32 0.0, %v2019
        %v2021 = vpop.f32.mrb[0].mxu0
        %v2022 = vadd.f32 0.0, %v2021
        %v2023 = vpop.f32.mrb[0].mxu0
        %v2024 = vadd.f32 0.0, %v2023
        %v2025 = vpop.f32.mrb[0].mxu0
        %v2026 = vadd.f32 0.0, %v2025
        %2027 = vmatprep.mubr.bf16.mxu0 0
        %2028 = vmatmul.mubr.bf16.gmra.mrb[0].mxu0 %v1865
        %v2029 = vpop.f32.mrb[0].mxu0
        %v2030 = vadd.f32 0.0, %v2029
        %v2031 = vpop.f32.mrb[0].mxu0
        %v2032 = vadd.f32 0.0, %v2031
        %v2033 = vpop.f32.mrb[0].mxu0
        %v2034 = vadd.f32 0.0, %v2033
        %v2035 = vpop.f32.mrb[0].mxu0
        %v2036 = vadd.f32 0.0, %v2035
        %2037 = vdwg.mxu0
        %2038 = vmatprep.subr.bf16.mxu0 %v1849
        %2039 = vmatpush1.bf16.msra.mxu0 %v1848
        %2040 = vmatprep.subr.bf16.mxu0 %v1877
        %2041 = vmatpush1.bf16.msra.mxu0 %v1874
        %2042 = vmatprep.subr.bf16.mxu0 0
        %2043 = vmatpush1.bf16.msra.mxu0 0
        %2044 = vmatprep.subr.bf16.mxu0 0
        %2045 = vmatpush1.bf16.msra.mxu0 0
        %2046 = vmatprep.subr.bf16.mxu0 0
        %2047 = vmatpush1.bf16.msra.mxu0 0
        %2048 = vmatprep.subr.bf16.mxu0 0
        %2049 = vmatpush1.bf16.msra.mxu0 0
        %2050 = vmatprep.subr.bf16.mxu0 0
        %2051 = vmatpush1.bf16.msra.mxu0 0
        %2052 = vmatprep.subr.bf16.mxu0 0
        %2053 = vmatpush1.bf16.msra.mxu0 0
        %2054 = vmatprep.subr.bf16.mxu0 0
        %2055 = vmatpush1.bf16.msra.mxu0 0
        %2056 = vmatprep.subr.bf16.mxu0 0
        %2057 = vmatpush1.bf16.msra.mxu0 0
        %2058 = vmatprep.subr.bf16.mxu0 0
        %2059 = vmatpush1.bf16.msra.mxu0 0
        %2060 = vmatprep.subr.bf16.mxu0 0
        %2061 = vmatpush1.bf16.msra.mxu0 0
        %2062 = vmatprep.subr.bf16.mxu0 0
        %2063 = vmatpush1.bf16.msra.mxu0 0
        %2064 = vmatprep.subr.bf16.mxu0 0
        %2065 = vmatpush1.bf16.msra.mxu0 0
        %2066 = vmatprep.subr.bf16.mxu0 0
        %2067 = vmatpush1.bf16.msra.mxu0 0
        %2068 = vmatprep.subr.bf16.mxu0 0
        %2069 = vmatpush1.bf16.msra.mxu0 0
        %2070 = vmatprep.mubr.bf16.mxu0 0
        %2071 = vmatmul.mubr.bf16.gmra.mrb[0].mxu0 %v1287
        %v2072 = vpop.f32.mrb[0].mxu0
        %v2073 = vadd.f32 0.0, %v2072
        %v2074 = vpop.f32.mrb[0].mxu0
        %v2075 = vadd.f32 0.0, %v2074
        %v2076 = vpop.f32.mrb[0].mxu0
        %v2077 = vadd.f32 0.0, %v2076
        %v2078 = vpop.f32.mrb[0].mxu0
        %v2079 = vadd.f32 0.0, %v2078
        %2080 = vmatprep.mubr.bf16.mxu0 0
        %2081 = vmatmul.mubr.bf16.gmra.mrb[0].mxu0 %v1290
        %v2082 = vpop.f32.mrb[0].mxu0
        %v2083 = vadd.f32 0.0, %v2082
        %v2084 = vpop.f32.mrb[0].mxu0
        %v2085 = vadd.f32 0.0, %v2084
        %v2086 = vpop.f32.mrb[0].mxu0
        %v2087 = vadd.f32 0.0, %v2086
        %v2088 = vpop.f32.mrb[0].mxu0
        %v2089 = vadd.f32 0.0, %v2088
        %2090 = vmatprep.mubr.bf16.mxu0 0
        %2091 = vmatmul.mubr.bf16.gmra.mrb[0].mxu0 %v1293
        %v2092 = vpop.f32.mrb[0].mxu0
        %v2093 = vadd.f32 0.0, %v2092
        %v2094 = vpop.f32.mrb[0].mxu0
        %v2095 = vadd.f32 0.0, %v2094
        %v2096 = vpop.f32.mrb[0].mxu0
        %v2097 = vadd.f32 0.0, %v2096
        %v2098 = vpop.f32.mrb[0].mxu0
        %v2099 = vadd.f32 0.0, %v2098
        %2100 = vmatprep.mubr.bf16.mxu0 0
        %2101 = vmatmul.mubr.bf16.gmra.mrb[0].mxu0 %v1296
        %v2102 = vpop.f32.mrb[0].mxu0
        %v2103 = vadd.f32 0.0, %v2102
        %v2104 = vpop.f32.mrb[0].mxu0
        %v2105 = vadd.f32 0.0, %v2104
        %v2106 = vpop.f32.mrb[0].mxu0
        %v2107 = vadd.f32 0.0, %v2106
        %v2108 = vpop.f32.mrb[0].mxu0
        %v2109 = vadd.f32 0.0, %v2108
        %2110 = vmatprep.mubr.bf16.mxu0 0
        %2111 = vmatmul.mubr.bf16.gmra.mrb[0].mxu0 %v1299
        %v2112 = vpop.f32.mrb[0].mxu0
        %v2113 = vadd.f32 0.0, %v2112
        %v2114 = vpop.f32.mrb[0].mxu0
        %v2115 = vadd.f32 0.0, %v2114
        %v2116 = vpop.f32.mrb[0].mxu0
        %v2117 = vadd.f32 0.0, %v2116
        %v2118 = vpop.f32.mrb[0].mxu0
        %v2119 = vadd.f32 0.0, %v2118
        %2120 = vmatprep.mubr.bf16.mxu0 0
        %2121 = vmatmul.mubr.bf16.gmra.mrb[0].mxu0 %v1302
        %v2122 = vpop.f32.mrb[0].mxu0
        %v2123 = vadd.f32 0.0, %v2122
        %v2124 = vpop.f32.mrb[0].mxu0
        %v2125 = vadd.f32 0.0, %v2124
        %v2126 = vpop.f32.mrb[0].mxu0
        %v2127 = vadd.f32 0.0, %v2126
        %v2128 = vpop.f32.mrb[0].mxu0
        %v2129 = vadd.f32 0.0, %v2128
        %2130 = vmatprep.mubr.bf16.mxu0 0
        %2131 = vmatmul.mubr.bf16.gmra.mrb[0].mxu0 %v1305
        %v2132 = vpop.f32.mrb[0].mxu0
        %v2133 = vadd.f32 0.0, %v2132
        %v2134 = vpop.f32.mrb[0].mxu0
        %v2135 = vadd.f32 0.0, %v2134
        %v2136 = vpop.f32.mrb[0].mxu0
        %v2137 = vadd.f32 0.0, %v2136
        %v2138 = vpop.f32.mrb[0].mxu0
        %v2139 = vadd.f32 0.0, %v2138
        %2140 = vmatprep.mubr.bf16.mxu0 0
        %2141 = vmatmul.mubr.bf16.gmra.mrb[0].mxu0 %v1308
        %v2142 = vpop.f32.mrb[0].mxu0
        %v2143 = vadd.f32 0.0, %v2142
        %v2144 = vpop.f32.mrb[0].mxu0
        %v2145 = vadd.f32 0.0, %v2144
        %v2146 = vpop.f32.mrb[0].mxu0
        %v2147 = vadd.f32 0.0, %v2146
        %v2148 = vpop.f32.mrb[0].mxu0
        %v2149 = vadd.f32 0.0, %v2148
        %2150 = vmatprep.mubr.bf16.mxu0 0
        %2151 = vmatmul.mubr.bf16.gmra.mrb[0].mxu0 %v1311
        %v2152 = vpop.f32.mrb[0].mxu0
        %v2153 = vadd.f32 0.0, %v2152
        %v2154 = vpop.f32.mrb[0].mxu0
        %v2155 = vadd.f32 0.0, %v2154
        %v2156 = vpop.f32.mrb[0].mxu0
        %v2157 = vadd.f32 0.0, %v2156
        %v2158 = vpop.f32.mrb[0].mxu0
        %v2159 = vadd.f32 0.0, %v2158
        %2160 = vmatprep.mubr.bf16.mxu0 0
        %2161 = vmatmul.mubr.bf16.gmra.mrb[0].mxu0 %v1314
        %v2162 = vpop.f32.mrb[0].mxu0
        %v2163 = vadd.f32 0.0, %v2162
        %v2164 = vpop.f32.mrb[0].mxu0
        %v2165 = vadd.f32 0.0, %v2164
        %v2166 = vpop.f32.mrb[0].mxu0
        %v2167 = vadd.f32 0.0, %v2166
        %v2168 = vpop.f32.mrb[0].mxu0
        %v2169 = vadd.f32 0.0, %v2168
        %2170 = vmatprep.mubr.bf16.mxu0 0
        %2171 = vmatmul.mubr.bf16.gmra.mrb[0].mxu0 %v1317
        %v2172 = vpop.f32.mrb[0].mxu0
        %v2173 = vadd.f32 0.0, %v2172
        %v2174 = vpop.f32.mrb[0].mxu0
        %v2175 = vadd.f32 0.0, %v2174
        %v2176 = vpop.f32.mrb[0].mxu0
        %v2177 = vadd.f32 0.0, %v2176
        %v2178 = vpop.f32.mrb[0].mxu0
        %v2179 = vadd.f32 0.0, %v2178
        %2180 = vmatprep.mubr.bf16.mxu0 0
        %2181 = vmatmul.mubr.bf16.gmra.mrb[0].mxu0 %v1865
        %v2182 = vpop.f32.mrb[0].mxu0
        %v2183 = vadd.f32 0.0, %v2182
        %v2184 = vpop.f32.mrb[0].mxu0
        %v2185 = vadd.f32 0.0, %v2184
        %v2186 = vpop.f32.mrb[0].mxu0
        %v2187 = vadd.f32 0.0, %v2186
        %v2188 = vpop.f32.mrb[0].mxu0
        %v2189 = vadd.f32 0.0, %v2188
        %2190 = vdwg.mxu0
        %2191 = vmatprep.subr.bf16.mxu0 %v1851
        %2192 = vmatpush1.bf16.msra.mxu0 %v1850
        %2193 = vmatprep.subr.bf16.mxu0 %v1883
        %2194 = vmatpush1.bf16.msra.mxu0 %v1880
        %2195 = vmatprep.subr.bf16.mxu0 0
        %2196 = vmatpush1.bf16.msra.mxu0 0
        %2197 = vmatprep.subr.bf16.mxu0 0
        %2198 = vmatpush1.bf16.msra.mxu0 0
        %2199 = vmatprep.subr.bf16.mxu0 0
        %2200 = vmatpush1.bf16.msra.mxu0 0
        %2201 = vmatprep.subr.bf16.mxu0 0
        %2202 = vmatpush1.bf16.msra.mxu0 0
        %2203 = vmatprep.subr.bf16.mxu0 0
        %2204 = vmatpush1.bf16.msra.mxu0 0
        %2205 = vmatprep.subr.bf16.mxu0 0
        %2206 = vmatpush1.bf16.msra.mxu0 0
        %2207 = vmatprep.subr.bf16.mxu0 0
        %2208 = vmatpush1.bf16.msra.mxu0 0
        %2209 = vmatprep.subr.bf16.mxu0 0
        %2210 = vmatpush1.bf16.msra.mxu0 0
        %2211 = vmatprep.subr.bf16.mxu0 0
        %2212 = vmatpush1.bf16.msra.mxu0 0
        %2213 = vmatprep.subr.bf16.mxu0 0
        %2214 = vmatpush1.bf16.msra.mxu0 0
        %2215 = vmatprep.subr.bf16.mxu0 0
        %2216 = vmatpush1.bf16.msra.mxu0 0
        %2217 = vmatprep.subr.bf16.mxu0 0
        %2218 = vmatpush1.bf16.msra.mxu0 0
        %2219 = vmatprep.subr.bf16.mxu0 0
        %2220 = vmatpush1.bf16.msra.mxu0 0
        %2221 = vmatprep.subr.bf16.mxu0 0
        %2222 = vmatpush1.bf16.msra.mxu0 0
        %2223 = vmatprep.mubr.bf16.mxu0 0
        %2224 = vmatmul.mubr.bf16.gmra.mrb[0].mxu0 %v1287
        %v2225 = vpop.f32.mrb[0].mxu0
        %v2226 = vadd.f32 0.0, %v2225
        %v2227 = vpop.f32.mrb[0].mxu0
        %v2228 = vadd.f32 0.0, %v2227
        %v2229 = vpop.f32.mrb[0].mxu0
        %v2230 = vadd.f32 0.0, %v2229
        %v2231 = vpop.f32.mrb[0].mxu0
        %v2232 = vadd.f32 0.0, %v2231
        %2233 = vmatprep.mubr.bf16.mxu0 0
        %2234 = vmatmul.mubr.bf16.gmra.mrb[0].mxu0 %v1290
        %v2235 = vpop.f32.mrb[0].mxu0
        %v2236 = vadd.f32 0.0, %v2235
        %v2237 = vpop.f32.mrb[0].mxu0
        %v2238 = vadd.f32 0.0, %v2237
        %v2239 = vpop.f32.mrb[0].mxu0
        %v2240 = vadd.f32 0.0, %v2239
        %v2241 = vpop.f32.mrb[0].mxu0
        %v2242 = vadd.f32 0.0, %v2241
        %2243 = vmatprep.mubr.bf16.mxu0 0
        %2244 = vmatmul.mubr.bf16.gmra.mrb[0].mxu0 %v1293
        %v2245 = vpop.f32.mrb[0].mxu0
        %v2246 = vadd.f32 0.0, %v2245
        %v2247 = vpop.f32.mrb[0].mxu0
        %v2248 = vadd.f32 0.0, %v2247
        %v2249 = vpop.f32.mrb[0].mxu0
        %v2250 = vadd.f32 0.0, %v2249
        %v2251 = vpop.f32.mrb[0].mxu0
        %v2252 = vadd.f32 0.0, %v2251
        %2253 = vmatprep.mubr.bf16.mxu0 0
        %2254 = vmatmul.mubr.bf16.gmra.mrb[0].mxu0 %v1296
        %v2255 = vpop.f32.mrb[0].mxu0
        %v2256 = vadd.f32 0.0, %v2255
        %v2257 = vpop.f32.mrb[0].mxu0
        %v2258 = vadd.f32 0.0, %v2257
        %v2259 = vpop.f32.mrb[0].mxu0
        %v2260 = vadd.f32 0.0, %v2259
        %v2261 = vpop.f32.mrb[0].mxu0
        %v2262 = vadd.f32 0.0, %v2261
        %2263 = vmatprep.mubr.bf16.mxu0 0
        %2264 = vmatmul.mubr.bf16.gmra.mrb[0].mxu0 %v1299
        %v2265 = vpop.f32.mrb[0].mxu0
        %v2266 = vadd.f32 0.0, %v2265
        %v2267 = vpop.f32.mrb[0].mxu0
        %v2268 = vadd.f32 0.0, %v2267
        %v2269 = vpop.f32.mrb[0].mxu0
        %v2270 = vadd.f32 0.0, %v2269
        %v2271 = vpop.f32.mrb[0].mxu0
        %v2272 = vadd.f32 0.0, %v2271
        %2273 = vmatprep.mubr.bf16.mxu0 0
        %2274 = vmatmul.mubr.bf16.gmra.mrb[0].mxu0 %v1302
        %v2275 = vpop.f32.mrb[0].mxu0
        %v2276 = vadd.f32 0.0, %v2275
        %v2277 = vpop.f32.mrb[0].mxu0
        %v2278 = vadd.f32 0.0, %v2277
        %v2279 = vpop.f32.mrb[0].mxu0
        %v2280 = vadd.f32 0.0, %v2279
        %v2281 = vpop.f32.mrb[0].mxu0
        %v2282 = vadd.f32 0.0, %v2281
        %2283 = vmatprep.mubr.bf16.mxu0 0
        %2284 = vmatmul.mubr.bf16.gmra.mrb[0].mxu0 %v1305
        %v2285 = vpop.f32.mrb[0].mxu0
        %v2286 = vadd.f32 0.0, %v2285
        %v2287 = vpop.f32.mrb[0].mxu0
        %v2288 = vadd.f32 0.0, %v2287
        %v2289 = vpop.f32.mrb[0].mxu0
        %v2290 = vadd.f32 0.0, %v2289
        %v2291 = vpop.f32.mrb[0].mxu0
        %v2292 = vadd.f32 0.0, %v2291
        %2293 = vmatprep.mubr.bf16.mxu0 0
        %2294 = vmatmul.mubr.bf16.gmra.mrb[0].mxu0 %v1308
        %v2295 = vpop.f32.mrb[0].mxu0
        %v2296 = vadd.f32 0.0, %v2295
        %v2297 = vpop.f32.mrb[0].mxu0
        %v2298 = vadd.f32 0.0, %v2297
        %v2299 = vpop.f32.mrb[0].mxu0
        %v2300 = vadd.f32 0.0, %v2299
        %v2301 = vpop.f32.mrb[0].mxu0
        %v2302 = vadd.f32 0.0, %v2301
        %2303 = vmatprep.mubr.bf16.mxu0 0
        %2304 = vmatmul.mubr.bf16.gmra.mrb[0].mxu0 %v1311
        %v2305 = vpop.f32.mrb[0].mxu0
        %v2306 = vadd.f32 0.0, %v2305
        %v2307 = vpop.f32.mrb[0].mxu0
        %v2308 = vadd.f32 0.0, %v2307
        %v2309 = vpop.f32.mrb[0].mxu0
        %v2310 = vadd.f32 0.0, %v2309
        %v2311 = vpop.f32.mrb[0].mxu0
        %v2312 = vadd.f32 0.0, %v2311
        %2313 = vmatprep.mubr.bf16.mxu0 0
        %2314 = vmatmul.mubr.bf16.gmra.mrb[0].mxu0 %v1314
        %v2315 = vpop.f32.mrb[0].mxu0
        %v2316 = vadd.f32 0.0, %v2315
        %v2317 = vpop.f32.mrb[0].mxu0
        %v2318 = vadd.f32 0.0, %v2317
        %v2319 = vpop.f32.mrb[0].mxu0
        %v2320 = vadd.f32 0.0, %v2319
        %v2321 = vpop.f32.mrb[0].mxu0
        %v2322 = vadd.f32 0.0, %v2321
        %2323 = vmatprep.mubr.bf16.mxu0 0
        %2324 = vmatmul.mubr.bf16.gmra.mrb[0].mxu0 %v1317
        %v2325 = vpop.f32.mrb[0].mxu0
        %v2326 = vadd.f32 0.0, %v2325
        %v2327 = vpop.f32.mrb[0].mxu0
        %v2328 = vadd.f32 0.0, %v2327
        %v2329 = vpop.f32.mrb[0].mxu0
        %v2330 = vadd.f32 0.0, %v2329
        %v2331 = vpop.f32.mrb[0].mxu0
        %v2332 = vadd.f32 0.0, %v2331
        %2333 = vmatprep.mubr.bf16.mxu0 0
        %2334 = vmatmul.mubr.bf16.gmra.mrb[0].mxu0 %v1865
        %v2335 = vpop.f32.mrb[0].mxu0
        %v2336 = vadd.f32 0.0, %v2335
        %v2337 = vpop.f32.mrb[0].mxu0
        %v2338 = vadd.f32 0.0, %v2337
        %v2339 = vpop.f32.mrb[0].mxu0
        %v2340 = vadd.f32 0.0, %v2339
        %v2341 = vpop.f32.mrb[0].mxu0
        %v2342 = vadd.f32 0.0, %v2341
        %2343 = vdwg.mxu0
        %v2344 = vadd.f32 %v1372, %v1920
        %v2345 = vadd.f32 %v1374, %v1922
        %v2346 = vadd.f32 %v1525, %v2073
        %v2347 = vadd.f32 %v1527, %v2075
        %v2348 = vadd.f32 %v1678, %v2226
        %v2349 = vadd.f32 %v1680, %v2228
        %v2350 = vadd.f32 %v1376, %v1924
        %v2351 = vadd.f32 %v1378, %v1926
        %v2352 = vadd.f32 %v1529, %v2077
        %v2353 = vadd.f32 %v1531, %v2079
        %v2354 = vadd.f32 %v1682, %v2230
        %v2355 = vadd.f32 %v1684, %v2232
        %v2356 = vadd.f32 %v1382, %v1930
        %v2357 = vadd.f32 %v1384, %v1932
        %v2358 = vadd.f32 %v1535, %v2083
        %v2359 = vadd.f32 %v1537, %v2085
        %v2360 = vadd.f32 %v1688, %v2236
        %v2361 = vadd.f32 %v1690, %v2238
        %v2362 = vadd.f32 %v1386, %v1934
        %v2363 = vadd.f32 %v1388, %v1936
        %v2364 = vadd.f32 %v1539, %v2087
        %v2365 = vadd.f32 %v1541, %v2089
        %v2366 = vadd.f32 %v1692, %v2240
        %v2367 = vadd.f32 %v1694, %v2242
        %v2368 = vadd.f32 %v1392, %v1940
        %v2369 = vadd.f32 %v1394, %v1942
        %v2370 = vadd.f32 %v1545, %v2093
        %v2371 = vadd.f32 %v1547, %v2095
        %v2372 = vadd.f32 %v1698, %v2246
        %v2373 = vadd.f32 %v1700, %v2248
        %v2374 = vadd.f32 %v1396, %v1944
        %v2375 = vadd.f32 %v1398, %v1946
        %v2376 = vadd.f32 %v1549, %v2097
        %v2377 = vadd.f32 %v1551, %v2099
        %v2378 = vadd.f32 %v1702, %v2250
        %v2379 = vadd.f32 %v1704, %v2252
        %v2380 = vadd.f32 %v1402, %v1950
        %v2381 = vadd.f32 %v1404, %v1952
        %v2382 = vadd.f32 %v1555, %v2103
        %v2383 = vadd.f32 %v1557, %v2105
        %v2384 = vadd.f32 %v1708, %v2256
        %v2385 = vadd.f32 %v1710, %v2258
        %v2386 = vadd.f32 %v1406, %v1954
        %v2387 = vadd.f32 %v1408, %v1956
        %v2388 = vadd.f32 %v1559, %v2107
        %v2389 = vadd.f32 %v1561, %v2109
        %v2390 = vadd.f32 %v1712, %v2260
        %v2391 = vadd.f32 %v1714, %v2262
        %v2392 = vadd.f32 %v1412, %v1960
        %v2393 = vadd.f32 %v1414, %v1962
        %v2394 = vadd.f32 %v1565, %v2113
        %v2395 = vadd.f32 %v1567, %v2115
        %v2396 = vadd.f32 %v1718, %v2266
        %v2397 = vadd.f32 %v1720, %v2268
        %v2398 = vadd.f32 %v1416, %v1964
        %v2399 = vadd.f32 %v1418, %v1966
        %v2400 = vadd.f32 %v1569, %v2117
        %v2401 = vadd.f32 %v1571, %v2119
        %v2402 = vadd.f32 %v1722, %v2270
        %v2403 = vadd.f32 %v1724, %v2272
        %v2404 = vadd.f32 %v1422, %v1970
        %v2405 = vadd.f32 %v1424, %v1972
        %v2406 = vadd.f32 %v1575, %v2123
        %v2407 = vadd.f32 %v1577, %v2125
        %v2408 = vadd.f32 %v1728, %v2276
        %v2409 = vadd.f32 %v1730, %v2278
        %v2410 = vadd.f32 %v1426, %v1974
        %v2411 = vadd.f32 %v1428, %v1976
        %v2412 = vadd.f32 %v1579, %v2127
        %v2413 = vadd.f32 %v1581, %v2129
        %v2414 = vadd.f32 %v1732, %v2280
        %v2415 = vadd.f32 %v1734, %v2282
        %v2416 = vadd.f32 %v1432, %v1980
        %v2417 = vadd.f32 %v1434, %v1982
        %v2418 = vadd.f32 %v1585, %v2133
        %v2419 = vadd.f32 %v1587, %v2135
        %v2420 = vadd.f32 %v1738, %v2286
        %v2421 = vadd.f32 %v1740, %v2288
        %v2422 = vadd.f32 %v1436, %v1984
        %v2423 = vadd.f32 %v1438, %v1986
        %v2424 = vadd.f32 %v1589, %v2137
        %v2425 = vadd.f32 %v1591, %v2139
        %v2426 = vadd.f32 %v1742, %v2290
        %v2427 = vadd.f32 %v1744, %v2292
        %v2428 = vadd.f32 %v1442, %v1990
        %v2429 = vadd.f32 %v1444, %v1992
        %v2430 = vadd.f32 %v1595, %v2143
        %v2431 = vadd.f32 %v1597, %v2145
        %v2432 = vadd.f32 %v1748, %v2296
        %v2433 = vadd.f32 %v1750, %v2298
        %v2434 = vadd.f32 %v1446, %v1994
        %v2435 = vadd.f32 %v1448, %v1996
        %v2436 = vadd.f32 %v1599, %v2147
        %v2437 = vadd.f32 %v1601, %v2149
        %v2438 = vadd.f32 %v1752, %v2300
        %v2439 = vadd.f32 %v1754, %v2302
        %v2440 = vadd.f32 %v1452, %v2000
        %v2441 = vadd.f32 %v1454, %v2002
        %v2442 = vadd.f32 %v1605, %v2153
        %v2443 = vadd.f32 %v1607, %v2155
        %v2444 = vadd.f32 %v1758, %v2306
        %v2445 = vadd.f32 %v1760, %v2308
        %v2446 = vadd.f32 %v1456, %v2004
        %v2447 = vadd.f32 %v1458, %v2006
        %v2448 = vadd.f32 %v1609, %v2157
        %v2449 = vadd.f32 %v1611, %v2159
        %v2450 = vadd.f32 %v1762, %v2310
        %v2451 = vadd.f32 %v1764, %v2312
        %v2452 = vadd.f32 %v1462, %v2010
        %v2453 = vadd.f32 %v1464, %v2012
        %v2454 = vadd.f32 %v1615, %v2163
        %v2455 = vadd.f32 %v1617, %v2165
        %v2456 = vadd.f32 %v1768, %v2316
        %v2457 = vadd.f32 %v1770, %v2318
        %v2458 = vadd.f32 %v1466, %v2014
        %v2459 = vadd.f32 %v1468, %v2016
        %v2460 = vadd.f32 %v1619, %v2167
        %v2461 = vadd.f32 %v1621, %v2169
        %v2462 = vadd.f32 %v1772, %v2320
        %v2463 = vadd.f32 %v1774, %v2322
        %v2464 = vadd.f32 %v1472, %v2020
        %v2465 = vadd.f32 %v1474, %v2022
        %v2466 = vadd.f32 %v1625, %v2173
        %v2467 = vadd.f32 %v1627, %v2175
        %v2468 = vadd.f32 %v1778, %v2326
        %v2469 = vadd.f32 %v1780, %v2328
        %v2470 = vadd.f32 %v1476, %v2024
        %v2471 = vadd.f32 %v1478, %v2026
        %v2472 = vadd.f32 %v1629, %v2177
        %v2473 = vadd.f32 %v1631, %v2179
        %v2474 = vadd.f32 %v1782, %v2330
        %v2475 = vadd.f32 %v1784, %v2332
        %v2476 = vadd.f32 %v1482, %v2030
        %v2477 = vadd.f32 %v1484, %v2032
        %v2478 = vadd.f32 %v1635, %v2183
        %v2479 = vadd.f32 %v1637, %v2185
        %v2480 = vadd.f32 %v1788, %v2336
        %v2481 = vadd.f32 %v1790, %v2338
        %v2482 = vadd.f32 %v1486, %v2034
        %v2483 = vadd.f32 %v1488, %v2036
        %v2484 = vadd.f32 %v1639, %v2187
        %v2485 = vadd.f32 %v1641, %v2189
        %v2486 = vadd.f32 %v1792, %v2340
        %v2487 = vadd.f32 %v1794, %v2342
        %v2488 = vpack.c.bf16 %v609, %v608
        %s2489 = scalar_lea.vmem [#allocation3], 288
        %v2490 = vld [vmem:[%s2489] sm:$0xff]
        %v2491 = vld [vmem:[%s2489 + $0x8] sm:$0xff]
        %v2492 = vld [vmem:[%s2489 + $0x10] sm:$0xff]
        %v2493 = vld [vmem:[%s2489 + $0x18] sm:$0xff]
        %v2494 = vld [vmem:[%s2489 + $0x20] sm:$0xff]
        %v2495 = vld [vmem:[%s2489 + $0x28] sm:$0xff]
        %v2496 = vld [vmem:[%s2489 + $0x30] sm:$0xff]
        %v2497 = vld [vmem:[%s2489 + $0x38] sm:$0xff]
        %v2498 = vld [vmem:[%s2489 + $0x40] sm:$0xff]
        %v2499 = vld [vmem:[%s2489 + $0x48] sm:$0x33]
        %v2500 = vld [vmem:[%s2489 + $0x50] sm:$0x33]
        %v2501 = vld [vmem:[%s2489 + $0x58] sm:$0x33]
        %v2514 = vunpack.c.l.b16 %v2490
        %v2515 = vunpack.c.h.b16 %v2490
        %v2516 = vunpack.c.l.b16 %v2491
        %v2517 = vunpack.c.h.b16 %v2491
        %v2518 = vunpack.c.l.b16 %v2492
        %v2519 = vunpack.c.h.b16 %v2492
        %v2520 = vunpack.c.l.b16 %v2493
        %v2521 = vunpack.c.h.b16 %v2493
        %v2522 = vunpack.c.l.b16 %v2494
        %v2523 = vunpack.c.h.b16 %v2494
        %v2524 = vunpack.c.l.b16 %v2495
        %v2525 = vunpack.c.h.b16 %v2495
        %v2526 = vunpack.c.l.b16 %v2496
        %v2527 = vunpack.c.h.b16 %v2496
        %v2528 = vunpack.c.l.b16 %v2497
        %v2529 = vunpack.c.h.b16 %v2497
        %v2530 = vunpack.c.l.b16 %v2498
        %v2531 = vunpack.c.h.b16 %v2498
        %v2532 = vunpack.c.l.b16 %v2499
        %v2533 = vunpack.c.h.b16 %v2499
        %v2534 = vunpack.c.l.b16 %v2500
        %v2535 = vunpack.c.h.b16 %v2500
        %v2536 = vunpack.c.l.b16 %v2501
        %v2537 = vunpack.c.h.b16 %v2501
        %v2538 = vpack.c.b16 %v2520, %v2514
        %v2539 = vpack.c.b16 %v2521, %v2515
        %v2540 = vpack.c.b16 %v2522, %v2516
        %v2541 = vpack.c.b16 %v2523, %v2517
        %v2542 = vpack.c.b16 %v2524, %v2518
        %v2543 = vpack.c.b16 %v2525, %v2519
        %v2544 = vpack.c.b16 %v2532, %v2526
        %v2545 = vpack.c.b16 %v2533, %v2527
        %v2546 = vpack.c.b16 %v2534, %v2528
        %v2547 = vpack.c.b16 %v2535, %v2529
        %v2548 = vpack.c.b16 %v2536, %v2530
        %v2549 = vpack.c.b16 %v2537, %v2531
        %v2557 = vsel %vm714, %v2488, 0
        %v2560 = vsel %vm751, %v2544, 0
        %v2563 = vsel %vm751, %v2545, 0
        %v2566 = vsel %vm751, %v2546, 0
        %v2569 = vsel %vm751, %v2547, 0
        %v2572 = vsel %vm751, %v2548, 0
        %v2575 = vsel %vm751, %v2549, 0
        %2577 = vmatprep.subr.bf16.mxu0 %v2539
        %2578 = vmatpush1.bf16.msra.mxu0 %v2538
        %2579 = vmatprep.subr.bf16.mxu0 %v2563
        %2580 = vmatpush1.bf16.msra.mxu0 %v2560
        %2581 = vmatprep.subr.bf16.mxu0 0
        %2582 = vmatpush1.bf16.msra.mxu0 0
        %2583 = vmatprep.subr.bf16.mxu0 0
        %2584 = vmatpush1.bf16.msra.mxu0 0
        %2585 = vmatprep.subr.bf16.mxu0 0
        %2586 = vmatpush1.bf16.msra.mxu0 0
        %2587 = vmatprep.subr.bf16.mxu0 0
        %2588 = vmatpush1.bf16.msra.mxu0 0
        %2589 = vmatprep.subr.bf16.mxu0 0
        %2590 = vmatpush1.bf16.msra.mxu0 0
        %2591 = vmatprep.subr.bf16.mxu0 0
        %2592 = vmatpush1.bf16.msra.mxu0 0
        %2593 = vmatprep.subr.bf16.mxu0 0
        %2594 = vmatpush1.bf16.msra.mxu0 0
        %2595 = vmatprep.subr.bf16.mxu0 0
        %2596 = vmatpush1.bf16.msra.mxu0 0
        %2597 = vmatprep.subr.bf16.mxu0 0
        %2598 = vmatpush1.bf16.msra.mxu0 0
        %2599 = vmatprep.subr.bf16.mxu0 0
        %2600 = vmatpush1.bf16.msra.mxu0 0
        %2601 = vmatprep.subr.bf16.mxu0 0
        %2602 = vmatpush1.bf16.msra.mxu0 0
        %2603 = vmatprep.subr.bf16.mxu0 0
        %2604 = vmatpush1.bf16.msra.mxu0 0
        %2605 = vmatprep.subr.bf16.mxu0 0
        %2606 = vmatpush1.bf16.msra.mxu0 0
        %2607 = vmatprep.subr.bf16.mxu0 0
        %2608 = vmatpush1.bf16.msra.mxu0 0
        %2609 = vmatprep.mubr.bf16.mxu0 0
        %2610 = vmatmul.mubr.bf16.gmra.mrb[0].mxu0 %v719
        %v2611 = vpop.f32.mrb[0].mxu0
        %v2612 = vadd.f32 0.0, %v2611
        %v2613 = vpop.f32.mrb[0].mxu0
        %v2614 = vadd.f32 0.0, %v2613
        %v2615 = vpop.f32.mrb[0].mxu0
        %v2616 = vadd.f32 0.0, %v2615
        %v2617 = vpop.f32.mrb[0].mxu0
        %v2618 = vadd.f32 0.0, %v2617
        %2619 = vmatprep.mubr.bf16.mxu0 0
        %2620 = vmatmul.mubr.bf16.gmra.mrb[0].mxu0 %v722
        %v2621 = vpop.f32.mrb[0].mxu0
        %v2622 = vadd.f32 0.0, %v2621
        %v2623 = vpop.f32.mrb[0].mxu0
        %v2624 = vadd.f32 0.0, %v2623
        %v2625 = vpop.f32.mrb[0].mxu0
        %v2626 = vadd.f32 0.0, %v2625
        %v2627 = vpop.f32.mrb[0].mxu0
        %v2628 = vadd.f32 0.0, %v2627
        %2629 = vmatprep.mubr.bf16.mxu0 0
        %2630 = vmatmul.mubr.bf16.gmra.mrb[0].mxu0 %v725
        %v2631 = vpop.f32.mrb[0].mxu0
        %v2632 = vadd.f32 0.0, %v2631
        %v2633 = vpop.f32.mrb[0].mxu0
        %v2634 = vadd.f32 0.0, %v2633
        %v2635 = vpop.f32.mrb[0].mxu0
        %v2636 = vadd.f32 0.0, %v2635
        %v2637 = vpop.f32.mrb[0].mxu0
        %v2638 = vadd.f32 0.0, %v2637
        %2639 = vmatprep.mubr.bf16.mxu0 0
        %2640 = vmatmul.mubr.bf16.gmra.mrb[0].mxu0 %v728
        %v2641 = vpop.f32.mrb[0].mxu0
        %v2642 = vadd.f32 0.0, %v2641
        %v2643 = vpop.f32.mrb[0].mxu0
        %v2644 = vadd.f32 0.0, %v2643
        %v2645 = vpop.f32.mrb[0].mxu0
        %v2646 = vadd.f32 0.0, %v2645
        %v2647 = vpop.f32.mrb[0].mxu0
        %v2648 = vadd.f32 0.0, %v2647
        %2649 = vmatprep.mubr.bf16.mxu0 0
        %2650 = vmatmul.mubr.bf16.gmra.mrb[0].mxu0 %v731
        %v2651 = vpop.f32.mrb[0].mxu0
        %v2652 = vadd.f32 0.0, %v2651
        %v2653 = vpop.f32.mrb[0].mxu0
        %v2654 = vadd.f32 0.0, %v2653
        %v2655 = vpop.f32.mrb[0].mxu0
        %v2656 = vadd.f32 0.0, %v2655
        %v2657 = vpop.f32.mrb[0].mxu0
        %v2658 = vadd.f32 0.0, %v2657
        %2659 = vmatprep.mubr.bf16.mxu0 0
        %2660 = vmatmul.mubr.bf16.gmra.mrb[0].mxu0 %v734
        %v2661 = vpop.f32.mrb[0].mxu0
        %v2662 = vadd.f32 0.0, %v2661
        %v2663 = vpop.f32.mrb[0].mxu0
        %v2664 = vadd.f32 0.0, %v2663
        %v2665 = vpop.f32.mrb[0].mxu0
        %v2666 = vadd.f32 0.0, %v2665
        %v2667 = vpop.f32.mrb[0].mxu0
        %v2668 = vadd.f32 0.0, %v2667
        %2669 = vmatprep.mubr.bf16.mxu0 0
        %2670 = vmatmul.mubr.bf16.gmra.mrb[0].mxu0 %v737
        %v2671 = vpop.f32.mrb[0].mxu0
        %v2672 = vadd.f32 0.0, %v2671
        %v2673 = vpop.f32.mrb[0].mxu0
        %v2674 = vadd.f32 0.0, %v2673
        %v2675 = vpop.f32.mrb[0].mxu0
        %v2676 = vadd.f32 0.0, %v2675
        %v2677 = vpop.f32.mrb[0].mxu0
        %v2678 = vadd.f32 0.0, %v2677
        %2679 = vmatprep.mubr.bf16.mxu0 0
        %2680 = vmatmul.mubr.bf16.gmra.mrb[0].mxu0 %v740
        %v2681 = vpop.f32.mrb[0].mxu0
        %v2682 = vadd.f32 0.0, %v2681
        %v2683 = vpop.f32.mrb[0].mxu0
        %v2684 = vadd.f32 0.0, %v2683
        %v2685 = vpop.f32.mrb[0].mxu0
        %v2686 = vadd.f32 0.0, %v2685
        %v2687 = vpop.f32.mrb[0].mxu0
        %v2688 = vadd.f32 0.0, %v2687
        %2689 = vmatprep.mubr.bf16.mxu0 0
        %2690 = vmatmul.mubr.bf16.gmra.mrb[0].mxu0 %v743
        %v2691 = vpop.f32.mrb[0].mxu0
        %v2692 = vadd.f32 0.0, %v2691
        %v2693 = vpop.f32.mrb[0].mxu0
        %v2694 = vadd.f32 0.0, %v2693
        %v2695 = vpop.f32.mrb[0].mxu0
        %v2696 = vadd.f32 0.0, %v2695
        %v2697 = vpop.f32.mrb[0].mxu0
        %v2698 = vadd.f32 0.0, %v2697
        %2699 = vmatprep.mubr.bf16.mxu0 0
        %2700 = vmatmul.mubr.bf16.gmra.mrb[0].mxu0 %v746
        %v2701 = vpop.f32.mrb[0].mxu0
        %v2702 = vadd.f32 0.0, %v2701
        %v2703 = vpop.f32.mrb[0].mxu0
        %v2704 = vadd.f32 0.0, %v2703
        %v2705 = vpop.f32.mrb[0].mxu0
        %v2706 = vadd.f32 0.0, %v2705
        %v2707 = vpop.f32.mrb[0].mxu0
        %v2708 = vadd.f32 0.0, %v2707
        %2709 = vmatprep.mubr.bf16.mxu0 0
        %2710 = vmatmul.mubr.bf16.gmra.mrb[0].mxu0 %v749
        %v2711 = vpop.f32.mrb[0].mxu0
        %v2712 = vadd.f32 0.0, %v2711
        %v2713 = vpop.f32.mrb[0].mxu0
        %v2714 = vadd.f32 0.0, %v2713
        %v2715 = vpop.f32.mrb[0].mxu0
        %v2716 = vadd.f32 0.0, %v2715
        %v2717 = vpop.f32.mrb[0].mxu0
        %v2718 = vadd.f32 0.0, %v2717
        %2719 = vmatprep.mubr.bf16.mxu0 0
        %2720 = vmatmul.mubr.bf16.gmra.mrb[0].mxu0 %v2557
        %v2721 = vpop.f32.mrb[0].mxu0
        %v2722 = vadd.f32 0.0, %v2721
        %v2723 = vpop.f32.mrb[0].mxu0
        %v2724 = vadd.f32 0.0, %v2723
        %v2725 = vpop.f32.mrb[0].mxu0
        %v2726 = vadd.f32 0.0, %v2725
        %v2727 = vpop.f32.mrb[0].mxu0
        %v2728 = vadd.f32 0.0, %v2727
        %2729 = vdwg.mxu0
        %2730 = vmatprep.subr.bf16.mxu0 %v2541
        %2731 = vmatpush1.bf16.msra.mxu0 %v2540
        %2732 = vmatprep.subr.bf16.mxu0 %v2569
        %2733 = vmatpush1.bf16.msra.mxu0 %v2566
        %2734 = vmatprep.subr.bf16.mxu0 0
        %2735 = vmatpush1.bf16.msra.mxu0 0
        %2736 = vmatprep.subr.bf16.mxu0 0
        %2737 = vmatpush1.bf16.msra.mxu0 0
        %2738 = vmatprep.subr.bf16.mxu0 0
        %2739 = vmatpush1.bf16.msra.mxu0 0
        %2740 = vmatprep.subr.bf16.mxu0 0
        %2741 = vmatpush1.bf16.msra.mxu0 0
        %2742 = vmatprep.subr.bf16.mxu0 0
        %2743 = vmatpush1.bf16.msra.mxu0 0
        %2744 = vmatprep.subr.bf16.mxu0 0
        %2745 = vmatpush1.bf16.msra.mxu0 0
        %2746 = vmatprep.subr.bf16.mxu0 0
        %2747 = vmatpush1.bf16.msra.mxu0 0
        %2748 = vmatprep.subr.bf16.mxu0 0
        %2749 = vmatpush1.bf16.msra.mxu0 0
        %2750 = vmatprep.subr.bf16.mxu0 0
        %2751 = vmatpush1.bf16.msra.mxu0 0
        %2752 = vmatprep.subr.bf16.mxu0 0
        %2753 = vmatpush1.bf16.msra.mxu0 0
        %2754 = vmatprep.subr.bf16.mxu0 0
        %2755 = vmatpush1.bf16.msra.mxu0 0
        %2756 = vmatprep.subr.bf16.mxu0 0
        %2757 = vmatpush1.bf16.msra.mxu0 0
        %2758 = vmatprep.subr.bf16.mxu0 0
        %2759 = vmatpush1.bf16.msra.mxu0 0
        %2760 = vmatprep.subr.bf16.mxu0 0
        %2761 = vmatpush1.bf16.msra.mxu0 0
        %2762 = vmatprep.mubr.bf16.mxu0 0
        %2763 = vmatmul.mubr.bf16.gmra.mrb[0].mxu0 %v719
        %v2764 = vpop.f32.mrb[0].mxu0
        %v2765 = vadd.f32 0.0, %v2764
        %v2766 = vpop.f32.mrb[0].mxu0
        %v2767 = vadd.f32 0.0, %v2766
        %v2768 = vpop.f32.mrb[0].mxu0
        %v2769 = vadd.f32 0.0, %v2768
        %v2770 = vpop.f32.mrb[0].mxu0
        %v2771 = vadd.f32 0.0, %v2770
        %2772 = vmatprep.mubr.bf16.mxu0 0
        %2773 = vmatmul.mubr.bf16.gmra.mrb[0].mxu0 %v722
        %v2774 = vpop.f32.mrb[0].mxu0
        %v2775 = vadd.f32 0.0, %v2774
        %v2776 = vpop.f32.mrb[0].mxu0
        %v2777 = vadd.f32 0.0, %v2776
        %v2778 = vpop.f32.mrb[0].mxu0
        %v2779 = vadd.f32 0.0, %v2778
        %v2780 = vpop.f32.mrb[0].mxu0
        %v2781 = vadd.f32 0.0, %v2780
        %2782 = vmatprep.mubr.bf16.mxu0 0
        %2783 = vmatmul.mubr.bf16.gmra.mrb[0].mxu0 %v725
        %v2784 = vpop.f32.mrb[0].mxu0
        %v2785 = vadd.f32 0.0, %v2784
        %v2786 = vpop.f32.mrb[0].mxu0
        %v2787 = vadd.f32 0.0, %v2786
        %v2788 = vpop.f32.mrb[0].mxu0
        %v2789 = vadd.f32 0.0, %v2788
        %v2790 = vpop.f32.mrb[0].mxu0
        %v2791 = vadd.f32 0.0, %v2790
        %2792 = vmatprep.mubr.bf16.mxu0 0
        %2793 = vmatmul.mubr.bf16.gmra.mrb[0].mxu0 %v728
        %v2794 = vpop.f32.mrb[0].mxu0
        %v2795 = vadd.f32 0.0, %v2794
        %v2796 = vpop.f32.mrb[0].mxu0
        %v2797 = vadd.f32 0.0, %v2796
        %v2798 = vpop.f32.mrb[0].mxu0
        %v2799 = vadd.f32 0.0, %v2798
        %v2800 = vpop.f32.mrb[0].mxu0
        %v2801 = vadd.f32 0.0, %v2800
        %2802 = vmatprep.mubr.bf16.mxu0 0
        %2803 = vmatmul.mubr.bf16.gmra.mrb[0].mxu0 %v731
        %v2804 = vpop.f32.mrb[0].mxu0
        %v2805 = vadd.f32 0.0, %v2804
        %v2806 = vpop.f32.mrb[0].mxu0
        %v2807 = vadd.f32 0.0, %v2806
        %v2808 = vpop.f32.mrb[0].mxu0
        %v2809 = vadd.f32 0.0, %v2808
        %v2810 = vpop.f32.mrb[0].mxu0
        %v2811 = vadd.f32 0.0, %v2810
        %2812 = vmatprep.mubr.bf16.mxu0 0
        %2813 = vmatmul.mubr.bf16.gmra.mrb[0].mxu0 %v734
        %v2814 = vpop.f32.mrb[0].mxu0
        %v2815 = vadd.f32 0.0, %v2814
        %v2816 = vpop.f32.mrb[0].mxu0
        %v2817 = vadd.f32 0.0, %v2816
        %v2818 = vpop.f32.mrb[0].mxu0
        %v2819 = vadd.f32 0.0, %v2818
        %v2820 = vpop.f32.mrb[0].mxu0
        %v2821 = vadd.f32 0.0, %v2820
        %2822 = vmatprep.mubr.bf16.mxu0 0
        %2823 = vmatmul.mubr.bf16.gmra.mrb[0].mxu0 %v737
        %v2824 = vpop.f32.mrb[0].mxu0
        %v2825 = vadd.f32 0.0, %v2824
        %v2826 = vpop.f32.mrb[0].mxu0
        %v2827 = vadd.f32 0.0, %v2826
        %v2828 = vpop.f32.mrb[0].mxu0
        %v2829 = vadd.f32 0.0, %v2828
        %v2830 = vpop.f32.mrb[0].mxu0
        %v2831 = vadd.f32 0.0, %v2830
        %2832 = vmatprep.mubr.bf16.mxu0 0
        %2833 = vmatmul.mubr.bf16.gmra.mrb[0].mxu0 %v740
        %v2834 = vpop.f32.mrb[0].mxu0
        %v2835 = vadd.f32 0.0, %v2834
        %v2836 = vpop.f32.mrb[0].mxu0
        %v2837 = vadd.f32 0.0, %v2836
        %v2838 = vpop.f32.mrb[0].mxu0
        %v2839 = vadd.f32 0.0, %v2838
        %v2840 = vpop.f32.mrb[0].mxu0
        %v2841 = vadd.f32 0.0, %v2840
        %2842 = vmatprep.mubr.bf16.mxu0 0
        %2843 = vmatmul.mubr.bf16.gmra.mrb[0].mxu0 %v743
        %v2844 = vpop.f32.mrb[0].mxu0
        %v2845 = vadd.f32 0.0, %v2844
        %v2846 = vpop.f32.mrb[0].mxu0
        %v2847 = vadd.f32 0.0, %v2846
        %v2848 = vpop.f32.mrb[0].mxu0
        %v2849 = vadd.f32 0.0, %v2848
        %v2850 = vpop.f32.mrb[0].mxu0
        %v2851 = vadd.f32 0.0, %v2850
        %2852 = vmatprep.mubr.bf16.mxu0 0
        %2853 = vmatmul.mubr.bf16.gmra.mrb[0].mxu0 %v746
        %v2854 = vpop.f32.mrb[0].mxu0
        %v2855 = vadd.f32 0.0, %v2854
        %v2856 = vpop.f32.mrb[0].mxu0
        %v2857 = vadd.f32 0.0, %v2856
        %v2858 = vpop.f32.mrb[0].mxu0
        %v2859 = vadd.f32 0.0, %v2858
        %v2860 = vpop.f32.mrb[0].mxu0
        %v2861 = vadd.f32 0.0, %v2860
        %2862 = vmatprep.mubr.bf16.mxu0 0
        %2863 = vmatmul.mubr.bf16.gmra.mrb[0].mxu0 %v749
        %v2864 = vpop.f32.mrb[0].mxu0
        %v2865 = vadd.f32 0.0, %v2864
        %v2866 = vpop.f32.mrb[0].mxu0
        %v2867 = vadd.f32 0.0, %v2866
        %v2868 = vpop.f32.mrb[0].mxu0
        %v2869 = vadd.f32 0.0, %v2868
        %v2870 = vpop.f32.mrb[0].mxu0
        %v2871 = vadd.f32 0.0, %v2870
        %2872 = vmatprep.mubr.bf16.mxu0 0
        %2873 = vmatmul.mubr.bf16.gmra.mrb[0].mxu0 %v2557
        %v2874 = vpop.f32.mrb[0].mxu0
        %v2875 = vadd.f32 0.0, %v2874
        %v2876 = vpop.f32.mrb[0].mxu0
        %v2877 = vadd.f32 0.0, %v2876
        %v2878 = vpop.f32.mrb[0].mxu0
        %v2879 = vadd.f32 0.0, %v2878
        %v2880 = vpop.f32.mrb[0].mxu0
        %v2881 = vadd.f32 0.0, %v2880
        %2882 = vdwg.mxu0
        %2883 = vmatprep.subr.bf16.mxu0 %v2543
        %2884 = vmatpush1.bf16.msra.mxu0 %v2542
        %2885 = vmatprep.subr.bf16.mxu0 %v2575
        %2886 = vmatpush1.bf16.msra.mxu0 %v2572
        %2887 = vmatprep.subr.bf16.mxu0 0
        %2888 = vmatpush1.bf16.msra.mxu0 0
        %2889 = vmatprep.subr.bf16.mxu0 0
        %2890 = vmatpush1.bf16.msra.mxu0 0
        %2891 = vmatprep.subr.bf16.mxu0 0
        %2892 = vmatpush1.bf16.msra.mxu0 0
        %2893 = vmatprep.subr.bf16.mxu0 0
        %2894 = vmatpush1.bf16.msra.mxu0 0
        %2895 = vmatprep.subr.bf16.mxu0 0
        %2896 = vmatpush1.bf16.msra.mxu0 0
        %2897 = vmatprep.subr.bf16.mxu0 0
        %2898 = vmatpush1.bf16.msra.mxu0 0
        %2899 = vmatprep.subr.bf16.mxu0 0
        %2900 = vmatpush1.bf16.msra.mxu0 0
        %2901 = vmatprep.subr.bf16.mxu0 0
        %2902 = vmatpush1.bf16.msra.mxu0 0
        %2903 = vmatprep.subr.bf16.mxu0 0
        %2904 = vmatpush1.bf16.msra.mxu0 0
        %2905 = vmatprep.subr.bf16.mxu0 0
        %2906 = vmatpush1.bf16.msra.mxu0 0
        %2907 = vmatprep.subr.bf16.mxu0 0
        %2908 = vmatpush1.bf16.msra.mxu0 0
        %2909 = vmatprep.subr.bf16.mxu0 0
        %2910 = vmatpush1.bf16.msra.mxu0 0
        %2911 = vmatprep.subr.bf16.mxu0 0
        %2912 = vmatpush1.bf16.msra.mxu0 0
        %2913 = vmatprep.subr.bf16.mxu0 0
        %2914 = vmatpush1.bf16.msra.mxu0 0
        %2915 = vmatprep.mubr.bf16.mxu0 0
        %2916 = vmatmul.mubr.bf16.gmra.mrb[0].mxu0 %v719
        %v2917 = vpop.f32.mrb[0].mxu0
        %v2918 = vadd.f32 0.0, %v2917
        %v2919 = vpop.f32.mrb[0].mxu0
        %v2920 = vadd.f32 0.0, %v2919
        %v2921 = vpop.f32.mrb[0].mxu0
        %v2922 = vadd.f32 0.0, %v2921
        %v2923 = vpop.f32.mrb[0].mxu0
        %v2924 = vadd.f32 0.0, %v2923
        %2925 = vmatprep.mubr.bf16.mxu0 0
        %2926 = vmatmul.mubr.bf16.gmra.mrb[0].mxu0 %v722
        %v2927 = vpop.f32.mrb[0].mxu0
        %v2928 = vadd.f32 0.0, %v2927
        %v2929 = vpop.f32.mrb[0].mxu0
        %v2930 = vadd.f32 0.0, %v2929
        %v2931 = vpop.f32.mrb[0].mxu0
        %v2932 = vadd.f32 0.0, %v2931
        %v2933 = vpop.f32.mrb[0].mxu0
        %v2934 = vadd.f32 0.0, %v2933
        %2935 = vmatprep.mubr.bf16.mxu0 0
        %2936 = vmatmul.mubr.bf16.gmra.mrb[0].mxu0 %v725
        %v2937 = vpop.f32.mrb[0].mxu0
        %v2938 = vadd.f32 0.0, %v2937
        %v2939 = vpop.f32.mrb[0].mxu0
        %v2940 = vadd.f32 0.0, %v2939
        %v2941 = vpop.f32.mrb[0].mxu0
        %v2942 = vadd.f32 0.0, %v2941
        %v2943 = vpop.f32.mrb[0].mxu0
        %v2944 = vadd.f32 0.0, %v2943
        %2945 = vmatprep.mubr.bf16.mxu0 0
        %2946 = vmatmul.mubr.bf16.gmra.mrb[0].mxu0 %v728
        %v2947 = vpop.f32.mrb[0].mxu0
        %v2948 = vadd.f32 0.0, %v2947
        %v2949 = vpop.f32.mrb[0].mxu0
        %v2950 = vadd.f32 0.0, %v2949
        %v2951 = vpop.f32.mrb[0].mxu0
        %v2952 = vadd.f32 0.0, %v2951
        %v2953 = vpop.f32.mrb[0].mxu0
        %v2954 = vadd.f32 0.0, %v2953
        %2955 = vmatprep.mubr.bf16.mxu0 0
        %2956 = vmatmul.mubr.bf16.gmra.mrb[0].mxu0 %v731
        %v2957 = vpop.f32.mrb[0].mxu0
        %v2958 = vadd.f32 0.0, %v2957
        %v2959 = vpop.f32.mrb[0].mxu0
        %v2960 = vadd.f32 0.0, %v2959
        %v2961 = vpop.f32.mrb[0].mxu0
        %v2962 = vadd.f32 0.0, %v2961
        %v2963 = vpop.f32.mrb[0].mxu0
        %v2964 = vadd.f32 0.0, %v2963
        %2965 = vmatprep.mubr.bf16.mxu0 0
        %2966 = vmatmul.mubr.bf16.gmra.mrb[0].mxu0 %v734
        %v2967 = vpop.f32.mrb[0].mxu0
        %v2968 = vadd.f32 0.0, %v2967
        %v2969 = vpop.f32.mrb[0].mxu0
        %v2970 = vadd.f32 0.0, %v2969
        %v2971 = vpop.f32.mrb[0].mxu0
        %v2972 = vadd.f32 0.0, %v2971
        %v2973 = vpop.f32.mrb[0].mxu0
        %v2974 = vadd.f32 0.0, %v2973
        %2975 = vmatprep.mubr.bf16.mxu0 0
        %2976 = vmatmul.mubr.bf16.gmra.mrb[0].mxu0 %v737
        %v2977 = vpop.f32.mrb[0].mxu0
        %v2978 = vadd.f32 0.0, %v2977
        %v2979 = vpop.f32.mrb[0].mxu0
        %v2980 = vadd.f32 0.0, %v2979
        %v2981 = vpop.f32.mrb[0].mxu0
        %v2982 = vadd.f32 0.0, %v2981
        %v2983 = vpop.f32.mrb[0].mxu0
        %v2984 = vadd.f32 0.0, %v2983
        %2985 = vmatprep.mubr.bf16.mxu0 0
        %2986 = vmatmul.mubr.bf16.gmra.mrb[0].mxu0 %v740
        %v2987 = vpop.f32.mrb[0].mxu0
        %v2988 = vadd.f32 0.0, %v2987
        %v2989 = vpop.f32.mrb[0].mxu0
        %v2990 = vadd.f32 0.0, %v2989
        %v2991 = vpop.f32.mrb[0].mxu0
        %v2992 = vadd.f32 0.0, %v2991
        %v2993 = vpop.f32.mrb[0].mxu0
        %v2994 = vadd.f32 0.0, %v2993
        %2995 = vmatprep.mubr.bf16.mxu0 0
        %2996 = vmatmul.mubr.bf16.gmra.mrb[0].mxu0 %v743
        %v2997 = vpop.f32.mrb[0].mxu0
        %v2998 = vadd.f32 0.0, %v2997
        %v2999 = vpop.f32.mrb[0].mxu0
        %v3000 = vadd.f32 0.0, %v2999
        %v3001 = vpop.f32.mrb[0].mxu0
        %v3002 = vadd.f32 0.0, %v3001
        %v3003 = vpop.f32.mrb[0].mxu0
        %v3004 = vadd.f32 0.0, %v3003
        %3005 = vmatprep.mubr.bf16.mxu0 0
        %3006 = vmatmul.mubr.bf16.gmra.mrb[0].mxu0 %v746
        %v3007 = vpop.f32.mrb[0].mxu0
        %v3008 = vadd.f32 0.0, %v3007
        %v3009 = vpop.f32.mrb[0].mxu0
        %v3010 = vadd.f32 0.0, %v3009
        %v3011 = vpop.f32.mrb[0].mxu0
        %v3012 = vadd.f32 0.0, %v3011
        %v3013 = vpop.f32.mrb[0].mxu0
        %v3014 = vadd.f32 0.0, %v3013
        %3015 = vmatprep.mubr.bf16.mxu0 0
        %3016 = vmatmul.mubr.bf16.gmra.mrb[0].mxu0 %v749
        %v3017 = vpop.f32.mrb[0].mxu0
        %v3018 = vadd.f32 0.0, %v3017
        %v3019 = vpop.f32.mrb[0].mxu0
        %v3020 = vadd.f32 0.0, %v3019
        %v3021 = vpop.f32.mrb[0].mxu0
        %v3022 = vadd.f32 0.0, %v3021
        %v3023 = vpop.f32.mrb[0].mxu0
        %v3024 = vadd.f32 0.0, %v3023
        %3025 = vmatprep.mubr.bf16.mxu0 0
        %3026 = vmatmul.mubr.bf16.gmra.mrb[0].mxu0 %v2557
        %v3027 = vpop.f32.mrb[0].mxu0
        %v3028 = vadd.f32 0.0, %v3027
        %v3029 = vpop.f32.mrb[0].mxu0
        %v3030 = vadd.f32 0.0, %v3029
        %v3031 = vpop.f32.mrb[0].mxu0
        %v3032 = vadd.f32 0.0, %v3031
        %v3033 = vpop.f32.mrb[0].mxu0
        %v3034 = vadd.f32 0.0, %v3033
        %3035 = vdwg.mxu0
        %v3036 = vadd.f32 %v2344, %v2612
        %v3037 = vadd.f32 %v2345, %v2614
        %v3038 = vadd.f32 %v2346, %v2765
        %v3039 = vadd.f32 %v2347, %v2767
        %v3040 = vadd.f32 %v2348, %v2918
        %v3041 = vadd.f32 %v2349, %v2920
        %v3042 = vadd.f32 %v2350, %v2616
        %v3043 = vadd.f32 %v2351, %v2618
        %v3044 = vadd.f32 %v2352, %v2769
        %v3045 = vadd.f32 %v2353, %v2771
        %v3046 = vadd.f32 %v2354, %v2922
        %v3047 = vadd.f32 %v2355, %v2924
        %v3048 = vadd.f32 %v2356, %v2622
        %v3049 = vadd.f32 %v2357, %v2624
        %v3050 = vadd.f32 %v2358, %v2775
        %v3051 = vadd.f32 %v2359, %v2777
        %v3052 = vadd.f32 %v2360, %v2928
        %v3053 = vadd.f32 %v2361, %v2930
        %v3054 = vadd.f32 %v2362, %v2626
        %v3055 = vadd.f32 %v2363, %v2628
        %v3056 = vadd.f32 %v2364, %v2779
        %v3057 = vadd.f32 %v2365, %v2781
        %v3058 = vadd.f32 %v2366, %v2932
        %v3059 = vadd.f32 %v2367, %v2934
        %v3060 = vadd.f32 %v2368, %v2632
        %v3061 = vadd.f32 %v2369, %v2634
        %v3062 = vadd.f32 %v2370, %v2785
        %v3063 = vadd.f32 %v2371, %v2787
        %v3064 = vadd.f32 %v2372, %v2938
        %v3065 = vadd.f32 %v2373, %v2940
        %v3066 = vadd.f32 %v2374, %v2636
        %v3067 = vadd.f32 %v2375, %v2638
        %v3068 = vadd.f32 %v2376, %v2789
        %v3069 = vadd.f32 %v2377, %v2791
        %v3070 = vadd.f32 %v2378, %v2942
        %v3071 = vadd.f32 %v2379, %v2944
        %v3072 = vadd.f32 %v2380, %v2642
        %v3073 = vadd.f32 %v2381, %v2644
        %v3074 = vadd.f32 %v2382, %v2795
        %v3075 = vadd.f32 %v2383, %v2797
        %v3076 = vadd.f32 %v2384, %v2948
        %v3077 = vadd.f32 %v2385, %v2950
        %v3078 = vadd.f32 %v2386, %v2646
        %v3079 = vadd.f32 %v2387, %v2648
        %v3080 = vadd.f32 %v2388, %v2799
        %v3081 = vadd.f32 %v2389, %v2801
        %v3082 = vadd.f32 %v2390, %v2952
        %v3083 = vadd.f32 %v2391, %v2954
        %v3084 = vadd.f32 %v2392, %v2652
        %v3085 = vadd.f32 %v2393, %v2654
        %v3086 = vadd.f32 %v2394, %v2805
        %v3087 = vadd.f32 %v2395, %v2807
        %v3088 = vadd.f32 %v2396, %v2958
        %v3089 = vadd.f32 %v2397, %v2960
        %v3090 = vadd.f32 %v2398, %v2656
        %v3091 = vadd.f32 %v2399, %v2658
        %v3092 = vadd.f32 %v2400, %v2809
        %v3093 = vadd.f32 %v2401, %v2811
        %v3094 = vadd.f32 %v2402, %v2962
        %v3095 = vadd.f32 %v2403, %v2964
        %v3096 = vadd.f32 %v2404, %v2662
        %v3097 = vadd.f32 %v2405, %v2664
        %v3098 = vadd.f32 %v2406, %v2815
        %v3099 = vadd.f32 %v2407, %v2817
        %v3100 = vadd.f32 %v2408, %v2968
        %v3101 = vadd.f32 %v2409, %v2970
        %v3102 = vadd.f32 %v2410, %v2666
        %v3103 = vadd.f32 %v2411, %v2668
        %v3104 = vadd.f32 %v2412, %v2819
        %v3105 = vadd.f32 %v2413, %v2821
        %v3106 = vadd.f32 %v2414, %v2972
        %v3107 = vadd.f32 %v2415, %v2974
        %v3108 = vadd.f32 %v2416, %v2672
        %v3109 = vadd.f32 %v2417, %v2674
        %v3110 = vadd.f32 %v2418, %v2825
        %v3111 = vadd.f32 %v2419, %v2827
        %v3112 = vadd.f32 %v2420, %v2978
        %v3113 = vadd.f32 %v2421, %v2980
        %v3114 = vadd.f32 %v2422, %v2676
        %v3115 = vadd.f32 %v2423, %v2678
        %v3116 = vadd.f32 %v2424, %v2829
        %v3117 = vadd.f32 %v2425, %v2831
        %v3118 = vadd.f32 %v2426, %v2982
        %v3119 = vadd.f32 %v2427, %v2984
        %v3120 = vadd.f32 %v2428, %v2682
        %v3121 = vadd.f32 %v2429, %v2684
        %v3122 = vadd.f32 %v2430, %v2835
        %v3123 = vadd.f32 %v2431, %v2837
        %v3124 = vadd.f32 %v2432, %v2988
        %v3125 = vadd.f32 %v2433, %v2990
        %v3126 = vadd.f32 %v2434, %v2686
        %v3127 = vadd.f32 %v2435, %v2688
        %v3128 = vadd.f32 %v2436, %v2839
        %v3129 = vadd.f32 %v2437, %v2841
        %v3130 = vadd.f32 %v2438, %v2992
        %v3131 = vadd.f32 %v2439, %v2994
        %v3132 = vadd.f32 %v2440, %v2692
        %v3133 = vadd.f32 %v2441, %v2694
        %v3134 = vadd.f32 %v2442, %v2845
        %v3135 = vadd.f32 %v2443, %v2847
        %v3136 = vadd.f32 %v2444, %v2998
        %v3137 = vadd.f32 %v2445, %v3000
        %v3138 = vadd.f32 %v2446, %v2696
        %v3139 = vadd.f32 %v2447, %v2698
        %v3140 = vadd.f32 %v2448, %v2849
        %v3141 = vadd.f32 %v2449, %v2851
        %v3142 = vadd.f32 %v2450, %v3002
        %v3143 = vadd.f32 %v2451, %v3004
        %v3144 = vadd.f32 %v2452, %v2702
        %v3145 = vadd.f32 %v2453, %v2704
        %v3146 = vadd.f32 %v2454, %v2855
        %v3147 = vadd.f32 %v2455, %v2857
        %v3148 = vadd.f32 %v2456, %v3008
        %v3149 = vadd.f32 %v2457, %v3010
        %v3150 = vadd.f32 %v2458, %v2706
        %v3151 = vadd.f32 %v2459, %v2708
        %v3152 = vadd.f32 %v2460, %v2859
        %v3153 = vadd.f32 %v2461, %v2861
        %v3154 = vadd.f32 %v2462, %v3012
        %v3155 = vadd.f32 %v2463, %v3014
        %v3156 = vadd.f32 %v2464, %v2712
        %v3157 = vadd.f32 %v2465, %v2714
        %v3158 = vadd.f32 %v2466, %v2865
        %v3159 = vadd.f32 %v2467, %v2867
        %v3160 = vadd.f32 %v2468, %v3018
        %v3161 = vadd.f32 %v2469, %v3020
        %v3162 = vadd.f32 %v2470, %v2716
        %v3163 = vadd.f32 %v2471, %v2718
        %v3164 = vadd.f32 %v2472, %v2869
        %v3165 = vadd.f32 %v2473, %v2871
        %v3166 = vadd.f32 %v2474, %v3022
        %v3167 = vadd.f32 %v2475, %v3024
        %v3168 = vadd.f32 %v2476, %v2722
        %v3169 = vadd.f32 %v2477, %v2724
        %v3170 = vadd.f32 %v2478, %v2875
        %v3171 = vadd.f32 %v2479, %v2877
        %v3172 = vadd.f32 %v2480, %v3028
        %v3173 = vadd.f32 %v2481, %v3030
        %v3174 = vadd.f32 %v2482, %v2726
        %v3175 = vadd.f32 %v2483, %v2728
        %v3176 = vadd.f32 %v2484, %v2879
        %v3177 = vadd.f32 %v2485, %v2881
        %v3178 = vadd.f32 %v2486, %v3032
        %v3179 = vadd.f32 %v2487, %v3034
        %v3180 = vpack.c.bf16 %v610, %v609
        %s3181 = scalar_lea.vmem [#allocation3], 384
        %v3182 = vld [vmem:[%s3181] sm:$0xff]
        %v3183 = vld [vmem:[%s3181 + $0x8] sm:$0xff]
        %v3184 = vld [vmem:[%s3181 + $0x10] sm:$0xff]
        %v3185 = vld [vmem:[%s3181 + $0x18] sm:$0xff]
        %v3186 = vld [vmem:[%s3181 + $0x20] sm:$0xff]
        %v3187 = vld [vmem:[%s3181 + $0x28] sm:$0xff]
        %v3188 = vld [vmem:[%s3181 + $0x30] sm:$0xff]
        %v3189 = vld [vmem:[%s3181 + $0x38] sm:$0xff]
        %v3190 = vld [vmem:[%s3181 + $0x40] sm:$0xff]
        %v3191 = vld [vmem:[%s3181 + $0x48] sm:$0x33]
        %v3192 = vld [vmem:[%s3181 + $0x50] sm:$0x33]
        %v3193 = vld [vmem:[%s3181 + $0x58] sm:$0x33]
        %v3206 = vunpack.c.l.b16 %v3182
        %v3207 = vunpack.c.h.b16 %v3182
        %v3208 = vunpack.c.l.b16 %v3183
        %v3209 = vunpack.c.h.b16 %v3183
        %v3210 = vunpack.c.l.b16 %v3184
        %v3211 = vunpack.c.h.b16 %v3184
        %v3212 = vunpack.c.l.b16 %v3185
        %v3213 = vunpack.c.h.b16 %v3185
        %v3214 = vunpack.c.l.b16 %v3186
        %v3215 = vunpack.c.h.b16 %v3186
        %v3216 = vunpack.c.l.b16 %v3187
        %v3217 = vunpack.c.h.b16 %v3187
        %v3218 = vunpack.c.l.b16 %v3188
        %v3219 = vunpack.c.h.b16 %v3188
        %v3220 = vunpack.c.l.b16 %v3189
        %v3221 = vunpack.c.h.b16 %v3189
        %v3222 = vunpack.c.l.b16 %v3190
        %v3223 = vunpack.c.h.b16 %v3190
        %v3224 = vunpack.c.l.b16 %v3191
        %v3225 = vunpack.c.h.b16 %v3191
        %v3226 = vunpack.c.l.b16 %v3192
        %v3227 = vunpack.c.h.b16 %v3192
        %v3228 = vunpack.c.l.b16 %v3193
        %v3229 = vunpack.c.h.b16 %v3193
        %v3230 = vpack.c.b16 %v3212, %v3206
        %v3231 = vpack.c.b16 %v3213, %v3207
        %v3232 = vpack.c.b16 %v3214, %v3208
        %v3233 = vpack.c.b16 %v3215, %v3209
        %v3234 = vpack.c.b16 %v3216, %v3210
        %v3235 = vpack.c.b16 %v3217, %v3211
        %v3236 = vpack.c.b16 %v3224, %v3218
        %v3237 = vpack.c.b16 %v3225, %v3219
        %v3238 = vpack.c.b16 %v3226, %v3220
        %v3239 = vpack.c.b16 %v3227, %v3221
        %v3240 = vpack.c.b16 %v3228, %v3222
        %v3241 = vpack.c.b16 %v3229, %v3223
        %v3249 = vsel %vm714, %v3180, 0
        %v3252 = vsel %vm751, %v3236, 0
        %v3255 = vsel %vm751, %v3237, 0
        %v3258 = vsel %vm751, %v3238, 0
        %v3261 = vsel %vm751, %v3239, 0
        %v3264 = vsel %vm751, %v3240, 0
        %v3267 = vsel %vm751, %v3241, 0
        %3269 = vmatprep.subr.bf16.mxu0 %v3231
        %3270 = vmatpush1.bf16.msra.mxu0 %v3230
        %3271 = vmatprep.subr.bf16.mxu0 %v3255
        %3272 = vmatpush1.bf16.msra.mxu0 %v3252
        %3273 = vmatprep.subr.bf16.mxu0 0
        %3274 = vmatpush1.bf16.msra.mxu0 0
        %3275 = vmatprep.subr.bf16.mxu0 0
        %3276 = vmatpush1.bf16.msra.mxu0 0
        %3277 = vmatprep.subr.bf16.mxu0 0
        %3278 = vmatpush1.bf16.msra.mxu0 0
        %3279 = vmatprep.subr.bf16.mxu0 0
        %3280 = vmatpush1.bf16.msra.mxu0 0
        %3281 = vmatprep.subr.bf16.mxu0 0
        %3282 = vmatpush1.bf16.msra.mxu0 0
        %3283 = vmatprep.subr.bf16.mxu0 0
        %3284 = vmatpush1.bf16.msra.mxu0 0
        %3285 = vmatprep.subr.bf16.mxu0 0
        %3286 = vmatpush1.bf16.msra.mxu0 0
        %3287 = vmatprep.subr.bf16.mxu0 0
        %3288 = vmatpush1.bf16.msra.mxu0 0
        %3289 = vmatprep.subr.bf16.mxu0 0
        %3290 = vmatpush1.bf16.msra.mxu0 0
        %3291 = vmatprep.subr.bf16.mxu0 0
        %3292 = vmatpush1.bf16.msra.mxu0 0
        %3293 = vmatprep.subr.bf16.mxu0 0
        %3294 = vmatpush1.bf16.msra.mxu0 0
        %3295 = vmatprep.subr.bf16.mxu0 0
        %3296 = vmatpush1.bf16.msra.mxu0 0
        %3297 = vmatprep.subr.bf16.mxu0 0
        %3298 = vmatpush1.bf16.msra.mxu0 0
        %3299 = vmatprep.subr.bf16.mxu0 0
        %3300 = vmatpush1.bf16.msra.mxu0 0
        %3301 = vmatprep.mubr.bf16.mxu0 0
        %3302 = vmatmul.mubr.bf16.gmra.mrb[0].mxu0 %v1290
        %v3303 = vpop.f32.mrb[0].mxu0
        %v3304 = vadd.f32 0.0, %v3303
        %v3305 = vpop.f32.mrb[0].mxu0
        %v3306 = vadd.f32 0.0, %v3305
        %v3307 = vpop.f32.mrb[0].mxu0
        %v3308 = vadd.f32 0.0, %v3307
        %v3309 = vpop.f32.mrb[0].mxu0
        %v3310 = vadd.f32 0.0, %v3309
        %3311 = vmatprep.mubr.bf16.mxu0 0
        %3312 = vmatmul.mubr.bf16.gmra.mrb[0].mxu0 %v1293
        %v3313 = vpop.f32.mrb[0].mxu0
        %v3314 = vadd.f32 0.0, %v3313
        %v3315 = vpop.f32.mrb[0].mxu0
        %v3316 = vadd.f32 0.0, %v3315
        %v3317 = vpop.f32.mrb[0].mxu0
        %v3318 = vadd.f32 0.0, %v3317
        %v3319 = vpop.f32.mrb[0].mxu0
        %v3320 = vadd.f32 0.0, %v3319
        %3321 = vmatprep.mubr.bf16.mxu0 0
        %3322 = vmatmul.mubr.bf16.gmra.mrb[0].mxu0 %v1296
        %v3323 = vpop.f32.mrb[0].mxu0
        %v3324 = vadd.f32 0.0, %v3323
        %v3325 = vpop.f32.mrb[0].mxu0
        %v3326 = vadd.f32 0.0, %v3325
        %v3327 = vpop.f32.mrb[0].mxu0
        %v3328 = vadd.f32 0.0, %v3327
        %v3329 = vpop.f32.mrb[0].mxu0
        %v3330 = vadd.f32 0.0, %v3329
        %3331 = vmatprep.mubr.bf16.mxu0 0
        %3332 = vmatmul.mubr.bf16.gmra.mrb[0].mxu0 %v1299
        %v3333 = vpop.f32.mrb[0].mxu0
        %v3334 = vadd.f32 0.0, %v3333
        %v3335 = vpop.f32.mrb[0].mxu0
        %v3336 = vadd.f32 0.0, %v3335
        %v3337 = vpop.f32.mrb[0].mxu0
        %v3338 = vadd.f32 0.0, %v3337
        %v3339 = vpop.f32.mrb[0].mxu0
        %v3340 = vadd.f32 0.0, %v3339
        %3341 = vmatprep.mubr.bf16.mxu0 0
        %3342 = vmatmul.mubr.bf16.gmra.mrb[0].mxu0 %v1302
        %v3343 = vpop.f32.mrb[0].mxu0
        %v3344 = vadd.f32 0.0, %v3343
        %v3345 = vpop.f32.mrb[0].mxu0
        %v3346 = vadd.f32 0.0, %v3345
        %v3347 = vpop.f32.mrb[0].mxu0
        %v3348 = vadd.f32 0.0, %v3347
        %v3349 = vpop.f32.mrb[0].mxu0
        %v3350 = vadd.f32 0.0, %v3349
        %3351 = vmatprep.mubr.bf16.mxu0 0
        %3352 = vmatmul.mubr.bf16.gmra.mrb[0].mxu0 %v1305
        %v3353 = vpop.f32.mrb[0].mxu0
        %v3354 = vadd.f32 0.0, %v3353
        %v3355 = vpop.f32.mrb[0].mxu0
        %v3356 = vadd.f32 0.0, %v3355
        %v3357 = vpop.f32.mrb[0].mxu0
        %v3358 = vadd.f32 0.0, %v3357
        %v3359 = vpop.f32.mrb[0].mxu0
        %v3360 = vadd.f32 0.0, %v3359
        %3361 = vmatprep.mubr.bf16.mxu0 0
        %3362 = vmatmul.mubr.bf16.gmra.mrb[0].mxu0 %v1308
        %v3363 = vpop.f32.mrb[0].mxu0
        %v3364 = vadd.f32 0.0, %v3363
        %v3365 = vpop.f32.mrb[0].mxu0
        %v3366 = vadd.f32 0.0, %v3365
        %v3367 = vpop.f32.mrb[0].mxu0
        %v3368 = vadd.f32 0.0, %v3367
        %v3369 = vpop.f32.mrb[0].mxu0
        %v3370 = vadd.f32 0.0, %v3369
        %3371 = vmatprep.mubr.bf16.mxu0 0
        %3372 = vmatmul.mubr.bf16.gmra.mrb[0].mxu0 %v1311
        %v3373 = vpop.f32.mrb[0].mxu0
        %v3374 = vadd.f32 0.0, %v3373
        %v3375 = vpop.f32.mrb[0].mxu0
        %v3376 = vadd.f32 0.0, %v3375
        %v3377 = vpop.f32.mrb[0].mxu0
        %v3378 = vadd.f32 0.0, %v3377
        %v3379 = vpop.f32.mrb[0].mxu0
        %v3380 = vadd.f32 0.0, %v3379
        %3381 = vmatprep.mubr.bf16.mxu0 0
        %3382 = vmatmul.mubr.bf16.gmra.mrb[0].mxu0 %v1314
        %v3383 = vpop.f32.mrb[0].mxu0
        %v3384 = vadd.f32 0.0, %v3383
        %v3385 = vpop.f32.mrb[0].mxu0
        %v3386 = vadd.f32 0.0, %v3385
        %v3387 = vpop.f32.mrb[0].mxu0
        %v3388 = vadd.f32 0.0, %v3387
        %v3389 = vpop.f32.mrb[0].mxu0
        %v3390 = vadd.f32 0.0, %v3389
        %3391 = vmatprep.mubr.bf16.mxu0 0
        %3392 = vmatmul.mubr.bf16.gmra.mrb[0].mxu0 %v1317
        %v3393 = vpop.f32.mrb[0].mxu0
        %v3394 = vadd.f32 0.0, %v3393
        %v3395 = vpop.f32.mrb[0].mxu0
        %v3396 = vadd.f32 0.0, %v3395
        %v3397 = vpop.f32.mrb[0].mxu0
        %v3398 = vadd.f32 0.0, %v3397
        %v3399 = vpop.f32.mrb[0].mxu0
        %v3400 = vadd.f32 0.0, %v3399
        %3401 = vmatprep.mubr.bf16.mxu0 0
        %3402 = vmatmul.mubr.bf16.gmra.mrb[0].mxu0 %v1865
        %v3403 = vpop.f32.mrb[0].mxu0
        %v3404 = vadd.f32 0.0, %v3403
        %v3405 = vpop.f32.mrb[0].mxu0
        %v3406 = vadd.f32 0.0, %v3405
        %v3407 = vpop.f32.mrb[0].mxu0
        %v3408 = vadd.f32 0.0, %v3407
        %v3409 = vpop.f32.mrb[0].mxu0
        %v3410 = vadd.f32 0.0, %v3409
        %3411 = vmatprep.mubr.bf16.mxu0 0
        %3412 = vmatmul.mubr.bf16.gmra.mrb[0].mxu0 %v3249
        %v3413 = vpop.f32.mrb[0].mxu0
        %v3414 = vadd.f32 0.0, %v3413
        %v3415 = vpop.f32.mrb[0].mxu0
        %v3416 = vadd.f32 0.0, %v3415
        %v3417 = vpop.f32.mrb[0].mxu0
        %v3418 = vadd.f32 0.0, %v3417
        %v3419 = vpop.f32.mrb[0].mxu0
        %v3420 = vadd.f32 0.0, %v3419
        %3421 = vdwg.mxu0
        %3422 = vmatprep.subr.bf16.mxu0 %v3233
        %3423 = vmatpush1.bf16.msra.mxu0 %v3232
        %3424 = vmatprep.subr.bf16.mxu0 %v3261
        %3425 = vmatpush1.bf16.msra.mxu0 %v3258
        %3426 = vmatprep.subr.bf16.mxu0 0
        %3427 = vmatpush1.bf16.msra.mxu0 0
        %3428 = vmatprep.subr.bf16.mxu0 0
        %3429 = vmatpush1.bf16.msra.mxu0 0
        %3430 = vmatprep.subr.bf16.mxu0 0
        %3431 = vmatpush1.bf16.msra.mxu0 0
        %3432 = vmatprep.subr.bf16.mxu0 0
        %3433 = vmatpush1.bf16.msra.mxu0 0
        %3434 = vmatprep.subr.bf16.mxu0 0
        %3435 = vmatpush1.bf16.msra.mxu0 0
        %3436 = vmatprep.subr.bf16.mxu0 0
        %3437 = vmatpush1.bf16.msra.mxu0 0
        %3438 = vmatprep.subr.bf16.mxu0 0
        %3439 = vmatpush1.bf16.msra.mxu0 0
        %3440 = vmatprep.subr.bf16.mxu0 0
        %3441 = vmatpush1.bf16.msra.mxu0 0
        %3442 = vmatprep.subr.bf16.mxu0 0
        %3443 = vmatpush1.bf16.msra.mxu0 0
        %3444 = vmatprep.subr.bf16.mxu0 0
        %3445 = vmatpush1.bf16.msra.mxu0 0
        %3446 = vmatprep.subr.bf16.mxu0 0
        %3447 = vmatpush1.bf16.msra.mxu0 0
        %3448 = vmatprep.subr.bf16.mxu0 0
        %3449 = vmatpush1.bf16.msra.mxu0 0
        %3450 = vmatprep.subr.bf16.mxu0 0
        %3451 = vmatpush1.bf16.msra.mxu0 0
        %3452 = vmatprep.subr.bf16.mxu0 0
        %3453 = vmatpush1.bf16.msra.mxu0 0
        %3454 = vmatprep.mubr.bf16.mxu0 0
        %3455 = vmatmul.mubr.bf16.gmra.mrb[0].mxu0 %v1290
        %v3456 = vpop.f32.mrb[0].mxu0
        %v3457 = vadd.f32 0.0, %v3456
        %v3458 = vpop.f32.mrb[0].mxu0
        %v3459 = vadd.f32 0.0, %v3458
        %v3460 = vpop.f32.mrb[0].mxu0
        %v3461 = vadd.f32 0.0, %v3460
        %v3462 = vpop.f32.mrb[0].mxu0
        %v3463 = vadd.f32 0.0, %v3462
        %3464 = vmatprep.mubr.bf16.mxu0 0
        %3465 = vmatmul.mubr.bf16.gmra.mrb[0].mxu0 %v1293
        %v3466 = vpop.f32.mrb[0].mxu0
        %v3467 = vadd.f32 0.0, %v3466
        %v3468 = vpop.f32.mrb[0].mxu0
        %v3469 = vadd.f32 0.0, %v3468
        %v3470 = vpop.f32.mrb[0].mxu0
        %v3471 = vadd.f32 0.0, %v3470
        %v3472 = vpop.f32.mrb[0].mxu0
        %v3473 = vadd.f32 0.0, %v3472
        %3474 = vmatprep.mubr.bf16.mxu0 0
        %3475 = vmatmul.mubr.bf16.gmra.mrb[0].mxu0 %v1296
        %v3476 = vpop.f32.mrb[0].mxu0
        %v3477 = vadd.f32 0.0, %v3476
        %v3478 = vpop.f32.mrb[0].mxu0
        %v3479 = vadd.f32 0.0, %v3478
        %v3480 = vpop.f32.mrb[0].mxu0
        %v3481 = vadd.f32 0.0, %v3480
        %v3482 = vpop.f32.mrb[0].mxu0
        %v3483 = vadd.f32 0.0, %v3482
        %3484 = vmatprep.mubr.bf16.mxu0 0
        %3485 = vmatmul.mubr.bf16.gmra.mrb[0].mxu0 %v1299
        %v3486 = vpop.f32.mrb[0].mxu0
        %v3487 = vadd.f32 0.0, %v3486
        %v3488 = vpop.f32.mrb[0].mxu0
        %v3489 = vadd.f32 0.0, %v3488
        %v3490 = vpop.f32.mrb[0].mxu0
        %v3491 = vadd.f32 0.0, %v3490
        %v3492 = vpop.f32.mrb[0].mxu0
        %v3493 = vadd.f32 0.0, %v3492
        %3494 = vmatprep.mubr.bf16.mxu0 0
        %3495 = vmatmul.mubr.bf16.gmra.mrb[0].mxu0 %v1302
        %v3496 = vpop.f32.mrb[0].mxu0
        %v3497 = vadd.f32 0.0, %v3496
        %v3498 = vpop.f32.mrb[0].mxu0
        %v3499 = vadd.f32 0.0, %v3498
        %v3500 = vpop.f32.mrb[0].mxu0
        %v3501 = vadd.f32 0.0, %v3500
        %v3502 = vpop.f32.mrb[0].mxu0
        %v3503 = vadd.f32 0.0, %v3502
        %3504 = vmatprep.mubr.bf16.mxu0 0
        %3505 = vmatmul.mubr.bf16.gmra.mrb[0].mxu0 %v1305
        %v3506 = vpop.f32.mrb[0].mxu0
        %v3507 = vadd.f32 0.0, %v3506
        %v3508 = vpop.f32.mrb[0].mxu0
        %v3509 = vadd.f32 0.0, %v3508
        %v3510 = vpop.f32.mrb[0].mxu0
        %v3511 = vadd.f32 0.0, %v3510
        %v3512 = vpop.f32.mrb[0].mxu0
        %v3513 = vadd.f32 0.0, %v3512
        %3514 = vmatprep.mubr.bf16.mxu0 0
        %3515 = vmatmul.mubr.bf16.gmra.mrb[0].mxu0 %v1308
        %v3516 = vpop.f32.mrb[0].mxu0
        %v3517 = vadd.f32 0.0, %v3516
        %v3518 = vpop.f32.mrb[0].mxu0
        %v3519 = vadd.f32 0.0, %v3518
        %v3520 = vpop.f32.mrb[0].mxu0
        %v3521 = vadd.f32 0.0, %v3520
        %v3522 = vpop.f32.mrb[0].mxu0
        %v3523 = vadd.f32 0.0, %v3522
        %3524 = vmatprep.mubr.bf16.mxu0 0
        %3525 = vmatmul.mubr.bf16.gmra.mrb[0].mxu0 %v1311
        %v3526 = vpop.f32.mrb[0].mxu0
        %v3527 = vadd.f32 0.0, %v3526
        %v3528 = vpop.f32.mrb[0].mxu0
        %v3529 = vadd.f32 0.0, %v3528
        %v3530 = vpop.f32.mrb[0].mxu0
        %v3531 = vadd.f32 0.0, %v3530
        %v3532 = vpop.f32.mrb[0].mxu0
        %v3533 = vadd.f32 0.0, %v3532
        %3534 = vmatprep.mubr.bf16.mxu0 0
        %3535 = vmatmul.mubr.bf16.gmra.mrb[0].mxu0 %v1314
        %v3536 = vpop.f32.mrb[0].mxu0
        %v3537 = vadd.f32 0.0, %v3536
        %v3538 = vpop.f32.mrb[0].mxu0
        %v3539 = vadd.f32 0.0, %v3538
        %v3540 = vpop.f32.mrb[0].mxu0
        %v3541 = vadd.f32 0.0, %v3540
        %v3542 = vpop.f32.mrb[0].mxu0
        %v3543 = vadd.f32 0.0, %v3542
        %3544 = vmatprep.mubr.bf16.mxu0 0
        %3545 = vmatmul.mubr.bf16.gmra.mrb[0].mxu0 %v1317
        %v3546 = vpop.f32.mrb[0].mxu0
        %v3547 = vadd.f32 0.0, %v3546
        %v3548 = vpop.f32.mrb[0].mxu0
        %v3549 = vadd.f32 0.0, %v3548
        %v3550 = vpop.f32.mrb[0].mxu0
        %v3551 = vadd.f32 0.0, %v3550
        %v3552 = vpop.f32.mrb[0].mxu0
        %v3553 = vadd.f32 0.0, %v3552
        %3554 = vmatprep.mubr.bf16.mxu0 0
        %3555 = vmatmul.mubr.bf16.gmra.mrb[0].mxu0 %v1865
        %v3556 = vpop.f32.mrb[0].mxu0
        %v3557 = vadd.f32 0.0, %v3556
        %v3558 = vpop.f32.mrb[0].mxu0
        %v3559 = vadd.f32 0.0, %v3558
        %v3560 = vpop.f32.mrb[0].mxu0
        %v3561 = vadd.f32 0.0, %v3560
        %v3562 = vpop.f32.mrb[0].mxu0
        %v3563 = vadd.f32 0.0, %v3562
        %3564 = vmatprep.mubr.bf16.mxu0 0
        %3565 = vmatmul.mubr.bf16.gmra.mrb[0].mxu0 %v3249
        %v3566 = vpop.f32.mrb[0].mxu0
        %v3567 = vadd.f32 0.0, %v3566
        %v3568 = vpop.f32.mrb[0].mxu0
        %v3569 = vadd.f32 0.0, %v3568
        %v3570 = vpop.f32.mrb[0].mxu0
        %v3571 = vadd.f32 0.0, %v3570
        %v3572 = vpop.f32.mrb[0].mxu0
        %v3573 = vadd.f32 0.0, %v3572
        %3574 = vdwg.mxu0
        %3575 = vmatprep.subr.bf16.mxu0 %v3235
        %3576 = vmatpush1.bf16.msra.mxu0 %v3234
        %3577 = vmatprep.subr.bf16.mxu0 %v3267
        %3578 = vmatpush1.bf16.msra.mxu0 %v3264
        %3579 = vmatprep.subr.bf16.mxu0 0
        %3580 = vmatpush1.bf16.msra.mxu0 0
        %3581 = vmatprep.subr.bf16.mxu0 0
        %3582 = vmatpush1.bf16.msra.mxu0 0
        %3583 = vmatprep.subr.bf16.mxu0 0
        %3584 = vmatpush1.bf16.msra.mxu0 0
        %3585 = vmatprep.subr.bf16.mxu0 0
        %3586 = vmatpush1.bf16.msra.mxu0 0
        %3587 = vmatprep.subr.bf16.mxu0 0
        %3588 = vmatpush1.bf16.msra.mxu0 0
        %3589 = vmatprep.subr.bf16.mxu0 0
        %3590 = vmatpush1.bf16.msra.mxu0 0
        %3591 = vmatprep.subr.bf16.mxu0 0
        %3592 = vmatpush1.bf16.msra.mxu0 0
        %3593 = vmatprep.subr.bf16.mxu0 0
        %3594 = vmatpush1.bf16.msra.mxu0 0
        %3595 = vmatprep.subr.bf16.mxu0 0
        %3596 = vmatpush1.bf16.msra.mxu0 0
        %3597 = vmatprep.subr.bf16.mxu0 0
        %3598 = vmatpush1.bf16.msra.mxu0 0
        %3599 = vmatprep.subr.bf16.mxu0 0
        %3600 = vmatpush1.bf16.msra.mxu0 0
        %3601 = vmatprep.subr.bf16.mxu0 0
        %3602 = vmatpush1.bf16.msra.mxu0 0
        %3603 = vmatprep.subr.bf16.mxu0 0
        %3604 = vmatpush1.bf16.msra.mxu0 0
        %3605 = vmatprep.subr.bf16.mxu0 0
        %3606 = vmatpush1.bf16.msra.mxu0 0
        %3607 = vmatprep.mubr.bf16.mxu0 0
        %3608 = vmatmul.mubr.bf16.gmra.mrb[0].mxu0 %v1290
        %v3609 = vpop.f32.mrb[0].mxu0
        %v3610 = vadd.f32 0.0, %v3609
        %v3611 = vpop.f32.mrb[0].mxu0
        %v3612 = vadd.f32 0.0, %v3611
        %v3613 = vpop.f32.mrb[0].mxu0
        %v3614 = vadd.f32 0.0, %v3613
        %v3615 = vpop.f32.mrb[0].mxu0
        %v3616 = vadd.f32 0.0, %v3615
        %3617 = vmatprep.mubr.bf16.mxu0 0
        %3618 = vmatmul.mubr.bf16.gmra.mrb[0].mxu0 %v1293
        %v3619 = vpop.f32.mrb[0].mxu0
        %v3620 = vadd.f32 0.0, %v3619
        %v3621 = vpop.f32.mrb[0].mxu0
        %v3622 = vadd.f32 0.0, %v3621
        %v3623 = vpop.f32.mrb[0].mxu0
        %v3624 = vadd.f32 0.0, %v3623
        %v3625 = vpop.f32.mrb[0].mxu0
        %v3626 = vadd.f32 0.0, %v3625
        %3627 = vmatprep.mubr.bf16.mxu0 0
        %3628 = vmatmul.mubr.bf16.gmra.mrb[0].mxu0 %v1296
        %v3629 = vpop.f32.mrb[0].mxu0
        %v3630 = vadd.f32 0.0, %v3629
        %v3631 = vpop.f32.mrb[0].mxu0
        %v3632 = vadd.f32 0.0, %v3631
        %v3633 = vpop.f32.mrb[0].mxu0
        %v3634 = vadd.f32 0.0, %v3633
        %v3635 = vpop.f32.mrb[0].mxu0
        %v3636 = vadd.f32 0.0, %v3635
        %3637 = vmatprep.mubr.bf16.mxu0 0
        %3638 = vmatmul.mubr.bf16.gmra.mrb[0].mxu0 %v1299
        %v3639 = vpop.f32.mrb[0].mxu0
        %v3640 = vadd.f32 0.0, %v3639
        %v3641 = vpop.f32.mrb[0].mxu0
        %v3642 = vadd.f32 0.0, %v3641
        %v3643 = vpop.f32.mrb[0].mxu0
        %v3644 = vadd.f32 0.0, %v3643
        %v3645 = vpop.f32.mrb[0].mxu0
        %v3646 = vadd.f32 0.0, %v3645
        %3647 = vmatprep.mubr.bf16.mxu0 0
        %3648 = vmatmul.mubr.bf16.gmra.mrb[0].mxu0 %v1302
        %v3649 = vpop.f32.mrb[0].mxu0
        %v3650 = vadd.f32 0.0, %v3649
        %v3651 = vpop.f32.mrb[0].mxu0
        %v3652 = vadd.f32 0.0, %v3651
        %v3653 = vpop.f32.mrb[0].mxu0
        %v3654 = vadd.f32 0.0, %v3653
        %v3655 = vpop.f32.mrb[0].mxu0
        %v3656 = vadd.f32 0.0, %v3655
        %3657 = vmatprep.mubr.bf16.mxu0 0
        %3658 = vmatmul.mubr.bf16.gmra.mrb[0].mxu0 %v1305
        %v3659 = vpop.f32.mrb[0].mxu0
        %v3660 = vadd.f32 0.0, %v3659
        %v3661 = vpop.f32.mrb[0].mxu0
        %v3662 = vadd.f32 0.0, %v3661
        %v3663 = vpop.f32.mrb[0].mxu0
        %v3664 = vadd.f32 0.0, %v3663
        %v3665 = vpop.f32.mrb[0].mxu0
        %v3666 = vadd.f32 0.0, %v3665
        %3667 = vmatprep.mubr.bf16.mxu0 0
        %3668 = vmatmul.mubr.bf16.gmra.mrb[0].mxu0 %v1308
        %v3669 = vpop.f32.mrb[0].mxu0
        %v3670 = vadd.f32 0.0, %v3669
        %v3671 = vpop.f32.mrb[0].mxu0
        %v3672 = vadd.f32 0.0, %v3671
        %v3673 = vpop.f32.mrb[0].mxu0
        %v3674 = vadd.f32 0.0, %v3673
        %v3675 = vpop.f32.mrb[0].mxu0
        %v3676 = vadd.f32 0.0, %v3675
        %3677 = vmatprep.mubr.bf16.mxu0 0
        %3678 = vmatmul.mubr.bf16.gmra.mrb[0].mxu0 %v1311
        %v3679 = vpop.f32.mrb[0].mxu0
        %v3680 = vadd.f32 0.0, %v3679
        %v3681 = vpop.f32.mrb[0].mxu0
        %v3682 = vadd.f32 0.0, %v3681
        %v3683 = vpop.f32.mrb[0].mxu0
        %v3684 = vadd.f32 0.0, %v3683
        %v3685 = vpop.f32.mrb[0].mxu0
        %v3686 = vadd.f32 0.0, %v3685
        %3687 = vmatprep.mubr.bf16.mxu0 0
        %3688 = vmatmul.mubr.bf16.gmra.mrb[0].mxu0 %v1314
        %v3689 = vpop.f32.mrb[0].mxu0
        %v3690 = vadd.f32 0.0, %v3689
        %v3691 = vpop.f32.mrb[0].mxu0
        %v3692 = vadd.f32 0.0, %v3691
        %v3693 = vpop.f32.mrb[0].mxu0
        %v3694 = vadd.f32 0.0, %v3693
        %v3695 = vpop.f32.mrb[0].mxu0
        %v3696 = vadd.f32 0.0, %v3695
        %3697 = vmatprep.mubr.bf16.mxu0 0
        %3698 = vmatmul.mubr.bf16.gmra.mrb[0].mxu0 %v1317
        %v3699 = vpop.f32.mrb[0].mxu0
        %v3700 = vadd.f32 0.0, %v3699
        %v3701 = vpop.f32.mrb[0].mxu0
        %v3702 = vadd.f32 0.0, %v3701
        %v3703 = vpop.f32.mrb[0].mxu0
        %v3704 = vadd.f32 0.0, %v3703
        %v3705 = vpop.f32.mrb[0].mxu0
        %v3706 = vadd.f32 0.0, %v3705
        %3707 = vmatprep.mubr.bf16.mxu0 0
        %3708 = vmatmul.mubr.bf16.gmra.mrb[0].mxu0 %v1865
        %v3709 = vpop.f32.mrb[0].mxu0
        %v3710 = vadd.f32 0.0, %v3709
        %v3711 = vpop.f32.mrb[0].mxu0
        %v3712 = vadd.f32 0.0, %v3711
        %v3713 = vpop.f32.mrb[0].mxu0
        %v3714 = vadd.f32 0.0, %v3713
        %v3715 = vpop.f32.mrb[0].mxu0
        %v3716 = vadd.f32 0.0, %v3715
        %3717 = vmatprep.mubr.bf16.mxu0 0
        %3718 = vmatmul.mubr.bf16.gmra.mrb[0].mxu0 %v3249
        %v3719 = vpop.f32.mrb[0].mxu0
        %v3720 = vadd.f32 0.0, %v3719
        %v3721 = vpop.f32.mrb[0].mxu0
        %v3722 = vadd.f32 0.0, %v3721
        %v3723 = vpop.f32.mrb[0].mxu0
        %v3724 = vadd.f32 0.0, %v3723
        %v3725 = vpop.f32.mrb[0].mxu0
        %v3726 = vadd.f32 0.0, %v3725
        %3727 = vdwg.mxu0
        %v3728 = vadd.f32 %v3036, %v3304
        %v3729 = vadd.f32 %v3037, %v3306
        %v3730 = vadd.f32 %v3038, %v3457
        %v3731 = vadd.f32 %v3039, %v3459
        %v3732 = vadd.f32 %v3040, %v3610
        %v3733 = vadd.f32 %v3041, %v3612
        %v3734 = vadd.f32 %v3042, %v3308
        %v3735 = vadd.f32 %v3043, %v3310
        %v3736 = vadd.f32 %v3044, %v3461
        %v3737 = vadd.f32 %v3045, %v3463
        %v3738 = vadd.f32 %v3046, %v3614
        %v3739 = vadd.f32 %v3047, %v3616
        %v3740 = vadd.f32 %v3048, %v3314
        %v3741 = vadd.f32 %v3049, %v3316
        %v3742 = vadd.f32 %v3050, %v3467
        %v3743 = vadd.f32 %v3051, %v3469
        %v3744 = vadd.f32 %v3052, %v3620
        %v3745 = vadd.f32 %v3053, %v3622
        %v3746 = vadd.f32 %v3054, %v3318
        %v3747 = vadd.f32 %v3055, %v3320
        %v3748 = vadd.f32 %v3056, %v3471
        %v3749 = vadd.f32 %v3057, %v3473
        %v3750 = vadd.f32 %v3058, %v3624
        %v3751 = vadd.f32 %v3059, %v3626
        %v3752 = vadd.f32 %v3060, %v3324
        %v3753 = vadd.f32 %v3061, %v3326
        %v3754 = vadd.f32 %v3062, %v3477
        %v3755 = vadd.f32 %v3063, %v3479
        %v3756 = vadd.f32 %v3064, %v3630
        %v3757 = vadd.f32 %v3065, %v3632
        %v3758 = vadd.f32 %v3066, %v3328
        %v3759 = vadd.f32 %v3067, %v3330
        %v3760 = vadd.f32 %v3068, %v3481
        %v3761 = vadd.f32 %v3069, %v3483
        %v3762 = vadd.f32 %v3070, %v3634
        %v3763 = vadd.f32 %v3071, %v3636
        %v3764 = vadd.f32 %v3072, %v3334
        %v3765 = vadd.f32 %v3073, %v3336
        %v3766 = vadd.f32 %v3074, %v3487
        %v3767 = vadd.f32 %v3075, %v3489
        %v3768 = vadd.f32 %v3076, %v3640
        %v3769 = vadd.f32 %v3077, %v3642
        %v3770 = vadd.f32 %v3078, %v3338
        %v3771 = vadd.f32 %v3079, %v3340
        %v3772 = vadd.f32 %v3080, %v3491
        %v3773 = vadd.f32 %v3081, %v3493
        %v3774 = vadd.f32 %v3082, %v3644
        %v3775 = vadd.f32 %v3083, %v3646
        %v3776 = vadd.f32 %v3084, %v3344
        %v3777 = vadd.f32 %v3085, %v3346
        %v3778 = vadd.f32 %v3086, %v3497
        %v3779 = vadd.f32 %v3087, %v3499
        %v3780 = vadd.f32 %v3088, %v3650
        %v3781 = vadd.f32 %v3089, %v3652
        %v3782 = vadd.f32 %v3090, %v3348
        %v3783 = vadd.f32 %v3091, %v3350
        %v3784 = vadd.f32 %v3092, %v3501
        %v3785 = vadd.f32 %v3093, %v3503
        %v3786 = vadd.f32 %v3094, %v3654
        %v3787 = vadd.f32 %v3095, %v3656
        %v3788 = vadd.f32 %v3096, %v3354
        %v3789 = vadd.f32 %v3097, %v3356
        %v3790 = vadd.f32 %v3098, %v3507
        %v3791 = vadd.f32 %v3099, %v3509
        %v3792 = vadd.f32 %v3100, %v3660
        %v3793 = vadd.f32 %v3101, %v3662
        %v3794 = vadd.f32 %v3102, %v3358
        %v3795 = vadd.f32 %v3103, %v3360
        %v3796 = vadd.f32 %v3104, %v3511
        %v3797 = vadd.f32 %v3105, %v3513
        %v3798 = vadd.f32 %v3106, %v3664
        %v3799 = vadd.f32 %v3107, %v3666
        %v3800 = vadd.f32 %v3108, %v3364
        %v3801 = vadd.f32 %v3109, %v3366
        %v3802 = vadd.f32 %v3110, %v3517
        %v3803 = vadd.f32 %v3111, %v3519
        %v3804 = vadd.f32 %v3112, %v3670
        %v3805 = vadd.f32 %v3113, %v3672
        %v3806 = vadd.f32 %v3114, %v3368
        %v3807 = vadd.f32 %v3115, %v3370
        %v3808 = vadd.f32 %v3116, %v3521
        %v3809 = vadd.f32 %v3117, %v3523
        %v3810 = vadd.f32 %v3118, %v3674
        %v3811 = vadd.f32 %v3119, %v3676
        %v3812 = vadd.f32 %v3120, %v3374
        %v3813 = vadd.f32 %v3121, %v3376
        %v3814 = vadd.f32 %v3122, %v3527
        %v3815 = vadd.f32 %v3123, %v3529
        %v3816 = vadd.f32 %v3124, %v3680
        %v3817 = vadd.f32 %v3125, %v3682
        %v3818 = vadd.f32 %v3126, %v3378
        %v3819 = vadd.f32 %v3127, %v3380
        %v3820 = vadd.f32 %v3128, %v3531
        %v3821 = vadd.f32 %v3129, %v3533
        %v3822 = vadd.f32 %v3130, %v3684
        %v3823 = vadd.f32 %v3131, %v3686
        %v3824 = vadd.f32 %v3132, %v3384
        %v3825 = vadd.f32 %v3133, %v3386
        %v3826 = vadd.f32 %v3134, %v3537
        %v3827 = vadd.f32 %v3135, %v3539
        %v3828 = vadd.f32 %v3136, %v3690
        %v3829 = vadd.f32 %v3137, %v3692
        %v3830 = vadd.f32 %v3138, %v3388
        %v3831 = vadd.f32 %v3139, %v3390
        %v3832 = vadd.f32 %v3140, %v3541
        %v3833 = vadd.f32 %v3141, %v3543
        %v3834 = vadd.f32 %v3142, %v3694
        %v3835 = vadd.f32 %v3143, %v3696
        %v3836 = vadd.f32 %v3144, %v3394
        %v3837 = vadd.f32 %v3145, %v3396
        %v3838 = vadd.f32 %v3146, %v3547
        %v3839 = vadd.f32 %v3147, %v3549
        %v3840 = vadd.f32 %v3148, %v3700
        %v3841 = vadd.f32 %v3149, %v3702
        %v3842 = vadd.f32 %v3150, %v3398
        %v3843 = vadd.f32 %v3151, %v3400
        %v3844 = vadd.f32 %v3152, %v3551
        %v3845 = vadd.f32 %v3153, %v3553
        %v3846 = vadd.f32 %v3154, %v3704
        %v3847 = vadd.f32 %v3155, %v3706
        %v3848 = vadd.f32 %v3156, %v3404
        %v3849 = vadd.f32 %v3157, %v3406
        %v3850 = vadd.f32 %v3158, %v3557
        %v3851 = vadd.f32 %v3159, %v3559
        %v3852 = vadd.f32 %v3160, %v3710
        %v3853 = vadd.f32 %v3161, %v3712
        %v3854 = vadd.f32 %v3162, %v3408
        %v3855 = vadd.f32 %v3163, %v3410
        %v3856 = vadd.f32 %v3164, %v3561
        %v3857 = vadd.f32 %v3165, %v3563
        %v3858 = vadd.f32 %v3166, %v3714
        %v3859 = vadd.f32 %v3167, %v3716
        %v3860 = vadd.f32 %v3168, %v3414
        %v3861 = vadd.f32 %v3169, %v3416
        %v3862 = vadd.f32 %v3170, %v3567
        %v3863 = vadd.f32 %v3171, %v3569
        %v3864 = vadd.f32 %v3172, %v3720
        %v3865 = vadd.f32 %v3173, %v3722
        %v3866 = vadd.f32 %v3174, %v3418
        %v3867 = vadd.f32 %v3175, %v3420
        %v3868 = vadd.f32 %v3176, %v3571
        %v3869 = vadd.f32 %v3177, %v3573
        %v3870 = vadd.f32 %v3178, %v3724
        %v3871 = vadd.f32 %v3179, %v3726
        %v3872 = vmax.f32 %v3728, %v3734
        %v3873 = vmax.f32 %v3729, %v3735
        %v3874 = vmax.f32 %v3730, %v3736
        %v3875 = vmax.f32 %v3731, %v3737
        %v3876 = vmax.f32 %v3732, %v3738
        %v3877 = vmax.f32 %v3733, %v3739
        %v3878 = vmax.f32 %v3740, %v3746
        %v3879 = vmax.f32 %v3741, %v3747
        %v3880 = vmax.f32 %v3742, %v3748
        %v3881 = vmax.f32 %v3743, %v3749
        %v3882 = vmax.f32 %v3744, %v3750
        %v3883 = vmax.f32 %v3745, %v3751
        %v3884 = vmax.f32 %v3752, %v3758
        %v3885 = vmax.f32 %v3753, %v3759
        %v3886 = vmax.f32 %v3754, %v3760
        %v3887 = vmax.f32 %v3755, %v3761
        %v3888 = vmax.f32 %v3756, %v3762
        %v3889 = vmax.f32 %v3757, %v3763
        %v3890 = vmax.f32 %v3764, %v3770
        %v3891 = vmax.f32 %v3765, %v3771
        %v3892 = vmax.f32 %v3766, %v3772
        %v3893 = vmax.f32 %v3767, %v3773
        %v3894 = vmax.f32 %v3768, %v3774
        %v3895 = vmax.f32 %v3769, %v3775
        %v3896 = vmax.f32 %v3776, %v3782
        %v3897 = vmax.f32 %v3777, %v3783
        %v3898 = vmax.f32 %v3778, %v3784
        %v3899 = vmax.f32 %v3779, %v3785
        %v3900 = vmax.f32 %v3780, %v3786
        %v3901 = vmax.f32 %v3781, %v3787
        %v3902 = vmax.f32 %v3788, %v3794
        %v3903 = vmax.f32 %v3789, %v3795
        %v3904 = vmax.f32 %v3790, %v3796
        %v3905 = vmax.f32 %v3791, %v3797
        %v3906 = vmax.f32 %v3792, %v3798
        %v3907 = vmax.f32 %v3793, %v3799
        %v3908 = vmax.f32 %v3800, %v3806
        %v3909 = vmax.f32 %v3801, %v3807
        %v3910 = vmax.f32 %v3802, %v3808
        %v3911 = vmax.f32 %v3803, %v3809
        %v3912 = vmax.f32 %v3804, %v3810
        %v3913 = vmax.f32 %v3805, %v3811
        %v3914 = vmax.f32 %v3812, %v3818
        %v3915 = vmax.f32 %v3813, %v3819
        %v3916 = vmax.f32 %v3814, %v3820
        %v3917 = vmax.f32 %v3815, %v3821
        %v3918 = vmax.f32 %v3816, %v3822
        %v3919 = vmax.f32 %v3817, %v3823
        %v3920 = vmax.f32 %v3824, %v3830
        %v3921 = vmax.f32 %v3825, %v3831
        %v3922 = vmax.f32 %v3826, %v3832
        %v3923 = vmax.f32 %v3827, %v3833
        %v3924 = vmax.f32 %v3828, %v3834
        %v3925 = vmax.f32 %v3829, %v3835
        %v3926 = vmax.f32 %v3836, %v3842
        %v3927 = vmax.f32 %v3837, %v3843
        %v3928 = vmax.f32 %v3838, %v3844
        %v3929 = vmax.f32 %v3839, %v3845
        %v3930 = vmax.f32 %v3840, %v3846
        %v3931 = vmax.f32 %v3841, %v3847
        %v3932 = vmax.f32 %v3848, %v3854
        %v3933 = vmax.f32 %v3849, %v3855
        %v3934 = vmax.f32 %v3850, %v3856
        %v3935 = vmax.f32 %v3851, %v3857
        %v3936 = vmax.f32 %v3852, %v3858
        %v3937 = vmax.f32 %v3853, %v3859
        %v3938 = vmax.f32 %v3860, %v3866
        %v3939 = vmax.f32 %v3861, %v3867
        %v3940 = vmax.f32 %v3862, %v3868
        %v3941 = vmax.f32 %v3863, %v3869
        %v3942 = vmax.f32 %v3864, %v3870
        %v3943 = vmax.f32 %v3865, %v3871
        %v3944 = vmax.f32 %v3872, %v3875
        %v3945 = vmax.f32 %v3873, %v3876
        %v3946 = vmax.f32 %v3874, %v3877
        %v3947 = vmax.f32 %v3878, %v3881
        %v3948 = vmax.f32 %v3879, %v3882
        %v3949 = vmax.f32 %v3880, %v3883
        %v3950 = vmax.f32 %v3884, %v3887
        %v3951 = vmax.f32 %v3885, %v3888
        %v3952 = vmax.f32 %v3886, %v3889
        %v3953 = vmax.f32 %v3890, %v3893
        %v3954 = vmax.f32 %v3891, %v3894
        %v3955 = vmax.f32 %v3892, %v3895
        %v3956 = vmax.f32 %v3896, %v3899
        %v3957 = vmax.f32 %v3897, %v3900
        %v3958 = vmax.f32 %v3898, %v3901
        %v3959 = vmax.f32 %v3902, %v3905
        %v3960 = vmax.f32 %v3903, %v3906
        %v3961 = vmax.f32 %v3904, %v3907
        %v3962 = vmax.f32 %v3908, %v3911
        %v3963 = vmax.f32 %v3909, %v3912
        %v3964 = vmax.f32 %v3910, %v3913
        %v3965 = vmax.f32 %v3914, %v3917
        %v3966 = vmax.f32 %v3915, %v3918
        %v3967 = vmax.f32 %v3916, %v3919
        %v3968 = vmax.f32 %v3920, %v3923
        %v3969 = vmax.f32 %v3921, %v3924
        %v3970 = vmax.f32 %v3922, %v3925
        %v3971 = vmax.f32 %v3926, %v3929
        %v3972 = vmax.f32 %v3927, %v3930
        %v3973 = vmax.f32 %v3928, %v3931
        %v3974 = vmax.f32 %v3932, %v3935
        %v3975 = vmax.f32 %v3933, %v3936
        %v3976 = vmax.f32 %v3934, %v3937
        %v3977 = vmax.f32 %v3938, %v3941
        %v3978 = vmax.f32 %v3939, %v3942
        %v3979 = vmax.f32 %v3940, %v3943
        %v3980 = vld [vmem:[#allocation5] sm:$0x7]
        %v3982 = vlaneseq
        %v3983 = vshrl.u32 %v3982, 7
        %v3984 = vsub.s32 0, %v3983
        %v3985 = vrot.slane %v3980, %v3984
        %v3986 = vlaneseq
        %v3987 = vshrl.u32 %v3986, 7
        %v3988 = vsub.s32 1, %v3987
        %v3989 = vrot.slane %v3980, %v3988
        %v3990 = vlaneseq
        %v3991 = vshrl.u32 %v3990, 7
        %v3992 = vsub.s32 2, %v3991
        %v3993 = vrot.slane %v3980, %v3992
        %v3997 = vadd.f32 %v3944, %v3985
        %v3998 = vadd.f32 %v3945, %v3989
        %v3999 = vadd.f32 %v3946, %v3993
        %v4000 = vadd.f32 %v3947, %v3985
        %v4001 = vadd.f32 %v3948, %v3989
        %v4002 = vadd.f32 %v3949, %v3993
        %v4003 = vadd.f32 %v3950, %v3985
        %v4004 = vadd.f32 %v3951, %v3989
        %v4005 = vadd.f32 %v3952, %v3993
        %v4006 = vadd.f32 %v3953, %v3985
        %v4007 = vadd.f32 %v3954, %v3989
        %v4008 = vadd.f32 %v3955, %v3993
        %v4009 = vadd.f32 %v3956, %v3985
        %v4010 = vadd.f32 %v3957, %v3989
        %v4011 = vadd.f32 %v3958, %v3993
        %v4012 = vadd.f32 %v3959, %v3985
        %v4013 = vadd.f32 %v3960, %v3989
        %v4014 = vadd.f32 %v3961, %v3993
        %v4015 = vadd.f32 %v3962, %v3985
        %v4016 = vadd.f32 %v3963, %v3989
        %v4017 = vadd.f32 %v3964, %v3993
        %v4018 = vadd.f32 %v3965, %v3985
        %v4019 = vadd.f32 %v3966, %v3989
        %v4020 = vadd.f32 %v3967, %v3993
        %v4021 = vadd.f32 %v3968, %v3985
        %v4022 = vadd.f32 %v3969, %v3989
        %v4023 = vadd.f32 %v3970, %v3993
        %v4024 = vadd.f32 %v3971, %v3985
        %v4025 = vadd.f32 %v3972, %v3989
        %v4026 = vadd.f32 %v3973, %v3993
        %v4027 = vadd.f32 %v3974, %v3985
        %v4028 = vadd.f32 %v3975, %v3989
        %v4029 = vadd.f32 %v3976, %v3993
        %v4030 = vadd.f32 %v3977, %v3985
        %v4031 = vadd.f32 %v3978, %v3989
        %v4032 = vadd.f32 %v3979, %v3993
        %v4033 = vmax.f32 %v3997, 0.0
        %v4034 = vmax.f32 %v3998, 0.0
        %v4035 = vmax.f32 %v3999, 0.0
        %v4036 = vmax.f32 %v4000, 0.0
        %v4037 = vmax.f32 %v4001, 0.0
        %v4038 = vmax.f32 %v4002, 0.0
        %v4039 = vmax.f32 %v4003, 0.0
        %v4040 = vmax.f32 %v4004, 0.0
        %v4041 = vmax.f32 %v4005, 0.0
        %v4042 = vmax.f32 %v4006, 0.0
        %v4043 = vmax.f32 %v4007, 0.0
        %v4044 = vmax.f32 %v4008, 0.0
        %v4045 = vmax.f32 %v4009, 0.0
        %v4046 = vmax.f32 %v4010, 0.0
        %v4047 = vmax.f32 %v4011, 0.0
        %v4048 = vmax.f32 %v4012, 0.0
        %v4049 = vmax.f32 %v4013, 0.0
        %v4050 = vmax.f32 %v4014, 0.0
        %v4051 = vmax.f32 %v4015, 0.0
        %v4052 = vmax.f32 %v4016, 0.0
        %v4053 = vmax.f32 %v4017, 0.0
        %v4054 = vmax.f32 %v4018, 0.0
        %v4055 = vmax.f32 %v4019, 0.0
        %v4056 = vmax.f32 %v4020, 0.0
        %v4057 = vmax.f32 %v4021, 0.0
        %v4058 = vmax.f32 %v4022, 0.0
        %v4059 = vmax.f32 %v4023, 0.0
        %v4060 = vmax.f32 %v4024, 0.0
        %v4061 = vmax.f32 %v4025, 0.0
        %v4062 = vmax.f32 %v4026, 0.0
        %v4063 = vmax.f32 %v4027, 0.0
        %v4064 = vmax.f32 %v4028, 0.0
        %v4065 = vmax.f32 %v4029, 0.0
        %v4066 = vmax.f32 %v4030, 0.0
        %v4067 = vmax.f32 %v4031, 0.0
        %v4068 = vmax.f32 %v4032, 0.0
        %v4069 = vpack.c.bf16 %v4036, %v4033
        %v4070 = vpack.c.bf16 %v4037, %v4034
        %v4071 = vpack.c.bf16 %v4038, %v4035
        %v4072 = vpack.c.bf16 %v4042, %v4039
        %v4073 = vpack.c.bf16 %v4043, %v4040
        %v4074 = vpack.c.bf16 %v4044, %v4041
        %v4075 = vpack.c.bf16 %v4048, %v4045
        %v4076 = vpack.c.bf16 %v4049, %v4046
        %v4077 = vpack.c.bf16 %v4050, %v4047
        %v4078 = vpack.c.bf16 %v4054, %v4051
        %v4079 = vpack.c.bf16 %v4055, %v4052
        %v4080 = vpack.c.bf16 %v4056, %v4053
        %v4081 = vld [vmem:[#allocation7] sm:$0xff]
        %v4082 = vld [vmem:[#allocation7 + $0x8] sm:$0xff]
        %v4083 = vld [vmem:[#allocation7 + $0x10] sm:$0xff]
        %v4084 = vld [vmem:[#allocation7 + $0x18] sm:$0xff]
        %v4085 = vld [vmem:[#allocation7 + $0x20] sm:$0xff]
        %v4086 = vld [vmem:[#allocation7 + $0x28] sm:$0xff]
        %v4087 = vld [vmem:[#allocation7 + $0x30] sm:$0xff]
        %v4088 = vld [vmem:[#allocation7 + $0x38] sm:$0xff]
        %v4089 = vld [vmem:[#allocation7 + $0x40] sm:$0xff]
        %v4090 = vld [vmem:[#allocation7 + $0x48] sm:$0xff]
        %v4091 = vld [vmem:[#allocation7 + $0x50] sm:$0xff]
        %v4092 = vld [vmem:[#allocation7 + $0x58] sm:$0xff]
        %v4093 = vld [vmem:[#allocation7 + $0x60] sm:$0xff]
        %v4094 = vld [vmem:[#allocation7 + $0x68] sm:$0xff]
        %v4095 = vld [vmem:[#allocation7 + $0x70] sm:$0xff]
        %v4096 = vld [vmem:[#allocation7 + $0x78] sm:$0xff]
        %v4097 = vld [vmem:[#allocation7 + $0x80] sm:$0xff]
        %v4098 = vld [vmem:[#allocation7 + $0x88] sm:$0xff]
        %v4099 = vld [vmem:[#allocation7 + $0x90] sm:$0xff]
        %v4100 = vld [vmem:[#allocation7 + $0x98] sm:$0xff]
        %v4101 = vld [vmem:[#allocation7 + $0xa0] sm:$0xff]
        %v4102 = vld [vmem:[#allocation7 + $0xa8] sm:$0xff]
        %v4103 = vld [vmem:[#allocation7 + $0xb0] sm:$0xff]
        %v4104 = vld [vmem:[#allocation7 + $0xb8] sm:$0xff]
        %v4105 = vld [vmem:[#allocation7 + $0xc0] sm:$0xff]
        %v4106 = vld [vmem:[#allocation7 + $0xc8] sm:$0xff]
        %v4107 = vld [vmem:[#allocation7 + $0xd0] sm:$0xff]
        %v4108 = vld [vmem:[#allocation7 + $0xd8] sm:$0xff]
        %v4109 = vld [vmem:[#allocation7 + $0xe0] sm:$0xff]
        %v4110 = vld [vmem:[#allocation7 + $0xe8] sm:$0xff]
        %v4111 = vld [vmem:[#allocation7 + $0xf0] sm:$0xff]
        %v4112 = vld [vmem:[#allocation7 + $0xf8] sm:$0xff]
        %v4113 = vld [vmem:[#allocation7 + $0x100] sm:$0xff]
        %v4114 = vld [vmem:[#allocation7 + $0x108] sm:$0xff]
        %v4115 = vld [vmem:[#allocation7 + $0x110] sm:$0xff]
        %v4116 = vld [vmem:[#allocation7 + $0x118] sm:$0xff]
        %v4117 = vld [vmem:[#allocation7 + $0x120] sm:$0xff]
        %v4118 = vld [vmem:[#allocation7 + $0x128] sm:$0xff]
        %v4119 = vld [vmem:[#allocation7 + $0x130] sm:$0xff]
        %v4120 = vld [vmem:[#allocation7 + $0x138] sm:$0xff]
        %v4121 = vld [vmem:[#allocation7 + $0x140] sm:$0xff]
        %v4122 = vld [vmem:[#allocation7 + $0x148] sm:$0xff]
        %v4123 = vld [vmem:[#allocation7 + $0x150] sm:$0xff]
        %v4124 = vld [vmem:[#allocation7 + $0x158] sm:$0xff]
        %v4125 = vld [vmem:[#allocation7 + $0x160] sm:$0xff]
        %v4126 = vld [vmem:[#allocation7 + $0x168] sm:$0xff]
        %v4127 = vld [vmem:[#allocation7 + $0x170] sm:$0xff]
        %v4128 = vld [vmem:[#allocation7 + $0x178] sm:$0xff]
        %v4129 = vld [vmem:[#allocation7 + $0x180] sm:$0xff]
        %v4130 = vld [vmem:[#allocation7 + $0x188] sm:$0xff]
        %v4131 = vld [vmem:[#allocation7 + $0x190] sm:$0xff]
        %v4132 = vld [vmem:[#allocation7 + $0x198] sm:$0xff]
        %v4133 = vld [vmem:[#allocation7 + $0x1a0] sm:$0xff]
        %v4134 = vld [vmem:[#allocation7 + $0x1a8] sm:$0xff]
        %v4135 = vld [vmem:[#allocation7 + $0x1b0] sm:$0xff]
        %v4136 = vld [vmem:[#allocation7 + $0x1b8] sm:$0xff]
        %v4137 = vld [vmem:[#allocation7 + $0x1c0] sm:$0xff]
        %v4138 = vld [vmem:[#allocation7 + $0x1c8] sm:$0xff]
        %v4139 = vld [vmem:[#allocation7 + $0x1d0] sm:$0xff]
        %v4140 = vld [vmem:[#allocation7 + $0x1d8] sm:$0xff]
        %v4141 = vld [vmem:[#allocation7 + $0x1e0] sm:$0xff]
        %v4142 = vld [vmem:[#allocation7 + $0x1e8] sm:$0xff]
        %v4143 = vld [vmem:[#allocation7 + $0x1f0] sm:$0xff]
        %v4144 = vld [vmem:[#allocation7 + $0x1f8] sm:$0xff]
        %v4145 = vld [vmem:[#allocation7 + $0x200] sm:$0xff]
        %v4146 = vld [vmem:[#allocation7 + $0x208] sm:$0xff]
        %v4147 = vld [vmem:[#allocation7 + $0x210] sm:$0xff]
        %v4148 = vld [vmem:[#allocation7 + $0x218] sm:$0xff]
        %v4149 = vld [vmem:[#allocation7 + $0x220] sm:$0xff]
        %v4150 = vld [vmem:[#allocation7 + $0x228] sm:$0xff]
        %v4151 = vld [vmem:[#allocation7 + $0x230] sm:$0xff]
        %v4152 = vld [vmem:[#allocation7 + $0x238] sm:$0xff]
        %v4153 = vld [vmem:[#allocation7 + $0x240] sm:$0xff]
        %v4154 = vld [vmem:[#allocation7 + $0x248] sm:$0xff]
        %v4155 = vld [vmem:[#allocation7 + $0x250] sm:$0xff]
        %v4156 = vld [vmem:[#allocation7 + $0x258] sm:$0xff]
        %v4157 = vld [vmem:[#allocation7 + $0x260] sm:$0xff]
        %v4158 = vld [vmem:[#allocation7 + $0x268] sm:$0xff]
        %v4159 = vld [vmem:[#allocation7 + $0x270] sm:$0xff]
        %v4160 = vld [vmem:[#allocation7 + $0x278] sm:$0xff]
        %v4161 = vld [vmem:[#allocation7 + $0x280] sm:$0xff]
        %v4162 = vld [vmem:[#allocation7 + $0x288] sm:$0xff]
        %v4163 = vld [vmem:[#allocation7 + $0x290] sm:$0xff]
        %v4164 = vld [vmem:[#allocation7 + $0x298] sm:$0xff]
        %v4165 = vld [vmem:[#allocation7 + $0x2a0] sm:$0xff]
        %v4166 = vld [vmem:[#allocation7 + $0x2a8] sm:$0xff]
        %v4167 = vld [vmem:[#allocation7 + $0x2b0] sm:$0xff]
        %v4168 = vld [vmem:[#allocation7 + $0x2b8] sm:$0xff]
        %v4169 = vld [vmem:[#allocation7 + $0x2c0] sm:$0xff]
        %v4170 = vld [vmem:[#allocation7 + $0x2c8] sm:$0xff]
        %v4171 = vld [vmem:[#allocation7 + $0x2d0] sm:$0xff]
        %v4172 = vld [vmem:[#allocation7 + $0x2d8] sm:$0xff]
        %v4173 = vld [vmem:[#allocation7 + $0x2e0] sm:$0xff]
        %v4174 = vld [vmem:[#allocation7 + $0x2e8] sm:$0xff]
        %v4175 = vld [vmem:[#allocation7 + $0x2f0] sm:$0xff]
        %v4176 = vld [vmem:[#allocation7 + $0x2f8] sm:$0xff]
        %v4177 = vpack.c.bf16 %v4039, %v4036
        %v4178 = vpack.c.bf16 %v4040, %v4037
        %v4179 = vpack.c.bf16 %v4041, %v4038
        %v4180 = vpack.c.bf16 %v4045, %v4042
        %v4181 = vpack.c.bf16 %v4046, %v4043
        %v4182 = vpack.c.bf16 %v4047, %v4044
        %v4183 = vpack.c.bf16 %v4051, %v4048
        %v4184 = vpack.c.bf16 %v4052, %v4049
        %v4185 = vpack.c.bf16 %v4053, %v4050
        %v4186 = vpack.c.bf16 %v4057, %v4054
        %v4187 = vpack.c.bf16 %v4058, %v4055
        %v4188 = vpack.c.bf16 %v4059, %v4056
        %s4189 = scalar_lea.vmem [#allocation7], 768
        %v4190 = vld [vmem:[%s4189] sm:$0xff]
        %v4191 = vld [vmem:[%s4189 + $0x8] sm:$0xff]
        %v4192 = vld [vmem:[%s4189 + $0x10] sm:$0xff]
        %v4193 = vld [vmem:[%s4189 + $0x18] sm:$0xff]
        %v4194 = vld [vmem:[%s4189 + $0x20] sm:$0xff]
        %v4195 = vld [vmem:[%s4189 + $0x28] sm:$0xff]
        %v4196 = vld [vmem:[%s4189 + $0x30] sm:$0xff]
        %v4197 = vld [vmem:[%s4189 + $0x38] sm:$0xff]
        %v4198 = vld [vmem:[%s4189 + $0x40] sm:$0xff]
        %v4199 = vld [vmem:[%s4189 + $0x48] sm:$0xff]
        %v4200 = vld [vmem:[%s4189 + $0x50] sm:$0xff]
        %v4201 = vld [vmem:[%s4189 + $0x58] sm:$0xff]
        %v4202 = vld [vmem:[%s4189 + $0x60] sm:$0xff]
        %v4203 = vld [vmem:[%s4189 + $0x68] sm:$0xff]
        %v4204 = vld [vmem:[%s4189 + $0x70] sm:$0xff]
        %v4205 = vld [vmem:[%s4189 + $0x78] sm:$0xff]
        %v4206 = vld [vmem:[%s4189 + $0x80] sm:$0xff]
        %v4207 = vld [vmem:[%s4189 + $0x88] sm:$0xff]
        %v4208 = vld [vmem:[%s4189 + $0x90] sm:$0xff]
        %v4209 = vld [vmem:[%s4189 + $0x98] sm:$0xff]
        %v4210 = vld [vmem:[%s4189 + $0xa0] sm:$0xff]
        %v4211 = vld [vmem:[%s4189 + $0xa8] sm:$0xff]
        %v4212 = vld [vmem:[%s4189 + $0xb0] sm:$0xff]
        %v4213 = vld [vmem:[%s4189 + $0xb8] sm:$0xff]
        %v4214 = vld [vmem:[%s4189 + $0xc0] sm:$0xff]
        %v4215 = vld [vmem:[%s4189 + $0xc8] sm:$0xff]
        %v4216 = vld [vmem:[%s4189 + $0xd0] sm:$0xff]
        %v4217 = vld [vmem:[%s4189 + $0xd8] sm:$0xff]
        %v4218 = vld [vmem:[%s4189 + $0xe0] sm:$0xff]
        %v4219 = vld [vmem:[%s4189 + $0xe8] sm:$0xff]
        %v4220 = vld [vmem:[%s4189 + $0xf0] sm:$0xff]
        %v4221 = vld [vmem:[%s4189 + $0xf8] sm:$0xff]
        %v4222 = vld [vmem:[%s4189 + $0x100] sm:$0xff]
        %v4223 = vld [vmem:[%s4189 + $0x108] sm:$0xff]
        %v4224 = vld [vmem:[%s4189 + $0x110] sm:$0xff]
        %v4225 = vld [vmem:[%s4189 + $0x118] sm:$0xff]
        %v4226 = vld [vmem:[%s4189 + $0x120] sm:$0xff]
        %v4227 = vld [vmem:[%s4189 + $0x128] sm:$0xff]
        %v4228 = vld [vmem:[%s4189 + $0x130] sm:$0xff]
        %v4229 = vld [vmem:[%s4189 + $0x138] sm:$0xff]
        %v4230 = vld [vmem:[%s4189 + $0x140] sm:$0xff]
        %v4231 = vld [vmem:[%s4189 + $0x148] sm:$0xff]
        %v4232 = vld [vmem:[%s4189 + $0x150] sm:$0xff]
        %v4233 = vld [vmem:[%s4189 + $0x158] sm:$0xff]
        %v4234 = vld [vmem:[%s4189 + $0x160] sm:$0xff]
        %v4235 = vld [vmem:[%s4189 + $0x168] sm:$0xff]
        %v4236 = vld [vmem:[%s4189 + $0x170] sm:$0xff]
        %v4237 = vld [vmem:[%s4189 + $0x178] sm:$0xff]
        %v4238 = vld [vmem:[%s4189 + $0x180] sm:$0xff]
        %v4239 = vld [vmem:[%s4189 + $0x188] sm:$0xff]
        %v4240 = vld [vmem:[%s4189 + $0x190] sm:$0xff]
        %v4241 = vld [vmem:[%s4189 + $0x198] sm:$0xff]
        %v4242 = vld [vmem:[%s4189 + $0x1a0] sm:$0xff]
        %v4243 = vld [vmem:[%s4189 + $0x1a8] sm:$0xff]
        %v4244 = vld [vmem:[%s4189 + $0x1b0] sm:$0xff]
        %v4245 = vld [vmem:[%s4189 + $0x1b8] sm:$0xff]
        %v4246 = vld [vmem:[%s4189 + $0x1c0] sm:$0xff]
        %v4247 = vld [vmem:[%s4189 + $0x1c8] sm:$0xff]
        %v4248 = vld [vmem:[%s4189 + $0x1d0] sm:$0xff]
        %v4249 = vld [vmem:[%s4189 + $0x1d8] sm:$0xff]
        %v4250 = vld [vmem:[%s4189 + $0x1e0] sm:$0xff]
        %v4251 = vld [vmem:[%s4189 + $0x1e8] sm:$0xff]
        %v4252 = vld [vmem:[%s4189 + $0x1f0] sm:$0xff]
        %v4253 = vld [vmem:[%s4189 + $0x1f8] sm:$0xff]
        %v4254 = vld [vmem:[%s4189 + $0x200] sm:$0xff]
        %v4255 = vld [vmem:[%s4189 + $0x208] sm:$0xff]
        %v4256 = vld [vmem:[%s4189 + $0x210] sm:$0xff]
        %v4257 = vld [vmem:[%s4189 + $0x218] sm:$0xff]
        %v4258 = vld [vmem:[%s4189 + $0x220] sm:$0xff]
        %v4259 = vld [vmem:[%s4189 + $0x228] sm:$0xff]
        %v4260 = vld [vmem:[%s4189 + $0x230] sm:$0xff]
        %v4261 = vld [vmem:[%s4189 + $0x238] sm:$0xff]
        %v4262 = vld [vmem:[%s4189 + $0x240] sm:$0xff]
        %v4263 = vld [vmem:[%s4189 + $0x248] sm:$0xff]
        %v4264 = vld [vmem:[%s4189 + $0x250] sm:$0xff]
        %v4265 = vld [vmem:[%s4189 + $0x258] sm:$0xff]
        %v4266 = vld [vmem:[%s4189 + $0x260] sm:$0xff]
        %v4267 = vld [vmem:[%s4189 + $0x268] sm:$0xff]
        %v4268 = vld [vmem:[%s4189 + $0x270] sm:$0xff]
        %v4269 = vld [vmem:[%s4189 + $0x278] sm:$0xff]
        %v4270 = vld [vmem:[%s4189 + $0x280] sm:$0xff]
        %v4271 = vld [vmem:[%s4189 + $0x288] sm:$0xff]
        %v4272 = vld [vmem:[%s4189 + $0x290] sm:$0xff]
        %v4273 = vld [vmem:[%s4189 + $0x298] sm:$0xff]
        %v4274 = vld [vmem:[%s4189 + $0x2a0] sm:$0xff]
        %v4275 = vld [vmem:[%s4189 + $0x2a8] sm:$0xff]
        %v4276 = vld [vmem:[%s4189 + $0x2b0] sm:$0xff]
        %v4277 = vld [vmem:[%s4189 + $0x2b8] sm:$0xff]
        %v4278 = vld [vmem:[%s4189 + $0x2c0] sm:$0xff]
        %v4279 = vld [vmem:[%s4189 + $0x2c8] sm:$0xff]
        %v4280 = vld [vmem:[%s4189 + $0x2d0] sm:$0xff]
        %v4281 = vld [vmem:[%s4189 + $0x2d8] sm:$0xff]
        %v4282 = vld [vmem:[%s4189 + $0x2e0] sm:$0xff]
        %v4283 = vld [vmem:[%s4189 + $0x2e8] sm:$0xff]
        %v4284 = vld [vmem:[%s4189 + $0x2f0] sm:$0xff]
        %v4285 = vld [vmem:[%s4189 + $0x2f8] sm:$0xff]
        %v4382 = vunpack.c.l.b16 %v4190
        %v4383 = vunpack.c.h.b16 %v4190
        %v4384 = vunpack.c.l.b16 %v4191
        %v4385 = vunpack.c.h.b16 %v4191
        %v4386 = vunpack.c.l.b16 %v4192
        %v4387 = vunpack.c.h.b16 %v4192
        %v4388 = vunpack.c.l.b16 %v4193
        %v4389 = vunpack.c.h.b16 %v4193
        %v4390 = vunpack.c.l.b16 %v4194
        %v4391 = vunpack.c.h.b16 %v4194
        %v4392 = vunpack.c.l.b16 %v4195
        %v4393 = vunpack.c.h.b16 %v4195
        %v4394 = vunpack.c.l.b16 %v4196
        %v4395 = vunpack.c.h.b16 %v4196
        %v4396 = vunpack.c.l.b16 %v4197
        %v4397 = vunpack.c.h.b16 %v4197
        %v4398 = vunpack.c.l.b16 %v4198
        %v4399 = vunpack.c.h.b16 %v4198
        %v4400 = vunpack.c.l.b16 %v4199
        %v4401 = vunpack.c.h.b16 %v4199
        %v4402 = vunpack.c.l.b16 %v4200
        %v4403 = vunpack.c.h.b16 %v4200
        %v4404 = vunpack.c.l.b16 %v4201
        %v4405 = vunpack.c.h.b16 %v4201
        %v4406 = vunpack.c.l.b16 %v4202
        %v4407 = vunpack.c.h.b16 %v4202
        %v4408 = vunpack.c.l.b16 %v4203
        %v4409 = vunpack.c.h.b16 %v4203
        %v4410 = vunpack.c.l.b16 %v4204
        %v4411 = vunpack.c.h.b16 %v4204
        %v4412 = vunpack.c.l.b16 %v4205
        %v4413 = vunpack.c.h.b16 %v4205
        %v4414 = vunpack.c.l.b16 %v4206
        %v4415 = vunpack.c.h.b16 %v4206
        %v4416 = vunpack.c.l.b16 %v4207
        %v4417 = vunpack.c.h.b16 %v4207
        %v4418 = vunpack.c.l.b16 %v4208
        %v4419 = vunpack.c.h.b16 %v4208
        %v4420 = vunpack.c.l.b16 %v4209
        %v4421 = vunpack.c.h.b16 %v4209
        %v4422 = vunpack.c.l.b16 %v4210
        %v4423 = vunpack.c.h.b16 %v4210
        %v4424 = vunpack.c.l.b16 %v4211
        %v4425 = vunpack.c.h.b16 %v4211
        %v4426 = vunpack.c.l.b16 %v4212
        %v4427 = vunpack.c.h.b16 %v4212
        %v4428 = vunpack.c.l.b16 %v4213
        %v4429 = vunpack.c.h.b16 %v4213
        %v4430 = vunpack.c.l.b16 %v4214
        %v4431 = vunpack.c.h.b16 %v4214
        %v4432 = vunpack.c.l.b16 %v4215
        %v4433 = vunpack.c.h.b16 %v4215
        %v4434 = vunpack.c.l.b16 %v4216
        %v4435 = vunpack.c.h.b16 %v4216
        %v4436 = vunpack.c.l.b16 %v4217
        %v4437 = vunpack.c.h.b16 %v4217
        %v4438 = vunpack.c.l.b16 %v4218
        %v4439 = vunpack.c.h.b16 %v4218
        %v4440 = vunpack.c.l.b16 %v4219
        %v4441 = vunpack.c.h.b16 %v4219
        %v4442 = vunpack.c.l.b16 %v4220
        %v4443 = vunpack.c.h.b16 %v4220
        %v4444 = vunpack.c.l.b16 %v4221
        %v4445 = vunpack.c.h.b16 %v4221
        %v4446 = vunpack.c.l.b16 %v4222
        %v4447 = vunpack.c.h.b16 %v4222
        %v4448 = vunpack.c.l.b16 %v4223
        %v4449 = vunpack.c.h.b16 %v4223
        %v4450 = vunpack.c.l.b16 %v4224
        %v4451 = vunpack.c.h.b16 %v4224
        %v4452 = vunpack.c.l.b16 %v4225
        %v4453 = vunpack.c.h.b16 %v4225
        %v4454 = vunpack.c.l.b16 %v4226
        %v4455 = vunpack.c.h.b16 %v4226
        %v4456 = vunpack.c.l.b16 %v4227
        %v4457 = vunpack.c.h.b16 %v4227
        %v4458 = vunpack.c.l.b16 %v4228
        %v4459 = vunpack.c.h.b16 %v4228
        %v4460 = vunpack.c.l.b16 %v4229
        %v4461 = vunpack.c.h.b16 %v4229
        %v4462 = vunpack.c.l.b16 %v4230
        %v4463 = vunpack.c.h.b16 %v4230
        %v4464 = vunpack.c.l.b16 %v4231
        %v4465 = vunpack.c.h.b16 %v4231
        %v4466 = vunpack.c.l.b16 %v4232
        %v4467 = vunpack.c.h.b16 %v4232
        %v4468 = vunpack.c.l.b16 %v4233
        %v4469 = vunpack.c.h.b16 %v4233
        %v4470 = vunpack.c.l.b16 %v4234
        %v4471 = vunpack.c.h.b16 %v4234
        %v4472 = vunpack.c.l.b16 %v4235
        %v4473 = vunpack.c.h.b16 %v4235
        %v4474 = vunpack.c.l.b16 %v4236
        %v4475 = vunpack.c.h.b16 %v4236
        %v4476 = vunpack.c.l.b16 %v4237
        %v4477 = vunpack.c.h.b16 %v4237
        %v4478 = vunpack.c.l.b16 %v4238
        %v4479 = vunpack.c.h.b16 %v4238
        %v4480 = vunpack.c.l.b16 %v4239
        %v4481 = vunpack.c.h.b16 %v4239
        %v4482 = vunpack.c.l.b16 %v4240
        %v4483 = vunpack.c.h.b16 %v4240
        %v4484 = vunpack.c.l.b16 %v4241
        %v4485 = vunpack.c.h.b16 %v4241
        %v4486 = vunpack.c.l.b16 %v4242
        %v4487 = vunpack.c.h.b16 %v4242
        %v4488 = vunpack.c.l.b16 %v4243
        %v4489 = vunpack.c.h.b16 %v4243
        %v4490 = vunpack.c.l.b16 %v4244
        %v4491 = vunpack.c.h.b16 %v4244
        %v4492 = vunpack.c.l.b16 %v4245
        %v4493 = vunpack.c.h.b16 %v4245
        %v4494 = vunpack.c.l.b16 %v4246
        %v4495 = vunpack.c.h.b16 %v4246
        %v4496 = vunpack.c.l.b16 %v4247
        %v4497 = vunpack.c.h.b16 %v4247
        %v4498 = vunpack.c.l.b16 %v4248
        %v4499 = vunpack.c.h.b16 %v4248
        %v4500 = vunpack.c.l.b16 %v4249
        %v4501 = vunpack.c.h.b16 %v4249
        %v4502 = vunpack.c.l.b16 %v4250
        %v4503 = vunpack.c.h.b16 %v4250
        %v4504 = vunpack.c.l.b16 %v4251
        %v4505 = vunpack.c.h.b16 %v4251
        %v4506 = vunpack.c.l.b16 %v4252
        %v4507 = vunpack.c.h.b16 %v4252
        %v4508 = vunpack.c.l.b16 %v4253
        %v4509 = vunpack.c.h.b16 %v4253
        %v4510 = vunpack.c.l.b16 %v4254
        %v4511 = vunpack.c.h.b16 %v4254
        %v4512 = vunpack.c.l.b16 %v4255
        %v4513 = vunpack.c.h.b16 %v4255
        %v4514 = vunpack.c.l.b16 %v4256
        %v4515 = vunpack.c.h.b16 %v4256
        %v4516 = vunpack.c.l.b16 %v4257
        %v4517 = vunpack.c.h.b16 %v4257
        %v4518 = vunpack.c.l.b16 %v4258
        %v4519 = vunpack.c.h.b16 %v4258
        %v4520 = vunpack.c.l.b16 %v4259
        %v4521 = vunpack.c.h.b16 %v4259
        %v4522 = vunpack.c.l.b16 %v4260
        %v4523 = vunpack.c.h.b16 %v4260
        %v4524 = vunpack.c.l.b16 %v4261
        %v4525 = vunpack.c.h.b16 %v4261
        %v4526 = vunpack.c.l.b16 %v4262
        %v4527 = vunpack.c.h.b16 %v4262
        %v4528 = vunpack.c.l.b16 %v4263
        %v4529 = vunpack.c.h.b16 %v4263
        %v4530 = vunpack.c.l.b16 %v4264
        %v4531 = vunpack.c.h.b16 %v4264
        %v4532 = vunpack.c.l.b16 %v4265
        %v4533 = vunpack.c.h.b16 %v4265
        %v4534 = vunpack.c.l.b16 %v4266
        %v4535 = vunpack.c.h.b16 %v4266
        %v4536 = vunpack.c.l.b16 %v4267
        %v4537 = vunpack.c.h.b16 %v4267
        %v4538 = vunpack.c.l.b16 %v4268
        %v4539 = vunpack.c.h.b16 %v4268
        %v4540 = vunpack.c.l.b16 %v4269
        %v4541 = vunpack.c.h.b16 %v4269
        %v4542 = vunpack.c.l.b16 %v4270
        %v4543 = vunpack.c.h.b16 %v4270
        %v4544 = vunpack.c.l.b16 %v4271
        %v4545 = vunpack.c.h.b16 %v4271
        %v4546 = vunpack.c.l.b16 %v4272
        %v4547 = vunpack.c.h.b16 %v4272
        %v4548 = vunpack.c.l.b16 %v4273
        %v4549 = vunpack.c.h.b16 %v4273
        %v4550 = vunpack.c.l.b16 %v4274
        %v4551 = vunpack.c.h.b16 %v4274
        %v4552 = vunpack.c.l.b16 %v4275
        %v4553 = vunpack.c.h.b16 %v4275
        %v4554 = vunpack.c.l.b16 %v4276
        %v4555 = vunpack.c.h.b16 %v4276
        %v4556 = vunpack.c.l.b16 %v4277
        %v4557 = vunpack.c.h.b16 %v4277
        %v4558 = vunpack.c.l.b16 %v4278
        %v4559 = vunpack.c.h.b16 %v4278
        %v4560 = vunpack.c.l.b16 %v4279
        %v4561 = vunpack.c.h.b16 %v4279
        %v4562 = vunpack.c.l.b16 %v4280
        %v4563 = vunpack.c.h.b16 %v4280
        %v4564 = vunpack.c.l.b16 %v4281
        %v4565 = vunpack.c.h.b16 %v4281
        %v4566 = vunpack.c.l.b16 %v4282
        %v4567 = vunpack.c.h.b16 %v4282
        %v4568 = vunpack.c.l.b16 %v4283
        %v4569 = vunpack.c.h.b16 %v4283
        %v4570 = vunpack.c.l.b16 %v4284
        %v4571 = vunpack.c.h.b16 %v4284
        %v4572 = vunpack.c.l.b16 %v4285
        %v4573 = vunpack.c.h.b16 %v4285
        %v4574 = vpack.c.b16 %v4386, %v4382
        %v4575 = vpack.c.b16 %v4387, %v4383
        %v4576 = vpack.c.b16 %v4388, %v4384
        %v4577 = vpack.c.b16 %v4389, %v4385
        %v4578 = vpack.c.b16 %v4394, %v4390
        %v4579 = vpack.c.b16 %v4395, %v4391
        %v4580 = vpack.c.b16 %v4396, %v4392
        %v4581 = vpack.c.b16 %v4397, %v4393
        %v4582 = vpack.c.b16 %v4402, %v4398
        %v4583 = vpack.c.b16 %v4403, %v4399
        %v4584 = vpack.c.b16 %v4404, %v4400
        %v4585 = vpack.c.b16 %v4405, %v4401
        %v4586 = vpack.c.b16 %v4410, %v4406
        %v4587 = vpack.c.b16 %v4411, %v4407
        %v4588 = vpack.c.b16 %v4412, %v4408
        %v4589 = vpack.c.b16 %v4413, %v4409
        %v4590 = vpack.c.b16 %v4418, %v4414
        %v4591 = vpack.c.b16 %v4419, %v4415
        %v4592 = vpack.c.b16 %v4420, %v4416
        %v4593 = vpack.c.b16 %v4421, %v4417
        %v4594 = vpack.c.b16 %v4426, %v4422
        %v4595 = vpack.c.b16 %v4427, %v4423
        %v4596 = vpack.c.b16 %v4428, %v4424
        %v4597 = vpack.c.b16 %v4429, %v4425
        %v4598 = vpack.c.b16 %v4434, %v4430
        %v4599 = vpack.c.b16 %v4435, %v4431
        %v4600 = vpack.c.b16 %v4436, %v4432
        %v4601 = vpack.c.b16 %v4437, %v4433
        %v4602 = vpack.c.b16 %v4442, %v4438
        %v4603 = vpack.c.b16 %v4443, %v4439
        %v4604 = vpack.c.b16 %v4444, %v4440
        %v4605 = vpack.c.b16 %v4445, %v4441
        %v4606 = vpack.c.b16 %v4450, %v4446
        %v4607 = vpack.c.b16 %v4451, %v4447
        %v4608 = vpack.c.b16 %v4452, %v4448
        %v4609 = vpack.c.b16 %v4453, %v4449
        %v4610 = vpack.c.b16 %v4458, %v4454
        %v4611 = vpack.c.b16 %v4459, %v4455
        %v4612 = vpack.c.b16 %v4460, %v4456
        %v4613 = vpack.c.b16 %v4461, %v4457
        %v4614 = vpack.c.b16 %v4466, %v4462
        %v4615 = vpack.c.b16 %v4467, %v4463
        %v4616 = vpack.c.b16 %v4468, %v4464
        %v4617 = vpack.c.b16 %v4469, %v4465
        %v4618 = vpack.c.b16 %v4474, %v4470
        %v4619 = vpack.c.b16 %v4475, %v4471
        %v4620 = vpack.c.b16 %v4476, %v4472
        %v4621 = vpack.c.b16 %v4477, %v4473
        %v4622 = vpack.c.b16 %v4482, %v4478
        %v4623 = vpack.c.b16 %v4483, %v4479
        %v4624 = vpack.c.b16 %v4484, %v4480
        %v4625 = vpack.c.b16 %v4485, %v4481
        %v4626 = vpack.c.b16 %v4490, %v4486
        %v4627 = vpack.c.b16 %v4491, %v4487
        %v4628 = vpack.c.b16 %v4492, %v4488
        %v4629 = vpack.c.b16 %v4493, %v4489
        %v4630 = vpack.c.b16 %v4498, %v4494
        %v4631 = vpack.c.b16 %v4499, %v4495
        %v4632 = vpack.c.b16 %v4500, %v4496
        %v4633 = vpack.c.b16 %v4501, %v4497
        %v4634 = vpack.c.b16 %v4506, %v4502
        %v4635 = vpack.c.b16 %v4507, %v4503
        %v4636 = vpack.c.b16 %v4508, %v4504
        %v4637 = vpack.c.b16 %v4509, %v4505
        %v4638 = vpack.c.b16 %v4514, %v4510
        %v4639 = vpack.c.b16 %v4515, %v4511
        %v4640 = vpack.c.b16 %v4516, %v4512
        %v4641 = vpack.c.b16 %v4517, %v4513
        %v4642 = vpack.c.b16 %v4522, %v4518
        %v4643 = vpack.c.b16 %v4523, %v4519
        %v4644 = vpack.c.b16 %v4524, %v4520
        %v4645 = vpack.c.b16 %v4525, %v4521
        %v4646 = vpack.c.b16 %v4530, %v4526
        %v4647 = vpack.c.b16 %v4531, %v4527
        %v4648 = vpack.c.b16 %v4532, %v4528
        %v4649 = vpack.c.b16 %v4533, %v4529
        %v4650 = vpack.c.b16 %v4538, %v4534
        %v4651 = vpack.c.b16 %v4539, %v4535
        %v4652 = vpack.c.b16 %v4540, %v4536
        %v4653 = vpack.c.b16 %v4541, %v4537
        %v4654 = vpack.c.b16 %v4546, %v4542
        %v4655 = vpack.c.b16 %v4547, %v4543
        %v4656 = vpack.c.b16 %v4548, %v4544
        %v4657 = vpack.c.b16 %v4549, %v4545
        %v4658 = vpack.c.b16 %v4554, %v4550
        %v4659 = vpack.c.b16 %v4555, %v4551
        %v4660 = vpack.c.b16 %v4556, %v4552
        %v4661 = vpack.c.b16 %v4557, %v4553
        %v4662 = vpack.c.b16 %v4562, %v4558
        %v4663 = vpack.c.b16 %v4563, %v4559
        %v4664 = vpack.c.b16 %v4564, %v4560
        %v4665 = vpack.c.b16 %v4565, %v4561
        %v4666 = vpack.c.b16 %v4570, %v4566
        %v4667 = vpack.c.b16 %v4571, %v4567
        %v4668 = vpack.c.b16 %v4572, %v4568
        %v4669 = vpack.c.b16 %v4573, %v4569
        %4766 = vmatprep.subr.bf16.mxu0 %v4575
        %4767 = vmatpush1.bf16.msra.mxu0 %v4574
        %4768 = vmatprep.subr.bf16.mxu0 %v4579
        %4769 = vmatpush1.bf16.msra.mxu0 %v4578
        %4770 = vmatprep.subr.bf16.mxu0 %v4583
        %4771 = vmatpush1.bf16.msra.mxu0 %v4582
        %4772 = vmatprep.subr.bf16.mxu0 %v4587
        %4773 = vmatpush1.bf16.msra.mxu0 %v4586
        %4774 = vmatprep.subr.bf16.mxu0 %v4591
        %4775 = vmatpush1.bf16.msra.mxu0 %v4590
        %4776 = vmatprep.subr.bf16.mxu0 %v4595
        %4777 = vmatpush1.bf16.msra.mxu0 %v4594
        %4778 = vmatprep.subr.bf16.mxu0 %v4599
        %4779 = vmatpush1.bf16.msra.mxu0 %v4598
        %4780 = vmatprep.subr.bf16.mxu0 %v4603
        %4781 = vmatpush1.bf16.msra.mxu0 %v4602
        %4782 = vmatprep.subr.bf16.mxu0 %v4607
        %4783 = vmatpush1.bf16.msra.mxu0 %v4606
        %4784 = vmatprep.subr.bf16.mxu0 %v4611
        %4785 = vmatpush1.bf16.msra.mxu0 %v4610
        %4786 = vmatprep.subr.bf16.mxu0 %v4615
        %4787 = vmatpush1.bf16.msra.mxu0 %v4614
        %4788 = vmatprep.subr.bf16.mxu0 %v4619
        %4789 = vmatpush1.bf16.msra.mxu0 %v4618
        %4790 = vmatprep.subr.bf16.mxu0 %v4623
        %4791 = vmatpush1.bf16.msra.mxu0 %v4622
        %4792 = vmatprep.subr.bf16.mxu0 %v4627
        %4793 = vmatpush1.bf16.msra.mxu0 %v4626
        %4794 = vmatprep.subr.bf16.mxu0 %v4631
        %4795 = vmatpush1.bf16.msra.mxu0 %v4630
        %4796 = vmatprep.subr.bf16.mxu0 %v4635
        %4797 = vmatpush1.bf16.msra.mxu0 %v4634
        %4798 = vmatprep.mubr.bf16.mxu0 %v4178
        %4799 = vmatmul.mubr.bf16.gmra.mrb[0].mxu0 %v4177
        %v4800 = vpop.f32.mrb[0].mxu0
        %v4801 = vadd.f32 0.0, %v4800
        %v4802 = vpop.f32.mrb[0].mxu0
        %v4803 = vadd.f32 0.0, %v4802
        %v4804 = vpop.f32.mrb[0].mxu0
        %v4805 = vadd.f32 0.0, %v4804
        %v4806 = vpop.f32.mrb[0].mxu0
        %v4807 = vadd.f32 0.0, %v4806
        %4808 = vmatprep.mubr.bf16.mxu0 %v4181
        %4809 = vmatmul.mubr.bf16.gmra.mrb[0].mxu0 %v4180
        %v4810 = vpop.f32.mrb[0].mxu0
        %v4811 = vadd.f32 0.0, %v4810
        %v4812 = vpop.f32.mrb[0].mxu0
        %v4813 = vadd.f32 0.0, %v4812
        %v4814 = vpop.f32.mrb[0].mxu0
        %v4815 = vadd.f32 0.0, %v4814
        %v4816 = vpop.f32.mrb[0].mxu0
        %v4817 = vadd.f32 0.0, %v4816
        %4818 = vmatprep.mubr.bf16.mxu0 %v4184
        %4819 = vmatmul.mubr.bf16.gmra.mrb[0].mxu0 %v4183
        %v4820 = vpop.f32.mrb[0].mxu0
        %v4821 = vadd.f32 0.0, %v4820
        %v4822 = vpop.f32.mrb[0].mxu0
        %v4823 = vadd.f32 0.0, %v4822
        %v4824 = vpop.f32.mrb[0].mxu0
        %v4825 = vadd.f32 0.0, %v4824
        %v4826 = vpop.f32.mrb[0].mxu0
        %v4827 = vadd.f32 0.0, %v4826
        %4828 = vmatprep.mubr.bf16.mxu0 %v4187
        %4829 = vmatmul.mubr.bf16.gmra.mrb[0].mxu0 %v4186
        %v4830 = vpop.f32.mrb[0].mxu0
        %v4831 = vadd.f32 0.0, %v4830
        %v4832 = vpop.f32.mrb[0].mxu0
        %v4833 = vadd.f32 0.0, %v4832
        %v4834 = vpop.f32.mrb[0].mxu0
        %v4835 = vadd.f32 0.0, %v4834
        %v4836 = vpop.f32.mrb[0].mxu0
        %v4837 = vadd.f32 0.0, %v4836
        %4838 = vdwg.mxu0
        %4839 = vmatprep.subr.bf16.mxu0 %v4639
        %4840 = vmatpush1.bf16.msra.mxu0 %v4638
        %4841 = vmatprep.subr.bf16.mxu0 %v4643
        %4842 = vmatpush1.bf16.msra.mxu0 %v4642
        %4843 = vmatprep.subr.bf16.mxu0 %v4647
        %4844 = vmatpush1.bf16.msra.mxu0 %v4646
        %4845 = vmatprep.subr.bf16.mxu0 %v4651
        %4846 = vmatpush1.bf16.msra.mxu0 %v4650
        %4847 = vmatprep.subr.bf16.mxu0 %v4655
        %4848 = vmatpush1.bf16.msra.mxu0 %v4654
        %4849 = vmatprep.subr.bf16.mxu0 %v4659
        %4850 = vmatpush1.bf16.msra.mxu0 %v4658
        %4851 = vmatprep.subr.bf16.mxu0 %v4663
        %4852 = vmatpush1.bf16.msra.mxu0 %v4662
        %4853 = vmatprep.subr.bf16.mxu0 %v4667
        %4854 = vmatpush1.bf16.msra.mxu0 %v4666
        %4855 = vmatprep.subr.bf16.mxu0 0
        %4856 = vmatpush1.bf16.msra.mxu0 0
        %4857 = vmatprep.subr.bf16.mxu0 0
        %4858 = vmatpush1.bf16.msra.mxu0 0
        %4859 = vmatprep.subr.bf16.mxu0 0
        %4860 = vmatpush1.bf16.msra.mxu0 0
        %4861 = vmatprep.subr.bf16.mxu0 0
        %4862 = vmatpush1.bf16.msra.mxu0 0
        %4863 = vmatprep.subr.bf16.mxu0 0
        %4864 = vmatpush1.bf16.msra.mxu0 0
        %4865 = vmatprep.subr.bf16.mxu0 0
        %4866 = vmatpush1.bf16.msra.mxu0 0
        %4867 = vmatprep.subr.bf16.mxu0 0
        %4868 = vmatpush1.bf16.msra.mxu0 0
        %4869 = vmatprep.subr.bf16.mxu0 0
        %4870 = vmatpush1.bf16.msra.mxu0 0
        %4871 = vmatprep.mubr.bf16.mxu0 0
        %4872 = vmatmul.mubr.bf16.gmra.mrb[0].mxu0 %v4179
        %v4873 = vpop.f32.mrb[0].mxu0
        %v4874 = vadd.f32 %v4801, %v4873
        %v4875 = vpop.f32.mrb[0].mxu0
        %v4876 = vadd.f32 %v4803, %v4875
        %v4877 = vpop.f32.mrb[0].mxu0
        %v4878 = vadd.f32 %v4805, %v4877
        %v4879 = vpop.f32.mrb[0].mxu0
        %v4880 = vadd.f32 %v4807, %v4879
        %4881 = vmatprep.mubr.bf16.mxu0 0
        %4882 = vmatmul.mubr.bf16.gmra.mrb[0].mxu0 %v4182
        %v4883 = vpop.f32.mrb[0].mxu0
        %v4884 = vadd.f32 %v4811, %v4883
        %v4885 = vpop.f32.mrb[0].mxu0
        %v4886 = vadd.f32 %v4813, %v4885
        %v4887 = vpop.f32.mrb[0].mxu0
        %v4888 = vadd.f32 %v4815, %v4887
        %v4889 = vpop.f32.mrb[0].mxu0
        %v4890 = vadd.f32 %v4817, %v4889
        %4891 = vmatprep.mubr.bf16.mxu0 0
        %4892 = vmatmul.mubr.bf16.gmra.mrb[0].mxu0 %v4185
        %v4893 = vpop.f32.mrb[0].mxu0
        %v4894 = vadd.f32 %v4821, %v4893
        %v4895 = vpop.f32.mrb[0].mxu0
        %v4896 = vadd.f32 %v4823, %v4895
        %v4897 = vpop.f32.mrb[0].mxu0
        %v4898 = vadd.f32 %v4825, %v4897
        %v4899 = vpop.f32.mrb[0].mxu0
        %v4900 = vadd.f32 %v4827, %v4899
        %4901 = vmatprep.mubr.bf16.mxu0 0
        %4902 = vmatmul.mubr.bf16.gmra.mrb[0].mxu0 %v4188
        %v4903 = vpop.f32.mrb[0].mxu0
        %v4904 = vadd.f32 %v4831, %v4903
        %v4905 = vpop.f32.mrb[0].mxu0
        %v4906 = vadd.f32 %v4833, %v4905
        %v4907 = vpop.f32.mrb[0].mxu0
        %v4908 = vadd.f32 %v4835, %v4907
        %v4909 = vpop.f32.mrb[0].mxu0
        %v4910 = vadd.f32 %v4837, %v4909
        %4911 = vdwg.mxu0
        %4912 = vmatprep.subr.bf16.mxu0 %v4577
        %4913 = vmatpush1.bf16.msra.mxu0 %v4576
        %4914 = vmatprep.subr.bf16.mxu0 %v4581
        %4915 = vmatpush1.bf16.msra.mxu0 %v4580
        %4916 = vmatprep.subr.bf16.mxu0 %v4585
        %4917 = vmatpush1.bf16.msra.mxu0 %v4584
        %4918 = vmatprep.subr.bf16.mxu0 %v4589
        %4919 = vmatpush1.bf16.msra.mxu0 %v4588
        %4920 = vmatprep.subr.bf16.mxu0 %v4593
        %4921 = vmatpush1.bf16.msra.mxu0 %v4592
        %4922 = vmatprep.subr.bf16.mxu0 %v4597
        %4923 = vmatpush1.bf16.msra.mxu0 %v4596
        %4924 = vmatprep.subr.bf16.mxu0 %v4601
        %4925 = vmatpush1.bf16.msra.mxu0 %v4600
        %4926 = vmatprep.subr.bf16.mxu0 %v4605
        %4927 = vmatpush1.bf16.msra.mxu0 %v4604
        %4928 = vmatprep.subr.bf16.mxu0 %v4609
        %4929 = vmatpush1.bf16.msra.mxu0 %v4608
        %4930 = vmatprep.subr.bf16.mxu0 %v4613
        %4931 = vmatpush1.bf16.msra.mxu0 %v4612
        %4932 = vmatprep.subr.bf16.mxu0 %v4617
        %4933 = vmatpush1.bf16.msra.mxu0 %v4616
        %4934 = vmatprep.subr.bf16.mxu0 %v4621
        %4935 = vmatpush1.bf16.msra.mxu0 %v4620
        %4936 = vmatprep.subr.bf16.mxu0 %v4625
        %4937 = vmatpush1.bf16.msra.mxu0 %v4624
        %4938 = vmatprep.subr.bf16.mxu0 %v4629
        %4939 = vmatpush1.bf16.msra.mxu0 %v4628
        %4940 = vmatprep.subr.bf16.mxu0 %v4633
        %4941 = vmatpush1.bf16.msra.mxu0 %v4632
        %4942 = vmatprep.subr.bf16.mxu0 %v4637
        %4943 = vmatpush1.bf16.msra.mxu0 %v4636
        %4944 = vmatprep.mubr.bf16.mxu0 %v4178
        %4945 = vmatmul.mubr.bf16.gmra.mrb[0].mxu0 %v4177
        %v4946 = vpop.f32.mrb[0].mxu0
        %v4947 = vadd.f32 0.0, %v4946
        %v4948 = vpop.f32.mrb[0].mxu0
        %v4949 = vadd.f32 0.0, %v4948
        %v4950 = vpop.f32.mrb[0].mxu0
        %v4951 = vadd.f32 0.0, %v4950
        %v4952 = vpop.f32.mrb[0].mxu0
        %v4953 = vadd.f32 0.0, %v4952
        %4954 = vmatprep.mubr.bf16.mxu0 %v4181
        %4955 = vmatmul.mubr.bf16.gmra.mrb[0].mxu0 %v4180
        %v4956 = vpop.f32.mrb[0].mxu0
        %v4957 = vadd.f32 0.0, %v4956
        %v4958 = vpop.f32.mrb[0].mxu0
        %v4959 = vadd.f32 0.0, %v4958
        %v4960 = vpop.f32.mrb[0].mxu0
        %v4961 = vadd.f32 0.0, %v4960
        %v4962 = vpop.f32.mrb[0].mxu0
        %v4963 = vadd.f32 0.0, %v4962
        %4964 = vmatprep.mubr.bf16.mxu0 %v4184
        %4965 = vmatmul.mubr.bf16.gmra.mrb[0].mxu0 %v4183
        %v4966 = vpop.f32.mrb[0].mxu0
        %v4967 = vadd.f32 0.0, %v4966
        %v4968 = vpop.f32.mrb[0].mxu0
        %v4969 = vadd.f32 0.0, %v4968
        %v4970 = vpop.f32.mrb[0].mxu0
        %v4971 = vadd.f32 0.0, %v4970
        %v4972 = vpop.f32.mrb[0].mxu0
        %v4973 = vadd.f32 0.0, %v4972
        %4974 = vmatprep.mubr.bf16.mxu0 %v4187
        %4975 = vmatmul.mubr.bf16.gmra.mrb[0].mxu0 %v4186
        %v4976 = vpop.f32.mrb[0].mxu0
        %v4977 = vadd.f32 0.0, %v4976
        %v4978 = vpop.f32.mrb[0].mxu0
        %v4979 = vadd.f32 0.0, %v4978
        %v4980 = vpop.f32.mrb[0].mxu0
        %v4981 = vadd.f32 0.0, %v4980
        %v4982 = vpop.f32.mrb[0].mxu0
        %v4983 = vadd.f32 0.0, %v4982
        %4984 = vdwg.mxu0
        %4985 = vmatprep.subr.bf16.mxu0 %v4641
        %4986 = vmatpush1.bf16.msra.mxu0 %v4640
        %4987 = vmatprep.subr.bf16.mxu0 %v4645
        %4988 = vmatpush1.bf16.msra.mxu0 %v4644
        %4989 = vmatprep.subr.bf16.mxu0 %v4649
        %4990 = vmatpush1.bf16.msra.mxu0 %v4648
        %4991 = vmatprep.subr.bf16.mxu0 %v4653
        %4992 = vmatpush1.bf16.msra.mxu0 %v4652
        %4993 = vmatprep.subr.bf16.mxu0 %v4657
        %4994 = vmatpush1.bf16.msra.mxu0 %v4656
        %4995 = vmatprep.subr.bf16.mxu0 %v4661
        %4996 = vmatpush1.bf16.msra.mxu0 %v4660
        %4997 = vmatprep.subr.bf16.mxu0 %v4665
        %4998 = vmatpush1.bf16.msra.mxu0 %v4664
        %4999 = vmatprep.subr.bf16.mxu0 %v4669
        %5000 = vmatpush1.bf16.msra.mxu0 %v4668
        %5001 = vmatprep.subr.bf16.mxu0 0
        %5002 = vmatpush1.bf16.msra.mxu0 0
        %5003 = vmatprep.subr.bf16.mxu0 0
        %5004 = vmatpush1.bf16.msra.mxu0 0
        %5005 = vmatprep.subr.bf16.mxu0 0
        %5006 = vmatpush1.bf16.msra.mxu0 0
        %5007 = vmatprep.subr.bf16.mxu0 0
        %5008 = vmatpush1.bf16.msra.mxu0 0
        %5009 = vmatprep.subr.bf16.mxu0 0
        %5010 = vmatpush1.bf16.msra.mxu0 0
        %5011 = vmatprep.subr.bf16.mxu0 0
        %5012 = vmatpush1.bf16.msra.mxu0 0
        %5013 = vmatprep.subr.bf16.mxu0 0
        %5014 = vmatpush1.bf16.msra.mxu0 0
        %5015 = vmatprep.subr.bf16.mxu0 0
        %5016 = vmatpush1.bf16.msra.mxu0 0
        %5017 = vmatprep.mubr.bf16.mxu0 0
        %5018 = vmatmul.mubr.bf16.gmra.mrb[0].mxu0 %v4179
        %v5019 = vpop.f32.mrb[0].mxu0
        %v5020 = vadd.f32 %v4947, %v5019
        %v5021 = vpop.f32.mrb[0].mxu0
        %v5022 = vadd.f32 %v4949, %v5021
        %v5023 = vpop.f32.mrb[0].mxu0
        %v5024 = vadd.f32 %v4951, %v5023
        %v5025 = vpop.f32.mrb[0].mxu0
        %v5026 = vadd.f32 %v4953, %v5025
        %5027 = vmatprep.mubr.bf16.mxu0 0
        %5028 = vmatmul.mubr.bf16.gmra.mrb[0].mxu0 %v4182
        %v5029 = vpop.f32.mrb[0].mxu0
        %v5030 = vadd.f32 %v4957, %v5029
        %v5031 = vpop.f32.mrb[0].mxu0
        %v5032 = vadd.f32 %v4959, %v5031
        %v5033 = vpop.f32.mrb[0].mxu0
        %v5034 = vadd.f32 %v4961, %v5033
        %v5035 = vpop.f32.mrb[0].mxu0
        %v5036 = vadd.f32 %v4963, %v5035
        %5037 = vmatprep.mubr.bf16.mxu0 0
        %5038 = vmatmul.mubr.bf16.gmra.mrb[0].mxu0 %v4185
        %v5039 = vpop.f32.mrb[0].mxu0
        %v5040 = vadd.f32 %v4967, %v5039
        %v5041 = vpop.f32.mrb[0].mxu0
        %v5042 = vadd.f32 %v4969, %v5041
        %v5043 = vpop.f32.mrb[0].mxu0
        %v5044 = vadd.f32 %v4971, %v5043
        %v5045 = vpop.f32.mrb[0].mxu0
        %v5046 = vadd.f32 %v4973, %v5045
        %5047 = vmatprep.mubr.bf16.mxu0 0
        %5048 = vmatmul.mubr.bf16.gmra.mrb[0].mxu0 %v4188
        %v5049 = vpop.f32.mrb[0].mxu0
        %v5050 = vadd.f32 %v4977, %v5049
        %v5051 = vpop.f32.mrb[0].mxu0
        %v5052 = vadd.f32 %v4979, %v5051
        %v5053 = vpop.f32.mrb[0].mxu0
        %v5054 = vadd.f32 %v4981, %v5053
        %v5055 = vpop.f32.mrb[0].mxu0
        %v5056 = vadd.f32 %v4983, %v5055
        %5057 = vdwg.mxu0
        %v5154 = vunpack.c.l.b16 %v4081
        %v5155 = vunpack.c.h.b16 %v4081
        %v5156 = vunpack.c.l.b16 %v4082
        %v5157 = vunpack.c.h.b16 %v4082
        %v5158 = vunpack.c.l.b16 %v4083
        %v5159 = vunpack.c.h.b16 %v4083
        %v5160 = vunpack.c.l.b16 %v4084
        %v5161 = vunpack.c.h.b16 %v4084
        %v5162 = vunpack.c.l.b16 %v4085
        %v5163 = vunpack.c.h.b16 %v4085
        %v5164 = vunpack.c.l.b16 %v4086
        %v5165 = vunpack.c.h.b16 %v4086
        %v5166 = vunpack.c.l.b16 %v4087
        %v5167 = vunpack.c.h.b16 %v4087
        %v5168 = vunpack.c.l.b16 %v4088
        %v5169 = vunpack.c.h.b16 %v4088
        %v5170 = vunpack.c.l.b16 %v4089
        %v5171 = vunpack.c.h.b16 %v4089
        %v5172 = vunpack.c.l.b16 %v4090
        %v5173 = vunpack.c.h.b16 %v4090
        %v5174 = vunpack.c.l.b16 %v4091
        %v5175 = vunpack.c.h.b16 %v4091
        %v5176 = vunpack.c.l.b16 %v4092
        %v5177 = vunpack.c.h.b16 %v4092
        %v5178 = vunpack.c.l.b16 %v4093
        %v5179 = vunpack.c.h.b16 %v4093
        %v5180 = vunpack.c.l.b16 %v4094
        %v5181 = vunpack.c.h.b16 %v4094
        %v5182 = vunpack.c.l.b16 %v4095
        %v5183 = vunpack.c.h.b16 %v4095
        %v5184 = vunpack.c.l.b16 %v4096
        %v5185 = vunpack.c.h.b16 %v4096
        %v5186 = vunpack.c.l.b16 %v4097
        %v5187 = vunpack.c.h.b16 %v4097
        %v5188 = vunpack.c.l.b16 %v4098
        %v5189 = vunpack.c.h.b16 %v4098
        %v5190 = vunpack.c.l.b16 %v4099
        %v5191 = vunpack.c.h.b16 %v4099
        %v5192 = vunpack.c.l.b16 %v4100
        %v5193 = vunpack.c.h.b16 %v4100
        %v5194 = vunpack.c.l.b16 %v4101
        %v5195 = vunpack.c.h.b16 %v4101
        %v5196 = vunpack.c.l.b16 %v4102
        %v5197 = vunpack.c.h.b16 %v4102
        %v5198 = vunpack.c.l.b16 %v4103
        %v5199 = vunpack.c.h.b16 %v4103
        %v5200 = vunpack.c.l.b16 %v4104
        %v5201 = vunpack.c.h.b16 %v4104
        %v5202 = vunpack.c.l.b16 %v4105
        %v5203 = vunpack.c.h.b16 %v4105
        %v5204 = vunpack.c.l.b16 %v4106
        %v5205 = vunpack.c.h.b16 %v4106
        %v5206 = vunpack.c.l.b16 %v4107
        %v5207 = vunpack.c.h.b16 %v4107
        %v5208 = vunpack.c.l.b16 %v4108
        %v5209 = vunpack.c.h.b16 %v4108
        %v5210 = vunpack.c.l.b16 %v4109
        %v5211 = vunpack.c.h.b16 %v4109
        %v5212 = vunpack.c.l.b16 %v4110
        %v5213 = vunpack.c.h.b16 %v4110
        %v5214 = vunpack.c.l.b16 %v4111
        %v5215 = vunpack.c.h.b16 %v4111
        %v5216 = vunpack.c.l.b16 %v4112
        %v5217 = vunpack.c.h.b16 %v4112
        %v5218 = vunpack.c.l.b16 %v4113
        %v5219 = vunpack.c.h.b16 %v4113
        %v5220 = vunpack.c.l.b16 %v4114
        %v5221 = vunpack.c.h.b16 %v4114
        %v5222 = vunpack.c.l.b16 %v4115
        %v5223 = vunpack.c.h.b16 %v4115
        %v5224 = vunpack.c.l.b16 %v4116
        %v5225 = vunpack.c.h.b16 %v4116
        %v5226 = vunpack.c.l.b16 %v4117
        %v5227 = vunpack.c.h.b16 %v4117
        %v5228 = vunpack.c.l.b16 %v4118
        %v5229 = vunpack.c.h.b16 %v4118
        %v5230 = vunpack.c.l.b16 %v4119
        %v5231 = vunpack.c.h.b16 %v4119
        %v5232 = vunpack.c.l.b16 %v4120
        %v5233 = vunpack.c.h.b16 %v4120
        %v5234 = vunpack.c.l.b16 %v4121
        %v5235 = vunpack.c.h.b16 %v4121
        %v5236 = vunpack.c.l.b16 %v4122
        %v5237 = vunpack.c.h.b16 %v4122
        %v5238 = vunpack.c.l.b16 %v4123
        %v5239 = vunpack.c.h.b16 %v4123
        %v5240 = vunpack.c.l.b16 %v4124
        %v5241 = vunpack.c.h.b16 %v4124
        %v5242 = vunpack.c.l.b16 %v4125
        %v5243 = vunpack.c.h.b16 %v4125
        %v5244 = vunpack.c.l.b16 %v4126
        %v5245 = vunpack.c.h.b16 %v4126
        %v5246 = vunpack.c.l.b16 %v4127
        %v5247 = vunpack.c.h.b16 %v4127
        %v5248 = vunpack.c.l.b16 %v4128
        %v5249 = vunpack.c.h.b16 %v4128
        %v5250 = vunpack.c.l.b16 %v4129
        %v5251 = vunpack.c.h.b16 %v4129
        %v5252 = vunpack.c.l.b16 %v4130
        %v5253 = vunpack.c.h.b16 %v4130
        %v5254 = vunpack.c.l.b16 %v4131
        %v5255 = vunpack.c.h.b16 %v4131
        %v5256 = vunpack.c.l.b16 %v4132
        %v5257 = vunpack.c.h.b16 %v4132
        %v5258 = vunpack.c.l.b16 %v4133
        %v5259 = vunpack.c.h.b16 %v4133
        %v5260 = vunpack.c.l.b16 %v4134
        %v5261 = vunpack.c.h.b16 %v4134
        %v5262 = vunpack.c.l.b16 %v4135
        %v5263 = vunpack.c.h.b16 %v4135
        %v5264 = vunpack.c.l.b16 %v4136
        %v5265 = vunpack.c.h.b16 %v4136
        %v5266 = vunpack.c.l.b16 %v4137
        %v5267 = vunpack.c.h.b16 %v4137
        %v5268 = vunpack.c.l.b16 %v4138
        %v5269 = vunpack.c.h.b16 %v4138
        %v5270 = vunpack.c.l.b16 %v4139
        %v5271 = vunpack.c.h.b16 %v4139
        %v5272 = vunpack.c.l.b16 %v4140
        %v5273 = vunpack.c.h.b16 %v4140
        %v5274 = vunpack.c.l.b16 %v4141
        %v5275 = vunpack.c.h.b16 %v4141
        %v5276 = vunpack.c.l.b16 %v4142
        %v5277 = vunpack.c.h.b16 %v4142
        %v5278 = vunpack.c.l.b16 %v4143
        %v5279 = vunpack.c.h.b16 %v4143
        %v5280 = vunpack.c.l.b16 %v4144
        %v5281 = vunpack.c.h.b16 %v4144
        %v5282 = vunpack.c.l.b16 %v4145
        %v5283 = vunpack.c.h.b16 %v4145
        %v5284 = vunpack.c.l.b16 %v4146
        %v5285 = vunpack.c.h.b16 %v4146
        %v5286 = vunpack.c.l.b16 %v4147
        %v5287 = vunpack.c.h.b16 %v4147
        %v5288 = vunpack.c.l.b16 %v4148
        %v5289 = vunpack.c.h.b16 %v4148
        %v5290 = vunpack.c.l.b16 %v4149
        %v5291 = vunpack.c.h.b16 %v4149
        %v5292 = vunpack.c.l.b16 %v4150
        %v5293 = vunpack.c.h.b16 %v4150
        %v5294 = vunpack.c.l.b16 %v4151
        %v5295 = vunpack.c.h.b16 %v4151
        %v5296 = vunpack.c.l.b16 %v4152
        %v5297 = vunpack.c.h.b16 %v4152
        %v5298 = vunpack.c.l.b16 %v4153
        %v5299 = vunpack.c.h.b16 %v4153
        %v5300 = vunpack.c.l.b16 %v4154
        %v5301 = vunpack.c.h.b16 %v4154
        %v5302 = vunpack.c.l.b16 %v4155
        %v5303 = vunpack.c.h.b16 %v4155
        %v5304 = vunpack.c.l.b16 %v4156
        %v5305 = vunpack.c.h.b16 %v4156
        %v5306 = vunpack.c.l.b16 %v4157
        %v5307 = vunpack.c.h.b16 %v4157
        %v5308 = vunpack.c.l.b16 %v4158
        %v5309 = vunpack.c.h.b16 %v4158
        %v5310 = vunpack.c.l.b16 %v4159
        %v5311 = vunpack.c.h.b16 %v4159
        %v5312 = vunpack.c.l.b16 %v4160
        %v5313 = vunpack.c.h.b16 %v4160
        %v5314 = vunpack.c.l.b16 %v4161
        %v5315 = vunpack.c.h.b16 %v4161
        %v5316 = vunpack.c.l.b16 %v4162
        %v5317 = vunpack.c.h.b16 %v4162
        %v5318 = vunpack.c.l.b16 %v4163
        %v5319 = vunpack.c.h.b16 %v4163
        %v5320 = vunpack.c.l.b16 %v4164
        %v5321 = vunpack.c.h.b16 %v4164
        %v5322 = vunpack.c.l.b16 %v4165
        %v5323 = vunpack.c.h.b16 %v4165
        %v5324 = vunpack.c.l.b16 %v4166
        %v5325 = vunpack.c.h.b16 %v4166
        %v5326 = vunpack.c.l.b16 %v4167
        %v5327 = vunpack.c.h.b16 %v4167
        %v5328 = vunpack.c.l.b16 %v4168
        %v5329 = vunpack.c.h.b16 %v4168
        %v5330 = vunpack.c.l.b16 %v4169
        %v5331 = vunpack.c.h.b16 %v4169
        %v5332 = vunpack.c.l.b16 %v4170
        %v5333 = vunpack.c.h.b16 %v4170
        %v5334 = vunpack.c.l.b16 %v4171
        %v5335 = vunpack.c.h.b16 %v4171
        %v5336 = vunpack.c.l.b16 %v4172
        %v5337 = vunpack.c.h.b16 %v4172
        %v5338 = vunpack.c.l.b16 %v4173
        %v5339 = vunpack.c.h.b16 %v4173
        %v5340 = vunpack.c.l.b16 %v4174
        %v5341 = vunpack.c.h.b16 %v4174
        %v5342 = vunpack.c.l.b16 %v4175
        %v5343 = vunpack.c.h.b16 %v4175
        %v5344 = vunpack.c.l.b16 %v4176
        %v5345 = vunpack.c.h.b16 %v4176
        %v5346 = vpack.c.b16 %v5158, %v5154
        %v5347 = vpack.c.b16 %v5159, %v5155
        %v5348 = vpack.c.b16 %v5160, %v5156
        %v5349 = vpack.c.b16 %v5161, %v5157
        %v5350 = vpack.c.b16 %v5166, %v5162
        %v5351 = vpack.c.b16 %v5167, %v5163
        %v5352 = vpack.c.b16 %v5168, %v5164
        %v5353 = vpack.c.b16 %v5169, %v5165
        %v5354 = vpack.c.b16 %v5174, %v5170
        %v5355 = vpack.c.b16 %v5175, %v5171
        %v5356 = vpack.c.b16 %v5176, %v5172
        %v5357 = vpack.c.b16 %v5177, %v5173
        %v5358 = vpack.c.b16 %v5182, %v5178
        %v5359 = vpack.c.b16 %v5183, %v5179
        %v5360 = vpack.c.b16 %v5184, %v5180
        %v5361 = vpack.c.b16 %v5185, %v5181
        %v5362 = vpack.c.b16 %v5190, %v5186
        %v5363 = vpack.c.b16 %v5191, %v5187
        %v5364 = vpack.c.b16 %v5192, %v5188
        %v5365 = vpack.c.b16 %v5193, %v5189
        %v5366 = vpack.c.b16 %v5198, %v5194
        %v5367 = vpack.c.b16 %v5199, %v5195
        %v5368 = vpack.c.b16 %v5200, %v5196
        %v5369 = vpack.c.b16 %v5201, %v5197
        %v5370 = vpack.c.b16 %v5206, %v5202
        %v5371 = vpack.c.b16 %v5207, %v5203
        %v5372 = vpack.c.b16 %v5208, %v5204
        %v5373 = vpack.c.b16 %v5209, %v5205
        %v5374 = vpack.c.b16 %v5214, %v5210
        %v5375 = vpack.c.b16 %v5215, %v5211
        %v5376 = vpack.c.b16 %v5216, %v5212
        %v5377 = vpack.c.b16 %v5217, %v5213
        %v5378 = vpack.c.b16 %v5222, %v5218
        %v5379 = vpack.c.b16 %v5223, %v5219
        %v5380 = vpack.c.b16 %v5224, %v5220
        %v5381 = vpack.c.b16 %v5225, %v5221
        %v5382 = vpack.c.b16 %v5230, %v5226
        %v5383 = vpack.c.b16 %v5231, %v5227
        %v5384 = vpack.c.b16 %v5232, %v5228
        %v5385 = vpack.c.b16 %v5233, %v5229
        %v5386 = vpack.c.b16 %v5238, %v5234
        %v5387 = vpack.c.b16 %v5239, %v5235
        %v5388 = vpack.c.b16 %v5240, %v5236
        %v5389 = vpack.c.b16 %v5241, %v5237
        %v5390 = vpack.c.b16 %v5246, %v5242
        %v5391 = vpack.c.b16 %v5247, %v5243
        %v5392 = vpack.c.b16 %v5248, %v5244
        %v5393 = vpack.c.b16 %v5249, %v5245
        %v5394 = vpack.c.b16 %v5254, %v5250
        %v5395 = vpack.c.b16 %v5255, %v5251
        %v5396 = vpack.c.b16 %v5256, %v5252
        %v5397 = vpack.c.b16 %v5257, %v5253
        %v5398 = vpack.c.b16 %v5262, %v5258
        %v5399 = vpack.c.b16 %v5263, %v5259
        %v5400 = vpack.c.b16 %v5264, %v5260
        %v5401 = vpack.c.b16 %v5265, %v5261
        %v5402 = vpack.c.b16 %v5270, %v5266
        %v5403 = vpack.c.b16 %v5271, %v5267
        %v5404 = vpack.c.b16 %v5272, %v5268
        %v5405 = vpack.c.b16 %v5273, %v5269
        %v5406 = vpack.c.b16 %v5278, %v5274
        %v5407 = vpack.c.b16 %v5279, %v5275
        %v5408 = vpack.c.b16 %v5280, %v5276
        %v5409 = vpack.c.b16 %v5281, %v5277
        %v5410 = vpack.c.b16 %v5286, %v5282
        %v5411 = vpack.c.b16 %v5287, %v5283
        %v5412 = vpack.c.b16 %v5288, %v5284
        %v5413 = vpack.c.b16 %v5289, %v5285
        %v5414 = vpack.c.b16 %v5294, %v5290
        %v5415 = vpack.c.b16 %v5295, %v5291
        %v5416 = vpack.c.b16 %v5296, %v5292
        %v5417 = vpack.c.b16 %v5297, %v5293
        %v5418 = vpack.c.b16 %v5302, %v5298
        %v5419 = vpack.c.b16 %v5303, %v5299
        %v5420 = vpack.c.b16 %v5304, %v5300
        %v5421 = vpack.c.b16 %v5305, %v5301
        %v5422 = vpack.c.b16 %v5310, %v5306
        %v5423 = vpack.c.b16 %v5311, %v5307
        %v5424 = vpack.c.b16 %v5312, %v5308
        %v5425 = vpack.c.b16 %v5313, %v5309
        %v5426 = vpack.c.b16 %v5318, %v5314
        %v5427 = vpack.c.b16 %v5319, %v5315
        %v5428 = vpack.c.b16 %v5320, %v5316
        %v5429 = vpack.c.b16 %v5321, %v5317
        %v5430 = vpack.c.b16 %v5326, %v5322
        %v5431 = vpack.c.b16 %v5327, %v5323
        %v5432 = vpack.c.b16 %v5328, %v5324
        %v5433 = vpack.c.b16 %v5329, %v5325
        %v5434 = vpack.c.b16 %v5334, %v5330
        %v5435 = vpack.c.b16 %v5335, %v5331
        %v5436 = vpack.c.b16 %v5336, %v5332
        %v5437 = vpack.c.b16 %v5337, %v5333
        %v5438 = vpack.c.b16 %v5342, %v5338
        %v5439 = vpack.c.b16 %v5343, %v5339
        %v5440 = vpack.c.b16 %v5344, %v5340
        %v5441 = vpack.c.b16 %v5345, %v5341
        %5538 = vmatprep.subr.bf16.mxu0 %v5347
        %5539 = vmatpush1.bf16.msra.mxu0 %v5346
        %5540 = vmatprep.subr.bf16.mxu0 %v5351
        %5541 = vmatpush1.bf16.msra.mxu0 %v5350
        %5542 = vmatprep.subr.bf16.mxu0 %v5355
        %5543 = vmatpush1.bf16.msra.mxu0 %v5354
        %5544 = vmatprep.subr.bf16.mxu0 %v5359
        %5545 = vmatpush1.bf16.msra.mxu0 %v5358
        %5546 = vmatprep.subr.bf16.mxu0 %v5363
        %5547 = vmatpush1.bf16.msra.mxu0 %v5362
        %5548 = vmatprep.subr.bf16.mxu0 %v5367
        %5549 = vmatpush1.bf16.msra.mxu0 %v5366
        %5550 = vmatprep.subr.bf16.mxu0 %v5371
        %5551 = vmatpush1.bf16.msra.mxu0 %v5370
        %5552 = vmatprep.subr.bf16.mxu0 %v5375
        %5553 = vmatpush1.bf16.msra.mxu0 %v5374
        %5554 = vmatprep.subr.bf16.mxu0 %v5379
        %5555 = vmatpush1.bf16.msra.mxu0 %v5378
        %5556 = vmatprep.subr.bf16.mxu0 %v5383
        %5557 = vmatpush1.bf16.msra.mxu0 %v5382
        %5558 = vmatprep.subr.bf16.mxu0 %v5387
        %5559 = vmatpush1.bf16.msra.mxu0 %v5386
        %5560 = vmatprep.subr.bf16.mxu0 %v5391
        %5561 = vmatpush1.bf16.msra.mxu0 %v5390
        %5562 = vmatprep.subr.bf16.mxu0 %v5395
        %5563 = vmatpush1.bf16.msra.mxu0 %v5394
        %5564 = vmatprep.subr.bf16.mxu0 %v5399
        %5565 = vmatpush1.bf16.msra.mxu0 %v5398
        %5566 = vmatprep.subr.bf16.mxu0 %v5403
        %5567 = vmatpush1.bf16.msra.mxu0 %v5402
        %5568 = vmatprep.subr.bf16.mxu0 %v5407
        %5569 = vmatpush1.bf16.msra.mxu0 %v5406
        %5570 = vmatprep.mubr.bf16.mxu0 %v4070
        %5571 = vmatmul.mubr.bf16.gmra.mrb[0].mxu0 %v4069
        %v5572 = vpop.f32.mrb[0].mxu0
        %v5573 = vadd.f32 %v4874, %v5572
        %v5574 = vpop.f32.mrb[0].mxu0
        %v5575 = vadd.f32 %v4876, %v5574
        %v5576 = vpop.f32.mrb[0].mxu0
        %v5577 = vadd.f32 %v4878, %v5576
        %v5578 = vpop.f32.mrb[0].mxu0
        %v5579 = vadd.f32 %v4880, %v5578
        %5580 = vmatprep.mubr.bf16.mxu0 %v4073
        %5581 = vmatmul.mubr.bf16.gmra.mrb[0].mxu0 %v4072
        %v5582 = vpop.f32.mrb[0].mxu0
        %v5583 = vadd.f32 %v4884, %v5582
        %v5584 = vpop.f32.mrb[0].mxu0
        %v5585 = vadd.f32 %v4886, %v5584
        %v5586 = vpop.f32.mrb[0].mxu0
        %v5587 = vadd.f32 %v4888, %v5586
        %v5588 = vpop.f32.mrb[0].mxu0
        %v5589 = vadd.f32 %v4890, %v5588
        %5590 = vmatprep.mubr.bf16.mxu0 %v4076
        %5591 = vmatmul.mubr.bf16.gmra.mrb[0].mxu0 %v4075
        %v5592 = vpop.f32.mrb[0].mxu0
        %v5593 = vadd.f32 %v4894, %v5592
        %v5594 = vpop.f32.mrb[0].mxu0
        %v5595 = vadd.f32 %v4896, %v5594
        %v5596 = vpop.f32.mrb[0].mxu0
        %v5597 = vadd.f32 %v4898, %v5596
        %v5598 = vpop.f32.mrb[0].mxu0
        %v5599 = vadd.f32 %v4900, %v5598
        %5600 = vmatprep.mubr.bf16.mxu0 %v4079
        %5601 = vmatmul.mubr.bf16.gmra.mrb[0].mxu0 %v4078
        %v5602 = vpop.f32.mrb[0].mxu0
        %v5603 = vadd.f32 %v4904, %v5602
        %v5604 = vpop.f32.mrb[0].mxu0
        %v5605 = vadd.f32 %v4906, %v5604
        %v5606 = vpop.f32.mrb[0].mxu0
        %v5607 = vadd.f32 %v4908, %v5606
        %v5608 = vpop.f32.mrb[0].mxu0
        %v5609 = vadd.f32 %v4910, %v5608
        %5610 = vdwg.mxu0
        %5611 = vmatprep.subr.bf16.mxu0 %v5411
        %5612 = vmatpush1.bf16.msra.mxu0 %v5410
        %5613 = vmatprep.subr.bf16.mxu0 %v5415
        %5614 = vmatpush1.bf16.msra.mxu0 %v5414
        %5615 = vmatprep.subr.bf16.mxu0 %v5419
        %5616 = vmatpush1.bf16.msra.mxu0 %v5418
        %5617 = vmatprep.subr.bf16.mxu0 %v5423
        %5618 = vmatpush1.bf16.msra.mxu0 %v5422
        %5619 = vmatprep.subr.bf16.mxu0 %v5427
        %5620 = vmatpush1.bf16.msra.mxu0 %v5426
        %5621 = vmatprep.subr.bf16.mxu0 %v5431
        %5622 = vmatpush1.bf16.msra.mxu0 %v5430
        %5623 = vmatprep.subr.bf16.mxu0 %v5435
        %5624 = vmatpush1.bf16.msra.mxu0 %v5434
        %5625 = vmatprep.subr.bf16.mxu0 %v5439
        %5626 = vmatpush1.bf16.msra.mxu0 %v5438
        %5627 = vmatprep.subr.bf16.mxu0 0
        %5628 = vmatpush1.bf16.msra.mxu0 0
        %5629 = vmatprep.subr.bf16.mxu0 0
        %5630 = vmatpush1.bf16.msra.mxu0 0
        %5631 = vmatprep.subr.bf16.mxu0 0
        %5632 = vmatpush1.bf16.msra.mxu0 0
        %5633 = vmatprep.subr.bf16.mxu0 0
        %5634 = vmatpush1.bf16.msra.mxu0 0
        %5635 = vmatprep.subr.bf16.mxu0 0
        %5636 = vmatpush1.bf16.msra.mxu0 0
        %5637 = vmatprep.subr.bf16.mxu0 0
        %5638 = vmatpush1.bf16.msra.mxu0 0
        %5639 = vmatprep.subr.bf16.mxu0 0
        %5640 = vmatpush1.bf16.msra.mxu0 0
        %5641 = vmatprep.subr.bf16.mxu0 0
        %5642 = vmatpush1.bf16.msra.mxu0 0
        %5643 = vmatprep.mubr.bf16.mxu0 0
        %5644 = vmatmul.mubr.bf16.gmra.mrb[0].mxu0 %v4071
        %v5645 = vpop.f32.mrb[0].mxu0
        %v5646 = vadd.f32 %v5573, %v5645
        %v5647 = vpop.f32.mrb[0].mxu0
        %v5648 = vadd.f32 %v5575, %v5647
        %v5649 = vpop.f32.mrb[0].mxu0
        %v5650 = vadd.f32 %v5577, %v5649
        %v5651 = vpop.f32.mrb[0].mxu0
        %v5652 = vadd.f32 %v5579, %v5651
        %5653 = vmatprep.mubr.bf16.mxu0 0
        %5654 = vmatmul.mubr.bf16.gmra.mrb[0].mxu0 %v4074
        %v5655 = vpop.f32.mrb[0].mxu0
        %v5656 = vadd.f32 %v5583, %v5655
        %v5657 = vpop.f32.mrb[0].mxu0
        %v5658 = vadd.f32 %v5585, %v5657
        %v5659 = vpop.f32.mrb[0].mxu0
        %v5660 = vadd.f32 %v5587, %v5659
        %v5661 = vpop.f32.mrb[0].mxu0
        %v5662 = vadd.f32 %v5589, %v5661
        %5663 = vmatprep.mubr.bf16.mxu0 0
        %5664 = vmatmul.mubr.bf16.gmra.mrb[0].mxu0 %v4077
        %v5665 = vpop.f32.mrb[0].mxu0
        %v5666 = vadd.f32 %v5593, %v5665
        %v5667 = vpop.f32.mrb[0].mxu0
        %v5668 = vadd.f32 %v5595, %v5667
        %v5669 = vpop.f32.mrb[0].mxu0
        %v5670 = vadd.f32 %v5597, %v5669
        %v5671 = vpop.f32.mrb[0].mxu0
        %v5672 = vadd.f32 %v5599, %v5671
        %5673 = vmatprep.mubr.bf16.mxu0 0
        %5674 = vmatmul.mubr.bf16.gmra.mrb[0].mxu0 %v4080
        %v5675 = vpop.f32.mrb[0].mxu0
        %v5676 = vadd.f32 %v5603, %v5675
        %v5677 = vpop.f32.mrb[0].mxu0
        %v5678 = vadd.f32 %v5605, %v5677
        %v5679 = vpop.f32.mrb[0].mxu0
        %v5680 = vadd.f32 %v5607, %v5679
        %v5681 = vpop.f32.mrb[0].mxu0
        %v5682 = vadd.f32 %v5609, %v5681
        %5683 = vdwg.mxu0
        %5684 = vmatprep.subr.bf16.mxu0 %v5349
        %5685 = vmatpush1.bf16.msra.mxu0 %v5348
        %5686 = vmatprep.subr.bf16.mxu0 %v5353
        %5687 = vmatpush1.bf16.msra.mxu0 %v5352
        %5688 = vmatprep.subr.bf16.mxu0 %v5357
        %5689 = vmatpush1.bf16.msra.mxu0 %v5356
        %5690 = vmatprep.subr.bf16.mxu0 %v5361
        %5691 = vmatpush1.bf16.msra.mxu0 %v5360
        %5692 = vmatprep.subr.bf16.mxu0 %v5365
        %5693 = vmatpush1.bf16.msra.mxu0 %v5364
        %5694 = vmatprep.subr.bf16.mxu0 %v5369
        %5695 = vmatpush1.bf16.msra.mxu0 %v5368
        %5696 = vmatprep.subr.bf16.mxu0 %v5373
        %5697 = vmatpush1.bf16.msra.mxu0 %v5372
        %5698 = vmatprep.subr.bf16.mxu0 %v5377
        %5699 = vmatpush1.bf16.msra.mxu0 %v5376
        %5700 = vmatprep.subr.bf16.mxu0 %v5381
        %5701 = vmatpush1.bf16.msra.mxu0 %v5380
        %5702 = vmatprep.subr.bf16.mxu0 %v5385
        %5703 = vmatpush1.bf16.msra.mxu0 %v5384
        %5704 = vmatprep.subr.bf16.mxu0 %v5389
        %5705 = vmatpush1.bf16.msra.mxu0 %v5388
        %5706 = vmatprep.subr.bf16.mxu0 %v5393
        %5707 = vmatpush1.bf16.msra.mxu0 %v5392
        %5708 = vmatprep.subr.bf16.mxu0 %v5397
        %5709 = vmatpush1.bf16.msra.mxu0 %v5396
        %5710 = vmatprep.subr.bf16.mxu0 %v5401
        %5711 = vmatpush1.bf16.msra.mxu0 %v5400
        %5712 = vmatprep.subr.bf16.mxu0 %v5405
        %5713 = vmatpush1.bf16.msra.mxu0 %v5404
        %5714 = vmatprep.subr.bf16.mxu0 %v5409
        %5715 = vmatpush1.bf16.msra.mxu0 %v5408
        %5716 = vmatprep.mubr.bf16.mxu0 %v4070
        %5717 = vmatmul.mubr.bf16.gmra.mrb[0].mxu0 %v4069
        %v5718 = vpop.f32.mrb[0].mxu0
        %v5719 = vadd.f32 %v5020, %v5718
        %v5720 = vpop.f32.mrb[0].mxu0
        %v5721 = vadd.f32 %v5022, %v5720
        %v5722 = vpop.f32.mrb[0].mxu0
        %v5723 = vadd.f32 %v5024, %v5722
        %v5724 = vpop.f32.mrb[0].mxu0
        %v5725 = vadd.f32 %v5026, %v5724
        %5726 = vmatprep.mubr.bf16.mxu0 %v4073
        %5727 = vmatmul.mubr.bf16.gmra.mrb[0].mxu0 %v4072
        %v5728 = vpop.f32.mrb[0].mxu0
        %v5729 = vadd.f32 %v5030, %v5728
        %v5730 = vpop.f32.mrb[0].mxu0
        %v5731 = vadd.f32 %v5032, %v5730
        %v5732 = vpop.f32.mrb[0].mxu0
        %v5733 = vadd.f32 %v5034, %v5732
        %v5734 = vpop.f32.mrb[0].mxu0
        %v5735 = vadd.f32 %v5036, %v5734
        %5736 = vmatprep.mubr.bf16.mxu0 %v4076
        %5737 = vmatmul.mubr.bf16.gmra.mrb[0].mxu0 %v4075
        %v5738 = vpop.f32.mrb[0].mxu0
        %v5739 = vadd.f32 %v5040, %v5738
        %v5740 = vpop.f32.mrb[0].mxu0
        %v5741 = vadd.f32 %v5042, %v5740
        %v5742 = vpop.f32.mrb[0].mxu0
        %v5743 = vadd.f32 %v5044, %v5742
        %v5744 = vpop.f32.mrb[0].mxu0
        %v5745 = vadd.f32 %v5046, %v5744
        %5746 = vmatprep.mubr.bf16.mxu0 %v4079
        %5747 = vmatmul.mubr.bf16.gmra.mrb[0].mxu0 %v4078
        %v5748 = vpop.f32.mrb[0].mxu0
        %v5749 = vadd.f32 %v5050, %v5748
        %v5750 = vpop.f32.mrb[0].mxu0
        %v5751 = vadd.f32 %v5052, %v5750
        %v5752 = vpop.f32.mrb[0].mxu0
        %v5753 = vadd.f32 %v5054, %v5752
        %v5754 = vpop.f32.mrb[0].mxu0
        %v5755 = vadd.f32 %v5056, %v5754
        %5756 = vdwg.mxu0
        %5757 = vmatprep.subr.bf16.mxu0 %v5413
        %5758 = vmatpush1.bf16.msra.mxu0 %v5412
        %5759 = vmatprep.subr.bf16.mxu0 %v5417
        %5760 = vmatpush1.bf16.msra.mxu0 %v5416
        %5761 = vmatprep.subr.bf16.mxu0 %v5421
        %5762 = vmatpush1.bf16.msra.mxu0 %v5420
        %5763 = vmatprep.subr.bf16.mxu0 %v5425
        %5764 = vmatpush1.bf16.msra.mxu0 %v5424
        %5765 = vmatprep.subr.bf16.mxu0 %v5429
        %5766 = vmatpush1.bf16.msra.mxu0 %v5428
        %5767 = vmatprep.subr.bf16.mxu0 %v5433
        %5768 = vmatpush1.bf16.msra.mxu0 %v5432
        %5769 = vmatprep.subr.bf16.mxu0 %v5437
        %5770 = vmatpush1.bf16.msra.mxu0 %v5436
        %5771 = vmatprep.subr.bf16.mxu0 %v5441
        %5772 = vmatpush1.bf16.msra.mxu0 %v5440
        %5773 = vmatprep.subr.bf16.mxu0 0
        %5774 = vmatpush1.bf16.msra.mxu0 0
        %5775 = vmatprep.subr.bf16.mxu0 0
        %5776 = vmatpush1.bf16.msra.mxu0 0
        %5777 = vmatprep.subr.bf16.mxu0 0
        %5778 = vmatpush1.bf16.msra.mxu0 0
        %5779 = vmatprep.subr.bf16.mxu0 0
        %5780 = vmatpush1.bf16.msra.mxu0 0
        %5781 = vmatprep.subr.bf16.mxu0 0
        %5782 = vmatpush1.bf16.msra.mxu0 0
        %5783 = vmatprep.subr.bf16.mxu0 0
        %5784 = vmatpush1.bf16.msra.mxu0 0
        %5785 = vmatprep.subr.bf16.mxu0 0
        %5786 = vmatpush1.bf16.msra.mxu0 0
        %5787 = vmatprep.subr.bf16.mxu0 0
        %5788 = vmatpush1.bf16.msra.mxu0 0
        %5789 = vmatprep.mubr.bf16.mxu0 0
        %5790 = vmatmul.mubr.bf16.gmra.mrb[0].mxu0 %v4071
        %v5791 = vpop.f32.mrb[0].mxu0
        %v5792 = vadd.f32 %v5719, %v5791
        %v5793 = vpop.f32.mrb[0].mxu0
        %v5794 = vadd.f32 %v5721, %v5793
        %v5795 = vpop.f32.mrb[0].mxu0
        %v5796 = vadd.f32 %v5723, %v5795
        %v5797 = vpop.f32.mrb[0].mxu0
        %v5798 = vadd.f32 %v5725, %v5797
        %5799 = vmatprep.mubr.bf16.mxu0 0
        %5800 = vmatmul.mubr.bf16.gmra.mrb[0].mxu0 %v4074
        %v5801 = vpop.f32.mrb[0].mxu0
        %v5802 = vadd.f32 %v5729, %v5801
        %v5803 = vpop.f32.mrb[0].mxu0
        %v5804 = vadd.f32 %v5731, %v5803
        %v5805 = vpop.f32.mrb[0].mxu0
        %v5806 = vadd.f32 %v5733, %v5805
        %v5807 = vpop.f32.mrb[0].mxu0
        %v5808 = vadd.f32 %v5735, %v5807
        %5809 = vmatprep.mubr.bf16.mxu0 0
        %5810 = vmatmul.mubr.bf16.gmra.mrb[0].mxu0 %v4077
        %v5811 = vpop.f32.mrb[0].mxu0
        %v5812 = vadd.f32 %v5739, %v5811
        %v5813 = vpop.f32.mrb[0].mxu0
        %v5814 = vadd.f32 %v5741, %v5813
        %v5815 = vpop.f32.mrb[0].mxu0
        %v5816 = vadd.f32 %v5743, %v5815
        %v5817 = vpop.f32.mrb[0].mxu0
        %v5818 = vadd.f32 %v5745, %v5817
        %5819 = vmatprep.mubr.bf16.mxu0 0
        %5820 = vmatmul.mubr.bf16.gmra.mrb[0].mxu0 %v4080
        %v5821 = vpop.f32.mrb[0].mxu0
        %v5822 = vadd.f32 %v5749, %v5821
        %v5823 = vpop.f32.mrb[0].mxu0
        %v5824 = vadd.f32 %v5751, %v5823
        %v5825 = vpop.f32.mrb[0].mxu0
        %v5826 = vadd.f32 %v5753, %v5825
        %v5827 = vpop.f32.mrb[0].mxu0
        %v5828 = vadd.f32 %v5755, %v5827
        %5829 = vdwg.mxu0
        %v5830 = vpack.c.bf16 %v4060, %v4057
        %v5831 = vpack.c.bf16 %v4061, %v4058
        %v5832 = vpack.c.bf16 %v4062, %v4059
        %s5833 = scalar_lea.vmem [#allocation7], 1536
        %v5834 = vld [vmem:[%s5833] sm:$0xff]
        %v5835 = vld [vmem:[%s5833 + $0x8] sm:$0xff]
        %v5836 = vld [vmem:[%s5833 + $0x10] sm:$0xff]
        %v5837 = vld [vmem:[%s5833 + $0x18] sm:$0xff]
        %v5838 = vld [vmem:[%s5833 + $0x20] sm:$0xff]
        %v5839 = vld [vmem:[%s5833 + $0x28] sm:$0xff]
        %v5840 = vld [vmem:[%s5833 + $0x30] sm:$0xff]
        %v5841 = vld [vmem:[%s5833 + $0x38] sm:$0xff]
        %v5842 = vld [vmem:[%s5833 + $0x40] sm:$0xff]
        %v5843 = vld [vmem:[%s5833 + $0x48] sm:$0xff]
        %v5844 = vld [vmem:[%s5833 + $0x50] sm:$0xff]
        %v5845 = vld [vmem:[%s5833 + $0x58] sm:$0xff]
        %v5846 = vld [vmem:[%s5833 + $0x60] sm:$0xff]
        %v5847 = vld [vmem:[%s5833 + $0x68] sm:$0xff]
        %v5848 = vld [vmem:[%s5833 + $0x70] sm:$0xff]
        %v5849 = vld [vmem:[%s5833 + $0x78] sm:$0xff]
        %v5850 = vld [vmem:[%s5833 + $0x80] sm:$0xff]
        %v5851 = vld [vmem:[%s5833 + $0x88] sm:$0xff]
        %v5852 = vld [vmem:[%s5833 + $0x90] sm:$0xff]
        %v5853 = vld [vmem:[%s5833 + $0x98] sm:$0xff]
        %v5854 = vld [vmem:[%s5833 + $0xa0] sm:$0xff]
        %v5855 = vld [vmem:[%s5833 + $0xa8] sm:$0xff]
        %v5856 = vld [vmem:[%s5833 + $0xb0] sm:$0xff]
        %v5857 = vld [vmem:[%s5833 + $0xb8] sm:$0xff]
        %v5858 = vld [vmem:[%s5833 + $0xc0] sm:$0xff]
        %v5859 = vld [vmem:[%s5833 + $0xc8] sm:$0xff]
        %v5860 = vld [vmem:[%s5833 + $0xd0] sm:$0xff]
        %v5861 = vld [vmem:[%s5833 + $0xd8] sm:$0xff]
        %v5862 = vld [vmem:[%s5833 + $0xe0] sm:$0xff]
        %v5863 = vld [vmem:[%s5833 + $0xe8] sm:$0xff]
        %v5864 = vld [vmem:[%s5833 + $0xf0] sm:$0xff]
        %v5865 = vld [vmem:[%s5833 + $0xf8] sm:$0xff]
        %v5866 = vld [vmem:[%s5833 + $0x100] sm:$0xff]
        %v5867 = vld [vmem:[%s5833 + $0x108] sm:$0xff]
        %v5868 = vld [vmem:[%s5833 + $0x110] sm:$0xff]
        %v5869 = vld [vmem:[%s5833 + $0x118] sm:$0xff]
        %v5870 = vld [vmem:[%s5833 + $0x120] sm:$0xff]
        %v5871 = vld [vmem:[%s5833 + $0x128] sm:$0xff]
        %v5872 = vld [vmem:[%s5833 + $0x130] sm:$0xff]
        %v5873 = vld [vmem:[%s5833 + $0x138] sm:$0xff]
        %v5874 = vld [vmem:[%s5833 + $0x140] sm:$0xff]
        %v5875 = vld [vmem:[%s5833 + $0x148] sm:$0xff]
        %v5876 = vld [vmem:[%s5833 + $0x150] sm:$0xff]
        %v5877 = vld [vmem:[%s5833 + $0x158] sm:$0xff]
        %v5878 = vld [vmem:[%s5833 + $0x160] sm:$0xff]
        %v5879 = vld [vmem:[%s5833 + $0x168] sm:$0xff]
        %v5880 = vld [vmem:[%s5833 + $0x170] sm:$0xff]
        %v5881 = vld [vmem:[%s5833 + $0x178] sm:$0xff]
        %v5882 = vld [vmem:[%s5833 + $0x180] sm:$0xff]
        %v5883 = vld [vmem:[%s5833 + $0x188] sm:$0xff]
        %v5884 = vld [vmem:[%s5833 + $0x190] sm:$0xff]
        %v5885 = vld [vmem:[%s5833 + $0x198] sm:$0xff]
        %v5886 = vld [vmem:[%s5833 + $0x1a0] sm:$0xff]
        %v5887 = vld [vmem:[%s5833 + $0x1a8] sm:$0xff]
        %v5888 = vld [vmem:[%s5833 + $0x1b0] sm:$0xff]
        %v5889 = vld [vmem:[%s5833 + $0x1b8] sm:$0xff]
        %v5890 = vld [vmem:[%s5833 + $0x1c0] sm:$0xff]
        %v5891 = vld [vmem:[%s5833 + $0x1c8] sm:$0xff]
        %v5892 = vld [vmem:[%s5833 + $0x1d0] sm:$0xff]
        %v5893 = vld [vmem:[%s5833 + $0x1d8] sm:$0xff]
        %v5894 = vld [vmem:[%s5833 + $0x1e0] sm:$0xff]
        %v5895 = vld [vmem:[%s5833 + $0x1e8] sm:$0xff]
        %v5896 = vld [vmem:[%s5833 + $0x1f0] sm:$0xff]
        %v5897 = vld [vmem:[%s5833 + $0x1f8] sm:$0xff]
        %v5898 = vld [vmem:[%s5833 + $0x200] sm:$0xff]
        %v5899 = vld [vmem:[%s5833 + $0x208] sm:$0xff]
        %v5900 = vld [vmem:[%s5833 + $0x210] sm:$0xff]
        %v5901 = vld [vmem:[%s5833 + $0x218] sm:$0xff]
        %v5902 = vld [vmem:[%s5833 + $0x220] sm:$0xff]
        %v5903 = vld [vmem:[%s5833 + $0x228] sm:$0xff]
        %v5904 = vld [vmem:[%s5833 + $0x230] sm:$0xff]
        %v5905 = vld [vmem:[%s5833 + $0x238] sm:$0xff]
        %v5906 = vld [vmem:[%s5833 + $0x240] sm:$0xff]
        %v5907 = vld [vmem:[%s5833 + $0x248] sm:$0xff]
        %v5908 = vld [vmem:[%s5833 + $0x250] sm:$0xff]
        %v5909 = vld [vmem:[%s5833 + $0x258] sm:$0xff]
        %v5910 = vld [vmem:[%s5833 + $0x260] sm:$0xff]
        %v5911 = vld [vmem:[%s5833 + $0x268] sm:$0xff]
        %v5912 = vld [vmem:[%s5833 + $0x270] sm:$0xff]
        %v5913 = vld [vmem:[%s5833 + $0x278] sm:$0xff]
        %v5914 = vld [vmem:[%s5833 + $0x280] sm:$0xff]
        %v5915 = vld [vmem:[%s5833 + $0x288] sm:$0xff]
        %v5916 = vld [vmem:[%s5833 + $0x290] sm:$0xff]
        %v5917 = vld [vmem:[%s5833 + $0x298] sm:$0xff]
        %v5918 = vld [vmem:[%s5833 + $0x2a0] sm:$0xff]
        %v5919 = vld [vmem:[%s5833 + $0x2a8] sm:$0xff]
        %v5920 = vld [vmem:[%s5833 + $0x2b0] sm:$0xff]
        %v5921 = vld [vmem:[%s5833 + $0x2b8] sm:$0xff]
        %v5922 = vld [vmem:[%s5833 + $0x2c0] sm:$0xff]
        %v5923 = vld [vmem:[%s5833 + $0x2c8] sm:$0xff]
        %v5924 = vld [vmem:[%s5833 + $0x2d0] sm:$0xff]
        %v5925 = vld [vmem:[%s5833 + $0x2d8] sm:$0xff]
        %v5926 = vld [vmem:[%s5833 + $0x2e0] sm:$0xff]
        %v5927 = vld [vmem:[%s5833 + $0x2e8] sm:$0xff]
        %v5928 = vld [vmem:[%s5833 + $0x2f0] sm:$0xff]
        %v5929 = vld [vmem:[%s5833 + $0x2f8] sm:$0xff]
        %v6026 = vunpack.c.l.b16 %v5834
        %v6027 = vunpack.c.h.b16 %v5834
        %v6028 = vunpack.c.l.b16 %v5835
        %v6029 = vunpack.c.h.b16 %v5835
        %v6030 = vunpack.c.l.b16 %v5836
        %v6031 = vunpack.c.h.b16 %v5836
        %v6032 = vunpack.c.l.b16 %v5837
        %v6033 = vunpack.c.h.b16 %v5837
        %v6034 = vunpack.c.l.b16 %v5838
        %v6035 = vunpack.c.h.b16 %v5838
        %v6036 = vunpack.c.l.b16 %v5839
        %v6037 = vunpack.c.h.b16 %v5839
        %v6038 = vunpack.c.l.b16 %v5840
        %v6039 = vunpack.c.h.b16 %v5840
        %v6040 = vunpack.c.l.b16 %v5841
        %v6041 = vunpack.c.h.b16 %v5841
        %v6042 = vunpack.c.l.b16 %v5842
        %v6043 = vunpack.c.h.b16 %v5842
        %v6044 = vunpack.c.l.b16 %v5843
        %v6045 = vunpack.c.h.b16 %v5843
        %v6046 = vunpack.c.l.b16 %v5844
        %v6047 = vunpack.c.h.b16 %v5844
        %v6048 = vunpack.c.l.b16 %v5845
        %v6049 = vunpack.c.h.b16 %v5845
        %v6050 = vunpack.c.l.b16 %v5846
        %v6051 = vunpack.c.h.b16 %v5846
        %v6052 = vunpack.c.l.b16 %v5847
        %v6053 = vunpack.c.h.b16 %v5847
        %v6054 = vunpack.c.l.b16 %v5848
        %v6055 = vunpack.c.h.b16 %v5848
        %v6056 = vunpack.c.l.b16 %v5849
        %v6057 = vunpack.c.h.b16 %v5849
        %v6058 = vunpack.c.l.b16 %v5850
        %v6059 = vunpack.c.h.b16 %v5850
        %v6060 = vunpack.c.l.b16 %v5851
        %v6061 = vunpack.c.h.b16 %v5851
        %v6062 = vunpack.c.l.b16 %v5852
        %v6063 = vunpack.c.h.b16 %v5852
        %v6064 = vunpack.c.l.b16 %v5853
        %v6065 = vunpack.c.h.b16 %v5853
        %v6066 = vunpack.c.l.b16 %v5854
        %v6067 = vunpack.c.h.b16 %v5854
        %v6068 = vunpack.c.l.b16 %v5855
        %v6069 = vunpack.c.h.b16 %v5855
        %v6070 = vunpack.c.l.b16 %v5856
        %v6071 = vunpack.c.h.b16 %v5856
        %v6072 = vunpack.c.l.b16 %v5857
        %v6073 = vunpack.c.h.b16 %v5857
        %v6074 = vunpack.c.l.b16 %v5858
        %v6075 = vunpack.c.h.b16 %v5858
        %v6076 = vunpack.c.l.b16 %v5859
        %v6077 = vunpack.c.h.b16 %v5859
        %v6078 = vunpack.c.l.b16 %v5860
        %v6079 = vunpack.c.h.b16 %v5860
        %v6080 = vunpack.c.l.b16 %v5861
        %v6081 = vunpack.c.h.b16 %v5861
        %v6082 = vunpack.c.l.b16 %v5862
        %v6083 = vunpack.c.h.b16 %v5862
        %v6084 = vunpack.c.l.b16 %v5863
        %v6085 = vunpack.c.h.b16 %v5863
        %v6086 = vunpack.c.l.b16 %v5864
        %v6087 = vunpack.c.h.b16 %v5864
        %v6088 = vunpack.c.l.b16 %v5865
        %v6089 = vunpack.c.h.b16 %v5865
        %v6090 = vunpack.c.l.b16 %v5866
        %v6091 = vunpack.c.h.b16 %v5866
        %v6092 = vunpack.c.l.b16 %v5867
        %v6093 = vunpack.c.h.b16 %v5867
        %v6094 = vunpack.c.l.b16 %v5868
        %v6095 = vunpack.c.h.b16 %v5868
        %v6096 = vunpack.c.l.b16 %v5869
        %v6097 = vunpack.c.h.b16 %v5869
        %v6098 = vunpack.c.l.b16 %v5870
        %v6099 = vunpack.c.h.b16 %v5870
        %v6100 = vunpack.c.l.b16 %v5871
        %v6101 = vunpack.c.h.b16 %v5871
        %v6102 = vunpack.c.l.b16 %v5872
        %v6103 = vunpack.c.h.b16 %v5872
        %v6104 = vunpack.c.l.b16 %v5873
        %v6105 = vunpack.c.h.b16 %v5873
        %v6106 = vunpack.c.l.b16 %v5874
        %v6107 = vunpack.c.h.b16 %v5874
        %v6108 = vunpack.c.l.b16 %v5875
        %v6109 = vunpack.c.h.b16 %v5875
        %v6110 = vunpack.c.l.b16 %v5876
        %v6111 = vunpack.c.h.b16 %v5876
        %v6112 = vunpack.c.l.b16 %v5877
        %v6113 = vunpack.c.h.b16 %v5877
        %v6114 = vunpack.c.l.b16 %v5878
        %v6115 = vunpack.c.h.b16 %v5878
        %v6116 = vunpack.c.l.b16 %v5879
        %v6117 = vunpack.c.h.b16 %v5879
        %v6118 = vunpack.c.l.b16 %v5880
        %v6119 = vunpack.c.h.b16 %v5880
        %v6120 = vunpack.c.l.b16 %v5881
        %v6121 = vunpack.c.h.b16 %v5881
        %v6122 = vunpack.c.l.b16 %v5882
        %v6123 = vunpack.c.h.b16 %v5882
        %v6124 = vunpack.c.l.b16 %v5883
        %v6125 = vunpack.c.h.b16 %v5883
        %v6126 = vunpack.c.l.b16 %v5884
        %v6127 = vunpack.c.h.b16 %v5884
        %v6128 = vunpack.c.l.b16 %v5885
        %v6129 = vunpack.c.h.b16 %v5885
        %v6130 = vunpack.c.l.b16 %v5886
        %v6131 = vunpack.c.h.b16 %v5886
        %v6132 = vunpack.c.l.b16 %v5887
        %v6133 = vunpack.c.h.b16 %v5887
        %v6134 = vunpack.c.l.b16 %v5888
        %v6135 = vunpack.c.h.b16 %v5888
        %v6136 = vunpack.c.l.b16 %v5889
        %v6137 = vunpack.c.h.b16 %v5889
        %v6138 = vunpack.c.l.b16 %v5890
        %v6139 = vunpack.c.h.b16 %v5890
        %v6140 = vunpack.c.l.b16 %v5891
        %v6141 = vunpack.c.h.b16 %v5891
        %v6142 = vunpack.c.l.b16 %v5892
        %v6143 = vunpack.c.h.b16 %v5892
        %v6144 = vunpack.c.l.b16 %v5893
        %v6145 = vunpack.c.h.b16 %v5893
        %v6146 = vunpack.c.l.b16 %v5894
        %v6147 = vunpack.c.h.b16 %v5894
        %v6148 = vunpack.c.l.b16 %v5895
        %v6149 = vunpack.c.h.b16 %v5895
        %v6150 = vunpack.c.l.b16 %v5896
        %v6151 = vunpack.c.h.b16 %v5896
        %v6152 = vunpack.c.l.b16 %v5897
        %v6153 = vunpack.c.h.b16 %v5897
        %v6154 = vunpack.c.l.b16 %v5898
        %v6155 = vunpack.c.h.b16 %v5898
        %v6156 = vunpack.c.l.b16 %v5899
        %v6157 = vunpack.c.h.b16 %v5899
        %v6158 = vunpack.c.l.b16 %v5900
        %v6159 = vunpack.c.h.b16 %v5900
        %v6160 = vunpack.c.l.b16 %v5901
        %v6161 = vunpack.c.h.b16 %v5901
        %v6162 = vunpack.c.l.b16 %v5902
        %v6163 = vunpack.c.h.b16 %v5902
        %v6164 = vunpack.c.l.b16 %v5903
        %v6165 = vunpack.c.h.b16 %v5903
        %v6166 = vunpack.c.l.b16 %v5904
        %v6167 = vunpack.c.h.b16 %v5904
        %v6168 = vunpack.c.l.b16 %v5905
        %v6169 = vunpack.c.h.b16 %v5905
        %v6170 = vunpack.c.l.b16 %v5906
        %v6171 = vunpack.c.h.b16 %v5906
        %v6172 = vunpack.c.l.b16 %v5907
        %v6173 = vunpack.c.h.b16 %v5907
        %v6174 = vunpack.c.l.b16 %v5908
        %v6175 = vunpack.c.h.b16 %v5908
        %v6176 = vunpack.c.l.b16 %v5909
        %v6177 = vunpack.c.h.b16 %v5909
        %v6178 = vunpack.c.l.b16 %v5910
        %v6179 = vunpack.c.h.b16 %v5910
        %v6180 = vunpack.c.l.b16 %v5911
        %v6181 = vunpack.c.h.b16 %v5911
        %v6182 = vunpack.c.l.b16 %v5912
        %v6183 = vunpack.c.h.b16 %v5912
        %v6184 = vunpack.c.l.b16 %v5913
        %v6185 = vunpack.c.h.b16 %v5913
        %v6186 = vunpack.c.l.b16 %v5914
        %v6187 = vunpack.c.h.b16 %v5914
        %v6188 = vunpack.c.l.b16 %v5915
        %v6189 = vunpack.c.h.b16 %v5915
        %v6190 = vunpack.c.l.b16 %v5916
        %v6191 = vunpack.c.h.b16 %v5916
        %v6192 = vunpack.c.l.b16 %v5917
        %v6193 = vunpack.c.h.b16 %v5917
        %v6194 = vunpack.c.l.b16 %v5918
        %v6195 = vunpack.c.h.b16 %v5918
        %v6196 = vunpack.c.l.b16 %v5919
        %v6197 = vunpack.c.h.b16 %v5919
        %v6198 = vunpack.c.l.b16 %v5920
        %v6199 = vunpack.c.h.b16 %v5920
        %v6200 = vunpack.c.l.b16 %v5921
        %v6201 = vunpack.c.h.b16 %v5921
        %v6202 = vunpack.c.l.b16 %v5922
        %v6203 = vunpack.c.h.b16 %v5922
        %v6204 = vunpack.c.l.b16 %v5923
        %v6205 = vunpack.c.h.b16 %v5923
        %v6206 = vunpack.c.l.b16 %v5924
        %v6207 = vunpack.c.h.b16 %v5924
        %v6208 = vunpack.c.l.b16 %v5925
        %v6209 = vunpack.c.h.b16 %v5925
        %v6210 = vunpack.c.l.b16 %v5926
        %v6211 = vunpack.c.h.b16 %v5926
        %v6212 = vunpack.c.l.b16 %v5927
        %v6213 = vunpack.c.h.b16 %v5927
        %v6214 = vunpack.c.l.b16 %v5928
        %v6215 = vunpack.c.h.b16 %v5928
        %v6216 = vunpack.c.l.b16 %v5929
        %v6217 = vunpack.c.h.b16 %v5929
        %v6218 = vpack.c.b16 %v6030, %v6026
        %v6219 = vpack.c.b16 %v6031, %v6027
        %v6220 = vpack.c.b16 %v6032, %v6028
        %v6221 = vpack.c.b16 %v6033, %v6029
        %v6222 = vpack.c.b16 %v6038, %v6034
        %v6223 = vpack.c.b16 %v6039, %v6035
        %v6224 = vpack.c.b16 %v6040, %v6036
        %v6225 = vpack.c.b16 %v6041, %v6037
        %v6226 = vpack.c.b16 %v6046, %v6042
        %v6227 = vpack.c.b16 %v6047, %v6043
        %v6228 = vpack.c.b16 %v6048, %v6044
        %v6229 = vpack.c.b16 %v6049, %v6045
        %v6230 = vpack.c.b16 %v6054, %v6050
        %v6231 = vpack.c.b16 %v6055, %v6051
        %v6232 = vpack.c.b16 %v6056, %v6052
        %v6233 = vpack.c.b16 %v6057, %v6053
        %v6234 = vpack.c.b16 %v6062, %v6058
        %v6235 = vpack.c.b16 %v6063, %v6059
        %v6236 = vpack.c.b16 %v6064, %v6060
        %v6237 = vpack.c.b16 %v6065, %v6061
        %v6238 = vpack.c.b16 %v6070, %v6066
        %v6239 = vpack.c.b16 %v6071, %v6067
        %v6240 = vpack.c.b16 %v6072, %v6068
        %v6241 = vpack.c.b16 %v6073, %v6069
        %v6242 = vpack.c.b16 %v6078, %v6074
        %v6243 = vpack.c.b16 %v6079, %v6075
        %v6244 = vpack.c.b16 %v6080, %v6076
        %v6245 = vpack.c.b16 %v6081, %v6077
        %v6246 = vpack.c.b16 %v6086, %v6082
        %v6247 = vpack.c.b16 %v6087, %v6083
        %v6248 = vpack.c.b16 %v6088, %v6084
        %v6249 = vpack.c.b16 %v6089, %v6085
        %v6250 = vpack.c.b16 %v6094, %v6090
        %v6251 = vpack.c.b16 %v6095, %v6091
        %v6252 = vpack.c.b16 %v6096, %v6092
        %v6253 = vpack.c.b16 %v6097, %v6093
        %v6254 = vpack.c.b16 %v6102, %v6098
        %v6255 = vpack.c.b16 %v6103, %v6099
        %v6256 = vpack.c.b16 %v6104, %v6100
        %v6257 = vpack.c.b16 %v6105, %v6101
        %v6258 = vpack.c.b16 %v6110, %v6106
        %v6259 = vpack.c.b16 %v6111, %v6107
        %v6260 = vpack.c.b16 %v6112, %v6108
        %v6261 = vpack.c.b16 %v6113, %v6109
        %v6262 = vpack.c.b16 %v6118, %v6114
        %v6263 = vpack.c.b16 %v6119, %v6115
        %v6264 = vpack.c.b16 %v6120, %v6116
        %v6265 = vpack.c.b16 %v6121, %v6117
        %v6266 = vpack.c.b16 %v6126, %v6122
        %v6267 = vpack.c.b16 %v6127, %v6123
        %v6268 = vpack.c.b16 %v6128, %v6124
        %v6269 = vpack.c.b16 %v6129, %v6125
        %v6270 = vpack.c.b16 %v6134, %v6130
        %v6271 = vpack.c.b16 %v6135, %v6131
        %v6272 = vpack.c.b16 %v6136, %v6132
        %v6273 = vpack.c.b16 %v6137, %v6133
        %v6274 = vpack.c.b16 %v6142, %v6138
        %v6275 = vpack.c.b16 %v6143, %v6139
        %v6276 = vpack.c.b16 %v6144, %v6140
        %v6277 = vpack.c.b16 %v6145, %v6141
        %v6278 = vpack.c.b16 %v6150, %v6146
        %v6279 = vpack.c.b16 %v6151, %v6147
        %v6280 = vpack.c.b16 %v6152, %v6148
        %v6281 = vpack.c.b16 %v6153, %v6149
        %v6282 = vpack.c.b16 %v6158, %v6154
        %v6283 = vpack.c.b16 %v6159, %v6155
        %v6284 = vpack.c.b16 %v6160, %v6156
        %v6285 = vpack.c.b16 %v6161, %v6157
        %v6286 = vpack.c.b16 %v6166, %v6162
        %v6287 = vpack.c.b16 %v6167, %v6163
        %v6288 = vpack.c.b16 %v6168, %v6164
        %v6289 = vpack.c.b16 %v6169, %v6165
        %v6290 = vpack.c.b16 %v6174, %v6170
        %v6291 = vpack.c.b16 %v6175, %v6171
        %v6292 = vpack.c.b16 %v6176, %v6172
        %v6293 = vpack.c.b16 %v6177, %v6173
        %v6294 = vpack.c.b16 %v6182, %v6178
        %v6295 = vpack.c.b16 %v6183, %v6179
        %v6296 = vpack.c.b16 %v6184, %v6180
        %v6297 = vpack.c.b16 %v6185, %v6181
        %v6298 = vpack.c.b16 %v6190, %v6186
        %v6299 = vpack.c.b16 %v6191, %v6187
        %v6300 = vpack.c.b16 %v6192, %v6188
        %v6301 = vpack.c.b16 %v6193, %v6189
        %v6302 = vpack.c.b16 %v6198, %v6194
        %v6303 = vpack.c.b16 %v6199, %v6195
        %v6304 = vpack.c.b16 %v6200, %v6196
        %v6305 = vpack.c.b16 %v6201, %v6197
        %v6306 = vpack.c.b16 %v6206, %v6202
        %v6307 = vpack.c.b16 %v6207, %v6203
        %v6308 = vpack.c.b16 %v6208, %v6204
        %v6309 = vpack.c.b16 %v6209, %v6205
        %v6310 = vpack.c.b16 %v6214, %v6210
        %v6311 = vpack.c.b16 %v6215, %v6211
        %v6312 = vpack.c.b16 %v6216, %v6212
        %v6313 = vpack.c.b16 %v6217, %v6213
        %6410 = vmatprep.subr.bf16.mxu0 %v6219
        %6411 = vmatpush1.bf16.msra.mxu0 %v6218
        %6412 = vmatprep.subr.bf16.mxu0 %v6223
        %6413 = vmatpush1.bf16.msra.mxu0 %v6222
        %6414 = vmatprep.subr.bf16.mxu0 %v6227
        %6415 = vmatpush1.bf16.msra.mxu0 %v6226
        %6416 = vmatprep.subr.bf16.mxu0 %v6231
        %6417 = vmatpush1.bf16.msra.mxu0 %v6230
        %6418 = vmatprep.subr.bf16.mxu0 %v6235
        %6419 = vmatpush1.bf16.msra.mxu0 %v6234
        %6420 = vmatprep.subr.bf16.mxu0 %v6239
        %6421 = vmatpush1.bf16.msra.mxu0 %v6238
        %6422 = vmatprep.subr.bf16.mxu0 %v6243
        %6423 = vmatpush1.bf16.msra.mxu0 %v6242
        %6424 = vmatprep.subr.bf16.mxu0 %v6247
        %6425 = vmatpush1.bf16.msra.mxu0 %v6246
        %6426 = vmatprep.subr.bf16.mxu0 %v6251
        %6427 = vmatpush1.bf16.msra.mxu0 %v6250
        %6428 = vmatprep.subr.bf16.mxu0 %v6255
        %6429 = vmatpush1.bf16.msra.mxu0 %v6254
        %6430 = vmatprep.subr.bf16.mxu0 %v6259
        %6431 = vmatpush1.bf16.msra.mxu0 %v6258
        %6432 = vmatprep.subr.bf16.mxu0 %v6263
        %6433 = vmatpush1.bf16.msra.mxu0 %v6262
        %6434 = vmatprep.subr.bf16.mxu0 %v6267
        %6435 = vmatpush1.bf16.msra.mxu0 %v6266
        %6436 = vmatprep.subr.bf16.mxu0 %v6271
        %6437 = vmatpush1.bf16.msra.mxu0 %v6270
        %6438 = vmatprep.subr.bf16.mxu0 %v6275
        %6439 = vmatpush1.bf16.msra.mxu0 %v6274
        %6440 = vmatprep.subr.bf16.mxu0 %v6279
        %6441 = vmatpush1.bf16.msra.mxu0 %v6278
        %6442 = vmatprep.mubr.bf16.mxu0 %v4073
        %6443 = vmatmul.mubr.bf16.gmra.mrb[0].mxu0 %v4072
        %v6444 = vpop.f32.mrb[0].mxu0
        %v6445 = vadd.f32 0.0, %v6444
        %v6446 = vpop.f32.mrb[0].mxu0
        %v6447 = vadd.f32 0.0, %v6446
        %v6448 = vpop.f32.mrb[0].mxu0
        %v6449 = vadd.f32 0.0, %v6448
        %v6450 = vpop.f32.mrb[0].mxu0
        %v6451 = vadd.f32 0.0, %v6450
        %6452 = vmatprep.mubr.bf16.mxu0 %v4076
        %6453 = vmatmul.mubr.bf16.gmra.mrb[0].mxu0 %v4075
        %v6454 = vpop.f32.mrb[0].mxu0
        %v6455 = vadd.f32 0.0, %v6454
        %v6456 = vpop.f32.mrb[0].mxu0
        %v6457 = vadd.f32 0.0, %v6456
        %v6458 = vpop.f32.mrb[0].mxu0
        %v6459 = vadd.f32 0.0, %v6458
        %v6460 = vpop.f32.mrb[0].mxu0
        %v6461 = vadd.f32 0.0, %v6460
        %6462 = vmatprep.mubr.bf16.mxu0 %v4079
        %6463 = vmatmul.mubr.bf16.gmra.mrb[0].mxu0 %v4078
        %v6464 = vpop.f32.mrb[0].mxu0
        %v6465 = vadd.f32 0.0, %v6464
        %v6466 = vpop.f32.mrb[0].mxu0
        %v6467 = vadd.f32 0.0, %v6466
        %v6468 = vpop.f32.mrb[0].mxu0
        %v6469 = vadd.f32 0.0, %v6468
        %v6470 = vpop.f32.mrb[0].mxu0
        %v6471 = vadd.f32 0.0, %v6470
        %6472 = vmatprep.mubr.bf16.mxu0 %v5831
        %6473 = vmatmul.mubr.bf16.gmra.mrb[0].mxu0 %v5830
        %v6474 = vpop.f32.mrb[0].mxu0
        %v6475 = vadd.f32 0.0, %v6474
        %v6476 = vpop.f32.mrb[0].mxu0
        %v6477 = vadd.f32 0.0, %v6476
        %v6478 = vpop.f32.mrb[0].mxu0
        %v6479 = vadd.f32 0.0, %v6478
        %v6480 = vpop.f32.mrb[0].mxu0
        %v6481 = vadd.f32 0.0, %v6480
        %6482 = vdwg.mxu0
        %6483 = vmatprep.subr.bf16.mxu0 %v6283
        %6484 = vmatpush1.bf16.msra.mxu0 %v6282
        %6485 = vmatprep.subr.bf16.mxu0 %v6287
        %6486 = vmatpush1.bf16.msra.mxu0 %v6286
        %6487 = vmatprep.subr.bf16.mxu0 %v6291
        %6488 = vmatpush1.bf16.msra.mxu0 %v6290
        %6489 = vmatprep.subr.bf16.mxu0 %v6295
        %6490 = vmatpush1.bf16.msra.mxu0 %v6294
        %6491 = vmatprep.subr.bf16.mxu0 %v6299
        %6492 = vmatpush1.bf16.msra.mxu0 %v6298
        %6493 = vmatprep.subr.bf16.mxu0 %v6303
        %6494 = vmatpush1.bf16.msra.mxu0 %v6302
        %6495 = vmatprep.subr.bf16.mxu0 %v6307
        %6496 = vmatpush1.bf16.msra.mxu0 %v6306
        %6497 = vmatprep.subr.bf16.mxu0 %v6311
        %6498 = vmatpush1.bf16.msra.mxu0 %v6310
        %6499 = vmatprep.subr.bf16.mxu0 0
        %6500 = vmatpush1.bf16.msra.mxu0 0
        %6501 = vmatprep.subr.bf16.mxu0 0
        %6502 = vmatpush1.bf16.msra.mxu0 0
        %6503 = vmatprep.subr.bf16.mxu0 0
        %6504 = vmatpush1.bf16.msra.mxu0 0
        %6505 = vmatprep.subr.bf16.mxu0 0
        %6506 = vmatpush1.bf16.msra.mxu0 0
        %6507 = vmatprep.subr.bf16.mxu0 0
        %6508 = vmatpush1.bf16.msra.mxu0 0
        %6509 = vmatprep.subr.bf16.mxu0 0
        %6510 = vmatpush1.bf16.msra.mxu0 0
        %6511 = vmatprep.subr.bf16.mxu0 0
        %6512 = vmatpush1.bf16.msra.mxu0 0
        %6513 = vmatprep.subr.bf16.mxu0 0
        %6514 = vmatpush1.bf16.msra.mxu0 0
        %6515 = vmatprep.mubr.bf16.mxu0 0
        %6516 = vmatmul.mubr.bf16.gmra.mrb[0].mxu0 %v4074
        %v6517 = vpop.f32.mrb[0].mxu0
        %v6518 = vadd.f32 %v6445, %v6517
        %v6519 = vpop.f32.mrb[0].mxu0
        %v6520 = vadd.f32 %v6447, %v6519
        %v6521 = vpop.f32.mrb[0].mxu0
        %v6522 = vadd.f32 %v6449, %v6521
        %v6523 = vpop.f32.mrb[0].mxu0
        %v6524 = vadd.f32 %v6451, %v6523
        %6525 = vmatprep.mubr.bf16.mxu0 0
        %6526 = vmatmul.mubr.bf16.gmra.mrb[0].mxu0 %v4077
        %v6527 = vpop.f32.mrb[0].mxu0
        %v6528 = vadd.f32 %v6455, %v6527
        %v6529 = vpop.f32.mrb[0].mxu0
        %v6530 = vadd.f32 %v6457, %v6529
        %v6531 = vpop.f32.mrb[0].mxu0
        %v6532 = vadd.f32 %v6459, %v6531
        %v6533 = vpop.f32.mrb[0].mxu0
        %v6534 = vadd.f32 %v6461, %v6533
        %6535 = vmatprep.mubr.bf16.mxu0 0
        %6536 = vmatmul.mubr.bf16.gmra.mrb[0].mxu0 %v4080
        %v6537 = vpop.f32.mrb[0].mxu0
        %v6538 = vadd.f32 %v6465, %v6537
        %v6539 = vpop.f32.mrb[0].mxu0
        %v6540 = vadd.f32 %v6467, %v6539
        %v6541 = vpop.f32.mrb[0].mxu0
        %v6542 = vadd.f32 %v6469, %v6541
        %v6543 = vpop.f32.mrb[0].mxu0
        %v6544 = vadd.f32 %v6471, %v6543
        %6545 = vmatprep.mubr.bf16.mxu0 0
        %6546 = vmatmul.mubr.bf16.gmra.mrb[0].mxu0 %v5832
        %v6547 = vpop.f32.mrb[0].mxu0
        %v6548 = vadd.f32 %v6475, %v6547
        %v6549 = vpop.f32.mrb[0].mxu0
        %v6550 = vadd.f32 %v6477, %v6549
        %v6551 = vpop.f32.mrb[0].mxu0
        %v6552 = vadd.f32 %v6479, %v6551
        %v6553 = vpop.f32.mrb[0].mxu0
        %v6554 = vadd.f32 %v6481, %v6553
        %6555 = vdwg.mxu0
        %6556 = vmatprep.subr.bf16.mxu0 %v6221
        %6557 = vmatpush1.bf16.msra.mxu0 %v6220
        %6558 = vmatprep.subr.bf16.mxu0 %v6225
        %6559 = vmatpush1.bf16.msra.mxu0 %v6224
        %6560 = vmatprep.subr.bf16.mxu0 %v6229
        %6561 = vmatpush1.bf16.msra.mxu0 %v6228
        %6562 = vmatprep.subr.bf16.mxu0 %v6233
        %6563 = vmatpush1.bf16.msra.mxu0 %v6232
        %6564 = vmatprep.subr.bf16.mxu0 %v6237
        %6565 = vmatpush1.bf16.msra.mxu0 %v6236
        %6566 = vmatprep.subr.bf16.mxu0 %v6241
        %6567 = vmatpush1.bf16.msra.mxu0 %v6240
        %6568 = vmatprep.subr.bf16.mxu0 %v6245
        %6569 = vmatpush1.bf16.msra.mxu0 %v6244
        %6570 = vmatprep.subr.bf16.mxu0 %v6249
        %6571 = vmatpush1.bf16.msra.mxu0 %v6248
        %6572 = vmatprep.subr.bf16.mxu0 %v6253
        %6573 = vmatpush1.bf16.msra.mxu0 %v6252
        %6574 = vmatprep.subr.bf16.mxu0 %v6257
        %6575 = vmatpush1.bf16.msra.mxu0 %v6256
        %6576 = vmatprep.subr.bf16.mxu0 %v6261
        %6577 = vmatpush1.bf16.msra.mxu0 %v6260
        %6578 = vmatprep.subr.bf16.mxu0 %v6265
        %6579 = vmatpush1.bf16.msra.mxu0 %v6264
        %6580 = vmatprep.subr.bf16.mxu0 %v6269
        %6581 = vmatpush1.bf16.msra.mxu0 %v6268
        %6582 = vmatprep.subr.bf16.mxu0 %v6273
        %6583 = vmatpush1.bf16.msra.mxu0 %v6272
        %6584 = vmatprep.subr.bf16.mxu0 %v6277
        %6585 = vmatpush1.bf16.msra.mxu0 %v6276
        %6586 = vmatprep.subr.bf16.mxu0 %v6281
        %6587 = vmatpush1.bf16.msra.mxu0 %v6280
        %6588 = vmatprep.mubr.bf16.mxu0 %v4073
        %6589 = vmatmul.mubr.bf16.gmra.mrb[0].mxu0 %v4072
        %v6590 = vpop.f32.mrb[0].mxu0
        %v6591 = vadd.f32 0.0, %v6590
        %v6592 = vpop.f32.mrb[0].mxu0
        %v6593 = vadd.f32 0.0, %v6592
        %v6594 = vpop.f32.mrb[0].mxu0
        %v6595 = vadd.f32 0.0, %v6594
        %v6596 = vpop.f32.mrb[0].mxu0
        %v6597 = vadd.f32 0.0, %v6596
        %6598 = vmatprep.mubr.bf16.mxu0 %v4076
        %6599 = vmatmul.mubr.bf16.gmra.mrb[0].mxu0 %v4075
        %v6600 = vpop.f32.mrb[0].mxu0
        %v6601 = vadd.f32 0.0, %v6600
        %v6602 = vpop.f32.mrb[0].mxu0
        %v6603 = vadd.f32 0.0, %v6602
        %v6604 = vpop.f32.mrb[0].mxu0
        %v6605 = vadd.f32 0.0, %v6604
        %v6606 = vpop.f32.mrb[0].mxu0
        %v6607 = vadd.f32 0.0, %v6606
        %6608 = vmatprep.mubr.bf16.mxu0 %v4079
        %6609 = vmatmul.mubr.bf16.gmra.mrb[0].mxu0 %v4078
        %v6610 = vpop.f32.mrb[0].mxu0
        %v6611 = vadd.f32 0.0, %v6610
        %v6612 = vpop.f32.mrb[0].mxu0
        %v6613 = vadd.f32 0.0, %v6612
        %v6614 = vpop.f32.mrb[0].mxu0
        %v6615 = vadd.f32 0.0, %v6614
        %v6616 = vpop.f32.mrb[0].mxu0
        %v6617 = vadd.f32 0.0, %v6616
        %6618 = vmatprep.mubr.bf16.mxu0 %v5831
        %6619 = vmatmul.mubr.bf16.gmra.mrb[0].mxu0 %v5830
        %v6620 = vpop.f32.mrb[0].mxu0
        %v6621 = vadd.f32 0.0, %v6620
        %v6622 = vpop.f32.mrb[0].mxu0
        %v6623 = vadd.f32 0.0, %v6622
        %v6624 = vpop.f32.mrb[0].mxu0
        %v6625 = vadd.f32 0.0, %v6624
        %v6626 = vpop.f32.mrb[0].mxu0
        %v6627 = vadd.f32 0.0, %v6626
        %6628 = vdwg.mxu0
        %6629 = vmatprep.subr.bf16.mxu0 %v6285
        %6630 = vmatpush1.bf16.msra.mxu0 %v6284
        %6631 = vmatprep.subr.bf16.mxu0 %v6289
        %6632 = vmatpush1.bf16.msra.mxu0 %v6288
        %6633 = vmatprep.subr.bf16.mxu0 %v6293
        %6634 = vmatpush1.bf16.msra.mxu0 %v6292
        %6635 = vmatprep.subr.bf16.mxu0 %v6297
        %6636 = vmatpush1.bf16.msra.mxu0 %v6296
        %6637 = vmatprep.subr.bf16.mxu0 %v6301
        %6638 = vmatpush1.bf16.msra.mxu0 %v6300
        %6639 = vmatprep.subr.bf16.mxu0 %v6305
        %6640 = vmatpush1.bf16.msra.mxu0 %v6304
        %6641 = vmatprep.subr.bf16.mxu0 %v6309
        %6642 = vmatpush1.bf16.msra.mxu0 %v6308
        %6643 = vmatprep.subr.bf16.mxu0 %v6313
        %6644 = vmatpush1.bf16.msra.mxu0 %v6312
        %6645 = vmatprep.subr.bf16.mxu0 0
        %6646 = vmatpush1.bf16.msra.mxu0 0
        %6647 = vmatprep.subr.bf16.mxu0 0
        %6648 = vmatpush1.bf16.msra.mxu0 0
        %6649 = vmatprep.subr.bf16.mxu0 0
        %6650 = vmatpush1.bf16.msra.mxu0 0
        %6651 = vmatprep.subr.bf16.mxu0 0
        %6652 = vmatpush1.bf16.msra.mxu0 0
        %6653 = vmatprep.subr.bf16.mxu0 0
        %6654 = vmatpush1.bf16.msra.mxu0 0
        %6655 = vmatprep.subr.bf16.mxu0 0
        %6656 = vmatpush1.bf16.msra.mxu0 0
        %6657 = vmatprep.subr.bf16.mxu0 0
        %6658 = vmatpush1.bf16.msra.mxu0 0
        %6659 = vmatprep.subr.bf16.mxu0 0
        %6660 = vmatpush1.bf16.msra.mxu0 0
        %6661 = vmatprep.mubr.bf16.mxu0 0
        %6662 = vmatmul.mubr.bf16.gmra.mrb[0].mxu0 %v4074
        %v6663 = vpop.f32.mrb[0].mxu0
        %v6664 = vadd.f32 %v6591, %v6663
        %v6665 = vpop.f32.mrb[0].mxu0
        %v6666 = vadd.f32 %v6593, %v6665
        %v6667 = vpop.f32.mrb[0].mxu0
        %v6668 = vadd.f32 %v6595, %v6667
        %v6669 = vpop.f32.mrb[0].mxu0
        %v6670 = vadd.f32 %v6597, %v6669
        %6671 = vmatprep.mubr.bf16.mxu0 0
        %6672 = vmatmul.mubr.bf16.gmra.mrb[0].mxu0 %v4077
        %v6673 = vpop.f32.mrb[0].mxu0
        %v6674 = vadd.f32 %v6601, %v6673
        %v6675 = vpop.f32.mrb[0].mxu0
        %v6676 = vadd.f32 %v6603, %v6675
        %v6677 = vpop.f32.mrb[0].mxu0
        %v6678 = vadd.f32 %v6605, %v6677
        %v6679 = vpop.f32.mrb[0].mxu0
        %v6680 = vadd.f32 %v6607, %v6679
        %6681 = vmatprep.mubr.bf16.mxu0 0
        %6682 = vmatmul.mubr.bf16.gmra.mrb[0].mxu0 %v4080
        %v6683 = vpop.f32.mrb[0].mxu0
        %v6684 = vadd.f32 %v6611, %v6683
        %v6685 = vpop.f32.mrb[0].mxu0
        %v6686 = vadd.f32 %v6613, %v6685
        %v6687 = vpop.f32.mrb[0].mxu0
        %v6688 = vadd.f32 %v6615, %v6687
        %v6689 = vpop.f32.mrb[0].mxu0
        %v6690 = vadd.f32 %v6617, %v6689
        %6691 = vmatprep.mubr.bf16.mxu0 0
        %6692 = vmatmul.mubr.bf16.gmra.mrb[0].mxu0 %v5832
        %v6693 = vpop.f32.mrb[0].mxu0
        %v6694 = vadd.f32 %v6621, %v6693
        %v6695 = vpop.f32.mrb[0].mxu0
        %v6696 = vadd.f32 %v6623, %v6695
        %v6697 = vpop.f32.mrb[0].mxu0
        %v6698 = vadd.f32 %v6625, %v6697
        %v6699 = vpop.f32.mrb[0].mxu0
        %v6700 = vadd.f32 %v6627, %v6699
        %6701 = vdwg.mxu0
        %v6702 = vadd.f32 %v5646, %v6518
        %v6703 = vadd.f32 %v5648, %v6520
        %v6704 = vadd.f32 %v5792, %v6664
        %v6705 = vadd.f32 %v5794, %v6666
        %v6706 = vadd.f32 %v5650, %v6522
        %v6707 = vadd.f32 %v5652, %v6524
        %v6708 = vadd.f32 %v5796, %v6668
        %v6709 = vadd.f32 %v5798, %v6670
        %v6710 = vadd.f32 %v5656, %v6528
        %v6711 = vadd.f32 %v5658, %v6530
        %v6712 = vadd.f32 %v5802, %v6674
        %v6713 = vadd.f32 %v5804, %v6676
        %v6714 = vadd.f32 %v5660, %v6532
        %v6715 = vadd.f32 %v5662, %v6534
        %v6716 = vadd.f32 %v5806, %v6678
        %v6717 = vadd.f32 %v5808, %v6680
        %v6718 = vadd.f32 %v5666, %v6538
        %v6719 = vadd.f32 %v5668, %v6540
        %v6720 = vadd.f32 %v5812, %v6684
        %v6721 = vadd.f32 %v5814, %v6686
        %v6722 = vadd.f32 %v5670, %v6542
        %v6723 = vadd.f32 %v5672, %v6544
        %v6724 = vadd.f32 %v5816, %v6688
        %v6725 = vadd.f32 %v5818, %v6690
        %v6726 = vadd.f32 %v5676, %v6548
        %v6727 = vadd.f32 %v5678, %v6550
        %v6728 = vadd.f32 %v5822, %v6694
        %v6729 = vadd.f32 %v5824, %v6696
        %v6730 = vadd.f32 %v5680, %v6552
        %v6731 = vadd.f32 %v5682, %v6554
        %v6732 = vadd.f32 %v5826, %v6698
        %v6733 = vadd.f32 %v5828, %v6700
        %v6734 = vpack.c.bf16 %v4063, %v4060
        %v6735 = vpack.c.bf16 %v4064, %v4061
        %v6736 = vpack.c.bf16 %v4065, %v4062
        %s6737 = scalar_lea.vmem [#allocation7], 2304
        %v6738 = vld [vmem:[%s6737] sm:$0xff]
        %v6739 = vld [vmem:[%s6737 + $0x8] sm:$0xff]
        %v6740 = vld [vmem:[%s6737 + $0x10] sm:$0xff]
        %v6741 = vld [vmem:[%s6737 + $0x18] sm:$0xff]
        %v6742 = vld [vmem:[%s6737 + $0x20] sm:$0xff]
        %v6743 = vld [vmem:[%s6737 + $0x28] sm:$0xff]
        %v6744 = vld [vmem:[%s6737 + $0x30] sm:$0xff]
        %v6745 = vld [vmem:[%s6737 + $0x38] sm:$0xff]
        %v6746 = vld [vmem:[%s6737 + $0x40] sm:$0xff]
        %v6747 = vld [vmem:[%s6737 + $0x48] sm:$0xff]
        %v6748 = vld [vmem:[%s6737 + $0x50] sm:$0xff]
        %v6749 = vld [vmem:[%s6737 + $0x58] sm:$0xff]
        %v6750 = vld [vmem:[%s6737 + $0x60] sm:$0xff]
        %v6751 = vld [vmem:[%s6737 + $0x68] sm:$0xff]
        %v6752 = vld [vmem:[%s6737 + $0x70] sm:$0xff]
        %v6753 = vld [vmem:[%s6737 + $0x78] sm:$0xff]
        %v6754 = vld [vmem:[%s6737 + $0x80] sm:$0xff]
        %v6755 = vld [vmem:[%s6737 + $0x88] sm:$0xff]
        %v6756 = vld [vmem:[%s6737 + $0x90] sm:$0xff]
        %v6757 = vld [vmem:[%s6737 + $0x98] sm:$0xff]
        %v6758 = vld [vmem:[%s6737 + $0xa0] sm:$0xff]
        %v6759 = vld [vmem:[%s6737 + $0xa8] sm:$0xff]
        %v6760 = vld [vmem:[%s6737 + $0xb0] sm:$0xff]
        %v6761 = vld [vmem:[%s6737 + $0xb8] sm:$0xff]
        %v6762 = vld [vmem:[%s6737 + $0xc0] sm:$0xff]
        %v6763 = vld [vmem:[%s6737 + $0xc8] sm:$0xff]
        %v6764 = vld [vmem:[%s6737 + $0xd0] sm:$0xff]
        %v6765 = vld [vmem:[%s6737 + $0xd8] sm:$0xff]
        %v6766 = vld [vmem:[%s6737 + $0xe0] sm:$0xff]
        %v6767 = vld [vmem:[%s6737 + $0xe8] sm:$0xff]
        %v6768 = vld [vmem:[%s6737 + $0xf0] sm:$0xff]
        %v6769 = vld [vmem:[%s6737 + $0xf8] sm:$0xff]
        %v6770 = vld [vmem:[%s6737 + $0x100] sm:$0xff]
        %v6771 = vld [vmem:[%s6737 + $0x108] sm:$0xff]
        %v6772 = vld [vmem:[%s6737 + $0x110] sm:$0xff]
        %v6773 = vld [vmem:[%s6737 + $0x118] sm:$0xff]
        %v6774 = vld [vmem:[%s6737 + $0x120] sm:$0xff]
        %v6775 = vld [vmem:[%s6737 + $0x128] sm:$0xff]
        %v6776 = vld [vmem:[%s6737 + $0x130] sm:$0xff]
        %v6777 = vld [vmem:[%s6737 + $0x138] sm:$0xff]
        %v6778 = vld [vmem:[%s6737 + $0x140] sm:$0xff]
        %v6779 = vld [vmem:[%s6737 + $0x148] sm:$0xff]
        %v6780 = vld [vmem:[%s6737 + $0x150] sm:$0xff]
        %v6781 = vld [vmem:[%s6737 + $0x158] sm:$0xff]
        %v6782 = vld [vmem:[%s6737 + $0x160] sm:$0xff]
        %v6783 = vld [vmem:[%s6737 + $0x168] sm:$0xff]
        %v6784 = vld [vmem:[%s6737 + $0x170] sm:$0xff]
        %v6785 = vld [vmem:[%s6737 + $0x178] sm:$0xff]
        %v6786 = vld [vmem:[%s6737 + $0x180] sm:$0xff]
        %v6787 = vld [vmem:[%s6737 + $0x188] sm:$0xff]
        %v6788 = vld [vmem:[%s6737 + $0x190] sm:$0xff]
        %v6789 = vld [vmem:[%s6737 + $0x198] sm:$0xff]
        %v6790 = vld [vmem:[%s6737 + $0x1a0] sm:$0xff]
        %v6791 = vld [vmem:[%s6737 + $0x1a8] sm:$0xff]
        %v6792 = vld [vmem:[%s6737 + $0x1b0] sm:$0xff]
        %v6793 = vld [vmem:[%s6737 + $0x1b8] sm:$0xff]
        %v6794 = vld [vmem:[%s6737 + $0x1c0] sm:$0xff]
        %v6795 = vld [vmem:[%s6737 + $0x1c8] sm:$0xff]
        %v6796 = vld [vmem:[%s6737 + $0x1d0] sm:$0xff]
        %v6797 = vld [vmem:[%s6737 + $0x1d8] sm:$0xff]
        %v6798 = vld [vmem:[%s6737 + $0x1e0] sm:$0xff]
        %v6799 = vld [vmem:[%s6737 + $0x1e8] sm:$0xff]
        %v6800 = vld [vmem:[%s6737 + $0x1f0] sm:$0xff]
        %v6801 = vld [vmem:[%s6737 + $0x1f8] sm:$0xff]
        %v6802 = vld [vmem:[%s6737 + $0x200] sm:$0xff]
        %v6803 = vld [vmem:[%s6737 + $0x208] sm:$0xff]
        %v6804 = vld [vmem:[%s6737 + $0x210] sm:$0xff]
        %v6805 = vld [vmem:[%s6737 + $0x218] sm:$0xff]
        %v6806 = vld [vmem:[%s6737 + $0x220] sm:$0xff]
        %v6807 = vld [vmem:[%s6737 + $0x228] sm:$0xff]
        %v6808 = vld [vmem:[%s6737 + $0x230] sm:$0xff]
        %v6809 = vld [vmem:[%s6737 + $0x238] sm:$0xff]
        %v6810 = vld [vmem:[%s6737 + $0x240] sm:$0xff]
        %v6811 = vld [vmem:[%s6737 + $0x248] sm:$0xff]
        %v6812 = vld [vmem:[%s6737 + $0x250] sm:$0xff]
        %v6813 = vld [vmem:[%s6737 + $0x258] sm:$0xff]
        %v6814 = vld [vmem:[%s6737 + $0x260] sm:$0xff]
        %v6815 = vld [vmem:[%s6737 + $0x268] sm:$0xff]
        %v6816 = vld [vmem:[%s6737 + $0x270] sm:$0xff]
        %v6817 = vld [vmem:[%s6737 + $0x278] sm:$0xff]
        %v6818 = vld [vmem:[%s6737 + $0x280] sm:$0xff]
        %v6819 = vld [vmem:[%s6737 + $0x288] sm:$0xff]
        %v6820 = vld [vmem:[%s6737 + $0x290] sm:$0xff]
        %v6821 = vld [vmem:[%s6737 + $0x298] sm:$0xff]
        %v6822 = vld [vmem:[%s6737 + $0x2a0] sm:$0xff]
        %v6823 = vld [vmem:[%s6737 + $0x2a8] sm:$0xff]
        %v6824 = vld [vmem:[%s6737 + $0x2b0] sm:$0xff]
        %v6825 = vld [vmem:[%s6737 + $0x2b8] sm:$0xff]
        %v6826 = vld [vmem:[%s6737 + $0x2c0] sm:$0xff]
        %v6827 = vld [vmem:[%s6737 + $0x2c8] sm:$0xff]
        %v6828 = vld [vmem:[%s6737 + $0x2d0] sm:$0xff]
        %v6829 = vld [vmem:[%s6737 + $0x2d8] sm:$0xff]
        %v6830 = vld [vmem:[%s6737 + $0x2e0] sm:$0xff]
        %v6831 = vld [vmem:[%s6737 + $0x2e8] sm:$0xff]
        %v6832 = vld [vmem:[%s6737 + $0x2f0] sm:$0xff]
        %v6833 = vld [vmem:[%s6737 + $0x2f8] sm:$0xff]
        %v6930 = vunpack.c.l.b16 %v6738
        %v6931 = vunpack.c.h.b16 %v6738
        %v6932 = vunpack.c.l.b16 %v6739
        %v6933 = vunpack.c.h.b16 %v6739
        %v6934 = vunpack.c.l.b16 %v6740
        %v6935 = vunpack.c.h.b16 %v6740
        %v6936 = vunpack.c.l.b16 %v6741
        %v6937 = vunpack.c.h.b16 %v6741
        %v6938 = vunpack.c.l.b16 %v6742
        %v6939 = vunpack.c.h.b16 %v6742
        %v6940 = vunpack.c.l.b16 %v6743
        %v6941 = vunpack.c.h.b16 %v6743
        %v6942 = vunpack.c.l.b16 %v6744
        %v6943 = vunpack.c.h.b16 %v6744
        %v6944 = vunpack.c.l.b16 %v6745
        %v6945 = vunpack.c.h.b16 %v6745
        %v6946 = vunpack.c.l.b16 %v6746
        %v6947 = vunpack.c.h.b16 %v6746
        %v6948 = vunpack.c.l.b16 %v6747
        %v6949 = vunpack.c.h.b16 %v6747
        %v6950 = vunpack.c.l.b16 %v6748
        %v6951 = vunpack.c.h.b16 %v6748
        %v6952 = vunpack.c.l.b16 %v6749
        %v6953 = vunpack.c.h.b16 %v6749
        %v6954 = vunpack.c.l.b16 %v6750
        %v6955 = vunpack.c.h.b16 %v6750
        %v6956 = vunpack.c.l.b16 %v6751
        %v6957 = vunpack.c.h.b16 %v6751
        %v6958 = vunpack.c.l.b16 %v6752
        %v6959 = vunpack.c.h.b16 %v6752
        %v6960 = vunpack.c.l.b16 %v6753
        %v6961 = vunpack.c.h.b16 %v6753
        %v6962 = vunpack.c.l.b16 %v6754
        %v6963 = vunpack.c.h.b16 %v6754
        %v6964 = vunpack.c.l.b16 %v6755
        %v6965 = vunpack.c.h.b16 %v6755
        %v6966 = vunpack.c.l.b16 %v6756
        %v6967 = vunpack.c.h.b16 %v6756
        %v6968 = vunpack.c.l.b16 %v6757
        %v6969 = vunpack.c.h.b16 %v6757
        %v6970 = vunpack.c.l.b16 %v6758
        %v6971 = vunpack.c.h.b16 %v6758
        %v6972 = vunpack.c.l.b16 %v6759
        %v6973 = vunpack.c.h.b16 %v6759
        %v6974 = vunpack.c.l.b16 %v6760
        %v6975 = vunpack.c.h.b16 %v6760
        %v6976 = vunpack.c.l.b16 %v6761
        %v6977 = vunpack.c.h.b16 %v6761
        %v6978 = vunpack.c.l.b16 %v6762
        %v6979 = vunpack.c.h.b16 %v6762
        %v6980 = vunpack.c.l.b16 %v6763
        %v6981 = vunpack.c.h.b16 %v6763
        %v6982 = vunpack.c.l.b16 %v6764
        %v6983 = vunpack.c.h.b16 %v6764
        %v6984 = vunpack.c.l.b16 %v6765
        %v6985 = vunpack.c.h.b16 %v6765
        %v6986 = vunpack.c.l.b16 %v6766
        %v6987 = vunpack.c.h.b16 %v6766
        %v6988 = vunpack.c.l.b16 %v6767
        %v6989 = vunpack.c.h.b16 %v6767
        %v6990 = vunpack.c.l.b16 %v6768
        %v6991 = vunpack.c.h.b16 %v6768
        %v6992 = vunpack.c.l.b16 %v6769
        %v6993 = vunpack.c.h.b16 %v6769
        %v6994 = vunpack.c.l.b16 %v6770
        %v6995 = vunpack.c.h.b16 %v6770
        %v6996 = vunpack.c.l.b16 %v6771
        %v6997 = vunpack.c.h.b16 %v6771
        %v6998 = vunpack.c.l.b16 %v6772
        %v6999 = vunpack.c.h.b16 %v6772
        %v7000 = vunpack.c.l.b16 %v6773
        %v7001 = vunpack.c.h.b16 %v6773
        %v7002 = vunpack.c.l.b16 %v6774
        %v7003 = vunpack.c.h.b16 %v6774
        %v7004 = vunpack.c.l.b16 %v6775
        %v7005 = vunpack.c.h.b16 %v6775
        %v7006 = vunpack.c.l.b16 %v6776
        %v7007 = vunpack.c.h.b16 %v6776
        %v7008 = vunpack.c.l.b16 %v6777
        %v7009 = vunpack.c.h.b16 %v6777
        %v7010 = vunpack.c.l.b16 %v6778
        %v7011 = vunpack.c.h.b16 %v6778
        %v7012 = vunpack.c.l.b16 %v6779
        %v7013 = vunpack.c.h.b16 %v6779
        %v7014 = vunpack.c.l.b16 %v6780
        %v7015 = vunpack.c.h.b16 %v6780
        %v7016 = vunpack.c.l.b16 %v6781
        %v7017 = vunpack.c.h.b16 %v6781
        %v7018 = vunpack.c.l.b16 %v6782
        %v7019 = vunpack.c.h.b16 %v6782
        %v7020 = vunpack.c.l.b16 %v6783
        %v7021 = vunpack.c.h.b16 %v6783
        %v7022 = vunpack.c.l.b16 %v6784
        %v7023 = vunpack.c.h.b16 %v6784
        %v7024 = vunpack.c.l.b16 %v6785
        %v7025 = vunpack.c.h.b16 %v6785
        %v7026 = vunpack.c.l.b16 %v6786
        %v7027 = vunpack.c.h.b16 %v6786
        %v7028 = vunpack.c.l.b16 %v6787
        %v7029 = vunpack.c.h.b16 %v6787
        %v7030 = vunpack.c.l.b16 %v6788
        %v7031 = vunpack.c.h.b16 %v6788
        %v7032 = vunpack.c.l.b16 %v6789
        %v7033 = vunpack.c.h.b16 %v6789
        %v7034 = vunpack.c.l.b16 %v6790
        %v7035 = vunpack.c.h.b16 %v6790
        %v7036 = vunpack.c.l.b16 %v6791
        %v7037 = vunpack.c.h.b16 %v6791
        %v7038 = vunpack.c.l.b16 %v6792
        %v7039 = vunpack.c.h.b16 %v6792
        %v7040 = vunpack.c.l.b16 %v6793
        %v7041 = vunpack.c.h.b16 %v6793
        %v7042 = vunpack.c.l.b16 %v6794
        %v7043 = vunpack.c.h.b16 %v6794
        %v7044 = vunpack.c.l.b16 %v6795
        %v7045 = vunpack.c.h.b16 %v6795
        %v7046 = vunpack.c.l.b16 %v6796
        %v7047 = vunpack.c.h.b16 %v6796
        %v7048 = vunpack.c.l.b16 %v6797
        %v7049 = vunpack.c.h.b16 %v6797
        %v7050 = vunpack.c.l.b16 %v6798
        %v7051 = vunpack.c.h.b16 %v6798
        %v7052 = vunpack.c.l.b16 %v6799
        %v7053 = vunpack.c.h.b16 %v6799
        %v7054 = vunpack.c.l.b16 %v6800
        %v7055 = vunpack.c.h.b16 %v6800
        %v7056 = vunpack.c.l.b16 %v6801
        %v7057 = vunpack.c.h.b16 %v6801
        %v7058 = vunpack.c.l.b16 %v6802
        %v7059 = vunpack.c.h.b16 %v6802
        %v7060 = vunpack.c.l.b16 %v6803
        %v7061 = vunpack.c.h.b16 %v6803
        %v7062 = vunpack.c.l.b16 %v6804
        %v7063 = vunpack.c.h.b16 %v6804
        %v7064 = vunpack.c.l.b16 %v6805
        %v7065 = vunpack.c.h.b16 %v6805
        %v7066 = vunpack.c.l.b16 %v6806
        %v7067 = vunpack.c.h.b16 %v6806
        %v7068 = vunpack.c.l.b16 %v6807
        %v7069 = vunpack.c.h.b16 %v6807
        %v7070 = vunpack.c.l.b16 %v6808
        %v7071 = vunpack.c.h.b16 %v6808
        %v7072 = vunpack.c.l.b16 %v6809
        %v7073 = vunpack.c.h.b16 %v6809
        %v7074 = vunpack.c.l.b16 %v6810
        %v7075 = vunpack.c.h.b16 %v6810
        %v7076 = vunpack.c.l.b16 %v6811
        %v7077 = vunpack.c.h.b16 %v6811
        %v7078 = vunpack.c.l.b16 %v6812
        %v7079 = vunpack.c.h.b16 %v6812
        %v7080 = vunpack.c.l.b16 %v6813
        %v7081 = vunpack.c.h.b16 %v6813
        %v7082 = vunpack.c.l.b16 %v6814
        %v7083 = vunpack.c.h.b16 %v6814
        %v7084 = vunpack.c.l.b16 %v6815
        %v7085 = vunpack.c.h.b16 %v6815
        %v7086 = vunpack.c.l.b16 %v6816
        %v7087 = vunpack.c.h.b16 %v6816
        %v7088 = vunpack.c.l.b16 %v6817
        %v7089 = vunpack.c.h.b16 %v6817
        %v7090 = vunpack.c.l.b16 %v6818
        %v7091 = vunpack.c.h.b16 %v6818
        %v7092 = vunpack.c.l.b16 %v6819
        %v7093 = vunpack.c.h.b16 %v6819
        %v7094 = vunpack.c.l.b16 %v6820
        %v7095 = vunpack.c.h.b16 %v6820
        %v7096 = vunpack.c.l.b16 %v6821
        %v7097 = vunpack.c.h.b16 %v6821
        %v7098 = vunpack.c.l.b16 %v6822
        %v7099 = vunpack.c.h.b16 %v6822
        %v7100 = vunpack.c.l.b16 %v6823
        %v7101 = vunpack.c.h.b16 %v6823
        %v7102 = vunpack.c.l.b16 %v6824
        %v7103 = vunpack.c.h.b16 %v6824
        %v7104 = vunpack.c.l.b16 %v6825
        %v7105 = vunpack.c.h.b16 %v6825
        %v7106 = vunpack.c.l.b16 %v6826
        %v7107 = vunpack.c.h.b16 %v6826
        %v7108 = vunpack.c.l.b16 %v6827
        %v7109 = vunpack.c.h.b16 %v6827
        %v7110 = vunpack.c.l.b16 %v6828
        %v7111 = vunpack.c.h.b16 %v6828
        %v7112 = vunpack.c.l.b16 %v6829
        %v7113 = vunpack.c.h.b16 %v6829
        %v7114 = vunpack.c.l.b16 %v6830
        %v7115 = vunpack.c.h.b16 %v6830
        %v7116 = vunpack.c.l.b16 %v6831
        %v7117 = vunpack.c.h.b16 %v6831
        %v7118 = vunpack.c.l.b16 %v6832
        %v7119 = vunpack.c.h.b16 %v6832
        %v7120 = vunpack.c.l.b16 %v6833
        %v7121 = vunpack.c.h.b16 %v6833
        %v7122 = vpack.c.b16 %v6934, %v6930
        %v7123 = vpack.c.b16 %v6935, %v6931
        %v7124 = vpack.c.b16 %v6936, %v6932
        %v7125 = vpack.c.b16 %v6937, %v6933
        %v7126 = vpack.c.b16 %v6942, %v6938
        %v7127 = vpack.c.b16 %v6943, %v6939
        %v7128 = vpack.c.b16 %v6944, %v6940
        %v7129 = vpack.c.b16 %v6945, %v6941
        %v7130 = vpack.c.b16 %v6950, %v6946
        %v7131 = vpack.c.b16 %v6951, %v6947
        %v7132 = vpack.c.b16 %v6952, %v6948
        %v7133 = vpack.c.b16 %v6953, %v6949
        %v7134 = vpack.c.b16 %v6958, %v6954
        %v7135 = vpack.c.b16 %v6959, %v6955
        %v7136 = vpack.c.b16 %v6960, %v6956
        %v7137 = vpack.c.b16 %v6961, %v6957
        %v7138 = vpack.c.b16 %v6966, %v6962
        %v7139 = vpack.c.b16 %v6967, %v6963
        %v7140 = vpack.c.b16 %v6968, %v6964
        %v7141 = vpack.c.b16 %v6969, %v6965
        %v7142 = vpack.c.b16 %v6974, %v6970
        %v7143 = vpack.c.b16 %v6975, %v6971
        %v7144 = vpack.c.b16 %v6976, %v6972
        %v7145 = vpack.c.b16 %v6977, %v6973
        %v7146 = vpack.c.b16 %v6982, %v6978
        %v7147 = vpack.c.b16 %v6983, %v6979
        %v7148 = vpack.c.b16 %v6984, %v6980
        %v7149 = vpack.c.b16 %v6985, %v6981
        %v7150 = vpack.c.b16 %v6990, %v6986
        %v7151 = vpack.c.b16 %v6991, %v6987
        %v7152 = vpack.c.b16 %v6992, %v6988
        %v7153 = vpack.c.b16 %v6993, %v6989
        %v7154 = vpack.c.b16 %v6998, %v6994
        %v7155 = vpack.c.b16 %v6999, %v6995
        %v7156 = vpack.c.b16 %v7000, %v6996
        %v7157 = vpack.c.b16 %v7001, %v6997
        %v7158 = vpack.c.b16 %v7006, %v7002
        %v7159 = vpack.c.b16 %v7007, %v7003
        %v7160 = vpack.c.b16 %v7008, %v7004
        %v7161 = vpack.c.b16 %v7009, %v7005
        %v7162 = vpack.c.b16 %v7014, %v7010
        %v7163 = vpack.c.b16 %v7015, %v7011
        %v7164 = vpack.c.b16 %v7016, %v7012
        %v7165 = vpack.c.b16 %v7017, %v7013
        %v7166 = vpack.c.b16 %v7022, %v7018
        %v7167 = vpack.c.b16 %v7023, %v7019
        %v7168 = vpack.c.b16 %v7024, %v7020
        %v7169 = vpack.c.b16 %v7025, %v7021
        %v7170 = vpack.c.b16 %v7030, %v7026
        %v7171 = vpack.c.b16 %v7031, %v7027
        %v7172 = vpack.c.b16 %v7032, %v7028
        %v7173 = vpack.c.b16 %v7033, %v7029
        %v7174 = vpack.c.b16 %v7038, %v7034
        %v7175 = vpack.c.b16 %v7039, %v7035
        %v7176 = vpack.c.b16 %v7040, %v7036
        %v7177 = vpack.c.b16 %v7041, %v7037
        %v7178 = vpack.c.b16 %v7046, %v7042
        %v7179 = vpack.c.b16 %v7047, %v7043
        %v7180 = vpack.c.b16 %v7048, %v7044
        %v7181 = vpack.c.b16 %v7049, %v7045
        %v7182 = vpack.c.b16 %v7054, %v7050
        %v7183 = vpack.c.b16 %v7055, %v7051
        %v7184 = vpack.c.b16 %v7056, %v7052
        %v7185 = vpack.c.b16 %v7057, %v7053
        %v7186 = vpack.c.b16 %v7062, %v7058
        %v7187 = vpack.c.b16 %v7063, %v7059
        %v7188 = vpack.c.b16 %v7064, %v7060
        %v7189 = vpack.c.b16 %v7065, %v7061
        %v7190 = vpack.c.b16 %v7070, %v7066
        %v7191 = vpack.c.b16 %v7071, %v7067
        %v7192 = vpack.c.b16 %v7072, %v7068
        %v7193 = vpack.c.b16 %v7073, %v7069
        %v7194 = vpack.c.b16 %v7078, %v7074
        %v7195 = vpack.c.b16 %v7079, %v7075
        %v7196 = vpack.c.b16 %v7080, %v7076
        %v7197 = vpack.c.b16 %v7081, %v7077
        %v7198 = vpack.c.b16 %v7086, %v7082
        %v7199 = vpack.c.b16 %v7087, %v7083
        %v7200 = vpack.c.b16 %v7088, %v7084
        %v7201 = vpack.c.b16 %v7089, %v7085
        %v7202 = vpack.c.b16 %v7094, %v7090
        %v7203 = vpack.c.b16 %v7095, %v7091
        %v7204 = vpack.c.b16 %v7096, %v7092
        %v7205 = vpack.c.b16 %v7097, %v7093
        %v7206 = vpack.c.b16 %v7102, %v7098
        %v7207 = vpack.c.b16 %v7103, %v7099
        %v7208 = vpack.c.b16 %v7104, %v7100
        %v7209 = vpack.c.b16 %v7105, %v7101
        %v7210 = vpack.c.b16 %v7110, %v7106
        %v7211 = vpack.c.b16 %v7111, %v7107
        %v7212 = vpack.c.b16 %v7112, %v7108
        %v7213 = vpack.c.b16 %v7113, %v7109
        %v7214 = vpack.c.b16 %v7118, %v7114
        %v7215 = vpack.c.b16 %v7119, %v7115
        %v7216 = vpack.c.b16 %v7120, %v7116
        %v7217 = vpack.c.b16 %v7121, %v7117
        %7314 = vmatprep.subr.bf16.mxu0 %v7123
        %7315 = vmatpush1.bf16.msra.mxu0 %v7122
        %7316 = vmatprep.subr.bf16.mxu0 %v7127
        %7317 = vmatpush1.bf16.msra.mxu0 %v7126
        %7318 = vmatprep.subr.bf16.mxu0 %v7131
        %7319 = vmatpush1.bf16.msra.mxu0 %v7130
        %7320 = vmatprep.subr.bf16.mxu0 %v7135
        %7321 = vmatpush1.bf16.msra.mxu0 %v7134
        %7322 = vmatprep.subr.bf16.mxu0 %v7139
        %7323 = vmatpush1.bf16.msra.mxu0 %v7138
        %7324 = vmatprep.subr.bf16.mxu0 %v7143
        %7325 = vmatpush1.bf16.msra.mxu0 %v7142
        %7326 = vmatprep.subr.bf16.mxu0 %v7147
        %7327 = vmatpush1.bf16.msra.mxu0 %v7146
        %7328 = vmatprep.subr.bf16.mxu0 %v7151
        %7329 = vmatpush1.bf16.msra.mxu0 %v7150
        %7330 = vmatprep.subr.bf16.mxu0 %v7155
        %7331 = vmatpush1.bf16.msra.mxu0 %v7154
        %7332 = vmatprep.subr.bf16.mxu0 %v7159
        %7333 = vmatpush1.bf16.msra.mxu0 %v7158
        %7334 = vmatprep.subr.bf16.mxu0 %v7163
        %7335 = vmatpush1.bf16.msra.mxu0 %v7162
        %7336 = vmatprep.subr.bf16.mxu0 %v7167
        %7337 = vmatpush1.bf16.msra.mxu0 %v7166
        %7338 = vmatprep.subr.bf16.mxu0 %v7171
        %7339 = vmatpush1.bf16.msra.mxu0 %v7170
        %7340 = vmatprep.subr.bf16.mxu0 %v7175
        %7341 = vmatpush1.bf16.msra.mxu0 %v7174
        %7342 = vmatprep.subr.bf16.mxu0 %v7179
        %7343 = vmatpush1.bf16.msra.mxu0 %v7178
        %7344 = vmatprep.subr.bf16.mxu0 %v7183
        %7345 = vmatpush1.bf16.msra.mxu0 %v7182
        %7346 = vmatprep.mubr.bf16.mxu0 %v4181
        %7347 = vmatmul.mubr.bf16.gmra.mrb[0].mxu0 %v4180
        %v7348 = vpop.f32.mrb[0].mxu0
        %v7349 = vadd.f32 0.0, %v7348
        %v7350 = vpop.f32.mrb[0].mxu0
        %v7351 = vadd.f32 0.0, %v7350
        %v7352 = vpop.f32.mrb[0].mxu0
        %v7353 = vadd.f32 0.0, %v7352
        %v7354 = vpop.f32.mrb[0].mxu0
        %v7355 = vadd.f32 0.0, %v7354
        %7356 = vmatprep.mubr.bf16.mxu0 %v4184
        %7357 = vmatmul.mubr.bf16.gmra.mrb[0].mxu0 %v4183
        %v7358 = vpop.f32.mrb[0].mxu0
        %v7359 = vadd.f32 0.0, %v7358
        %v7360 = vpop.f32.mrb[0].mxu0
        %v7361 = vadd.f32 0.0, %v7360
        %v7362 = vpop.f32.mrb[0].mxu0
        %v7363 = vadd.f32 0.0, %v7362
        %v7364 = vpop.f32.mrb[0].mxu0
        %v7365 = vadd.f32 0.0, %v7364
        %7366 = vmatprep.mubr.bf16.mxu0 %v4187
        %7367 = vmatmul.mubr.bf16.gmra.mrb[0].mxu0 %v4186
        %v7368 = vpop.f32.mrb[0].mxu0
        %v7369 = vadd.f32 0.0, %v7368
        %v7370 = vpop.f32.mrb[0].mxu0
        %v7371 = vadd.f32 0.0, %v7370
        %v7372 = vpop.f32.mrb[0].mxu0
        %v7373 = vadd.f32 0.0, %v7372
        %v7374 = vpop.f32.mrb[0].mxu0
        %v7375 = vadd.f32 0.0, %v7374
        %7376 = vmatprep.mubr.bf16.mxu0 %v6735
        %7377 = vmatmul.mubr.bf16.gmra.mrb[0].mxu0 %v6734
        %v7378 = vpop.f32.mrb[0].mxu0
        %v7379 = vadd.f32 0.0, %v7378
        %v7380 = vpop.f32.mrb[0].mxu0
        %v7381 = vadd.f32 0.0, %v7380
        %v7382 = vpop.f32.mrb[0].mxu0
        %v7383 = vadd.f32 0.0, %v7382
        %v7384 = vpop.f32.mrb[0].mxu0
        %v7385 = vadd.f32 0.0, %v7384
        %7386 = vdwg.mxu0
        %7387 = vmatprep.subr.bf16.mxu0 %v7187
        %7388 = vmatpush1.bf16.msra.mxu0 %v7186
        %7389 = vmatprep.subr.bf16.mxu0 %v7191
        %7390 = vmatpush1.bf16.msra.mxu0 %v7190
        %7391 = vmatprep.subr.bf16.mxu0 %v7195
        %7392 = vmatpush1.bf16.msra.mxu0 %v7194
        %7393 = vmatprep.subr.bf16.mxu0 %v7199
        %7394 = vmatpush1.bf16.msra.mxu0 %v7198
        %7395 = vmatprep.subr.bf16.mxu0 %v7203
        %7396 = vmatpush1.bf16.msra.mxu0 %v7202
        %7397 = vmatprep.subr.bf16.mxu0 %v7207
        %7398 = vmatpush1.bf16.msra.mxu0 %v7206
        %7399 = vmatprep.subr.bf16.mxu0 %v7211
        %7400 = vmatpush1.bf16.msra.mxu0 %v7210
        %7401 = vmatprep.subr.bf16.mxu0 %v7215
        %7402 = vmatpush1.bf16.msra.mxu0 %v7214
        %7403 = vmatprep.subr.bf16.mxu0 0
        %7404 = vmatpush1.bf16.msra.mxu0 0
        %7405 = vmatprep.subr.bf16.mxu0 0
        %7406 = vmatpush1.bf16.msra.mxu0 0
        %7407 = vmatprep.subr.bf16.mxu0 0
        %7408 = vmatpush1.bf16.msra.mxu0 0
        %7409 = vmatprep.subr.bf16.mxu0 0
        %7410 = vmatpush1.bf16.msra.mxu0 0
        %7411 = vmatprep.subr.bf16.mxu0 0
        %7412 = vmatpush1.bf16.msra.mxu0 0
        %7413 = vmatprep.subr.bf16.mxu0 0
        %7414 = vmatpush1.bf16.msra.mxu0 0
        %7415 = vmatprep.subr.bf16.mxu0 0
        %7416 = vmatpush1.bf16.msra.mxu0 0
        %7417 = vmatprep.subr.bf16.mxu0 0
        %7418 = vmatpush1.bf16.msra.mxu0 0
        %7419 = vmatprep.mubr.bf16.mxu0 0
        %7420 = vmatmul.mubr.bf16.gmra.mrb[0].mxu0 %v4182
        %v7421 = vpop.f32.mrb[0].mxu0
        %v7422 = vadd.f32 %v7349, %v7421
        %v7423 = vpop.f32.mrb[0].mxu0
        %v7424 = vadd.f32 %v7351, %v7423
        %v7425 = vpop.f32.mrb[0].mxu0
        %v7426 = vadd.f32 %v7353, %v7425
        %v7427 = vpop.f32.mrb[0].mxu0
        %v7428 = vadd.f32 %v7355, %v7427
        %7429 = vmatprep.mubr.bf16.mxu0 0
        %7430 = vmatmul.mubr.bf16.gmra.mrb[0].mxu0 %v4185
        %v7431 = vpop.f32.mrb[0].mxu0
        %v7432 = vadd.f32 %v7359, %v7431
        %v7433 = vpop.f32.mrb[0].mxu0
        %v7434 = vadd.f32 %v7361, %v7433
        %v7435 = vpop.f32.mrb[0].mxu0
        %v7436 = vadd.f32 %v7363, %v7435
        %v7437 = vpop.f32.mrb[0].mxu0
        %v7438 = vadd.f32 %v7365, %v7437
        %7439 = vmatprep.mubr.bf16.mxu0 0
        %7440 = vmatmul.mubr.bf16.gmra.mrb[0].mxu0 %v4188
        %v7441 = vpop.f32.mrb[0].mxu0
        %v7442 = vadd.f32 %v7369, %v7441
        %v7443 = vpop.f32.mrb[0].mxu0
        %v7444 = vadd.f32 %v7371, %v7443
        %v7445 = vpop.f32.mrb[0].mxu0
        %v7446 = vadd.f32 %v7373, %v7445
        %v7447 = vpop.f32.mrb[0].mxu0
        %v7448 = vadd.f32 %v7375, %v7447
        %7449 = vmatprep.mubr.bf16.mxu0 0
        %7450 = vmatmul.mubr.bf16.gmra.mrb[0].mxu0 %v6736
        %v7451 = vpop.f32.mrb[0].mxu0
        %v7452 = vadd.f32 %v7379, %v7451
        %v7453 = vpop.f32.mrb[0].mxu0
        %v7454 = vadd.f32 %v7381, %v7453
        %v7455 = vpop.f32.mrb[0].mxu0
        %v7456 = vadd.f32 %v7383, %v7455
        %v7457 = vpop.f32.mrb[0].mxu0
        %v7458 = vadd.f32 %v7385, %v7457
        %7459 = vdwg.mxu0
        %7460 = vmatprep.subr.bf16.mxu0 %v7125
        %7461 = vmatpush1.bf16.msra.mxu0 %v7124
        %7462 = vmatprep.subr.bf16.mxu0 %v7129
        %7463 = vmatpush1.bf16.msra.mxu0 %v7128
        %7464 = vmatprep.subr.bf16.mxu0 %v7133
        %7465 = vmatpush1.bf16.msra.mxu0 %v7132
        %7466 = vmatprep.subr.bf16.mxu0 %v7137
        %7467 = vmatpush1.bf16.msra.mxu0 %v7136
        %7468 = vmatprep.subr.bf16.mxu0 %v7141
        %7469 = vmatpush1.bf16.msra.mxu0 %v7140
        %7470 = vmatprep.subr.bf16.mxu0 %v7145
        %7471 = vmatpush1.bf16.msra.mxu0 %v7144
        %7472 = vmatprep.subr.bf16.mxu0 %v7149
        %7473 = vmatpush1.bf16.msra.mxu0 %v7148
        %7474 = vmatprep.subr.bf16.mxu0 %v7153
        %7475 = vmatpush1.bf16.msra.mxu0 %v7152
        %7476 = vmatprep.subr.bf16.mxu0 %v7157
        %7477 = vmatpush1.bf16.msra.mxu0 %v7156
        %7478 = vmatprep.subr.bf16.mxu0 %v7161
        %7479 = vmatpush1.bf16.msra.mxu0 %v7160
        %7480 = vmatprep.subr.bf16.mxu0 %v7165
        %7481 = vmatpush1.bf16.msra.mxu0 %v7164
        %7482 = vmatprep.subr.bf16.mxu0 %v7169
        %7483 = vmatpush1.bf16.msra.mxu0 %v7168
        %7484 = vmatprep.subr.bf16.mxu0 %v7173
        %7485 = vmatpush1.bf16.msra.mxu0 %v7172
        %7486 = vmatprep.subr.bf16.mxu0 %v7177
        %7487 = vmatpush1.bf16.msra.mxu0 %v7176
        %7488 = vmatprep.subr.bf16.mxu0 %v7181
        %7489 = vmatpush1.bf16.msra.mxu0 %v7180
        %7490 = vmatprep.subr.bf16.mxu0 %v7185
        %7491 = vmatpush1.bf16.msra.mxu0 %v7184
        %7492 = vmatprep.mubr.bf16.mxu0 %v4181
        %7493 = vmatmul.mubr.bf16.gmra.mrb[0].mxu0 %v4180
        %v7494 = vpop.f32.mrb[0].mxu0
        %v7495 = vadd.f32 0.0, %v7494
        %v7496 = vpop.f32.mrb[0].mxu0
        %v7497 = vadd.f32 0.0, %v7496
        %v7498 = vpop.f32.mrb[0].mxu0
        %v7499 = vadd.f32 0.0, %v7498
        %v7500 = vpop.f32.mrb[0].mxu0
        %v7501 = vadd.f32 0.0, %v7500
        %7502 = vmatprep.mubr.bf16.mxu0 %v4184
        %7503 = vmatmul.mubr.bf16.gmra.mrb[0].mxu0 %v4183
        %v7504 = vpop.f32.mrb[0].mxu0
        %v7505 = vadd.f32 0.0, %v7504
        %v7506 = vpop.f32.mrb[0].mxu0
        %v7507 = vadd.f32 0.0, %v7506
        %v7508 = vpop.f32.mrb[0].mxu0
        %v7509 = vadd.f32 0.0, %v7508
        %v7510 = vpop.f32.mrb[0].mxu0
        %v7511 = vadd.f32 0.0, %v7510
        %7512 = vmatprep.mubr.bf16.mxu0 %v4187
        %7513 = vmatmul.mubr.bf16.gmra.mrb[0].mxu0 %v4186
        %v7514 = vpop.f32.mrb[0].mxu0
        %v7515 = vadd.f32 0.0, %v7514
        %v7516 = vpop.f32.mrb[0].mxu0
        %v7517 = vadd.f32 0.0, %v7516
        %v7518 = vpop.f32.mrb[0].mxu0
        %v7519 = vadd.f32 0.0, %v7518
        %v7520 = vpop.f32.mrb[0].mxu0
        %v7521 = vadd.f32 0.0, %v7520
        %7522 = vmatprep.mubr.bf16.mxu0 %v6735
        %7523 = vmatmul.mubr.bf16.gmra.mrb[0].mxu0 %v6734
        %v7524 = vpop.f32.mrb[0].mxu0
        %v7525 = vadd.f32 0.0, %v7524
        %v7526 = vpop.f32.mrb[0].mxu0
        %v7527 = vadd.f32 0.0, %v7526
        %v7528 = vpop.f32.mrb[0].mxu0
        %v7529 = vadd.f32 0.0, %v7528
        %v7530 = vpop.f32.mrb[0].mxu0
        %v7531 = vadd.f32 0.0, %v7530
        %7532 = vdwg.mxu0
        %7533 = vmatprep.subr.bf16.mxu0 %v7189
        %7534 = vmatpush1.bf16.msra.mxu0 %v7188
        %7535 = vmatprep.subr.bf16.mxu0 %v7193
        %7536 = vmatpush1.bf16.msra.mxu0 %v7192
        %7537 = vmatprep.subr.bf16.mxu0 %v7197
        %7538 = vmatpush1.bf16.msra.mxu0 %v7196
        %7539 = vmatprep.subr.bf16.mxu0 %v7201
        %7540 = vmatpush1.bf16.msra.mxu0 %v7200
        %7541 = vmatprep.subr.bf16.mxu0 %v7205
        %7542 = vmatpush1.bf16.msra.mxu0 %v7204
        %7543 = vmatprep.subr.bf16.mxu0 %v7209
        %7544 = vmatpush1.bf16.msra.mxu0 %v7208
        %7545 = vmatprep.subr.bf16.mxu0 %v7213
        %7546 = vmatpush1.bf16.msra.mxu0 %v7212
        %7547 = vmatprep.subr.bf16.mxu0 %v7217
        %7548 = vmatpush1.bf16.msra.mxu0 %v7216
        %7549 = vmatprep.subr.bf16.mxu0 0
        %7550 = vmatpush1.bf16.msra.mxu0 0
        %7551 = vmatprep.subr.bf16.mxu0 0
        %7552 = vmatpush1.bf16.msra.mxu0 0
        %7553 = vmatprep.subr.bf16.mxu0 0
        %7554 = vmatpush1.bf16.msra.mxu0 0
        %7555 = vmatprep.subr.bf16.mxu0 0
        %7556 = vmatpush1.bf16.msra.mxu0 0
        %7557 = vmatprep.subr.bf16.mxu0 0
        %7558 = vmatpush1.bf16.msra.mxu0 0
        %7559 = vmatprep.subr.bf16.mxu0 0
        %7560 = vmatpush1.bf16.msra.mxu0 0
        %7561 = vmatprep.subr.bf16.mxu0 0
        %7562 = vmatpush1.bf16.msra.mxu0 0
        %7563 = vmatprep.subr.bf16.mxu0 0
        %7564 = vmatpush1.bf16.msra.mxu0 0
        %7565 = vmatprep.mubr.bf16.mxu0 0
        %7566 = vmatmul.mubr.bf16.gmra.mrb[0].mxu0 %v4182
        %v7567 = vpop.f32.mrb[0].mxu0
        %v7568 = vadd.f32 %v7495, %v7567
        %v7569 = vpop.f32.mrb[0].mxu0
        %v7570 = vadd.f32 %v7497, %v7569
        %v7571 = vpop.f32.mrb[0].mxu0
        %v7572 = vadd.f32 %v7499, %v7571
        %v7573 = vpop.f32.mrb[0].mxu0
        %v7574 = vadd.f32 %v7501, %v7573
        %7575 = vmatprep.mubr.bf16.mxu0 0
        %7576 = vmatmul.mubr.bf16.gmra.mrb[0].mxu0 %v4185
        %v7577 = vpop.f32.mrb[0].mxu0
        %v7578 = vadd.f32 %v7505, %v7577
        %v7579 = vpop.f32.mrb[0].mxu0
        %v7580 = vadd.f32 %v7507, %v7579
        %v7581 = vpop.f32.mrb[0].mxu0
        %v7582 = vadd.f32 %v7509, %v7581
        %v7583 = vpop.f32.mrb[0].mxu0
        %v7584 = vadd.f32 %v7511, %v7583
        %7585 = vmatprep.mubr.bf16.mxu0 0
        %7586 = vmatmul.mubr.bf16.gmra.mrb[0].mxu0 %v4188
        %v7587 = vpop.f32.mrb[0].mxu0
        %v7588 = vadd.f32 %v7515, %v7587
        %v7589 = vpop.f32.mrb[0].mxu0
        %v7590 = vadd.f32 %v7517, %v7589
        %v7591 = vpop.f32.mrb[0].mxu0
        %v7592 = vadd.f32 %v7519, %v7591
        %v7593 = vpop.f32.mrb[0].mxu0
        %v7594 = vadd.f32 %v7521, %v7593
        %7595 = vmatprep.mubr.bf16.mxu0 0
        %7596 = vmatmul.mubr.bf16.gmra.mrb[0].mxu0 %v6736
        %v7597 = vpop.f32.mrb[0].mxu0
        %v7598 = vadd.f32 %v7525, %v7597
        %v7599 = vpop.f32.mrb[0].mxu0
        %v7600 = vadd.f32 %v7527, %v7599
        %v7601 = vpop.f32.mrb[0].mxu0
        %v7602 = vadd.f32 %v7529, %v7601
        %v7603 = vpop.f32.mrb[0].mxu0
        %v7604 = vadd.f32 %v7531, %v7603
        %7605 = vdwg.mxu0
        %v7606 = vadd.f32 %v6702, %v7422
        %v7607 = vadd.f32 %v6703, %v7424
        %v7608 = vadd.f32 %v6704, %v7568
        %v7609 = vadd.f32 %v6705, %v7570
        %v7610 = vadd.f32 %v6706, %v7426
        %v7611 = vadd.f32 %v6707, %v7428
        %v7612 = vadd.f32 %v6708, %v7572
        %v7613 = vadd.f32 %v6709, %v7574
        %v7614 = vadd.f32 %v6710, %v7432
        %v7615 = vadd.f32 %v6711, %v7434
        %v7616 = vadd.f32 %v6712, %v7578
        %v7617 = vadd.f32 %v6713, %v7580
        %v7618 = vadd.f32 %v6714, %v7436
        %v7619 = vadd.f32 %v6715, %v7438
        %v7620 = vadd.f32 %v6716, %v7582
        %v7621 = vadd.f32 %v6717, %v7584
        %v7622 = vadd.f32 %v6718, %v7442
        %v7623 = vadd.f32 %v6719, %v7444
        %v7624 = vadd.f32 %v6720, %v7588
        %v7625 = vadd.f32 %v6721, %v7590
        %v7626 = vadd.f32 %v6722, %v7446
        %v7627 = vadd.f32 %v6723, %v7448
        %v7628 = vadd.f32 %v6724, %v7592
        %v7629 = vadd.f32 %v6725, %v7594
        %v7630 = vadd.f32 %v6726, %v7452
        %v7631 = vadd.f32 %v6727, %v7454
        %v7632 = vadd.f32 %v6728, %v7598
        %v7633 = vadd.f32 %v6729, %v7600
        %v7634 = vadd.f32 %v6730, %v7456
        %v7635 = vadd.f32 %v6731, %v7458
        %v7636 = vadd.f32 %v6732, %v7602
        %v7637 = vadd.f32 %v6733, %v7604
        %v7638 = vpack.c.bf16 %v4066, %v4063
        %v7639 = vpack.c.bf16 %v4067, %v4064
        %v7640 = vpack.c.bf16 %v4068, %v4065
        %s7641 = scalar_lea.vmem [#allocation7], 3072
        %v7642 = vld [vmem:[%s7641] sm:$0xff]
        %v7643 = vld [vmem:[%s7641 + $0x8] sm:$0xff]
        %v7644 = vld [vmem:[%s7641 + $0x10] sm:$0xff]
        %v7645 = vld [vmem:[%s7641 + $0x18] sm:$0xff]
        %v7646 = vld [vmem:[%s7641 + $0x20] sm:$0xff]
        %v7647 = vld [vmem:[%s7641 + $0x28] sm:$0xff]
        %v7648 = vld [vmem:[%s7641 + $0x30] sm:$0xff]
        %v7649 = vld [vmem:[%s7641 + $0x38] sm:$0xff]
        %v7650 = vld [vmem:[%s7641 + $0x40] sm:$0xff]
        %v7651 = vld [vmem:[%s7641 + $0x48] sm:$0xff]
        %v7652 = vld [vmem:[%s7641 + $0x50] sm:$0xff]
        %v7653 = vld [vmem:[%s7641 + $0x58] sm:$0xff]
        %v7654 = vld [vmem:[%s7641 + $0x60] sm:$0xff]
        %v7655 = vld [vmem:[%s7641 + $0x68] sm:$0xff]
        %v7656 = vld [vmem:[%s7641 + $0x70] sm:$0xff]
        %v7657 = vld [vmem:[%s7641 + $0x78] sm:$0xff]
        %v7658 = vld [vmem:[%s7641 + $0x80] sm:$0xff]
        %v7659 = vld [vmem:[%s7641 + $0x88] sm:$0xff]
        %v7660 = vld [vmem:[%s7641 + $0x90] sm:$0xff]
        %v7661 = vld [vmem:[%s7641 + $0x98] sm:$0xff]
        %v7662 = vld [vmem:[%s7641 + $0xa0] sm:$0xff]
        %v7663 = vld [vmem:[%s7641 + $0xa8] sm:$0xff]
        %v7664 = vld [vmem:[%s7641 + $0xb0] sm:$0xff]
        %v7665 = vld [vmem:[%s7641 + $0xb8] sm:$0xff]
        %v7666 = vld [vmem:[%s7641 + $0xc0] sm:$0xff]
        %v7667 = vld [vmem:[%s7641 + $0xc8] sm:$0xff]
        %v7668 = vld [vmem:[%s7641 + $0xd0] sm:$0xff]
        %v7669 = vld [vmem:[%s7641 + $0xd8] sm:$0xff]
        %v7670 = vld [vmem:[%s7641 + $0xe0] sm:$0xff]
        %v7671 = vld [vmem:[%s7641 + $0xe8] sm:$0xff]
        %v7672 = vld [vmem:[%s7641 + $0xf0] sm:$0xff]
        %v7673 = vld [vmem:[%s7641 + $0xf8] sm:$0xff]
        %v7674 = vld [vmem:[%s7641 + $0x100] sm:$0xff]
        %v7675 = vld [vmem:[%s7641 + $0x108] sm:$0xff]
        %v7676 = vld [vmem:[%s7641 + $0x110] sm:$0xff]
        %v7677 = vld [vmem:[%s7641 + $0x118] sm:$0xff]
        %v7678 = vld [vmem:[%s7641 + $0x120] sm:$0xff]
        %v7679 = vld [vmem:[%s7641 + $0x128] sm:$0xff]
        %v7680 = vld [vmem:[%s7641 + $0x130] sm:$0xff]
        %v7681 = vld [vmem:[%s7641 + $0x138] sm:$0xff]
        %v7682 = vld [vmem:[%s7641 + $0x140] sm:$0xff]
        %v7683 = vld [vmem:[%s7641 + $0x148] sm:$0xff]
        %v7684 = vld [vmem:[%s7641 + $0x150] sm:$0xff]
        %v7685 = vld [vmem:[%s7641 + $0x158] sm:$0xff]
        %v7686 = vld [vmem:[%s7641 + $0x160] sm:$0xff]
        %v7687 = vld [vmem:[%s7641 + $0x168] sm:$0xff]
        %v7688 = vld [vmem:[%s7641 + $0x170] sm:$0xff]
        %v7689 = vld [vmem:[%s7641 + $0x178] sm:$0xff]
        %v7690 = vld [vmem:[%s7641 + $0x180] sm:$0xff]
        %v7691 = vld [vmem:[%s7641 + $0x188] sm:$0xff]
        %v7692 = vld [vmem:[%s7641 + $0x190] sm:$0xff]
        %v7693 = vld [vmem:[%s7641 + $0x198] sm:$0xff]
        %v7694 = vld [vmem:[%s7641 + $0x1a0] sm:$0xff]
        %v7695 = vld [vmem:[%s7641 + $0x1a8] sm:$0xff]
        %v7696 = vld [vmem:[%s7641 + $0x1b0] sm:$0xff]
        %v7697 = vld [vmem:[%s7641 + $0x1b8] sm:$0xff]
        %v7698 = vld [vmem:[%s7641 + $0x1c0] sm:$0xff]
        %v7699 = vld [vmem:[%s7641 + $0x1c8] sm:$0xff]
        %v7700 = vld [vmem:[%s7641 + $0x1d0] sm:$0xff]
        %v7701 = vld [vmem:[%s7641 + $0x1d8] sm:$0xff]
        %v7702 = vld [vmem:[%s7641 + $0x1e0] sm:$0xff]
        %v7703 = vld [vmem:[%s7641 + $0x1e8] sm:$0xff]
        %v7704 = vld [vmem:[%s7641 + $0x1f0] sm:$0xff]
        %v7705 = vld [vmem:[%s7641 + $0x1f8] sm:$0xff]
        %v7706 = vld [vmem:[%s7641 + $0x200] sm:$0xff]
        %v7707 = vld [vmem:[%s7641 + $0x208] sm:$0xff]
        %v7708 = vld [vmem:[%s7641 + $0x210] sm:$0xff]
        %v7709 = vld [vmem:[%s7641 + $0x218] sm:$0xff]
        %v7710 = vld [vmem:[%s7641 + $0x220] sm:$0xff]
        %v7711 = vld [vmem:[%s7641 + $0x228] sm:$0xff]
        %v7712 = vld [vmem:[%s7641 + $0x230] sm:$0xff]
        %v7713 = vld [vmem:[%s7641 + $0x238] sm:$0xff]
        %v7714 = vld [vmem:[%s7641 + $0x240] sm:$0xff]
        %v7715 = vld [vmem:[%s7641 + $0x248] sm:$0xff]
        %v7716 = vld [vmem:[%s7641 + $0x250] sm:$0xff]
        %v7717 = vld [vmem:[%s7641 + $0x258] sm:$0xff]
        %v7718 = vld [vmem:[%s7641 + $0x260] sm:$0xff]
        %v7719 = vld [vmem:[%s7641 + $0x268] sm:$0xff]
        %v7720 = vld [vmem:[%s7641 + $0x270] sm:$0xff]
        %v7721 = vld [vmem:[%s7641 + $0x278] sm:$0xff]
        %v7722 = vld [vmem:[%s7641 + $0x280] sm:$0xff]
        %v7723 = vld [vmem:[%s7641 + $0x288] sm:$0xff]
        %v7724 = vld [vmem:[%s7641 + $0x290] sm:$0xff]
        %v7725 = vld [vmem:[%s7641 + $0x298] sm:$0xff]
        %v7726 = vld [vmem:[%s7641 + $0x2a0] sm:$0xff]
        %v7727 = vld [vmem:[%s7641 + $0x2a8] sm:$0xff]
        %v7728 = vld [vmem:[%s7641 + $0x2b0] sm:$0xff]
        %v7729 = vld [vmem:[%s7641 + $0x2b8] sm:$0xff]
        %v7730 = vld [vmem:[%s7641 + $0x2c0] sm:$0xff]
        %v7731 = vld [vmem:[%s7641 + $0x2c8] sm:$0xff]
        %v7732 = vld [vmem:[%s7641 + $0x2d0] sm:$0xff]
        %v7733 = vld [vmem:[%s7641 + $0x2d8] sm:$0xff]
        %v7734 = vld [vmem:[%s7641 + $0x2e0] sm:$0xff]
        %v7735 = vld [vmem:[%s7641 + $0x2e8] sm:$0xff]
        %v7736 = vld [vmem:[%s7641 + $0x2f0] sm:$0xff]
        %v7737 = vld [vmem:[%s7641 + $0x2f8] sm:$0xff]
        %v7834 = vunpack.c.l.b16 %v7642
        %v7835 = vunpack.c.h.b16 %v7642
        %v7836 = vunpack.c.l.b16 %v7643
        %v7837 = vunpack.c.h.b16 %v7643
        %v7838 = vunpack.c.l.b16 %v7644
        %v7839 = vunpack.c.h.b16 %v7644
        %v7840 = vunpack.c.l.b16 %v7645
        %v7841 = vunpack.c.h.b16 %v7645
        %v7842 = vunpack.c.l.b16 %v7646
        %v7843 = vunpack.c.h.b16 %v7646
        %v7844 = vunpack.c.l.b16 %v7647
        %v7845 = vunpack.c.h.b16 %v7647
        %v7846 = vunpack.c.l.b16 %v7648
        %v7847 = vunpack.c.h.b16 %v7648
        %v7848 = vunpack.c.l.b16 %v7649
        %v7849 = vunpack.c.h.b16 %v7649
        %v7850 = vunpack.c.l.b16 %v7650
        %v7851 = vunpack.c.h.b16 %v7650
        %v7852 = vunpack.c.l.b16 %v7651
        %v7853 = vunpack.c.h.b16 %v7651
        %v7854 = vunpack.c.l.b16 %v7652
        %v7855 = vunpack.c.h.b16 %v7652
        %v7856 = vunpack.c.l.b16 %v7653
        %v7857 = vunpack.c.h.b16 %v7653
        %v7858 = vunpack.c.l.b16 %v7654
        %v7859 = vunpack.c.h.b16 %v7654
        %v7860 = vunpack.c.l.b16 %v7655
        %v7861 = vunpack.c.h.b16 %v7655
        %v7862 = vunpack.c.l.b16 %v7656
        %v7863 = vunpack.c.h.b16 %v7656
        %v7864 = vunpack.c.l.b16 %v7657
        %v7865 = vunpack.c.h.b16 %v7657
        %v7866 = vunpack.c.l.b16 %v7658
        %v7867 = vunpack.c.h.b16 %v7658
        %v7868 = vunpack.c.l.b16 %v7659
        %v7869 = vunpack.c.h.b16 %v7659
        %v7870 = vunpack.c.l.b16 %v7660
        %v7871 = vunpack.c.h.b16 %v7660
        %v7872 = vunpack.c.l.b16 %v7661
        %v7873 = vunpack.c.h.b16 %v7661
        %v7874 = vunpack.c.l.b16 %v7662
        %v7875 = vunpack.c.h.b16 %v7662
        %v7876 = vunpack.c.l.b16 %v7663
        %v7877 = vunpack.c.h.b16 %v7663
        %v7878 = vunpack.c.l.b16 %v7664
        %v7879 = vunpack.c.h.b16 %v7664
        %v7880 = vunpack.c.l.b16 %v7665
        %v7881 = vunpack.c.h.b16 %v7665
        %v7882 = vunpack.c.l.b16 %v7666
        %v7883 = vunpack.c.h.b16 %v7666
        %v7884 = vunpack.c.l.b16 %v7667
        %v7885 = vunpack.c.h.b16 %v7667
        %v7886 = vunpack.c.l.b16 %v7668
        %v7887 = vunpack.c.h.b16 %v7668
        %v7888 = vunpack.c.l.b16 %v7669
        %v7889 = vunpack.c.h.b16 %v7669
        %v7890 = vunpack.c.l.b16 %v7670
        %v7891 = vunpack.c.h.b16 %v7670
        %v7892 = vunpack.c.l.b16 %v7671
        %v7893 = vunpack.c.h.b16 %v7671
        %v7894 = vunpack.c.l.b16 %v7672
        %v7895 = vunpack.c.h.b16 %v7672
        %v7896 = vunpack.c.l.b16 %v7673
        %v7897 = vunpack.c.h.b16 %v7673
        %v7898 = vunpack.c.l.b16 %v7674
        %v7899 = vunpack.c.h.b16 %v7674
        %v7900 = vunpack.c.l.b16 %v7675
        %v7901 = vunpack.c.h.b16 %v7675
        %v7902 = vunpack.c.l.b16 %v7676
        %v7903 = vunpack.c.h.b16 %v7676
        %v7904 = vunpack.c.l.b16 %v7677
        %v7905 = vunpack.c.h.b16 %v7677
        %v7906 = vunpack.c.l.b16 %v7678
        %v7907 = vunpack.c.h.b16 %v7678
        %v7908 = vunpack.c.l.b16 %v7679
        %v7909 = vunpack.c.h.b16 %v7679
        %v7910 = vunpack.c.l.b16 %v7680
        %v7911 = vunpack.c.h.b16 %v7680
        %v7912 = vunpack.c.l.b16 %v7681
        %v7913 = vunpack.c.h.b16 %v7681
        %v7914 = vunpack.c.l.b16 %v7682
        %v7915 = vunpack.c.h.b16 %v7682
        %v7916 = vunpack.c.l.b16 %v7683
        %v7917 = vunpack.c.h.b16 %v7683
        %v7918 = vunpack.c.l.b16 %v7684
        %v7919 = vunpack.c.h.b16 %v7684
        %v7920 = vunpack.c.l.b16 %v7685
        %v7921 = vunpack.c.h.b16 %v7685
        %v7922 = vunpack.c.l.b16 %v7686
        %v7923 = vunpack.c.h.b16 %v7686
        %v7924 = vunpack.c.l.b16 %v7687
        %v7925 = vunpack.c.h.b16 %v7687
        %v7926 = vunpack.c.l.b16 %v7688
        %v7927 = vunpack.c.h.b16 %v7688
        %v7928 = vunpack.c.l.b16 %v7689
        %v7929 = vunpack.c.h.b16 %v7689
        %v7930 = vunpack.c.l.b16 %v7690
        %v7931 = vunpack.c.h.b16 %v7690
        %v7932 = vunpack.c.l.b16 %v7691
        %v7933 = vunpack.c.h.b16 %v7691
        %v7934 = vunpack.c.l.b16 %v7692
        %v7935 = vunpack.c.h.b16 %v7692
        %v7936 = vunpack.c.l.b16 %v7693
        %v7937 = vunpack.c.h.b16 %v7693
        %v7938 = vunpack.c.l.b16 %v7694
        %v7939 = vunpack.c.h.b16 %v7694
        %v7940 = vunpack.c.l.b16 %v7695
        %v7941 = vunpack.c.h.b16 %v7695
        %v7942 = vunpack.c.l.b16 %v7696
        %v7943 = vunpack.c.h.b16 %v7696
        %v7944 = vunpack.c.l.b16 %v7697
        %v7945 = vunpack.c.h.b16 %v7697
        %v7946 = vunpack.c.l.b16 %v7698
        %v7947 = vunpack.c.h.b16 %v7698
        %v7948 = vunpack.c.l.b16 %v7699
        %v7949 = vunpack.c.h.b16 %v7699
        %v7950 = vunpack.c.l.b16 %v7700
        %v7951 = vunpack.c.h.b16 %v7700
        %v7952 = vunpack.c.l.b16 %v7701
        %v7953 = vunpack.c.h.b16 %v7701
        %v7954 = vunpack.c.l.b16 %v7702
        %v7955 = vunpack.c.h.b16 %v7702
        %v7956 = vunpack.c.l.b16 %v7703
        %v7957 = vunpack.c.h.b16 %v7703
        %v7958 = vunpack.c.l.b16 %v7704
        %v7959 = vunpack.c.h.b16 %v7704
        %v7960 = vunpack.c.l.b16 %v7705
        %v7961 = vunpack.c.h.b16 %v7705
        %v7962 = vunpack.c.l.b16 %v7706
        %v7963 = vunpack.c.h.b16 %v7706
        %v7964 = vunpack.c.l.b16 %v7707
        %v7965 = vunpack.c.h.b16 %v7707
        %v7966 = vunpack.c.l.b16 %v7708
        %v7967 = vunpack.c.h.b16 %v7708
        %v7968 = vunpack.c.l.b16 %v7709
        %v7969 = vunpack.c.h.b16 %v7709
        %v7970 = vunpack.c.l.b16 %v7710
        %v7971 = vunpack.c.h.b16 %v7710
        %v7972 = vunpack.c.l.b16 %v7711
        %v7973 = vunpack.c.h.b16 %v7711
        %v7974 = vunpack.c.l.b16 %v7712
        %v7975 = vunpack.c.h.b16 %v7712
        %v7976 = vunpack.c.l.b16 %v7713
        %v7977 = vunpack.c.h.b16 %v7713
        %v7978 = vunpack.c.l.b16 %v7714
        %v7979 = vunpack.c.h.b16 %v7714
        %v7980 = vunpack.c.l.b16 %v7715
        %v7981 = vunpack.c.h.b16 %v7715
        %v7982 = vunpack.c.l.b16 %v7716
        %v7983 = vunpack.c.h.b16 %v7716
        %v7984 = vunpack.c.l.b16 %v7717
        %v7985 = vunpack.c.h.b16 %v7717
        %v7986 = vunpack.c.l.b16 %v7718
        %v7987 = vunpack.c.h.b16 %v7718
        %v7988 = vunpack.c.l.b16 %v7719
        %v7989 = vunpack.c.h.b16 %v7719
        %v7990 = vunpack.c.l.b16 %v7720
        %v7991 = vunpack.c.h.b16 %v7720
        %v7992 = vunpack.c.l.b16 %v7721
        %v7993 = vunpack.c.h.b16 %v7721
        %v7994 = vunpack.c.l.b16 %v7722
        %v7995 = vunpack.c.h.b16 %v7722
        %v7996 = vunpack.c.l.b16 %v7723
        %v7997 = vunpack.c.h.b16 %v7723
        %v7998 = vunpack.c.l.b16 %v7724
        %v7999 = vunpack.c.h.b16 %v7724
        %v8000 = vunpack.c.l.b16 %v7725
        %v8001 = vunpack.c.h.b16 %v7725
        %v8002 = vunpack.c.l.b16 %v7726
        %v8003 = vunpack.c.h.b16 %v7726
        %v8004 = vunpack.c.l.b16 %v7727
        %v8005 = vunpack.c.h.b16 %v7727
        %v8006 = vunpack.c.l.b16 %v7728
        %v8007 = vunpack.c.h.b16 %v7728
        %v8008 = vunpack.c.l.b16 %v7729
        %v8009 = vunpack.c.h.b16 %v7729
        %v8010 = vunpack.c.l.b16 %v7730
        %v8011 = vunpack.c.h.b16 %v7730
        %v8012 = vunpack.c.l.b16 %v7731
        %v8013 = vunpack.c.h.b16 %v7731
        %v8014 = vunpack.c.l.b16 %v7732
        %v8015 = vunpack.c.h.b16 %v7732
        %v8016 = vunpack.c.l.b16 %v7733
        %v8017 = vunpack.c.h.b16 %v7733
        %v8018 = vunpack.c.l.b16 %v7734
        %v8019 = vunpack.c.h.b16 %v7734
        %v8020 = vunpack.c.l.b16 %v7735
        %v8021 = vunpack.c.h.b16 %v7735
        %v8022 = vunpack.c.l.b16 %v7736
        %v8023 = vunpack.c.h.b16 %v7736
        %v8024 = vunpack.c.l.b16 %v7737
        %v8025 = vunpack.c.h.b16 %v7737
        %v8026 = vpack.c.b16 %v7838, %v7834
        %v8027 = vpack.c.b16 %v7839, %v7835
        %v8028 = vpack.c.b16 %v7840, %v7836
        %v8029 = vpack.c.b16 %v7841, %v7837
        %v8030 = vpack.c.b16 %v7846, %v7842
        %v8031 = vpack.c.b16 %v7847, %v7843
        %v8032 = vpack.c.b16 %v7848, %v7844
        %v8033 = vpack.c.b16 %v7849, %v7845
        %v8034 = vpack.c.b16 %v7854, %v7850
        %v8035 = vpack.c.b16 %v7855, %v7851
        %v8036 = vpack.c.b16 %v7856, %v7852
        %v8037 = vpack.c.b16 %v7857, %v7853
        %v8038 = vpack.c.b16 %v7862, %v7858
        %v8039 = vpack.c.b16 %v7863, %v7859
        %v8040 = vpack.c.b16 %v7864, %v7860
        %v8041 = vpack.c.b16 %v7865, %v7861
        %v8042 = vpack.c.b16 %v7870, %v7866
        %v8043 = vpack.c.b16 %v7871, %v7867
        %v8044 = vpack.c.b16 %v7872, %v7868
        %v8045 = vpack.c.b16 %v7873, %v7869
        %v8046 = vpack.c.b16 %v7878, %v7874
        %v8047 = vpack.c.b16 %v7879, %v7875
        %v8048 = vpack.c.b16 %v7880, %v7876
        %v8049 = vpack.c.b16 %v7881, %v7877
        %v8050 = vpack.c.b16 %v7886, %v7882
        %v8051 = vpack.c.b16 %v7887, %v7883
        %v8052 = vpack.c.b16 %v7888, %v7884
        %v8053 = vpack.c.b16 %v7889, %v7885
        %v8054 = vpack.c.b16 %v7894, %v7890
        %v8055 = vpack.c.b16 %v7895, %v7891
        %v8056 = vpack.c.b16 %v7896, %v7892
        %v8057 = vpack.c.b16 %v7897, %v7893
        %v8058 = vpack.c.b16 %v7902, %v7898
        %v8059 = vpack.c.b16 %v7903, %v7899
        %v8060 = vpack.c.b16 %v7904, %v7900
        %v8061 = vpack.c.b16 %v7905, %v7901
        %v8062 = vpack.c.b16 %v7910, %v7906
        %v8063 = vpack.c.b16 %v7911, %v7907
        %v8064 = vpack.c.b16 %v7912, %v7908
        %v8065 = vpack.c.b16 %v7913, %v7909
        %v8066 = vpack.c.b16 %v7918, %v7914
        %v8067 = vpack.c.b16 %v7919, %v7915
        %v8068 = vpack.c.b16 %v7920, %v7916
        %v8069 = vpack.c.b16 %v7921, %v7917
        %v8070 = vpack.c.b16 %v7926, %v7922
        %v8071 = vpack.c.b16 %v7927, %v7923
        %v8072 = vpack.c.b16 %v7928, %v7924
        %v8073 = vpack.c.b16 %v7929, %v7925
        %v8074 = vpack.c.b16 %v7934, %v7930
        %v8075 = vpack.c.b16 %v7935, %v7931
        %v8076 = vpack.c.b16 %v7936, %v7932
        %v8077 = vpack.c.b16 %v7937, %v7933
        %v8078 = vpack.c.b16 %v7942, %v7938
        %v8079 = vpack.c.b16 %v7943, %v7939
        %v8080 = vpack.c.b16 %v7944, %v7940
        %v8081 = vpack.c.b16 %v7945, %v7941
        %v8082 = vpack.c.b16 %v7950, %v7946
        %v8083 = vpack.c.b16 %v7951, %v7947
        %v8084 = vpack.c.b16 %v7952, %v7948
        %v8085 = vpack.c.b16 %v7953, %v7949
        %v8086 = vpack.c.b16 %v7958, %v7954
        %v8087 = vpack.c.b16 %v7959, %v7955
        %v8088 = vpack.c.b16 %v7960, %v7956
        %v8089 = vpack.c.b16 %v7961, %v7957
        %v8090 = vpack.c.b16 %v7966, %v7962
        %v8091 = vpack.c.b16 %v7967, %v7963
        %v8092 = vpack.c.b16 %v7968, %v7964
        %v8093 = vpack.c.b16 %v7969, %v7965
        %v8094 = vpack.c.b16 %v7974, %v7970
        %v8095 = vpack.c.b16 %v7975, %v7971
        %v8096 = vpack.c.b16 %v7976, %v7972
        %v8097 = vpack.c.b16 %v7977, %v7973
        %v8098 = vpack.c.b16 %v7982, %v7978
        %v8099 = vpack.c.b16 %v7983, %v7979
        %v8100 = vpack.c.b16 %v7984, %v7980
        %v8101 = vpack.c.b16 %v7985, %v7981
        %v8102 = vpack.c.b16 %v7990, %v7986
        %v8103 = vpack.c.b16 %v7991, %v7987
        %v8104 = vpack.c.b16 %v7992, %v7988
        %v8105 = vpack.c.b16 %v7993, %v7989
        %v8106 = vpack.c.b16 %v7998, %v7994
        %v8107 = vpack.c.b16 %v7999, %v7995
        %v8108 = vpack.c.b16 %v8000, %v7996
        %v8109 = vpack.c.b16 %v8001, %v7997
        %v8110 = vpack.c.b16 %v8006, %v8002
        %v8111 = vpack.c.b16 %v8007, %v8003
        %v8112 = vpack.c.b16 %v8008, %v8004
        %v8113 = vpack.c.b16 %v8009, %v8005
        %v8114 = vpack.c.b16 %v8014, %v8010
        %v8115 = vpack.c.b16 %v8015, %v8011
        %v8116 = vpack.c.b16 %v8016, %v8012
        %v8117 = vpack.c.b16 %v8017, %v8013
        %v8118 = vpack.c.b16 %v8022, %v8018
        %v8119 = vpack.c.b16 %v8023, %v8019
        %v8120 = vpack.c.b16 %v8024, %v8020
        %v8121 = vpack.c.b16 %v8025, %v8021
        %8218 = vmatprep.subr.bf16.mxu0 %v8027
        %8219 = vmatpush1.bf16.msra.mxu0 %v8026
        %8220 = vmatprep.subr.bf16.mxu0 %v8031
        %8221 = vmatpush1.bf16.msra.mxu0 %v8030
        %8222 = vmatprep.subr.bf16.mxu0 %v8035
        %8223 = vmatpush1.bf16.msra.mxu0 %v8034
        %8224 = vmatprep.subr.bf16.mxu0 %v8039
        %8225 = vmatpush1.bf16.msra.mxu0 %v8038
        %8226 = vmatprep.subr.bf16.mxu0 %v8043
        %8227 = vmatpush1.bf16.msra.mxu0 %v8042
        %8228 = vmatprep.subr.bf16.mxu0 %v8047
        %8229 = vmatpush1.bf16.msra.mxu0 %v8046
        %8230 = vmatprep.subr.bf16.mxu0 %v8051
        %8231 = vmatpush1.bf16.msra.mxu0 %v8050
        %8232 = vmatprep.subr.bf16.mxu0 %v8055
        %8233 = vmatpush1.bf16.msra.mxu0 %v8054
        %8234 = vmatprep.subr.bf16.mxu0 %v8059
        %8235 = vmatpush1.bf16.msra.mxu0 %v8058
        %8236 = vmatprep.subr.bf16.mxu0 %v8063
        %8237 = vmatpush1.bf16.msra.mxu0 %v8062
        %8238 = vmatprep.subr.bf16.mxu0 %v8067
        %8239 = vmatpush1.bf16.msra.mxu0 %v8066
        %8240 = vmatprep.subr.bf16.mxu0 %v8071
        %8241 = vmatpush1.bf16.msra.mxu0 %v8070
        %8242 = vmatprep.subr.bf16.mxu0 %v8075
        %8243 = vmatpush1.bf16.msra.mxu0 %v8074
        %8244 = vmatprep.subr.bf16.mxu0 %v8079
        %8245 = vmatpush1.bf16.msra.mxu0 %v8078
        %8246 = vmatprep.subr.bf16.mxu0 %v8083
        %8247 = vmatpush1.bf16.msra.mxu0 %v8082
        %8248 = vmatprep.subr.bf16.mxu0 %v8087
        %8249 = vmatpush1.bf16.msra.mxu0 %v8086
        %8250 = vmatprep.mubr.bf16.mxu0 %v4076
        %8251 = vmatmul.mubr.bf16.gmra.mrb[0].mxu0 %v4075
        %v8252 = vpop.f32.mrb[0].mxu0
        %v8253 = vadd.f32 0.0, %v8252
        %v8254 = vpop.f32.mrb[0].mxu0
        %v8255 = vadd.f32 0.0, %v8254
        %v8256 = vpop.f32.mrb[0].mxu0
        %v8257 = vadd.f32 0.0, %v8256
        %v8258 = vpop.f32.mrb[0].mxu0
        %v8259 = vadd.f32 0.0, %v8258
        %8260 = vmatprep.mubr.bf16.mxu0 %v4079
        %8261 = vmatmul.mubr.bf16.gmra.mrb[0].mxu0 %v4078
        %v8262 = vpop.f32.mrb[0].mxu0
        %v8263 = vadd.f32 0.0, %v8262
        %v8264 = vpop.f32.mrb[0].mxu0
        %v8265 = vadd.f32 0.0, %v8264
        %v8266 = vpop.f32.mrb[0].mxu0
        %v8267 = vadd.f32 0.0, %v8266
        %v8268 = vpop.f32.mrb[0].mxu0
        %v8269 = vadd.f32 0.0, %v8268
        %8270 = vmatprep.mubr.bf16.mxu0 %v5831
        %8271 = vmatmul.mubr.bf16.gmra.mrb[0].mxu0 %v5830
        %v8272 = vpop.f32.mrb[0].mxu0
        %v8273 = vadd.f32 0.0, %v8272
        %v8274 = vpop.f32.mrb[0].mxu0
        %v8275 = vadd.f32 0.0, %v8274
        %v8276 = vpop.f32.mrb[0].mxu0
        %v8277 = vadd.f32 0.0, %v8276
        %v8278 = vpop.f32.mrb[0].mxu0
        %v8279 = vadd.f32 0.0, %v8278
        %8280 = vmatprep.mubr.bf16.mxu0 %v7639
        %8281 = vmatmul.mubr.bf16.gmra.mrb[0].mxu0 %v7638
        %v8282 = vpop.f32.mrb[0].mxu0
        %v8283 = vadd.f32 0.0, %v8282
        %v8284 = vpop.f32.mrb[0].mxu0
        %v8285 = vadd.f32 0.0, %v8284
        %v8286 = vpop.f32.mrb[0].mxu0
        %v8287 = vadd.f32 0.0, %v8286
        %v8288 = vpop.f32.mrb[0].mxu0
        %v8289 = vadd.f32 0.0, %v8288
        %8290 = vdwg.mxu0
        %8291 = vmatprep.subr.bf16.mxu0 %v8091
        %8292 = vmatpush1.bf16.msra.mxu0 %v8090
        %8293 = vmatprep.subr.bf16.mxu0 %v8095
        %8294 = vmatpush1.bf16.msra.mxu0 %v8094
        %8295 = vmatprep.subr.bf16.mxu0 %v8099
        %8296 = vmatpush1.bf16.msra.mxu0 %v8098
        %8297 = vmatprep.subr.bf16.mxu0 %v8103
        %8298 = vmatpush1.bf16.msra.mxu0 %v8102
        %8299 = vmatprep.subr.bf16.mxu0 %v8107
        %8300 = vmatpush1.bf16.msra.mxu0 %v8106
        %8301 = vmatprep.subr.bf16.mxu0 %v8111
        %8302 = vmatpush1.bf16.msra.mxu0 %v8110
        %8303 = vmatprep.subr.bf16.mxu0 %v8115
        %8304 = vmatpush1.bf16.msra.mxu0 %v8114
        %8305 = vmatprep.subr.bf16.mxu0 %v8119
        %8306 = vmatpush1.bf16.msra.mxu0 %v8118
        %8307 = vmatprep.subr.bf16.mxu0 0
        %8308 = vmatpush1.bf16.msra.mxu0 0
        %8309 = vmatprep.subr.bf16.mxu0 0
        %8310 = vmatpush1.bf16.msra.mxu0 0
        %8311 = vmatprep.subr.bf16.mxu0 0
        %8312 = vmatpush1.bf16.msra.mxu0 0
        %8313 = vmatprep.subr.bf16.mxu0 0
        %8314 = vmatpush1.bf16.msra.mxu0 0
        %8315 = vmatprep.subr.bf16.mxu0 0
        %8316 = vmatpush1.bf16.msra.mxu0 0
        %8317 = vmatprep.subr.bf16.mxu0 0
        %8318 = vmatpush1.bf16.msra.mxu0 0
        %8319 = vmatprep.subr.bf16.mxu0 0
        %8320 = vmatpush1.bf16.msra.mxu0 0
        %8321 = vmatprep.subr.bf16.mxu0 0
        %8322 = vmatpush1.bf16.msra.mxu0 0
        %8323 = vmatprep.mubr.bf16.mxu0 0
        %8324 = vmatmul.mubr.bf16.gmra.mrb[0].mxu0 %v4077
        %v8325 = vpop.f32.mrb[0].mxu0
        %v8326 = vadd.f32 %v8253, %v8325
        %v8327 = vpop.f32.mrb[0].mxu0
        %v8328 = vadd.f32 %v8255, %v8327
        %v8329 = vpop.f32.mrb[0].mxu0
        %v8330 = vadd.f32 %v8257, %v8329
        %v8331 = vpop.f32.mrb[0].mxu0
        %v8332 = vadd.f32 %v8259, %v8331
        %8333 = vmatprep.mubr.bf16.mxu0 0
        %8334 = vmatmul.mubr.bf16.gmra.mrb[0].mxu0 %v4080
        %v8335 = vpop.f32.mrb[0].mxu0
        %v8336 = vadd.f32 %v8263, %v8335
        %v8337 = vpop.f32.mrb[0].mxu0
        %v8338 = vadd.f32 %v8265, %v8337
        %v8339 = vpop.f32.mrb[0].mxu0
        %v8340 = vadd.f32 %v8267, %v8339
        %v8341 = vpop.f32.mrb[0].mxu0
        %v8342 = vadd.f32 %v8269, %v8341
        %8343 = vmatprep.mubr.bf16.mxu0 0
        %8344 = vmatmul.mubr.bf16.gmra.mrb[0].mxu0 %v5832
        %v8345 = vpop.f32.mrb[0].mxu0
        %v8346 = vadd.f32 %v8273, %v8345
        %v8347 = vpop.f32.mrb[0].mxu0
        %v8348 = vadd.f32 %v8275, %v8347
        %v8349 = vpop.f32.mrb[0].mxu0
        %v8350 = vadd.f32 %v8277, %v8349
        %v8351 = vpop.f32.mrb[0].mxu0
        %v8352 = vadd.f32 %v8279, %v8351
        %8353 = vmatprep.mubr.bf16.mxu0 0
        %8354 = vmatmul.mubr.bf16.gmra.mrb[0].mxu0 %v7640
        %v8355 = vpop.f32.mrb[0].mxu0
        %v8356 = vadd.f32 %v8283, %v8355
        %v8357 = vpop.f32.mrb[0].mxu0
        %v8358 = vadd.f32 %v8285, %v8357
        %v8359 = vpop.f32.mrb[0].mxu0
        %v8360 = vadd.f32 %v8287, %v8359
        %v8361 = vpop.f32.mrb[0].mxu0
        %v8362 = vadd.f32 %v8289, %v8361
        %8363 = vdwg.mxu0
        %8364 = vmatprep.subr.bf16.mxu0 %v8029
        %8365 = vmatpush1.bf16.msra.mxu0 %v8028
        %8366 = vmatprep.subr.bf16.mxu0 %v8033
        %8367 = vmatpush1.bf16.msra.mxu0 %v8032
        %8368 = vmatprep.subr.bf16.mxu0 %v8037
        %8369 = vmatpush1.bf16.msra.mxu0 %v8036
        %8370 = vmatprep.subr.bf16.mxu0 %v8041
        %8371 = vmatpush1.bf16.msra.mxu0 %v8040
        %8372 = vmatprep.subr.bf16.mxu0 %v8045
        %8373 = vmatpush1.bf16.msra.mxu0 %v8044
        %8374 = vmatprep.subr.bf16.mxu0 %v8049
        %8375 = vmatpush1.bf16.msra.mxu0 %v8048
        %8376 = vmatprep.subr.bf16.mxu0 %v8053
        %8377 = vmatpush1.bf16.msra.mxu0 %v8052
        %8378 = vmatprep.subr.bf16.mxu0 %v8057
        %8379 = vmatpush1.bf16.msra.mxu0 %v8056
        %8380 = vmatprep.subr.bf16.mxu0 %v8061
        %8381 = vmatpush1.bf16.msra.mxu0 %v8060
        %8382 = vmatprep.subr.bf16.mxu0 %v8065
        %8383 = vmatpush1.bf16.msra.mxu0 %v8064
        %8384 = vmatprep.subr.bf16.mxu0 %v8069
        %8385 = vmatpush1.bf16.msra.mxu0 %v8068
        %8386 = vmatprep.subr.bf16.mxu0 %v8073
        %8387 = vmatpush1.bf16.msra.mxu0 %v8072
        %8388 = vmatprep.subr.bf16.mxu0 %v8077
        %8389 = vmatpush1.bf16.msra.mxu0 %v8076
        %8390 = vmatprep.subr.bf16.mxu0 %v8081
        %8391 = vmatpush1.bf16.msra.mxu0 %v8080
        %8392 = vmatprep.subr.bf16.mxu0 %v8085
        %8393 = vmatpush1.bf16.msra.mxu0 %v8084
        %8394 = vmatprep.subr.bf16.mxu0 %v8089
        %8395 = vmatpush1.bf16.msra.mxu0 %v8088
        %8396 = vmatprep.mubr.bf16.mxu0 %v4076
        %8397 = vmatmul.mubr.bf16.gmra.mrb[0].mxu0 %v4075
        %v8398 = vpop.f32.mrb[0].mxu0
        %v8399 = vadd.f32 0.0, %v8398
        %v8400 = vpop.f32.mrb[0].mxu0
        %v8401 = vadd.f32 0.0, %v8400
        %v8402 = vpop.f32.mrb[0].mxu0
        %v8403 = vadd.f32 0.0, %v8402
        %v8404 = vpop.f32.mrb[0].mxu0
        %v8405 = vadd.f32 0.0, %v8404
        %8406 = vmatprep.mubr.bf16.mxu0 %v4079
        %8407 = vmatmul.mubr.bf16.gmra.mrb[0].mxu0 %v4078
        %v8408 = vpop.f32.mrb[0].mxu0
        %v8409 = vadd.f32 0.0, %v8408
        %v8410 = vpop.f32.mrb[0].mxu0
        %v8411 = vadd.f32 0.0, %v8410
        %v8412 = vpop.f32.mrb[0].mxu0
        %v8413 = vadd.f32 0.0, %v8412
        %v8414 = vpop.f32.mrb[0].mxu0
        %v8415 = vadd.f32 0.0, %v8414
        %8416 = vmatprep.mubr.bf16.mxu0 %v5831
        %8417 = vmatmul.mubr.bf16.gmra.mrb[0].mxu0 %v5830
        %v8418 = vpop.f32.mrb[0].mxu0
        %v8419 = vadd.f32 0.0, %v8418
        %v8420 = vpop.f32.mrb[0].mxu0
        %v8421 = vadd.f32 0.0, %v8420
        %v8422 = vpop.f32.mrb[0].mxu0
        %v8423 = vadd.f32 0.0, %v8422
        %v8424 = vpop.f32.mrb[0].mxu0
        %v8425 = vadd.f32 0.0, %v8424
        %8426 = vmatprep.mubr.bf16.mxu0 %v7639
        %8427 = vmatmul.mubr.bf16.gmra.mrb[0].mxu0 %v7638
        %v8428 = vpop.f32.mrb[0].mxu0
        %v8429 = vadd.f32 0.0, %v8428
        %v8430 = vpop.f32.mrb[0].mxu0
        %v8431 = vadd.f32 0.0, %v8430
        %v8432 = vpop.f32.mrb[0].mxu0
        %v8433 = vadd.f32 0.0, %v8432
        %v8434 = vpop.f32.mrb[0].mxu0
        %v8435 = vadd.f32 0.0, %v8434
        %8436 = vdwg.mxu0
        %8437 = vmatprep.subr.bf16.mxu0 %v8093
        %8438 = vmatpush1.bf16.msra.mxu0 %v8092
        %8439 = vmatprep.subr.bf16.mxu0 %v8097
        %8440 = vmatpush1.bf16.msra.mxu0 %v8096
        %8441 = vmatprep.subr.bf16.mxu0 %v8101
        %8442 = vmatpush1.bf16.msra.mxu0 %v8100
        %8443 = vmatprep.subr.bf16.mxu0 %v8105
        %8444 = vmatpush1.bf16.msra.mxu0 %v8104
        %8445 = vmatprep.subr.bf16.mxu0 %v8109
        %8446 = vmatpush1.bf16.msra.mxu0 %v8108
        %8447 = vmatprep.subr.bf16.mxu0 %v8113
        %8448 = vmatpush1.bf16.msra.mxu0 %v8112
        %8449 = vmatprep.subr.bf16.mxu0 %v8117
        %8450 = vmatpush1.bf16.msra.mxu0 %v8116
        %8451 = vmatprep.subr.bf16.mxu0 %v8121
        %8452 = vmatpush1.bf16.msra.mxu0 %v8120
        %8453 = vmatprep.subr.bf16.mxu0 0
        %8454 = vmatpush1.bf16.msra.mxu0 0
        %8455 = vmatprep.subr.bf16.mxu0 0
        %8456 = vmatpush1.bf16.msra.mxu0 0
        %8457 = vmatprep.subr.bf16.mxu0 0
        %8458 = vmatpush1.bf16.msra.mxu0 0
        %8459 = vmatprep.subr.bf16.mxu0 0
        %8460 = vmatpush1.bf16.msra.mxu0 0
        %8461 = vmatprep.subr.bf16.mxu0 0
        %8462 = vmatpush1.bf16.msra.mxu0 0
        %8463 = vmatprep.subr.bf16.mxu0 0
        %8464 = vmatpush1.bf16.msra.mxu0 0
        %8465 = vmatprep.subr.bf16.mxu0 0
        %8466 = vmatpush1.bf16.msra.mxu0 0
        %8467 = vmatprep.subr.bf16.mxu0 0
        %8468 = vmatpush1.bf16.msra.mxu0 0
        %8469 = vmatprep.mubr.bf16.mxu0 0
        %8470 = vmatmul.mubr.bf16.gmra.mrb[0].mxu0 %v4077
        %v8471 = vpop.f32.mrb[0].mxu0
        %v8472 = vadd.f32 %v8399, %v8471
        %v8473 = vpop.f32.mrb[0].mxu0
        %v8474 = vadd.f32 %v8401, %v8473
        %v8475 = vpop.f32.mrb[0].mxu0
        %v8476 = vadd.f32 %v8403, %v8475
        %v8477 = vpop.f32.mrb[0].mxu0
        %v8478 = vadd.f32 %v8405, %v8477
        %8479 = vmatprep.mubr.bf16.mxu0 0
        %8480 = vmatmul.mubr.bf16.gmra.mrb[0].mxu0 %v4080
        %v8481 = vpop.f32.mrb[0].mxu0
        %v8482 = vadd.f32 %v8409, %v8481
        %v8483 = vpop.f32.mrb[0].mxu0
        %v8484 = vadd.f32 %v8411, %v8483
        %v8485 = vpop.f32.mrb[0].mxu0
        %v8486 = vadd.f32 %v8413, %v8485
        %v8487 = vpop.f32.mrb[0].mxu0
        %v8488 = vadd.f32 %v8415, %v8487
        %8489 = vmatprep.mubr.bf16.mxu0 0
        %8490 = vmatmul.mubr.bf16.gmra.mrb[0].mxu0 %v5832
        %v8491 = vpop.f32.mrb[0].mxu0
        %v8492 = vadd.f32 %v8419, %v8491
        %v8493 = vpop.f32.mrb[0].mxu0
        %v8494 = vadd.f32 %v8421, %v8493
        %v8495 = vpop.f32.mrb[0].mxu0
        %v8496 = vadd.f32 %v8423, %v8495
        %v8497 = vpop.f32.mrb[0].mxu0
        %v8498 = vadd.f32 %v8425, %v8497
        %8499 = vmatprep.mubr.bf16.mxu0 0
        %8500 = vmatmul.mubr.bf16.gmra.mrb[0].mxu0 %v7640
        %v8501 = vpop.f32.mrb[0].mxu0
        %v8502 = vadd.f32 %v8429, %v8501
        %v8503 = vpop.f32.mrb[0].mxu0
        %v8504 = vadd.f32 %v8431, %v8503
        %v8505 = vpop.f32.mrb[0].mxu0
        %v8506 = vadd.f32 %v8433, %v8505
        %v8507 = vpop.f32.mrb[0].mxu0
        %v8508 = vadd.f32 %v8435, %v8507
        %8509 = vdwg.mxu0
        %v8510 = vadd.f32 %v7606, %v8326
        %v8511 = vadd.f32 %v7607, %v8328
        %v8512 = vadd.f32 %v7608, %v8472
        %v8513 = vadd.f32 %v7609, %v8474
        %v8514 = vadd.f32 %v7610, %v8330
        %v8515 = vadd.f32 %v7611, %v8332
        %v8516 = vadd.f32 %v7612, %v8476
        %v8517 = vadd.f32 %v7613, %v8478
        %v8518 = vadd.f32 %v7614, %v8336
        %v8519 = vadd.f32 %v7615, %v8338
        %v8520 = vadd.f32 %v7616, %v8482
        %v8521 = vadd.f32 %v7617, %v8484
        %v8522 = vadd.f32 %v7618, %v8340
        %v8523 = vadd.f32 %v7619, %v8342
        %v8524 = vadd.f32 %v7620, %v8486
        %v8525 = vadd.f32 %v7621, %v8488
        %v8526 = vadd.f32 %v7622, %v8346
        %v8527 = vadd.f32 %v7623, %v8348
        %v8528 = vadd.f32 %v7624, %v8492
        %v8529 = vadd.f32 %v7625, %v8494
        %v8530 = vadd.f32 %v7626, %v8350
        %v8531 = vadd.f32 %v7627, %v8352
        %v8532 = vadd.f32 %v7628, %v8496
        %v8533 = vadd.f32 %v7629, %v8498
        %v8534 = vadd.f32 %v7630, %v8356
        %v8535 = vadd.f32 %v7631, %v8358
        %v8536 = vadd.f32 %v7632, %v8502
        %v8537 = vadd.f32 %v7633, %v8504
        %v8538 = vadd.f32 %v7634, %v8360
        %v8539 = vadd.f32 %v7635, %v8362
        %v8540 = vadd.f32 %v7636, %v8506
        %v8541 = vadd.f32 %v7637, %v8508
        %v8542 = vmax.f32 %v8510, %v8514
        %v8543 = vmax.f32 %v8511, %v8515
        %v8544 = vmax.f32 %v8512, %v8516
        %v8545 = vmax.f32 %v8513, %v8517
        %v8546 = vmax.f32 %v8518, %v8522
        %v8547 = vmax.f32 %v8519, %v8523
        %v8548 = vmax.f32 %v8520, %v8524
        %v8549 = vmax.f32 %v8521, %v8525
        %v8550 = vmax.f32 %v8526, %v8530
        %v8551 = vmax.f32 %v8527, %v8531
        %v8552 = vmax.f32 %v8528, %v8532
        %v8553 = vmax.f32 %v8529, %v8533
        %v8554 = vmax.f32 %v8534, %v8538
        %v8555 = vmax.f32 %v8535, %v8539
        %v8556 = vmax.f32 %v8536, %v8540
        %v8557 = vmax.f32 %v8537, %v8541
        %v8558 = vmax.f32 %v8542, %v8544
        %v8559 = vmax.f32 %v8543, %v8545
        %v8560 = vmax.f32 %v8546, %v8548
        %v8561 = vmax.f32 %v8547, %v8549
        %v8562 = vmax.f32 %v8550, %v8552
        %v8563 = vmax.f32 %v8551, %v8553
        %v8564 = vmax.f32 %v8554, %v8556
        %v8565 = vmax.f32 %v8555, %v8557
        %v8566 = vld [vmem:[#allocation8] sm:$0x3]
        %v8568 = vlaneseq
        %v8569 = vshrl.u32 %v8568, 7
        %v8570 = vsub.s32 0, %v8569
        %v8571 = vrot.slane %v8566, %v8570
        %v8572 = vlaneseq
        %v8573 = vshrl.u32 %v8572, 7
        %v8574 = vsub.s32 1, %v8573
        %v8575 = vrot.slane %v8566, %v8574
        %v8578 = vadd.f32 %v8558, %v8571
        %v8579 = vadd.f32 %v8559, %v8575
        %v8580 = vadd.f32 %v8560, %v8571
        %v8581 = vadd.f32 %v8561, %v8575
        %v8582 = vadd.f32 %v8562, %v8571
        %v8583 = vadd.f32 %v8563, %v8575
        %v8584 = vadd.f32 %v8564, %v8571
        %v8585 = vadd.f32 %v8565, %v8575
        %v8586 = vmax.f32 %v8578, 0.0
        %v8587 = vmax.f32 %v8579, 0.0
        %v8588 = vmax.f32 %v8580, 0.0
        %v8589 = vmax.f32 %v8581, 0.0
        %v8590 = vmax.f32 %v8582, 0.0
        %v8591 = vmax.f32 %v8583, 0.0
        %v8592 = vmax.f32 %v8584, 0.0
        %v8593 = vmax.f32 %v8585, 0.0
        %v8594 = vpack.c.bf16 %v8586, %v8586
        %v8595 = vpack.c.bf16 %v8587, %v8587
        %v8596 = vld [vmem:[#allocation10] sm:$0xf]
        %v8597 = vld [vmem:[#allocation10 + $0x4] sm:$0xf]
        %v8598 = vld [vmem:[#allocation10 + $0x8] sm:$0xf]
        %v8599 = vld [vmem:[#allocation10 + $0xc] sm:$0xf]
        %v8600 = vld [vmem:[#allocation10 + $0x10] sm:$0xf]
        %v8601 = vld [vmem:[#allocation10 + $0x14] sm:$0xf]
        %v8602 = vld [vmem:[#allocation10 + $0x18] sm:$0xf]
        %v8603 = vld [vmem:[#allocation10 + $0x1c] sm:$0xf]
        %v8604 = vld [vmem:[#allocation10 + $0x20] sm:$0xf]
        %v8605 = vld [vmem:[#allocation10 + $0x24] sm:$0xf]
        %v8606 = vld [vmem:[#allocation10 + $0x28] sm:$0xf]
        %v8607 = vld [vmem:[#allocation10 + $0x2c] sm:$0xf]
        %v8608 = vld [vmem:[#allocation10 + $0x30] sm:$0xf]
        %v8609 = vld [vmem:[#allocation10 + $0x34] sm:$0xf]
        %v8610 = vld [vmem:[#allocation10 + $0x38] sm:$0xf]
        %v8611 = vld [vmem:[#allocation10 + $0x3c] sm:$0xf]
        %v8612 = vld [vmem:[#allocation10 + $0x40] sm:$0xf]
        %v8613 = vld [vmem:[#allocation10 + $0x44] sm:$0xf]
        %v8614 = vld [vmem:[#allocation10 + $0x48] sm:$0xf]
        %v8615 = vld [vmem:[#allocation10 + $0x4c] sm:$0xf]
        %v8616 = vld [vmem:[#allocation10 + $0x50] sm:$0xf]
        %v8617 = vld [vmem:[#allocation10 + $0x54] sm:$0xf]
        %v8618 = vld [vmem:[#allocation10 + $0x58] sm:$0xf]
        %v8619 = vld [vmem:[#allocation10 + $0x5c] sm:$0xf]
        %v8620 = vld [vmem:[#allocation10 + $0x60] sm:$0xf]
        %v8621 = vld [vmem:[#allocation10 + $0x64] sm:$0xf]
        %v8622 = vld [vmem:[#allocation10 + $0x68] sm:$0xf]
        %v8623 = vld [vmem:[#allocation10 + $0x6c] sm:$0xf]
        %v8624 = vld [vmem:[#allocation10 + $0x70] sm:$0xf]
        %v8625 = vld [vmem:[#allocation10 + $0x74] sm:$0xf]
        %v8626 = vld [vmem:[#allocation10 + $0x78] sm:$0xf]
        %v8627 = vld [vmem:[#allocation10 + $0x7c] sm:$0xf]
        %v8628 = vpack.c.bf16 %v8588, %v8588
        %v8629 = vpack.c.bf16 %v8589, %v8589
        %s8630 = scalar_lea.vmem [#allocation10], 128
        %v8631 = vld [vmem:[%s8630] sm:$0xf]
        %v8632 = vld [vmem:[%s8630 + $0x4] sm:$0xf]
        %v8633 = vld [vmem:[%s8630 + $0x8] sm:$0xf]
        %v8634 = vld [vmem:[%s8630 + $0xc] sm:$0xf]
        %v8635 = vld [vmem:[%s8630 + $0x10] sm:$0xf]
        %v8636 = vld [vmem:[%s8630 + $0x14] sm:$0xf]
        %v8637 = vld [vmem:[%s8630 + $0x18] sm:$0xf]
        %v8638 = vld [vmem:[%s8630 + $0x1c] sm:$0xf]
        %v8639 = vld [vmem:[%s8630 + $0x20] sm:$0xf]
        %v8640 = vld [vmem:[%s8630 + $0x24] sm:$0xf]
        %v8641 = vld [vmem:[%s8630 + $0x28] sm:$0xf]
        %v8642 = vld [vmem:[%s8630 + $0x2c] sm:$0xf]
        %v8643 = vld [vmem:[%s8630 + $0x30] sm:$0xf]
        %v8644 = vld [vmem:[%s8630 + $0x34] sm:$0xf]
        %v8645 = vld [vmem:[%s8630 + $0x38] sm:$0xf]
        %v8646 = vld [vmem:[%s8630 + $0x3c] sm:$0xf]
        %v8647 = vld [vmem:[%s8630 + $0x40] sm:$0xf]
        %v8648 = vld [vmem:[%s8630 + $0x44] sm:$0xf]
        %v8649 = vld [vmem:[%s8630 + $0x48] sm:$0xf]
        %v8650 = vld [vmem:[%s8630 + $0x4c] sm:$0xf]
        %v8651 = vld [vmem:[%s8630 + $0x50] sm:$0xf]
        %v8652 = vld [vmem:[%s8630 + $0x54] sm:$0xf]
        %v8653 = vld [vmem:[%s8630 + $0x58] sm:$0xf]
        %v8654 = vld [vmem:[%s8630 + $0x5c] sm:$0xf]
        %v8655 = vld [vmem:[%s8630 + $0x60] sm:$0xf]
        %v8656 = vld [vmem:[%s8630 + $0x64] sm:$0xf]
        %v8657 = vld [vmem:[%s8630 + $0x68] sm:$0xf]
        %v8658 = vld [vmem:[%s8630 + $0x6c] sm:$0xf]
        %v8659 = vld [vmem:[%s8630 + $0x70] sm:$0xf]
        %v8660 = vld [vmem:[%s8630 + $0x74] sm:$0xf]
        %v8661 = vld [vmem:[%s8630 + $0x78] sm:$0xf]
        %v8662 = vld [vmem:[%s8630 + $0x7c] sm:$0xf]
        %v8695 = vunpack.c.l.b16 %v8631
        %v8696 = vunpack.c.l.b16 %v8632
        %v8697 = vunpack.c.l.b16 %v8633
        %v8698 = vunpack.c.l.b16 %v8634
        %v8699 = vunpack.c.l.b16 %v8635
        %v8700 = vunpack.c.l.b16 %v8636
        %v8701 = vunpack.c.l.b16 %v8637
        %v8702 = vunpack.c.l.b16 %v8638
        %v8703 = vunpack.c.l.b16 %v8639
        %v8704 = vunpack.c.l.b16 %v8640
        %v8705 = vunpack.c.l.b16 %v8641
        %v8706 = vunpack.c.l.b16 %v8642
        %v8707 = vunpack.c.l.b16 %v8643
        %v8708 = vunpack.c.l.b16 %v8644
        %v8709 = vunpack.c.l.b16 %v8645
        %v8710 = vunpack.c.l.b16 %v8646
        %v8711 = vunpack.c.l.b16 %v8647
        %v8712 = vunpack.c.l.b16 %v8648
        %v8713 = vunpack.c.l.b16 %v8649
        %v8714 = vunpack.c.l.b16 %v8650
        %v8715 = vunpack.c.l.b16 %v8651
        %v8716 = vunpack.c.l.b16 %v8652
        %v8717 = vunpack.c.l.b16 %v8653
        %v8718 = vunpack.c.l.b16 %v8654
        %v8719 = vunpack.c.l.b16 %v8655
        %v8720 = vunpack.c.l.b16 %v8656
        %v8721 = vunpack.c.l.b16 %v8657
        %v8722 = vunpack.c.l.b16 %v8658
        %v8723 = vunpack.c.l.b16 %v8659
        %v8724 = vunpack.c.l.b16 %v8660
        %v8725 = vunpack.c.l.b16 %v8661
        %v8726 = vunpack.c.l.b16 %v8662
        %v8727 = vpack.c.b16 %v8696, %v8695
        %v8728 = vpack.c.b16 %v8698, %v8697
        %v8729 = vpack.c.b16 %v8700, %v8699
        %v8730 = vpack.c.b16 %v8702, %v8701
        %v8731 = vpack.c.b16 %v8704, %v8703
        %v8732 = vpack.c.b16 %v8706, %v8705
        %v8733 = vpack.c.b16 %v8708, %v8707
        %v8734 = vpack.c.b16 %v8710, %v8709
        %v8735 = vpack.c.b16 %v8712, %v8711
        %v8736 = vpack.c.b16 %v8714, %v8713
        %v8737 = vpack.c.b16 %v8716, %v8715
        %v8738 = vpack.c.b16 %v8718, %v8717
        %v8739 = vpack.c.b16 %v8720, %v8719
        %v8740 = vpack.c.b16 %v8722, %v8721
        %v8741 = vpack.c.b16 %v8724, %v8723
        %v8742 = vpack.c.b16 %v8726, %v8725
        %8759 = vmatprep.subr.bf16.mxu0 0
        %8760 = vmatpush1.bf16.msra.mxu0 %v8727
        %8761 = vmatprep.subr.bf16.mxu0 0
        %8762 = vmatpush1.bf16.msra.mxu0 %v8728
        %8763 = vmatprep.subr.bf16.mxu0 0
        %8764 = vmatpush1.bf16.msra.mxu0 %v8729
        %8765 = vmatprep.subr.bf16.mxu0 0
        %8766 = vmatpush1.bf16.msra.mxu0 %v8730
        %8767 = vmatprep.subr.bf16.mxu0 0
        %8768 = vmatpush1.bf16.msra.mxu0 %v8731
        %8769 = vmatprep.subr.bf16.mxu0 0
        %8770 = vmatpush1.bf16.msra.mxu0 %v8732
        %8771 = vmatprep.subr.bf16.mxu0 0
        %8772 = vmatpush1.bf16.msra.mxu0 %v8733
        %8773 = vmatprep.subr.bf16.mxu0 0
        %8774 = vmatpush1.bf16.msra.mxu0 %v8734
        %8775 = vmatprep.subr.bf16.mxu0 0
        %8776 = vmatpush1.bf16.msra.mxu0 %v8735
        %8777 = vmatprep.subr.bf16.mxu0 0
        %8778 = vmatpush1.bf16.msra.mxu0 %v8736
        %8779 = vmatprep.subr.bf16.mxu0 0
        %8780 = vmatpush1.bf16.msra.mxu0 %v8737
        %8781 = vmatprep.subr.bf16.mxu0 0
        %8782 = vmatpush1.bf16.msra.mxu0 %v8738
        %8783 = vmatprep.subr.bf16.mxu0 0
        %8784 = vmatpush1.bf16.msra.mxu0 %v8739
        %8785 = vmatprep.subr.bf16.mxu0 0
        %8786 = vmatpush1.bf16.msra.mxu0 %v8740
        %8787 = vmatprep.subr.bf16.mxu0 0
        %8788 = vmatpush1.bf16.msra.mxu0 %v8741
        %8789 = vmatprep.subr.bf16.mxu0 0
        %8790 = vmatpush1.bf16.msra.mxu0 %v8742
        %8791 = vmatprep.mubr.bf16.mxu0 %v8629
        %8792 = vmatmul.mubr.bf16.gmra.mrb[0].mxu0 %v8628
        %v8793 = vpop.f32.mrb[0].mxu0
        %v8794 = vadd.f32 0.0, %v8793
        %v8795 = vpop.f32.mrb[0].mxu0
        %v8796 = vpop.f32.mrb[0].mxu0
        %v8797 = vpop.f32.mrb[0].mxu0
        %8798 = vdwg.mxu0
        %v8831 = vunpack.c.l.b16 %v8596
        %v8832 = vunpack.c.l.b16 %v8597
        %v8833 = vunpack.c.l.b16 %v8598
        %v8834 = vunpack.c.l.b16 %v8599
        %v8835 = vunpack.c.l.b16 %v8600
        %v8836 = vunpack.c.l.b16 %v8601
        %v8837 = vunpack.c.l.b16 %v8602
        %v8838 = vunpack.c.l.b16 %v8603
        %v8839 = vunpack.c.l.b16 %v8604
        %v8840 = vunpack.c.l.b16 %v8605
        %v8841 = vunpack.c.l.b16 %v8606
        %v8842 = vunpack.c.l.b16 %v8607
        %v8843 = vunpack.c.l.b16 %v8608
        %v8844 = vunpack.c.l.b16 %v8609
        %v8845 = vunpack.c.l.b16 %v8610
        %v8846 = vunpack.c.l.b16 %v8611
        %v8847 = vunpack.c.l.b16 %v8612
        %v8848 = vunpack.c.l.b16 %v8613
        %v8849 = vunpack.c.l.b16 %v8614
        %v8850 = vunpack.c.l.b16 %v8615
        %v8851 = vunpack.c.l.b16 %v8616
        %v8852 = vunpack.c.l.b16 %v8617
        %v8853 = vunpack.c.l.b16 %v8618
        %v8854 = vunpack.c.l.b16 %v8619
        %v8855 = vunpack.c.l.b16 %v8620
        %v8856 = vunpack.c.l.b16 %v8621
        %v8857 = vunpack.c.l.b16 %v8622
        %v8858 = vunpack.c.l.b16 %v8623
        %v8859 = vunpack.c.l.b16 %v8624
        %v8860 = vunpack.c.l.b16 %v8625
        %v8861 = vunpack.c.l.b16 %v8626
        %v8862 = vunpack.c.l.b16 %v8627
        %v8863 = vpack.c.b16 %v8832, %v8831
        %v8864 = vpack.c.b16 %v8834, %v8833
        %v8865 = vpack.c.b16 %v8836, %v8835
        %v8866 = vpack.c.b16 %v8838, %v8837
        %v8867 = vpack.c.b16 %v8840, %v8839
        %v8868 = vpack.c.b16 %v8842, %v8841
        %v8869 = vpack.c.b16 %v8844, %v8843
        %v8870 = vpack.c.b16 %v8846, %v8845
        %v8871 = vpack.c.b16 %v8848, %v8847
        %v8872 = vpack.c.b16 %v8850, %v8849
        %v8873 = vpack.c.b16 %v8852, %v8851
        %v8874 = vpack.c.b16 %v8854, %v8853
        %v8875 = vpack.c.b16 %v8856, %v8855
        %v8876 = vpack.c.b16 %v8858, %v8857
        %v8877 = vpack.c.b16 %v8860, %v8859
        %v8878 = vpack.c.b16 %v8862, %v8861
        %8895 = vmatprep.subr.bf16.mxu0 0
        %8896 = vmatpush1.bf16.msra.mxu0 %v8863
        %8897 = vmatprep.subr.bf16.mxu0 0
        %8898 = vmatpush1.bf16.msra.mxu0 %v8864
        %8899 = vmatprep.subr.bf16.mxu0 0
        %8900 = vmatpush1.bf16.msra.mxu0 %v8865
        %8901 = vmatprep.subr.bf16.mxu0 0
        %8902 = vmatpush1.bf16.msra.mxu0 %v8866
        %8903 = vmatprep.subr.bf16.mxu0 0
        %8904 = vmatpush1.bf16.msra.mxu0 %v8867
        %8905 = vmatprep.subr.bf16.mxu0 0
        %8906 = vmatpush1.bf16.msra.mxu0 %v8868
        %8907 = vmatprep.subr.bf16.mxu0 0
        %8908 = vmatpush1.bf16.msra.mxu0 %v8869
        %8909 = vmatprep.subr.bf16.mxu0 0
        %8910 = vmatpush1.bf16.msra.mxu0 %v8870
        %8911 = vmatprep.subr.bf16.mxu0 0
        %8912 = vmatpush1.bf16.msra.mxu0 %v8871
        %8913 = vmatprep.subr.bf16.mxu0 0
        %8914 = vmatpush1.bf16.msra.mxu0 %v8872
        %8915 = vmatprep.subr.bf16.mxu0 0
        %8916 = vmatpush1.bf16.msra.mxu0 %v8873
        %8917 = vmatprep.subr.bf16.mxu0 0
        %8918 = vmatpush1.bf16.msra.mxu0 %v8874
        %8919 = vmatprep.subr.bf16.mxu0 0
        %8920 = vmatpush1.bf16.msra.mxu0 %v8875
        %8921 = vmatprep.subr.bf16.mxu0 0
        %8922 = vmatpush1.bf16.msra.mxu0 %v8876
        %8923 = vmatprep.subr.bf16.mxu0 0
        %8924 = vmatpush1.bf16.msra.mxu0 %v8877
        %8925 = vmatprep.subr.bf16.mxu0 0
        %8926 = vmatpush1.bf16.msra.mxu0 %v8878
        %8927 = vmatprep.mubr.bf16.mxu0 %v8595
        %8928 = vmatmul.mubr.bf16.gmra.mrb[0].mxu0 %v8594
        %v8929 = vpop.f32.mrb[0].mxu0
        %v8930 = vadd.f32 %v8794, %v8929
        %v8931 = vpop.f32.mrb[0].mxu0
        %v8932 = vpop.f32.mrb[0].mxu0
        %v8933 = vpop.f32.mrb[0].mxu0
        %8934 = vdwg.mxu0
        %v8935 = vpack.c.bf16 %v8590, %v8590
        %v8936 = vpack.c.bf16 %v8591, %v8591
        %s8937 = scalar_lea.vmem [#allocation10], 256
        %v8938 = vld [vmem:[%s8937] sm:$0xf]
        %v8939 = vld [vmem:[%s8937 + $0x4] sm:$0xf]
        %v8940 = vld [vmem:[%s8937 + $0x8] sm:$0xf]
        %v8941 = vld [vmem:[%s8937 + $0xc] sm:$0xf]
        %v8942 = vld [vmem:[%s8937 + $0x10] sm:$0xf]
        %v8943 = vld [vmem:[%s8937 + $0x14] sm:$0xf]
        %v8944 = vld [vmem:[%s8937 + $0x18] sm:$0xf]
        %v8945 = vld [vmem:[%s8937 + $0x1c] sm:$0xf]
        %v8946 = vld [vmem:[%s8937 + $0x20] sm:$0xf]
        %v8947 = vld [vmem:[%s8937 + $0x24] sm:$0xf]
        %v8948 = vld [vmem:[%s8937 + $0x28] sm:$0xf]
        %v8949 = vld [vmem:[%s8937 + $0x2c] sm:$0xf]
        %v8950 = vld [vmem:[%s8937 + $0x30] sm:$0xf]
        %v8951 = vld [vmem:[%s8937 + $0x34] sm:$0xf]
        %v8952 = vld [vmem:[%s8937 + $0x38] sm:$0xf]
        %v8953 = vld [vmem:[%s8937 + $0x3c] sm:$0xf]
        %v8954 = vld [vmem:[%s8937 + $0x40] sm:$0xf]
        %v8955 = vld [vmem:[%s8937 + $0x44] sm:$0xf]
        %v8956 = vld [vmem:[%s8937 + $0x48] sm:$0xf]
        %v8957 = vld [vmem:[%s8937 + $0x4c] sm:$0xf]
        %v8958 = vld [vmem:[%s8937 + $0x50] sm:$0xf]
        %v8959 = vld [vmem:[%s8937 + $0x54] sm:$0xf]
        %v8960 = vld [vmem:[%s8937 + $0x58] sm:$0xf]
        %v8961 = vld [vmem:[%s8937 + $0x5c] sm:$0xf]
        %v8962 = vld [vmem:[%s8937 + $0x60] sm:$0xf]
        %v8963 = vld [vmem:[%s8937 + $0x64] sm:$0xf]
        %v8964 = vld [vmem:[%s8937 + $0x68] sm:$0xf]
        %v8965 = vld [vmem:[%s8937 + $0x6c] sm:$0xf]
        %v8966 = vld [vmem:[%s8937 + $0x70] sm:$0xf]
        %v8967 = vld [vmem:[%s8937 + $0x74] sm:$0xf]
        %v8968 = vld [vmem:[%s8937 + $0x78] sm:$0xf]
        %v8969 = vld [vmem:[%s8937 + $0x7c] sm:$0xf]
        %v9002 = vunpack.c.l.b16 %v8938
        %v9003 = vunpack.c.l.b16 %v8939
        %v9004 = vunpack.c.l.b16 %v8940
        %v9005 = vunpack.c.l.b16 %v8941
        %v9006 = vunpack.c.l.b16 %v8942
        %v9007 = vunpack.c.l.b16 %v8943
        %v9008 = vunpack.c.l.b16 %v8944
        %v9009 = vunpack.c.l.b16 %v8945
        %v9010 = vunpack.c.l.b16 %v8946
        %v9011 = vunpack.c.l.b16 %v8947
        %v9012 = vunpack.c.l.b16 %v8948
        %v9013 = vunpack.c.l.b16 %v8949
        %v9014 = vunpack.c.l.b16 %v8950
        %v9015 = vunpack.c.l.b16 %v8951
        %v9016 = vunpack.c.l.b16 %v8952
        %v9017 = vunpack.c.l.b16 %v8953
        %v9018 = vunpack.c.l.b16 %v8954
        %v9019 = vunpack.c.l.b16 %v8955
        %v9020 = vunpack.c.l.b16 %v8956
        %v9021 = vunpack.c.l.b16 %v8957
        %v9022 = vunpack.c.l.b16 %v8958
        %v9023 = vunpack.c.l.b16 %v8959
        %v9024 = vunpack.c.l.b16 %v8960
        %v9025 = vunpack.c.l.b16 %v8961
        %v9026 = vunpack.c.l.b16 %v8962
        %v9027 = vunpack.c.l.b16 %v8963
        %v9028 = vunpack.c.l.b16 %v8964
        %v9029 = vunpack.c.l.b16 %v8965
        %v9030 = vunpack.c.l.b16 %v8966
        %v9031 = vunpack.c.l.b16 %v8967
        %v9032 = vunpack.c.l.b16 %v8968
        %v9033 = vunpack.c.l.b16 %v8969
        %v9034 = vpack.c.b16 %v9003, %v9002
        %v9035 = vpack.c.b16 %v9005, %v9004
        %v9036 = vpack.c.b16 %v9007, %v9006
        %v9037 = vpack.c.b16 %v9009, %v9008
        %v9038 = vpack.c.b16 %v9011, %v9010
        %v9039 = vpack.c.b16 %v9013, %v9012
        %v9040 = vpack.c.b16 %v9015, %v9014
        %v9041 = vpack.c.b16 %v9017, %v9016
        %v9042 = vpack.c.b16 %v9019, %v9018
        %v9043 = vpack.c.b16 %v9021, %v9020
        %v9044 = vpack.c.b16 %v9023, %v9022
        %v9045 = vpack.c.b16 %v9025, %v9024
        %v9046 = vpack.c.b16 %v9027, %v9026
        %v9047 = vpack.c.b16 %v9029, %v9028
        %v9048 = vpack.c.b16 %v9031, %v9030
        %v9049 = vpack.c.b16 %v9033, %v9032
        %9066 = vmatprep.subr.bf16.mxu0 0
        %9067 = vmatpush1.bf16.msra.mxu0 %v9034
        %9068 = vmatprep.subr.bf16.mxu0 0
        %9069 = vmatpush1.bf16.msra.mxu0 %v9035
        %9070 = vmatprep.subr.bf16.mxu0 0
        %9071 = vmatpush1.bf16.msra.mxu0 %v9036
        %9072 = vmatprep.subr.bf16.mxu0 0
        %9073 = vmatpush1.bf16.msra.mxu0 %v9037
        %9074 = vmatprep.subr.bf16.mxu0 0
        %9075 = vmatpush1.bf16.msra.mxu0 %v9038
        %9076 = vmatprep.subr.bf16.mxu0 0
        %9077 = vmatpush1.bf16.msra.mxu0 %v9039
        %9078 = vmatprep.subr.bf16.mxu0 0
        %9079 = vmatpush1.bf16.msra.mxu0 %v9040
        %9080 = vmatprep.subr.bf16.mxu0 0
        %9081 = vmatpush1.bf16.msra.mxu0 %v9041
        %9082 = vmatprep.subr.bf16.mxu0 0
        %9083 = vmatpush1.bf16.msra.mxu0 %v9042
        %9084 = vmatprep.subr.bf16.mxu0 0
        %9085 = vmatpush1.bf16.msra.mxu0 %v9043
        %9086 = vmatprep.subr.bf16.mxu0 0
        %9087 = vmatpush1.bf16.msra.mxu0 %v9044
        %9088 = vmatprep.subr.bf16.mxu0 0
        %9089 = vmatpush1.bf16.msra.mxu0 %v9045
        %9090 = vmatprep.subr.bf16.mxu0 0
        %9091 = vmatpush1.bf16.msra.mxu0 %v9046
        %9092 = vmatprep.subr.bf16.mxu0 0
        %9093 = vmatpush1.bf16.msra.mxu0 %v9047
        %9094 = vmatprep.subr.bf16.mxu0 0
        %9095 = vmatpush1.bf16.msra.mxu0 %v9048
        %9096 = vmatprep.subr.bf16.mxu0 0
        %9097 = vmatpush1.bf16.msra.mxu0 %v9049
        %9098 = vmatprep.mubr.bf16.mxu0 %v8936
        %9099 = vmatmul.mubr.bf16.gmra.mrb[0].mxu0 %v8935
        %v9100 = vpop.f32.mrb[0].mxu0
        %v9101 = vadd.f32 0.0, %v9100
        %v9102 = vpop.f32.mrb[0].mxu0
        %v9103 = vpop.f32.mrb[0].mxu0
        %v9104 = vpop.f32.mrb[0].mxu0
        %9105 = vdwg.mxu0
        %v9106 = vadd.f32 %v8930, %v9101
        %v9107 = vpack.c.bf16 %v8592, %v8592
        %v9108 = vpack.c.bf16 %v8593, %v8593
        %s9109 = scalar_lea.vmem [#allocation10], 384
        %v9110 = vld [vmem:[%s9109] sm:$0xf]
        %v9111 = vld [vmem:[%s9109 + $0x4] sm:$0xf]
        %v9112 = vld [vmem:[%s9109 + $0x8] sm:$0xf]
        %v9113 = vld [vmem:[%s9109 + $0xc] sm:$0xf]
        %v9114 = vld [vmem:[%s9109 + $0x10] sm:$0xf]
        %v9115 = vld [vmem:[%s9109 + $0x14] sm:$0xf]
        %v9116 = vld [vmem:[%s9109 + $0x18] sm:$0xf]
        %v9117 = vld [vmem:[%s9109 + $0x1c] sm:$0xf]
        %v9118 = vld [vmem:[%s9109 + $0x20] sm:$0xf]
        %v9119 = vld [vmem:[%s9109 + $0x24] sm:$0xf]
        %v9120 = vld [vmem:[%s9109 + $0x28] sm:$0xf]
        %v9121 = vld [vmem:[%s9109 + $0x2c] sm:$0xf]
        %v9122 = vld [vmem:[%s9109 + $0x30] sm:$0xf]
        %v9123 = vld [vmem:[%s9109 + $0x34] sm:$0xf]
        %v9124 = vld [vmem:[%s9109 + $0x38] sm:$0xf]
        %v9125 = vld [vmem:[%s9109 + $0x3c] sm:$0xf]
        %v9126 = vld [vmem:[%s9109 + $0x40] sm:$0xf]
        %v9127 = vld [vmem:[%s9109 + $0x44] sm:$0xf]
        %v9128 = vld [vmem:[%s9109 + $0x48] sm:$0xf]
        %v9129 = vld [vmem:[%s9109 + $0x4c] sm:$0xf]
        %v9130 = vld [vmem:[%s9109 + $0x50] sm:$0xf]
        %v9131 = vld [vmem:[%s9109 + $0x54] sm:$0xf]
        %v9132 = vld [vmem:[%s9109 + $0x58] sm:$0xf]
        %v9133 = vld [vmem:[%s9109 + $0x5c] sm:$0xf]
        %v9134 = vld [vmem:[%s9109 + $0x60] sm:$0xf]
        %v9135 = vld [vmem:[%s9109 + $0x64] sm:$0xf]
        %v9136 = vld [vmem:[%s9109 + $0x68] sm:$0xf]
        %v9137 = vld [vmem:[%s9109 + $0x6c] sm:$0xf]
        %v9138 = vld [vmem:[%s9109 + $0x70] sm:$0xf]
        %v9139 = vld [vmem:[%s9109 + $0x74] sm:$0xf]
        %v9140 = vld [vmem:[%s9109 + $0x78] sm:$0xf]
        %v9141 = vld [vmem:[%s9109 + $0x7c] sm:$0xf]
        %v9174 = vunpack.c.l.b16 %v9110
        %v9175 = vunpack.c.l.b16 %v9111
        %v9176 = vunpack.c.l.b16 %v9112
        %v9177 = vunpack.c.l.b16 %v9113
        %v9178 = vunpack.c.l.b16 %v9114
        %v9179 = vunpack.c.l.b16 %v9115
        %v9180 = vunpack.c.l.b16 %v9116
        %v9181 = vunpack.c.l.b16 %v9117
        %v9182 = vunpack.c.l.b16 %v9118
        %v9183 = vunpack.c.l.b16 %v9119
        %v9184 = vunpack.c.l.b16 %v9120
        %v9185 = vunpack.c.l.b16 %v9121
        %v9186 = vunpack.c.l.b16 %v9122
        %v9187 = vunpack.c.l.b16 %v9123
        %v9188 = vunpack.c.l.b16 %v9124
        %v9189 = vunpack.c.l.b16 %v9125
        %v9190 = vunpack.c.l.b16 %v9126
        %v9191 = vunpack.c.l.b16 %v9127
        %v9192 = vunpack.c.l.b16 %v9128
        %v9193 = vunpack.c.l.b16 %v9129
        %v9194 = vunpack.c.l.b16 %v9130
        %v9195 = vunpack.c.l.b16 %v9131
        %v9196 = vunpack.c.l.b16 %v9132
        %v9197 = vunpack.c.l.b16 %v9133
        %v9198 = vunpack.c.l.b16 %v9134
        %v9199 = vunpack.c.l.b16 %v9135
        %v9200 = vunpack.c.l.b16 %v9136
        %v9201 = vunpack.c.l.b16 %v9137
        %v9202 = vunpack.c.l.b16 %v9138
        %v9203 = vunpack.c.l.b16 %v9139
        %v9204 = vunpack.c.l.b16 %v9140
        %v9205 = vunpack.c.l.b16 %v9141
        %v9206 = vpack.c.b16 %v9175, %v9174
        %v9207 = vpack.c.b16 %v9177, %v9176
        %v9208 = vpack.c.b16 %v9179, %v9178
        %v9209 = vpack.c.b16 %v9181, %v9180
        %v9210 = vpack.c.b16 %v9183, %v9182
        %v9211 = vpack.c.b16 %v9185, %v9184
        %v9212 = vpack.c.b16 %v9187, %v9186
        %v9213 = vpack.c.b16 %v9189, %v9188
        %v9214 = vpack.c.b16 %v9191, %v9190
        %v9215 = vpack.c.b16 %v9193, %v9192
        %v9216 = vpack.c.b16 %v9195, %v9194
        %v9217 = vpack.c.b16 %v9197, %v9196
        %v9218 = vpack.c.b16 %v9199, %v9198
        %v9219 = vpack.c.b16 %v9201, %v9200
        %v9220 = vpack.c.b16 %v9203, %v9202
        %v9221 = vpack.c.b16 %v9205, %v9204
        %9238 = vmatprep.subr.bf16.mxu0 0
        %9239 = vmatpush1.bf16.msra.mxu0 %v9206
        %9240 = vmatprep.subr.bf16.mxu0 0
        %9241 = vmatpush1.bf16.msra.mxu0 %v9207
        %9242 = vmatprep.subr.bf16.mxu0 0
        %9243 = vmatpush1.bf16.msra.mxu0 %v9208
        %9244 = vmatprep.subr.bf16.mxu0 0
        %9245 = vmatpush1.bf16.msra.mxu0 %v9209
        %9246 = vmatprep.subr.bf16.mxu0 0
        %9247 = vmatpush1.bf16.msra.mxu0 %v9210
        %9248 = vmatprep.subr.bf16.mxu0 0
        %9249 = vmatpush1.bf16.msra.mxu0 %v9211
        %9250 = vmatprep.subr.bf16.mxu0 0
        %9251 = vmatpush1.bf16.msra.mxu0 %v9212
        %9252 = vmatprep.subr.bf16.mxu0 0
        %9253 = vmatpush1.bf16.msra.mxu0 %v9213
        %9254 = vmatprep.subr.bf16.mxu0 0
        %9255 = vmatpush1.bf16.msra.mxu0 %v9214
        %9256 = vmatprep.subr.bf16.mxu0 0
        %9257 = vmatpush1.bf16.msra.mxu0 %v9215
        %9258 = vmatprep.subr.bf16.mxu0 0
        %9259 = vmatpush1.bf16.msra.mxu0 %v9216
        %9260 = vmatprep.subr.bf16.mxu0 0
        %9261 = vmatpush1.bf16.msra.mxu0 %v9217
        %9262 = vmatprep.subr.bf16.mxu0 0
        %9263 = vmatpush1.bf16.msra.mxu0 %v9218
        %9264 = vmatprep.subr.bf16.mxu0 0
        %9265 = vmatpush1.bf16.msra.mxu0 %v9219
        %9266 = vmatprep.subr.bf16.mxu0 0
        %9267 = vmatpush1.bf16.msra.mxu0 %v9220
        %9268 = vmatprep.subr.bf16.mxu0 0
        %9269 = vmatpush1.bf16.msra.mxu0 %v9221
        %9270 = vmatprep.mubr.bf16.mxu0 %v9108
        %9271 = vmatmul.mubr.bf16.gmra.mrb[0].mxu0 %v9107
        %v9272 = vpop.f32.mrb[0].mxu0
        %v9273 = vadd.f32 0.0, %v9272
        %v9274 = vpop.f32.mrb[0].mxu0
        %v9275 = vpop.f32.mrb[0].mxu0
        %v9276 = vpop.f32.mrb[0].mxu0
        %9277 = vdwg.mxu0
        %v9278 = vadd.f32 %v9106, %v9273
        %v9279 = vld [vmem:[#allocation11] sm:$0x1]
        %v9281 = vlaneseq
        %v9282 = vshrl.u32 %v9281, 7
        %v9283 = vsub.s32 0, %v9282
        %v9284 = vrot.slane %v9279, %v9283
        %v9286 = vadd.f32 %v9278, %v9284
        %v9287 = vmax.f32 %v9286, 0.0
        %v9288 = vpack.c.bf16 %v9287, %v9287
        %v9289 = vld [vmem:[#allocation13] sm:$0xf]
        %v9290 = vld [vmem:[#allocation13 + $0x4] sm:$0xf]
        %v9291 = vld [vmem:[#allocation13 + $0x8] sm:$0xf]
        %v9292 = vld [vmem:[#allocation13 + $0xc] sm:$0xf]
        %v9293 = vld [vmem:[#allocation13 + $0x10] sm:$0xf]
        %v9294 = vld [vmem:[#allocation13 + $0x14] sm:$0xf]
        %v9295 = vld [vmem:[#allocation13 + $0x18] sm:$0xf]
        %v9296 = vld [vmem:[#allocation13 + $0x1c] sm:$0xf]
        %v9297 = vld [vmem:[#allocation13 + $0x20] sm:$0xf]
        %v9298 = vld [vmem:[#allocation13 + $0x24] sm:$0xf]
        %v9299 = vld [vmem:[#allocation13 + $0x28] sm:$0xf]
        %v9300 = vld [vmem:[#allocation13 + $0x2c] sm:$0xf]
        %v9301 = vld [vmem:[#allocation13 + $0x30] sm:$0xf]
        %v9302 = vld [vmem:[#allocation13 + $0x34] sm:$0xf]
        %v9303 = vld [vmem:[#allocation13 + $0x38] sm:$0xf]
        %v9304 = vld [vmem:[#allocation13 + $0x3c] sm:$0xf]
        %v9305 = vld [vmem:[#allocation14] sm:$0x1]
        %v9307 = vlaneseq
        %v9308 = vshrl.u32 %v9307, 7
        %v9309 = vsub.s32 0, %v9308
        %v9310 = vrot.slane %v9305, %v9309
        %v9328 = vunpack.c.l.b16 %v9289
        %v9329 = vunpack.c.l.b16 %v9290
        %v9330 = vunpack.c.l.b16 %v9291
        %v9331 = vunpack.c.l.b16 %v9292
        %v9332 = vunpack.c.l.b16 %v9293
        %v9333 = vunpack.c.l.b16 %v9294
        %v9334 = vunpack.c.l.b16 %v9295
        %v9335 = vunpack.c.l.b16 %v9296
        %v9336 = vunpack.c.l.b16 %v9297
        %v9337 = vunpack.c.l.b16 %v9298
        %v9338 = vunpack.c.l.b16 %v9299
        %v9339 = vunpack.c.l.b16 %v9300
        %v9340 = vunpack.c.l.b16 %v9301
        %v9341 = vunpack.c.l.b16 %v9302
        %v9342 = vunpack.c.l.b16 %v9303
        %v9343 = vunpack.c.l.b16 %v9304
        %v9344 = vpack.c.b16 %v9329, %v9328
        %v9345 = vpack.c.b16 %v9331, %v9330
        %v9346 = vpack.c.b16 %v9333, %v9332
        %v9347 = vpack.c.b16 %v9335, %v9334
        %v9348 = vpack.c.b16 %v9337, %v9336
        %v9349 = vpack.c.b16 %v9339, %v9338
        %v9350 = vpack.c.b16 %v9341, %v9340
        %v9351 = vpack.c.b16 %v9343, %v9342
        %9360 = vmatprep.subr.bf16.mxu0 0
        %9361 = vmatpush1.bf16.msra.mxu0 %v9344
        %9362 = vmatprep.subr.bf16.mxu0 0
        %9363 = vmatpush1.bf16.msra.mxu0 %v9345
        %9364 = vmatprep.subr.bf16.mxu0 0
        %9365 = vmatpush1.bf16.msra.mxu0 %v9346
        %9366 = vmatprep.subr.bf16.mxu0 0
        %9367 = vmatpush1.bf16.msra.mxu0 %v9347
        %9368 = vmatprep.subr.bf16.mxu0 0
        %9369 = vmatpush1.bf16.msra.mxu0 %v9348
        %9370 = vmatprep.subr.bf16.mxu0 0
        %9371 = vmatpush1.bf16.msra.mxu0 %v9349
        %9372 = vmatprep.subr.bf16.mxu0 0
        %9373 = vmatpush1.bf16.msra.mxu0 %v9350
        %9374 = vmatprep.subr.bf16.mxu0 0
        %9375 = vmatpush1.bf16.msra.mxu0 %v9351
        %9376 = vmatprep.subr.bf16.mxu0 0
        %9377 = vmatpush1.bf16.msra.mxu0 0
        %9378 = vmatprep.subr.bf16.mxu0 0
        %9379 = vmatpush1.bf16.msra.mxu0 0
        %9380 = vmatprep.subr.bf16.mxu0 0
        %9381 = vmatpush1.bf16.msra.mxu0 0
        %9382 = vmatprep.subr.bf16.mxu0 0
        %9383 = vmatpush1.bf16.msra.mxu0 0
        %9384 = vmatprep.subr.bf16.mxu0 0
        %9385 = vmatpush1.bf16.msra.mxu0 0
        %9386 = vmatprep.subr.bf16.mxu0 0
        %9387 = vmatpush1.bf16.msra.mxu0 0
        %9388 = vmatprep.subr.bf16.mxu0 0
        %9389 = vmatpush1.bf16.msra.mxu0 0
        %9390 = vmatprep.subr.bf16.mxu0 0
        %9391 = vmatpush1.bf16.msra.mxu0 0
        %9392 = vmatprep.mubr.bf16.mxu0 0
        %9393 = vmatmul.mubr.bf16.gmra.mrb[0].mxu0 %v9288
        %v9394 = vpop.f32.mrb[0].mxu0
        %v9395 = vadd.f32 %v9310, %v9394
        %v9396 = vpop.f32.mrb[0].mxu0
        %v9397 = vpop.f32.mrb[0].mxu0
        %v9398 = vpop.f32.mrb[0].mxu0
        %9399 = vdwg.mxu0
        %9400 = vmax.xlane.f32.xlu0 %v9395
        %v9401 = vpop.xlane.xlu0 %9400
        %v9402 = vsub.f32 %v9395, %v9401
        %v9403 = vmul.f32 %v9402, 1.442695
        %v9404 = vpow.pop %v9403
        %9405 = vadd.xlane.f32.xlu0 %v9404
        %v9406 = vpop.xlane.xlu0 %9405
        %v9407 = vlog2.pop %v9406
        %v9408 = vmul.f32 %v9407, 0.6931472
        %v9409 = vadd.f32 %v9408, %v9401
        %v9410 = vsub.f32 %v9395, %v9409
        %9411 = vst [vmem:[%s581] sm:$0xff] %v9410
        %p9412 = scmp.lt.s32.totalorder %s25, 1
        %s9413 = scalar_select %p9412, %s25, 1
        %s9414 = smul.addr %s9413, 8
        %s9415 = scalar_lea.vmem %s9, %s9414
        // Predicated region
        $region127: #{mnist_net_forward.1} parent=89 // pred_check
          %p9416 = pneg %p237
        $region128: #{mnist_net_forward.1} parent=89 // pred_check_branch
          %9418 = sbr.rel (%p9416) target = $region130
        $region129: #{mnist_net_forward.1} parent=89 // pred_region
          _
        $region130: #{mnist_net_forward.1} parent=89 // pred_fallthru
          _
      $region90: #{mnist_net_forward.1} parent=5 // pred_fallthru
        _
      %p9419 = scmp.le.s32.totalorder 2, %s20
      // Predicated region
      $region131: #{mnist_net_forward.1} parent=5 // pred_check
        %p9420 = pneg %p9419
      $region132: #{mnist_net_forward.1} parent=5 // pred_check_branch
        %9422 = sbr.rel (%p9420) target = $region134
      $region133: #{mnist_net_forward.1} parent=5 // pred_region
        %s9423 = ssub.s32 %s20, 2
        // Predicated region
        $region135: #{mnist_net_forward.1} parent=133 // pred_check
          %p9424 = pneg %p243
        $region136: #{mnist_net_forward.1} parent=133 // pred_check_branch
          %9426 = sbr.rel (%p9424) target = $region138
        $region137: #{mnist_net_forward.1} parent=133 // pred_region
          %p9427 = scmp.lt.s32.totalorder %s26, 1
          %s9428 = scalar_select %p9427, %s26, 1
          %s9429 = smul.addr %s9428, 8
          %s9430 = scalar_lea.vmem %s9, %s9429
        $region138: #{mnist_net_forward.1} parent=133 // pred_fallthru
          _
      $region134: #{mnist_net_forward.1} parent=5 // pred_fallthru
        _
    $region6: #{mnist_net_forward.1} parent=1 // loop_footer
      %s24 = sadd.s32 1, %s20
    $region7: #{mnist_net_forward.1} parent=1 // loop_footer_branch
      %19 = sbr.rel target = $region3
    $region8: #{mnist_net_forward.1} parent=1 // loop_exit
      _
    %9431 = vsyncpa [#allocation4], 1
    %s9432 = scalar_lea.sflag [#allocation4], 1
    %9433 = vsyncpa %s9432, 1
    %9434 = vsyncpa [#allocation6], 1
    %9435 = vsyncpa [#allocation9], 1
    %9436 = vsyncpa [#allocation12], 1
    %9437 = vsyncpa [#allocation15], 1

</llo_original>
